<compile_context>
chip_gen: v7x
topology: tpu7x:2x2x1
jax: 0.10.0
libtpu: 0.0.40
codegen_flags: <defaults>
</compile_context>

<pallas_src>
import functools

import jax
import jax.numpy as jnp
from jax.experimental import pallas as pl
from jax.experimental.pallas import tpu as pltpu

_LANE = 128
_SUBLANE = 8


def _round_up(a, m):
    return (a + m - 1) // m * m


# --------------------------------------------------------------------------- #
# Kernel
# --------------------------------------------------------------------------- #
def _fcn_kernel(x_ref, w_in_ref, b_in_ref, w_hid_ref, b_hid_ref,
                w_out_t_ref, b_out_t_ref, o_ref, *,
                n_hidden_layers, n_input, matmul_dtype):
    f32 = jnp.float32
    # f32 matmuls must stay exact (PINN use-case); bf16 uses the fast MXU path.
    mm_precision = (jax.lax.Precision.HIGHEST
                    if matmul_dtype == jnp.float32 else None)

    # ---- in_layer: Linear + Tanh -----------------------------------------
    x = x_ref[...]
    if n_input <= 8:
        # K is tiny (typically 2): VPU broadcast-FMAs beat a nearly-empty MXU pass.
        acc = x[:, 0:1].astype(f32) * w_in_ref[0:1, :].astype(f32)
        for i in range(1, n_input):
            acc = acc + x[:, i:i + 1].astype(f32) * w_in_ref[i:i + 1, :].astype(f32)
    else:
        acc = jnp.dot(x.astype(matmul_dtype), w_in_ref[...].astype(matmul_dtype),
                      preferred_element_type=f32, precision=mm_precision)
    h = jnp.tanh(acc + b_in_ref[...].astype(f32))

    # ---- hid_layer: (N_LAYERS - 1) x (Linear + Tanh) ----------------------
    def hidden_step(h, w, b):
        return jnp.tanh(
            jnp.dot(h.astype(matmul_dtype), w.astype(matmul_dtype),
                    preferred_element_type=f32, precision=mm_precision)
            + b.astype(f32))

    if n_hidden_layers <= 2:
        # Very shallow: static unroll keeps full scheduler visibility.
        for layer in range(n_hidden_layers):
            h = hidden_step(h, w_hid_ref[layer], b_hid_ref[pl.ds(layer, 1), :])
    else:
        # Deeper nets / large tiles: fori_loop bounds vreg/VMEM live ranges.
        def body(layer, h):
            return hidden_step(h, w_hid_ref[layer], b_hid_ref[pl.ds(layer, 1), :])
        h = jax.lax.fori_loop(0, n_hidden_layers, body, h, unroll=2)

    # ---- out_layer: Linear, computed transposed ---------------------------
    # out_t[j, b] = sum_k w_out[k, j] * h[b, k]; stored as (n_out_pad8, tile_b)
    # -> lane dim is tile_b (dense vst), writeback = b_pad * n_out_pad8 * 4 B
    # instead of b_pad * 128 * 4 B (~16x less HBM traffic for n_out = 1).
    out_t = jax.lax.dot_general(
        w_out_t_ref[...].astype(matmul_dtype), h.astype(matmul_dtype),
        dimension_numbers=(((1,), (1,)), ((), ())),
        preferred_element_type=f32, precision=mm_precision)
    out_t = out_t + b_out_t_ref[...].astype(f32)
    o_ref[...] = out_t.astype(o_ref.dtype)


# --------------------------------------------------------------------------- #
# Parameter preparation (hoisted out of the per-step hot path)
# --------------------------------------------------------------------------- #
def prepare_fcn_params(params, *, matmul_dtype=jnp.bfloat16):
    """Pad/cast the FCN parameters once.

    Zero padding is numerically exact: tanh(0) = 0 and zero weight rows/cols
    contribute nothing, so the first n_out outputs match the unpadded math.
    """
    w_in, b_in, w_hid, b_hid, w_out, b_out = params
    matmul_dtype = jnp.dtype(matmul_dtype)
    f32 = jnp.float32

    n_input, n_hidden = w_in.shape
    n_out = w_out.shape[1]
    n_hidden_layers = w_hid.shape[0]

    hp = _round_up(n_hidden, _LANE)       # hidden width, lane-dense
    op8 = _round_up(n_out, _SUBLANE)      # output width, sublane-aligned (transposed store)

    w_in_p = jnp.pad(w_in, ((0, 0), (0, hp - n_hidden))).astype(f32)
    b_in_p = jnp.pad(b_in, ((0, 0), (0, hp - n_hidden))).astype(f32)
    if n_hidden_layers > 0:
        w_hid_p = jnp.pad(
            w_hid, ((0, 0), (0, hp - n_hidden), (0, hp - n_hidden))
        ).astype(matmul_dtype)
        b_hid_p = jnp.pad(b_hid, ((0, 0), (0, hp - n_hidden))).astype(f32)
    else:  # keep ref shapes non-empty; kernel never reads them
        w_hid_p = jnp.zeros((1, hp, hp), matmul_dtype)
        b_hid_p = jnp.zeros((1, hp), f32)

    # Transposed output params: (n_out_pad8, hp) weights, (n_out_pad8, 1) bias.
    w_out_t_p = jnp.pad(w_out.T, ((0, op8 - n_out), (0, hp - n_hidden))).astype(matmul_dtype)
    b_out_t_p = jnp.pad(b_out.reshape(n_out, 1), ((0, op8 - n_out), (0, 0))).astype(f32)

    return dict(
        arrays=(w_in_p, b_in_p, w_hid_p, b_hid_p, w_out_t_p, b_out_t_p),
        n_input=n_input, n_hidden=n_hidden, n_out=n_out,
        n_hidden_layers=n_hidden_layers, hp=hp, op8=op8,
        matmul_dtype=matmul_dtype,
    )


# --------------------------------------------------------------------------- #
# Wrapper
# --------------------------------------------------------------------------- #
def _vmem_budget_bytes():
    """Per-generation scoped-VMEM budget (~56 MiB v7x, ~112 MiB v5e/v6e)."""
    try:
        cap = int(pltpu.get_tpu_info().vmem_capacity_bytes)
    except Exception:
        cap = 64 << 20  # conservative (v7x per-TC physical)
    return max((cap * 7) // 8, 32 << 20)


def _resident_spec(shape, index_map, single_buffered):
    """Constant-index (weights-resident) BlockSpec; single-buffer when requested."""
    if single_buffered:
        try:
            return pl.BlockSpec(shape, index_map, pipeline_mode=pl.Buffered(1))
        except TypeError:  # older pallas without pipeline_mode kwarg
            pass
    return pl.BlockSpec(shape, index_map)


def fcn_forward(x, params=None, *, prepared=None, tile_b=None, matmul_dtype=None):
    """FCN forward (in_layer -> hid_layer -> out_layer) via one Pallas kernel.

    matmul_dtype: bfloat16 (default; MXU-native on v6e/v7x) or float32 (exact,
    e.g. for PINN higher-order grads).  Bias add + tanh always stay f32.
    """
    if prepared is None:
        if params is None:
            raise ValueError("pass either `params` or `prepared`")
        prepared = prepare_fcn_params(
            params,
            matmul_dtype=jnp.bfloat16 if matmul_dtype is None else matmul_dtype)

    (w_in_p, b_in_p, w_hid_p, b_hid_p, w_out_t_p, b_out_t_p) = prepared["arrays"]
    n_input = prepared["n_input"]
    n_out = prepared["n_out"]
    n_hidden_layers = prepared["n_hidden_layers"]
    hp = prepared["hp"]
    op8 = prepared["op8"]
    mm_dtype = prepared["matmul_dtype"]

    B = x.shape[0]
    assert x.shape[1] == n_input
    out_dtype = x.dtype

    # ---- batch tiling ------------------------------------------------------
    # Big tiles amortize the ~0.35us/step grid overhead; keep >= 2 grid steps
    # when the batch allows so the "parallel" axis can shard over v7x's 2 TCs.
    if tile_b is None:
        tile_b = min(1024, max(_LANE, _round_up(B, _LANE)))
    tile_b = max(_LANE, _round_up(int(tile_b), _LANE))
    b_pad = _round_up(max(B, tile_b), tile_b)
    if b_pad // tile_b < 2 and tile_b > _LANE:
        tile_b = max(_LANE, (b_pad // 2) // _LANE * _LANE)
        b_pad = _round_up(max(B, tile_b), tile_b)
    grid_b = b_pad // tile_b

    x_p = jnp.pad(x, ((0, b_pad - B), (0, 0)))

    kernel = functools.partial(
        _fcn_kernel,
        n_hidden_layers=n_hidden_layers,
        n_input=n_input,
        matmul_dtype=mm_dtype,
    )

    nbytes = lambda a: int(a.size) * a.dtype.itemsize
    weight_bytes = sum(nbytes(a) for a in prepared["arrays"])
    flops = 2 * b_pad * (n_input * hp + n_hidden_layers * hp * hp + hp * op8)
    cost = pl.CostEstimate(
        flops=flops,
        transcendentals=b_pad * hp * (1 + n_hidden_layers),
        bytes_accessed=nbytes(x_p) + weight_bytes + b_pad * op8 * 4,
    )

    # VMEM accounting: weights are single-buffered residents, x/out tiles are
    # double-buffered by the pipeline, plus a few live f32 activation buffers.
    io_bytes = 2 * (tile_b * n_input * x.dtype.itemsize + op8 * tile_b * 4)
    act_bytes = 4 * tile_b * hp * 4
    needed = weight_bytes + io_bytes + act_bytes + (4 << 20)  # headroom
    vmem_limit = int(min(max(needed, 32 << 20), _vmem_budget_bytes()))
    vmem_limit = max(vmem_limit, needed)  # never below the true footprint

    const2 = lambda i: (0, 0)
    const3 = lambda i: (0, 0, 0)

    def _run(single_buffer_weights):
        return pl.pallas_call(
            kernel,
            out_shape=jax.ShapeDtypeStruct((op8, b_pad), out_dtype),
            grid_spec=pltpu.PrefetchScalarGridSpec(
                num_scalar_prefetch=0,
                grid=(grid_b,),
                in_specs=[
                    pl.BlockSpec((tile_b, n_input), lambda i: (i, 0)),  # x tile
                    _resident_spec(w_in_p.shape, const2, single_buffer_weights),
                    _resident_spec(b_in_p.shape, const2, single_buffer_weights),
                    _resident_spec(w_hid_p.shape, const3, single_buffer_weights),
                    _resident_spec(b_hid_p.shape, const2, single_buffer_weights),
                    _resident_spec(w_out_t_p.shape, const2, single_buffer_weights),
                    _resident_spec(b_out_t_p.shape, const2, single_buffer_weights),
                ],
                # transposed output: lane dim = tile_b (dense, unmasked vst)
                out_specs=pl.BlockSpec((op8, tile_b), lambda i: (0, i)),
            ),
            compiler_params=pltpu.CompilerParams(
                dimension_semantics=("parallel",),
                vmem_limit_bytes=vmem_limit,
            ),
            cost_estimate=cost,
        )(x_p, w_in_p, b_in_p, w_hid_p, b_hid_p, w_out_t_p, b_out_t_p)

    try:
        out_t_padded = _run(True)
    except Exception:
        # Conservative fallback if Buffered(1) single-buffering is rejected.
        out_t_padded = _run(False)

    # (n_out_pad8, b_pad) -> (B, n_out); the slice + transpose is tiny.
    return out_t_padded[:n_out, :B].T


# --------------------------------------------------------------------------- #
# Init + reference
# --------------------------------------------------------------------------- #
def init_fcn_params(key, n_input, n_output, n_hidden, n_layers, dtype=jnp.float32):
    """Deterministic synthetic init matching the shapes of the PyTorch module."""
    ks = jax.random.split(key, 6)
    scale = 0.1
    w_in = scale * jax.random.normal(ks[0], (n_input, n_hidden), dtype)
    b_in = scale * jax.random.normal(ks[1], (1, n_hidden), dtype)
    w_hid = scale * jax.random.normal(ks[2], (n_layers - 1, n_hidden, n_hidden), dtype)
    b_hid = scale * jax.random.normal(ks[3], (n_layers - 1, n_hidden), dtype)
    w_out = scale * jax.random.normal(ks[4], (n_hidden, n_output), dtype)
    b_out = scale * jax.random.normal(ks[5], (1, n_output), dtype)
    return (w_in, b_in, w_hid, b_hid, w_out, b_out)


def fcn_reference(x, params):
    """Pure-JAX reference mirroring the PyTorch forward exactly."""
    w_in, b_in, w_hid, b_hid, w_out, b_out = params
    h = jnp.tanh(x @ w_in + b_in)
    for layer in range(w_hid.shape[0]):
        h = jnp.tanh(h @ w_hid[layer] + b_hid[layer][None, :])
    return h @ w_out + b_out


if __name__ == "__main__":
    # Small PINN-like configuration.
    N_INPUT, N_OUTPUT, N_HIDDEN, N_LAYERS = 2, 1, 32, 3
    BATCH = 200  # not a tile multiple -> exercises batch padding + a 2-step grid

    key = jax.random.PRNGKey(0)
    k_x, k_p = jax.random.split(key)
    x = jax.random.normal(k_x, (BATCH, N_INPUT), jnp.float32)
    params = init_fcn_params(k_p, N_INPUT, N_OUTPUT, N_HIDDEN, N_LAYERS)

    ref = fcn_reference(x, params)

    # Exact-precision path (f32 matmuls): must match the reference tightly.
    prep_f32 = prepare_fcn_params(params, matmul_dtype=jnp.float32)
    out_f32 = jax.block_until_ready(fcn_forward(x, prepared=prep_f32))
    assert out_f32.shape == (BATCH, N_OUTPUT)
    assert jnp.allclose(out_f32, ref, atol=1e-5, rtol=1e-5), "f32 mismatch vs reference"

    # Default bf16-MXU fast path (params prepared once, reused across calls).
    prep_bf16 = prepare_fcn_params(params)  # matmul_dtype = bfloat16 default
    out_bf16 = jax.block_until_ready(fcn_forward(x, prepared=prep_bf16))
    assert out_bf16.shape == (BATCH, N_OUTPUT)
    assert jnp.allclose(out_bf16, ref, atol=2e-2, rtol=2e-2), "bf16 mismatch vs reference"

    print("KERNEL_OK")
</pallas_src>

<mosaic_0001>
module attributes {stable_mosaic.version = 11 : i64} {
  func.func @_fcn_kernel(%arg0: i32, %arg1: memref<128x2xf32, #tpu.memory_space<vmem>>, %arg2: memref<2x128xf32, #tpu.memory_space<vmem>>, %arg3: memref<1x128xf32, #tpu.memory_space<vmem>>, %arg4: memref<2x128x128xf32, #tpu.memory_space<vmem>>, %arg5: memref<2x128xf32, #tpu.memory_space<vmem>>, %arg6: memref<8x128xf32, #tpu.memory_space<vmem>>, %arg7: memref<8x1xf32, #tpu.memory_space<vmem>>, %arg8: memref<8x128xf32, #tpu.memory_space<vmem>>) attributes {dimension_semantics = [#tpu.dimension_semantics<parallel>], iteration_bounds = array<i64: 2>, scalar_prefetch = 0 : i64, scratch_operands = 0 : i64, tpu.core_type = #tpu.core_type<tc>, window_params = [{transform_indices = @transform_0, window_bounds = array<i64: 128, 2>}, {pipeline_mode = #tpu.pipeline_mode<synchronous>, transform_indices = @transform_1, window_bounds = array<i64: 2, 128>}, {pipeline_mode = #tpu.pipeline_mode<synchronous>, transform_indices = @transform_2, window_bounds = array<i64: 1, 128>}, {pipeline_mode = #tpu.pipeline_mode<synchronous>, transform_indices = @transform_3, window_bounds = array<i64: 2, 128, 128>}, {pipeline_mode = #tpu.pipeline_mode<synchronous>, transform_indices = @transform_4, window_bounds = array<i64: 2, 128>}, {pipeline_mode = #tpu.pipeline_mode<synchronous>, transform_indices = @transform_5, window_bounds = array<i64: 8, 128>}, {pipeline_mode = #tpu.pipeline_mode<synchronous>, transform_indices = @transform_6, window_bounds = array<i64: 8, 1>}, {transform_indices = @transform_7, window_bounds = array<i64: 8, 128>}]} {
    %c0 = arith.constant 0 : index
    %c0_0 = arith.constant 0 : index
    %0 = vector.load %arg1[%c0, %c0_0] : memref<128x2xf32, #tpu.memory_space<vmem>>, vector<128x2xf32>
    %1 = vector.extract_strided_slice %0 {offsets = [0, 0], sizes = [128, 1], strides = [1, 1]} : vector<128x2xf32> to vector<128x1xf32>
    %c0_1 = arith.constant 0 : index
    %c0_2 = arith.constant 0 : index
    %2 = vector.load %arg2[%c0_1, %c0_2] : memref<2x128xf32, #tpu.memory_space<vmem>>, vector<1x128xf32>
    %3 = vector.broadcast %1 : vector<128x1xf32> to vector<128x128xf32>
    %4 = vector.broadcast %2 : vector<1x128xf32> to vector<128x128xf32>
    %5 = arith.mulf %3, %4 : vector<128x128xf32>
    %6 = vector.extract_strided_slice %0 {offsets = [0, 1], sizes = [128, 1], strides = [1, 1]} : vector<128x2xf32> to vector<128x1xf32>
    %c1 = arith.constant 1 : index
    %c0_3 = arith.constant 0 : index
    %7 = vector.load %arg2[%c1, %c0_3] : memref<2x128xf32, #tpu.memory_space<vmem>>, vector<1x128xf32>
    %8 = vector.broadcast %6 : vector<128x1xf32> to vector<128x128xf32>
    %9 = vector.broadcast %7 : vector<1x128xf32> to vector<128x128xf32>
    %10 = arith.mulf %8, %9 : vector<128x128xf32>
    %11 = arith.addf %5, %10 : vector<128x128xf32>
    %c0_4 = arith.constant 0 : index
    %c0_5 = arith.constant 0 : index
    %12 = vector.load %arg3[%c0_4, %c0_5] : memref<1x128xf32, #tpu.memory_space<vmem>>, vector<1x128xf32>
    %13 = vector.broadcast %12 : vector<1x128xf32> to vector<128x128xf32>
    %14 = arith.addf %11, %13 : vector<128x128xf32>
    %15 = math.tanh %14 : vector<128x128xf32>
    %c0_6 = arith.constant 0 : index
    %c0_7 = arith.constant 0 : index
    %c0_8 = arith.constant 0 : index
    %16 = vector.load %arg4[%c0_6, %c0_7, %c0_8] : memref<2x128x128xf32, #tpu.memory_space<vmem>>, vector<1x128x128xf32>
    %17 = vector.shape_cast %16 : vector<1x128x128xf32> to vector<128x128xf32>
    %c0_9 = arith.constant 0 : index
    %c0_10 = arith.constant 0 : index
    %18 = vector.load %arg5[%c0_9, %c0_10] : memref<2x128xf32, #tpu.memory_space<vmem>>, vector<1x128xf32>
    %cst = arith.constant dense<0.000000e+00> : vector<128x128xf32>
    %19 = tpu.matmul %15, %17, %cst {dimension_numbers = #tpu.dot_dimension_numbers<[1], [0], [0], [1], [0, 0, 1, 1], [], []>, precision = #tpu.contract_precision<fp32>} : vector<128x128xf32>, vector<128x128xf32>, vector<128x128xf32> -> vector<128x128xf32>
    %20 = vector.broadcast %18 : vector<1x128xf32> to vector<128x128xf32>
    %21 = arith.addf %19, %20 : vector<128x128xf32>
    %22 = math.tanh %21 : vector<128x128xf32>
    %c1_11 = arith.constant 1 : index
    %c0_12 = arith.constant 0 : index
    %c0_13 = arith.constant 0 : index
    %23 = vector.load %arg4[%c1_11, %c0_12, %c0_13] : memref<2x128x128xf32, #tpu.memory_space<vmem>>, vector<1x128x128xf32>
    %24 = vector.shape_cast %23 : vector<1x128x128xf32> to vector<128x128xf32>
    %c1_14 = arith.constant 1 : index
    %c0_15 = arith.constant 0 : index
    %25 = vector.load %arg5[%c1_14, %c0_15] : memref<2x128xf32, #tpu.memory_space<vmem>>, vector<1x128xf32>
    %cst_16 = arith.constant dense<0.000000e+00> : vector<128x128xf32>
    %26 = tpu.matmul %22, %24, %cst_16 {dimension_numbers = #tpu.dot_dimension_numbers<[1], [0], [0], [1], [0, 0, 1, 1], [], []>, precision = #tpu.contract_precision<fp32>} : vector<128x128xf32>, vector<128x128xf32>, vector<128x128xf32> -> vector<128x128xf32>
    %27 = vector.broadcast %25 : vector<1x128xf32> to vector<128x128xf32>
    %28 = arith.addf %26, %27 : vector<128x128xf32>
    %29 = math.tanh %28 : vector<128x128xf32>
    %c0_17 = arith.constant 0 : index
    %c0_18 = arith.constant 0 : index
    %30 = vector.load %arg6[%c0_17, %c0_18] : memref<8x128xf32, #tpu.memory_space<vmem>>, vector<8x128xf32>
    %cst_19 = arith.constant dense<0.000000e+00> : vector<8x128xf32>
    %31 = tpu.matmul %30, %29, %cst_19 {dimension_numbers = #tpu.dot_dimension_numbers<[1], [1], [0], [0], [0, 0, 1, 0], [], []>, precision = #tpu.contract_precision<fp32>} : vector<8x128xf32>, vector<128x128xf32>, vector<8x128xf32> -> vector<8x128xf32>
    %c0_20 = arith.constant 0 : index
    %c0_21 = arith.constant 0 : index
    %32 = vector.load %arg7[%c0_20, %c0_21] : memref<8x1xf32, #tpu.memory_space<vmem>>, vector<8x1xf32>
    %33 = vector.broadcast %32 : vector<8x1xf32> to vector<8x128xf32>
    %34 = arith.addf %31, %33 : vector<8x128xf32>
    %c0_22 = arith.constant 0 : index
    %c0_23 = arith.constant 0 : index
    %35 = vector.load %arg8[%c0_22, %c0_23] : memref<8x128xf32, #tpu.memory_space<vmem>>, vector<8x128xf32>
    tpu.vector_store %arg8[%c0_22, %c0_23], %34 {strides = array<i32>} : memref<8x128xf32, #tpu.memory_space<vmem>>, vector<8x128xf32>,
    return
  }
  func.func @transform_0(%arg0: i32) -> (i32, i32) {
    %c0_i32 = arith.constant 0 : i32
    %c0_i32_0 = arith.constant 0 : i32
    return %arg0, %c0_i32 : i32, i32
  }
  func.func @transform_1(%arg0: i32) -> (i32, i32) {
    %c0_i32 = arith.constant 0 : i32
    %c0_i32_0 = arith.constant 0 : i32
    %c0_i32_1 = arith.constant 0 : i32
    return %c0_i32, %c0_i32_0 : i32, i32
  }
  func.func @transform_2(%arg0: i32) -> (i32, i32) {
    %c0_i32 = arith.constant 0 : i32
    %c0_i32_0 = arith.constant 0 : i32
    %c0_i32_1 = arith.constant 0 : i32
    return %c0_i32, %c0_i32_0 : i32, i32
  }
  func.func @transform_3(%arg0: i32) -> (i32, i32, i32) {
    %c0_i32 = arith.constant 0 : i32
    %c0_i32_0 = arith.constant 0 : i32
    %c0_i32_1 = arith.constant 0 : i32
    %c0_i32_2 = arith.constant 0 : i32
    return %c0_i32, %c0_i32_0, %c0_i32_1 : i32, i32, i32
  }
  func.func @transform_4(%arg0: i32) -> (i32, i32) {
    %c0_i32 = arith.constant 0 : i32
    %c0_i32_0 = arith.constant 0 : i32
    %c0_i32_1 = arith.constant 0 : i32
    return %c0_i32, %c0_i32_0 : i32, i32
  }
  func.func @transform_5(%arg0: i32) -> (i32, i32) {
    %c0_i32 = arith.constant 0 : i32
    %c0_i32_0 = arith.constant 0 : i32
    %c0_i32_1 = arith.constant 0 : i32
    return %c0_i32, %c0_i32_0 : i32, i32
  }
  func.func @transform_6(%arg0: i32) -> (i32, i32) {
    %c0_i32 = arith.constant 0 : i32
    %c0_i32_0 = arith.constant 0 : i32
    %c0_i32_1 = arith.constant 0 : i32
    return %c0_i32, %c0_i32_0 : i32, i32
  }
  func.func @transform_7(%arg0: i32) -> (i32, i32) {
    %c0_i32 = arith.constant 0 : i32
    %c0_i32_0 = arith.constant 0 : i32
    return %c0_i32, %arg0 : i32, i32
  }
}

module attributes {stable_mosaic.version = 11 : i64} {
  func.func @_fcn_kernel(%arg0: i32, %arg1: memref<128x2xf32, #tpu.memory_space<vmem>>, %arg2: memref<2x128xf32, #tpu.memory_space<vmem>>, %arg3: memref<1x128xf32, #tpu.memory_space<vmem>>, %arg4: memref<2x128x128xf32, #tpu.memory_space<vmem>>, %arg5: memref<2x128xf32, #tpu.memory_space<vmem>>, %arg6: memref<8x128xf32, #tpu.memory_space<vmem>>, %arg7: memref<8x1xf32, #tpu.memory_space<vmem>>, %arg8: memref<8x128xf32, #tpu.memory_space<vmem>>) attributes {dimension_semantics = [#tpu.dimension_semantics<parallel>], iteration_bounds = array<i64: 2>, scalar_prefetch = 0 : i64, scratch_operands = 0 : i64, tpu.core_type = #tpu.core_type<tc>, window_params = [{transform_indices = @transform_0, window_bounds = array<i64: 128, 2>}, {pipeline_mode = #tpu.pipeline_mode<synchronous>, transform_indices = @transform_1, window_bounds = array<i64: 2, 128>}, {pipeline_mode = #tpu.pipeline_mode<synchronous>, transform_indices = @transform_2, window_bounds = array<i64: 1, 128>}, {pipeline_mode = #tpu.pipeline_mode<synchronous>, transform_indices = @transform_3, window_bounds = array<i64: 2, 128, 128>}, {pipeline_mode = #tpu.pipeline_mode<synchronous>, transform_indices = @transform_4, window_bounds = array<i64: 2, 128>}, {pipeline_mode = #tpu.pipeline_mode<synchronous>, transform_indices = @transform_5, window_bounds = array<i64: 8, 128>}, {pipeline_mode = #tpu.pipeline_mode<synchronous>, transform_indices = @transform_6, window_bounds = array<i64: 8, 1>}, {transform_indices = @transform_7, window_bounds = array<i64: 8, 128>}]} {
    %c0 = arith.constant 0 : index
    %c0_0 = arith.constant 0 : index
    %0 = vector.load %arg1[%c0, %c0_0] : memref<128x2xf32, #tpu.memory_space<vmem>>, vector<128x2xf32>
    %1 = vector.extract_strided_slice %0 {offsets = [0, 0], sizes = [128, 1], strides = [1, 1]} : vector<128x2xf32> to vector<128x1xf32>
    %c0_1 = arith.constant 0 : index
    %c0_2 = arith.constant 0 : index
    %2 = vector.load %arg2[%c0_1, %c0_2] : memref<2x128xf32, #tpu.memory_space<vmem>>, vector<1x128xf32>
    %3 = vector.broadcast %1 : vector<128x1xf32> to vector<128x128xf32>
    %4 = vector.broadcast %2 : vector<1x128xf32> to vector<128x128xf32>
    %5 = arith.mulf %3, %4 : vector<128x128xf32>
    %6 = vector.extract_strided_slice %0 {offsets = [0, 1], sizes = [128, 1], strides = [1, 1]} : vector<128x2xf32> to vector<128x1xf32>
    %c1 = arith.constant 1 : index
    %c0_3 = arith.constant 0 : index
    %7 = vector.load %arg2[%c1, %c0_3] : memref<2x128xf32, #tpu.memory_space<vmem>>, vector<1x128xf32>
    %8 = vector.broadcast %6 : vector<128x1xf32> to vector<128x128xf32>
    %9 = vector.broadcast %7 : vector<1x128xf32> to vector<128x128xf32>
    %10 = arith.mulf %8, %9 : vector<128x128xf32>
    %11 = arith.addf %5, %10 : vector<128x128xf32>
    %c0_4 = arith.constant 0 : index
    %c0_5 = arith.constant 0 : index
    %12 = vector.load %arg3[%c0_4, %c0_5] : memref<1x128xf32, #tpu.memory_space<vmem>>, vector<1x128xf32>
    %13 = vector.broadcast %12 : vector<1x128xf32> to vector<128x128xf32>
    %14 = arith.addf %11, %13 : vector<128x128xf32>
    %15 = math.tanh %14 : vector<128x128xf32>
    %c0_6 = arith.constant 0 : index
    %c0_7 = arith.constant 0 : index
    %c0_8 = arith.constant 0 : index
    %16 = vector.load %arg4[%c0_6, %c0_7, %c0_8] : memref<2x128x128xf32, #tpu.memory_space<vmem>>, vector<1x128x128xf32>
    %17 = vector.shape_cast %16 : vector<1x128x128xf32> to vector<128x128xf32>
    %c0_9 = arith.constant 0 : index
    %c0_10 = arith.constant 0 : index
    %18 = vector.load %arg5[%c0_9, %c0_10] : memref<2x128xf32, #tpu.memory_space<vmem>>, vector<1x128xf32>
    %cst = arith.constant dense<0.000000e+00> : vector<128x128xf32>
    %19 = tpu.matmul %15, %17, %cst {dimension_numbers = #tpu.dot_dimension_numbers<[1], [0], [0], [1], [0, 0, 1, 1], [], []>, precision = #tpu.contract_precision<fp32>} : vector<128x128xf32>, vector<128x128xf32>, vector<128x128xf32> -> vector<128x128xf32>
    %20 = vector.broadcast %18 : vector<1x128xf32> to vector<128x128xf32>
    %21 = arith.addf %19, %20 : vector<128x128xf32>
    %22 = math.tanh %21 : vector<128x128xf32>
    %c1_11 = arith.constant 1 : index
    %c0_12 = arith.constant 0 : index
    %c0_13 = arith.constant 0 : index
    %23 = vector.load %arg4[%c1_11, %c0_12, %c0_13] : memref<2x128x128xf32, #tpu.memory_space<vmem>>, vector<1x128x128xf32>
    %24 = vector.shape_cast %23 : vector<1x128x128xf32> to vector<128x128xf32>
    %c1_14 = arith.constant 1 : index
    %c0_15 = arith.constant 0 : index
    %25 = vector.load %arg5[%c1_14, %c0_15] : memref<2x128xf32, #tpu.memory_space<vmem>>, vector<1x128xf32>
    %cst_16 = arith.constant dense<0.000000e+00> : vector<128x128xf32>
    %26 = tpu.matmul %22, %24, %cst_16 {dimension_numbers = #tpu.dot_dimension_numbers<[1], [0], [0], [1], [0, 0, 1, 1], [], []>, precision = #tpu.contract_precision<fp32>} : vector<128x128xf32>, vector<128x128xf32>, vector<128x128xf32> -> vector<128x128xf32>
    %27 = vector.broadcast %25 : vector<1x128xf32> to vector<128x128xf32>
    %28 = arith.addf %26, %27 : vector<128x128xf32>
    %29 = math.tanh %28 : vector<128x128xf32>
    %c0_17 = arith.constant 0 : index
    %c0_18 = arith.constant 0 : index
    %30 = vector.load %arg6[%c0_17, %c0_18] : memref<8x128xf32, #tpu.memory_space<vmem>>, vector<8x128xf32>
    %cst_19 = arith.constant dense<0.000000e+00> : vector<8x128xf32>
    %31 = tpu.matmul %30, %29, %cst_19 {dimension_numbers = #tpu.dot_dimension_numbers<[1], [1], [0], [0], [0, 0, 1, 0], [], []>, precision = #tpu.contract_precision<fp32>} : vector<8x128xf32>, vector<128x128xf32>, vector<8x128xf32> -> vector<8x128xf32>
    %c0_20 = arith.constant 0 : index
    %c0_21 = arith.constant 0 : index
    %32 = vector.load %arg7[%c0_20, %c0_21] : memref<8x1xf32, #tpu.memory_space<vmem>>, vector<8x1xf32>
    %33 = vector.broadcast %32 : vector<8x1xf32> to vector<8x128xf32>
    %34 = arith.addf %31, %33 : vector<8x128xf32>
    %c0_22 = arith.constant 0 : index
    %c0_23 = arith.constant 0 : index
    %35 = vector.load %arg8[%c0_22, %c0_23] : memref<8x128xf32, #tpu.memory_space<vmem>>, vector<8x128xf32>
    tpu.vector_store %arg8[%c0_22, %c0_23], %34 {strides = array<i32>} : memref<8x128xf32, #tpu.memory_space<vmem>>, vector<8x128xf32>,
    return
  }
  func.func @transform_0(%arg0: i32) -> (i32, i32) {
    %c0_i32 = arith.constant 0 : i32
    %c0_i32_0 = arith.constant 0 : i32
    return %arg0, %c0_i32 : i32, i32
  }
  func.func @transform_1(%arg0: i32) -> (i32, i32) {
    %c0_i32 = arith.constant 0 : i32
    %c0_i32_0 = arith.constant 0 : i32
    %c0_i32_1 = arith.constant 0 : i32
    return %c0_i32, %c0_i32_0 : i32, i32
  }
  func.func @transform_2(%arg0: i32) -> (i32, i32) {
    %c0_i32 = arith.constant 0 : i32
    %c0_i32_0 = arith.constant 0 : i32
    %c0_i32_1 = arith.constant 0 : i32
    return %c0_i32, %c0_i32_0 : i32, i32
  }
  func.func @transform_3(%arg0: i32) -> (i32, i32, i32) {
    %c0_i32 = arith.constant 0 : i32
    %c0_i32_0 = arith.constant 0 : i32
    %c0_i32_1 = arith.constant 0 : i32
    %c0_i32_2 = arith.constant 0 : i32
    return %c0_i32, %c0_i32_0, %c0_i32_1 : i32, i32, i32
  }
  func.func @transform_4(%arg0: i32) -> (i32, i32) {
    %c0_i32 = arith.constant 0 : i32
    %c0_i32_0 = arith.constant 0 : i32
    %c0_i32_1 = arith.constant 0 : i32
    return %c0_i32, %c0_i32_0 : i32, i32
  }
  func.func @transform_5(%arg0: i32) -> (i32, i32) {
    %c0_i32 = arith.constant 0 : i32
    %c0_i32_0 = arith.constant 0 : i32
    %c0_i32_1 = arith.constant 0 : i32
    return %c0_i32, %c0_i32_0 : i32, i32
  }
  func.func @transform_6(%arg0: i32) -> (i32, i32) {
    %c0_i32 = arith.constant 0 : i32
    %c0_i32_0 = arith.constant 0 : i32
    %c0_i32_1 = arith.constant 0 : i32
    return %c0_i32, %c0_i32_0 : i32, i32
  }
  func.func @transform_7(%arg0: i32) -> (i32, i32) {
    %c0_i32 = arith.constant 0 : i32
    %c0_i32_0 = arith.constant 0 : i32
    return %c0_i32, %arg0 : i32, i32
  }
}

</mosaic_0001>

<llo_original>
// kernel: tpu_custom_call.1
$region0: #{tpu_custom_call.1}
  #allocation0 [shape = 'u32[]', space=smem, size = 0x4, offset = 0x4, fixed_abs, tag = 'smem constant byte address 0x4 - core index']
  #allocation1 [shape = 'u32[144,128]{1,0:T(1,128)}', space=vmem, size = 0x12000, scoped, tag = 'internal scratch']
  %s0 = inlined_call_operand.vmem [shape: f32[256,2], index: 0, kind: input, shape index: {}]
  %s1 = inlined_call_operand.vmem [shape: f32[2,128], index: 1, kind: input, shape index: {}]
  %s2 = inlined_call_operand.vmem [shape: f32[1,128], index: 2, kind: input, shape index: {}]
  %s3 = inlined_call_operand.vmem [shape: f32[2,128,128], index: 3, kind: input, shape index: {}]
  %s4 = inlined_call_operand.vmem [shape: f32[2,128], index: 4, kind: input, shape index: {}]
  %s5 = inlined_call_operand.vmem [shape: f32[8,128], index: 5, kind: input, shape index: {}]
  %s6 = inlined_call_operand.vmem [shape: f32[8,1], index: 6, kind: input, shape index: {}]
  %s7 = inlined_call_operand.hbm [shape: f32[8,256], index: 7, kind: output, shape index: {}]
  %s8 = sld [smem:[#allocation0]]
  $region61: #{tpu_custom_call.1} parent=0
    _
  %s10 = ssub.s32 1, %s8
  %s11 = scalar_select 0, %s10, %s8
  $region1: #{tpu_custom_call.1} parent=0
    #allocation2 [shape = 'u8[8192]{0}', space=vmem, size = 0x2000, scoped, tag = 'output window, operand 0']
    #allocation3 [shape = 's32[2]{0}', space=sflag, size = 0x8, scoped, tag = 'scoped memory for tpu_custom_call.1']
    %12 = vsyncpa [#allocation3], 0
    %s13 = scalar_lea.sflag [#allocation3], 1
    %14 = vsyncpa %s13, 0
    loop: start=0, step=1, limit=4
    $region2: #{tpu_custom_call.1} parent=1 // loop_pre_header
      _
    $region3: #{tpu_custom_call.1} parent=1 // loop_header
      %s16 = sphi 0, %s20
      %p17 = scmp.ge.s32.totalorder %s16, 4
      %s26 = sphi 0, %s28
      %s29 = sphi 0, %s26
      %s30 = sphi 0, %s29
      %s46 = sphi 0, %s30
      %s50 = sphi 0, %s50
      %s52 = sphi 0, %s50
      %s53 = sphi 0, %s52
      %s67 = sphi 0, %s53
      %s71 = sphi 0, %s71
      %s73 = sphi 0, %s71
      %s74 = sphi 0, %s73
      %s88 = sphi 0, %s74
      %s92 = sphi 0, %s92
      %s94 = sphi 0, %s92
      %s95 = sphi 0, %s94
      %s109 = sphi 0, %s95
      %s113 = sphi 0, %s113
      %s115 = sphi 0, %s113
      %s116 = sphi 0, %s115
      %s130 = sphi 0, %s116
      %s134 = sphi 0, %s134
      %s136 = sphi 0, %s134
      %s137 = sphi 0, %s136
      %s151 = sphi 0, %s137
      %s155 = sphi 0, %s155
      %s157 = sphi 0, %s155
      %s158 = sphi 0, %s157
      %s172 = sphi 0, %s158
      %s178 = sphi 0, %s180
      %s181 = sphi 0, %s178
      %s182 = sphi 0, %s181
      %s198 = sphi 0, %s182
    $region4: #{tpu_custom_call.1} parent=1 // loop_header_branch
      %19 = sbr.rel (%p17) target = $region8
    $region5: #{tpu_custom_call.1} parent=1 // loop_body
      %s21 = ssub.s32 %s16, 1
      %s22 = ssub.s32 %s16, 2
      %s23 = sadd.s32 %s16, 1
      %s24 = ssub.s32 %s16, %s23
      %p25 = scmp.eq.s32.totalorder %s24, 0
      %s27 = sadd.s32 %s26, 1
      %s28 = scalar_select %p25, %s26, %s27
      %p31 = pneg %p25
      %p32 = scmp.eq.s32.totalorder %s16, 1
      %p33 = por %p31, %p32
      %p34 = scmp.ne.s32.totalorder %s26, %s29
      %p35 = scmp.eq.s32.totalorder %s16, 0
      %p36 = por %p34, %p35
      %p37 = scmp.ne.s32.totalorder %s26, %s29
      %p38 = scmp.eq.s32.totalorder %s21, 1
      %p39 = por %p37, %p38
      %p40 = scmp.ne.s32.totalorder %s29, %s30
      %p41 = scmp.eq.s32.totalorder %s21, 0
      %p42 = por %p40, %p41
      %p43 = scmp.ne.s32.totalorder %s29, %s30
      %p44 = scmp.eq.s32.totalorder %s22, 1
      %p45 = por %p43, %p44
      %p47 = scmp.ne.s32.totalorder %s30, %s46
      %p48 = scmp.eq.s32.totalorder %s22, 0
      %p49 = por %p47, %p48
      %s51 = sadd.s32 %s50, 1
      %p54 = scmp.eq.s32.totalorder %s16, 1
      %p55 = scmp.ne.s32.totalorder %s50, %s52
      %p56 = scmp.eq.s32.totalorder %s16, 0
      %p57 = por %p55, %p56
      %p58 = scmp.ne.s32.totalorder %s50, %s52
      %p59 = scmp.eq.s32.totalorder %s21, 1
      %p60 = por %p58, %p59
      %p61 = scmp.ne.s32.totalorder %s52, %s53
      %p62 = scmp.eq.s32.totalorder %s21, 0
      %p63 = por %p61, %p62
      %p64 = scmp.ne.s32.totalorder %s52, %s53
      %p65 = scmp.eq.s32.totalorder %s22, 1
      %p66 = por %p64, %p65
      %p68 = scmp.ne.s32.totalorder %s53, %s67
      %p69 = scmp.eq.s32.totalorder %s22, 0
      %p70 = por %p68, %p69
      %s72 = sadd.s32 %s71, 1
      %p75 = scmp.eq.s32.totalorder %s16, 1
      %p76 = scmp.ne.s32.totalorder %s71, %s73
      %p77 = scmp.eq.s32.totalorder %s16, 0
      %p78 = por %p76, %p77
      %p79 = scmp.ne.s32.totalorder %s71, %s73
      %p80 = scmp.eq.s32.totalorder %s21, 1
      %p81 = por %p79, %p80
      %p82 = scmp.ne.s32.totalorder %s73, %s74
      %p83 = scmp.eq.s32.totalorder %s21, 0
      %p84 = por %p82, %p83
      %p85 = scmp.ne.s32.totalorder %s73, %s74
      %p86 = scmp.eq.s32.totalorder %s22, 1
      %p87 = por %p85, %p86
      %p89 = scmp.ne.s32.totalorder %s74, %s88
      %p90 = scmp.eq.s32.totalorder %s22, 0
      %p91 = por %p89, %p90
      %s93 = sadd.s32 %s92, 1
      %p96 = scmp.eq.s32.totalorder %s16, 1
      %p97 = scmp.ne.s32.totalorder %s92, %s94
      %p98 = scmp.eq.s32.totalorder %s16, 0
      %p99 = por %p97, %p98
      %p100 = scmp.ne.s32.totalorder %s92, %s94
      %p101 = scmp.eq.s32.totalorder %s21, 1
      %p102 = por %p100, %p101
      %p103 = scmp.ne.s32.totalorder %s94, %s95
      %p104 = scmp.eq.s32.totalorder %s21, 0
      %p105 = por %p103, %p104
      %p106 = scmp.ne.s32.totalorder %s94, %s95
      %p107 = scmp.eq.s32.totalorder %s22, 1
      %p108 = por %p106, %p107
      %p110 = scmp.ne.s32.totalorder %s95, %s109
      %p111 = scmp.eq.s32.totalorder %s22, 0
      %p112 = por %p110, %p111
      %s114 = sadd.s32 %s113, 1
      %p117 = scmp.eq.s32.totalorder %s16, 1
      %p118 = scmp.ne.s32.totalorder %s113, %s115
      %p119 = scmp.eq.s32.totalorder %s16, 0
      %p120 = por %p118, %p119
      %p121 = scmp.ne.s32.totalorder %s113, %s115
      %p122 = scmp.eq.s32.totalorder %s21, 1
      %p123 = por %p121, %p122
      %p124 = scmp.ne.s32.totalorder %s115, %s116
      %p125 = scmp.eq.s32.totalorder %s21, 0
      %p126 = por %p124, %p125
      %p127 = scmp.ne.s32.totalorder %s115, %s116
      %p128 = scmp.eq.s32.totalorder %s22, 1
      %p129 = por %p127, %p128
      %p131 = scmp.ne.s32.totalorder %s116, %s130
      %p132 = scmp.eq.s32.totalorder %s22, 0
      %p133 = por %p131, %p132
      %s135 = sadd.s32 %s134, 1
      %p138 = scmp.eq.s32.totalorder %s16, 1
      %p139 = scmp.ne.s32.totalorder %s134, %s136
      %p140 = scmp.eq.s32.totalorder %s16, 0
      %p141 = por %p139, %p140
      %p142 = scmp.ne.s32.totalorder %s134, %s136
      %p143 = scmp.eq.s32.totalorder %s21, 1
      %p144 = por %p142, %p143
      %p145 = scmp.ne.s32.totalorder %s136, %s137
      %p146 = scmp.eq.s32.totalorder %s21, 0
      %p147 = por %p145, %p146
      %p148 = scmp.ne.s32.totalorder %s136, %s137
      %p149 = scmp.eq.s32.totalorder %s22, 1
      %p150 = por %p148, %p149
      %p152 = scmp.ne.s32.totalorder %s137, %s151
      %p153 = scmp.eq.s32.totalorder %s22, 0
      %p154 = por %p152, %p153
      %s156 = sadd.s32 %s155, 1
      %p159 = scmp.eq.s32.totalorder %s16, 1
      %p160 = scmp.ne.s32.totalorder %s155, %s157
      %p161 = scmp.eq.s32.totalorder %s16, 0
      %p162 = por %p160, %p161
      %p163 = scmp.ne.s32.totalorder %s155, %s157
      %p164 = scmp.eq.s32.totalorder %s21, 1
      %p165 = por %p163, %p164
      %p166 = scmp.ne.s32.totalorder %s157, %s158
      %p167 = scmp.eq.s32.totalorder %s21, 0
      %p168 = por %p166, %p167
      %p169 = scmp.ne.s32.totalorder %s157, %s158
      %p170 = scmp.eq.s32.totalorder %s22, 1
      %p171 = por %p169, %p170
      %p173 = scmp.ne.s32.totalorder %s158, %s172
      %p174 = scmp.eq.s32.totalorder %s22, 0
      %p175 = por %p173, %p174
      %s176 = ssub.s32 %s16, %s23
      %p177 = scmp.eq.s32.totalorder %s176, 0
      %s179 = sadd.s32 %s178, 1
      %s180 = scalar_select %p177, %s178, %s179
      %p183 = pneg %p177
      %p184 = scmp.eq.s32.totalorder %s16, 1
      %p185 = por %p183, %p184
      %p186 = scmp.ne.s32.totalorder %s178, %s181
      %p187 = scmp.eq.s32.totalorder %s16, 0
      %p188 = por %p186, %p187
      %p189 = scmp.ne.s32.totalorder %s178, %s181
      %p190 = scmp.eq.s32.totalorder %s21, 1
      %p191 = por %p189, %p190
      %p192 = scmp.ne.s32.totalorder %s181, %s182
      %p193 = scmp.eq.s32.totalorder %s21, 0
      %p194 = por %p192, %p193
      %p195 = scmp.ne.s32.totalorder %s181, %s182
      %p196 = scmp.eq.s32.totalorder %s22, 1
      %p197 = por %p195, %p196
      %p199 = scmp.ne.s32.totalorder %s182, %s198
      %p200 = scmp.eq.s32.totalorder %s22, 0
      %p201 = por %p199, %p200
      %p202 = scmp.le.s32.totalorder 1, %s16
      %p203 = scmp.lt.s32.totalorder %s16, 3
      %p204 = pnand %p202, %p203
      %p205 = pneg %p204
      // Predicated region
      $region9: #{tpu_custom_call.1} parent=5 // pred_check
        _
      $region10: #{tpu_custom_call.1} parent=5 // pred_check_branch
        %207 = sbr.rel (%p204) target = $region12
      $region11: #{tpu_custom_call.1} parent=5 // pred_region
        %s208 = ssub.s32 %s16, 1
        // Predicated region
        $region13: #{tpu_custom_call.1} parent=11 // pred_check
          %p209 = pneg %p63
        $region14: #{tpu_custom_call.1} parent=11 // pred_check_branch
          %211 = sbr.rel (%p209) target = $region16
        $region15: #{tpu_custom_call.1} parent=11 // pred_region
          _
        $region16: #{tpu_custom_call.1} parent=11 // pred_fallthru
          _
        // Predicated region
        $region17: #{tpu_custom_call.1} parent=11 // pred_check
          %p212 = pneg %p84
        $region18: #{tpu_custom_call.1} parent=11 // pred_check_branch
          %214 = sbr.rel (%p212) target = $region20
        $region19: #{tpu_custom_call.1} parent=11 // pred_region
          _
        $region20: #{tpu_custom_call.1} parent=11 // pred_fallthru
          _
        // Predicated region
        $region21: #{tpu_custom_call.1} parent=11 // pred_check
          %p215 = pneg %p105
        $region22: #{tpu_custom_call.1} parent=11 // pred_check_branch
          %217 = sbr.rel (%p215) target = $region24
        $region23: #{tpu_custom_call.1} parent=11 // pred_region
          _
        $region24: #{tpu_custom_call.1} parent=11 // pred_fallthru
          _
        // Predicated region
        $region25: #{tpu_custom_call.1} parent=11 // pred_check
          %p218 = pneg %p126
        $region26: #{tpu_custom_call.1} parent=11 // pred_check_branch
          %220 = sbr.rel (%p218) target = $region28
        $region27: #{tpu_custom_call.1} parent=11 // pred_region
          _
        $region28: #{tpu_custom_call.1} parent=11 // pred_fallthru
          _
        // Predicated region
        $region29: #{tpu_custom_call.1} parent=11 // pred_check
          %p221 = pneg %p147
        $region30: #{tpu_custom_call.1} parent=11 // pred_check_branch
          %223 = sbr.rel (%p221) target = $region32
        $region31: #{tpu_custom_call.1} parent=11 // pred_region
          _
        $region32: #{tpu_custom_call.1} parent=11 // pred_fallthru
          _
        // Predicated region
        $region33: #{tpu_custom_call.1} parent=11 // pred_check
          %p224 = pneg %p168
        $region34: #{tpu_custom_call.1} parent=11 // pred_check_branch
          %226 = sbr.rel (%p224) target = $region36
        $region35: #{tpu_custom_call.1} parent=11 // pred_region
          _
        $region36: #{tpu_custom_call.1} parent=11 // pred_fallthru
          _
      $region12: #{tpu_custom_call.1} parent=5 // pred_fallthru
        _
      %p227 = scmp.lt.s32.totalorder %s16, 2
      // Predicated region
      $region37: #{tpu_custom_call.1} parent=5 // pred_check
        %p228 = pneg %p227
      $region38: #{tpu_custom_call.1} parent=5 // pred_check_branch
        %230 = sbr.rel (%p228) target = $region40
      $region39: #{tpu_custom_call.1} parent=5 // pred_region
        // Predicated region
        $region41: #{tpu_custom_call.1} parent=39 // pred_check
          %p231 = pneg %p36
        $region42: #{tpu_custom_call.1} parent=39 // pred_check_branch
          %233 = sbr.rel (%p231) target = $region44
        $region43: #{tpu_custom_call.1} parent=39 // pred_region
          %s234 = smul.u32 16, %s16
          %p235 = scmp.lt.s32.totalorder %s234, 31
          %s236 = scalar_select %p235, %s234, 31
          %s237 = smul.addr %s236, 8
          %s238 = scalar_lea.vmem %s0, %s237
          %s239 = smul.u32 16, %s16
        $region44: #{tpu_custom_call.1} parent=39 // pred_fallthru
          _
      $region40: #{tpu_custom_call.1} parent=5 // pred_fallthru
        _
      %p240 = scmp.le.s32.totalorder 1, %s16
      %p241 = scmp.lt.s32.totalorder %s16, 3
      %p242 = pnand %p240, %p241
      %p243 = pneg %p242
      // Predicated region
      $region45: #{tpu_custom_call.1} parent=5 // pred_check
        _
      $region46: #{tpu_custom_call.1} parent=5 // pred_check_branch
        %245 = sbr.rel (%p242) target = $region48
      $region47: #{tpu_custom_call.1} parent=5 // pred_region
        %s246 = ssub.s32 %s16, 1
        %s247 = smul.u32 16, %s21
        %p248 = scmp.lt.s32.totalorder %s247, 31
        %s249 = scalar_select %p248, %s247, 31
        %s250 = smul.addr %s249, 8
        %s251 = scalar_lea.vmem %s0, %s250
        %p252 = pneg %p42
        %p253 = pneg %p39
        %p254 = pneg %p63
        %p255 = pneg %p60
        %p256 = pneg %p84
        %p257 = pneg %p81
        %p258 = pneg %p105
        %p259 = pneg %p102
        %p260 = pneg %p126
        %p261 = pneg %p123
        %p262 = pneg %p147
        %p263 = pneg %p144
        %p264 = pneg %p168
        %p265 = pneg %p165
        %p266 = pneg %p194
        %p267 = pneg %p191
        %s268 = sand.u32 %s181, 1
        %s269 = scalar_lea.sflag [#allocation3], %s268
        %s270 = sand.u32 %s181, 1
        %s271 = smul.addr %s270, 8
        %s272 = scalar_lea.vmem [#allocation2], %s271
        %s273 = smul.u32 16, %s21
        %p274 = scmp.lt.s32.totalorder %s273, 31
        %s275 = scalar_select %p274, %s273, 31
        %s276 = smul.addr %s275, 8
        %s277 = scalar_lea.vmem %s0, %s276
        %s278 = smul.u32 16, %s21
        %v279 = vld [vmem:[%s277] sm:$0xff]
        %v280 = vld [vmem:[%s277 + $0x8] sm:$0xff]
        %v281 = vld [vmem:[%s277 + $0x10] sm:$0xff]
        %v282 = vld [vmem:[%s277 + $0x18] sm:$0xff]
        %v283 = vld [vmem:[%s277 + $0x20] sm:$0xff]
        %v284 = vld [vmem:[%s277 + $0x28] sm:$0xff]
        %v285 = vld [vmem:[%s277 + $0x30] sm:$0xff]
        %v286 = vld [vmem:[%s277 + $0x38] sm:$0xff]
        %v287 = vld [vmem:[%s277 + $0x40] sm:$0xff]
        %v288 = vld [vmem:[%s277 + $0x48] sm:$0xff]
        %v289 = vld [vmem:[%s277 + $0x50] sm:$0xff]
        %v290 = vld [vmem:[%s277 + $0x58] sm:$0xff]
        %v291 = vld [vmem:[%s277 + $0x60] sm:$0xff]
        %v292 = vld [vmem:[%s277 + $0x68] sm:$0xff]
        %v293 = vld [vmem:[%s277 + $0x70] sm:$0xff]
        %v294 = vld [vmem:[%s277 + $0x78] sm:$0xff]
        %v295 = vld [vmem:[%s1] sm:$0x1]
        %297 = vset.pattern.permute.xlu0 0
        %298 = vperm.xlu0 %297, %v279
        %v299 = vpop.permute.xlu0 %298
        %302 = vset.pattern.permute.xlu0 0
        %303 = vperm.xlu0 %302, %v280
        %v304 = vpop.permute.xlu0 %303
        %307 = vset.pattern.permute.xlu0 0
        %308 = vperm.xlu0 %307, %v281
        %v309 = vpop.permute.xlu0 %308
        %312 = vset.pattern.permute.xlu0 0
        %313 = vperm.xlu0 %312, %v282
        %v314 = vpop.permute.xlu0 %313
        %317 = vset.pattern.permute.xlu0 0
        %318 = vperm.xlu0 %317, %v283
        %v319 = vpop.permute.xlu0 %318
        %322 = vset.pattern.permute.xlu0 0
        %323 = vperm.xlu0 %322, %v284
        %v324 = vpop.permute.xlu0 %323
        %327 = vset.pattern.permute.xlu0 0
        %328 = vperm.xlu0 %327, %v285
        %v329 = vpop.permute.xlu0 %328
        %332 = vset.pattern.permute.xlu0 0
        %333 = vperm.xlu0 %332, %v286
        %v334 = vpop.permute.xlu0 %333
        %337 = vset.pattern.permute.xlu0 0
        %338 = vperm.xlu0 %337, %v287
        %v339 = vpop.permute.xlu0 %338
        %342 = vset.pattern.permute.xlu0 0
        %343 = vperm.xlu0 %342, %v288
        %v344 = vpop.permute.xlu0 %343
        %347 = vset.pattern.permute.xlu0 0
        %348 = vperm.xlu0 %347, %v289
        %v349 = vpop.permute.xlu0 %348
        %352 = vset.pattern.permute.xlu0 0
        %353 = vperm.xlu0 %352, %v290
        %v354 = vpop.permute.xlu0 %353
        %357 = vset.pattern.permute.xlu0 0
        %358 = vperm.xlu0 %357, %v291
        %v359 = vpop.permute.xlu0 %358
        %362 = vset.pattern.permute.xlu0 0
        %363 = vperm.xlu0 %362, %v292
        %v364 = vpop.permute.xlu0 %363
        %367 = vset.pattern.permute.xlu0 0
        %368 = vperm.xlu0 %367, %v293
        %v369 = vpop.permute.xlu0 %368
        %372 = vset.pattern.permute.xlu0 0
        %373 = vperm.xlu0 %372, %v294
        %v374 = vpop.permute.xlu0 %373
        %v376 = vlaneseq
        %v377 = vshrl.u32 %v376, 7
        %v378 = vsub.s32 0, %v377
        %v379 = vrot.slane %v295, %v378
        %v380 = vmul.f32 %v299, %v379
        %v381 = vmul.f32 %v304, %v379
        %v382 = vmul.f32 %v309, %v379
        %v383 = vmul.f32 %v314, %v379
        %v384 = vmul.f32 %v319, %v379
        %v385 = vmul.f32 %v324, %v379
        %v386 = vmul.f32 %v329, %v379
        %v387 = vmul.f32 %v334, %v379
        %v388 = vmul.f32 %v339, %v379
        %v389 = vmul.f32 %v344, %v379
        %v390 = vmul.f32 %v349, %v379
        %v391 = vmul.f32 %v354, %v379
        %v392 = vmul.f32 %v359, %v379
        %v393 = vmul.f32 %v364, %v379
        %v394 = vmul.f32 %v369, %v379
        %v395 = vmul.f32 %v374, %v379
        %v396 = vld [vmem:[%s1 + $0x1] sm:$0x1]
        %397 = vset.pattern.permute.xlu0 1
        %398 = vperm.xlu0 %397, %v279
        %v399 = vpop.permute.xlu0 %398
        %401 = vset.pattern.permute.xlu0 1
        %402 = vperm.xlu0 %401, %v280
        %v403 = vpop.permute.xlu0 %402
        %405 = vset.pattern.permute.xlu0 1
        %406 = vperm.xlu0 %405, %v281
        %v407 = vpop.permute.xlu0 %406
        %409 = vset.pattern.permute.xlu0 1
        %410 = vperm.xlu0 %409, %v282
        %v411 = vpop.permute.xlu0 %410
        %413 = vset.pattern.permute.xlu0 1
        %414 = vperm.xlu0 %413, %v283
        %v415 = vpop.permute.xlu0 %414
        %417 = vset.pattern.permute.xlu0 1
        %418 = vperm.xlu0 %417, %v284
        %v419 = vpop.permute.xlu0 %418
        %421 = vset.pattern.permute.xlu0 1
        %422 = vperm.xlu0 %421, %v285
        %v423 = vpop.permute.xlu0 %422
        %425 = vset.pattern.permute.xlu0 1
        %426 = vperm.xlu0 %425, %v286
        %v427 = vpop.permute.xlu0 %426
        %429 = vset.pattern.permute.xlu0 1
        %430 = vperm.xlu0 %429, %v287
        %v431 = vpop.permute.xlu0 %430
        %433 = vset.pattern.permute.xlu0 1
        %434 = vperm.xlu0 %433, %v288
        %v435 = vpop.permute.xlu0 %434
        %437 = vset.pattern.permute.xlu0 1
        %438 = vperm.xlu0 %437, %v289
        %v439 = vpop.permute.xlu0 %438
        %441 = vset.pattern.permute.xlu0 1
        %442 = vperm.xlu0 %441, %v290
        %v443 = vpop.permute.xlu0 %442
        %445 = vset.pattern.permute.xlu0 1
        %446 = vperm.xlu0 %445, %v291
        %v447 = vpop.permute.xlu0 %446
        %449 = vset.pattern.permute.xlu0 1
        %450 = vperm.xlu0 %449, %v292
        %v451 = vpop.permute.xlu0 %450
        %453 = vset.pattern.permute.xlu0 1
        %454 = vperm.xlu0 %453, %v293
        %v455 = vpop.permute.xlu0 %454
        %457 = vset.pattern.permute.xlu0 1
        %458 = vperm.xlu0 %457, %v294
        %v459 = vpop.permute.xlu0 %458
        %v461 = vlaneseq
        %v462 = vshrl.u32 %v461, 7
        %v463 = vsub.s32 0, %v462
        %v464 = vrot.slane %v396, %v463
        %v465 = vmul.f32 %v399, %v464
        %v466 = vmul.f32 %v403, %v464
        %v467 = vmul.f32 %v407, %v464
        %v468 = vmul.f32 %v411, %v464
        %v469 = vmul.f32 %v415, %v464
        %v470 = vmul.f32 %v419, %v464
        %v471 = vmul.f32 %v423, %v464
        %v472 = vmul.f32 %v427, %v464
        %v473 = vmul.f32 %v431, %v464
        %v474 = vmul.f32 %v435, %v464
        %v475 = vmul.f32 %v439, %v464
        %v476 = vmul.f32 %v443, %v464
        %v477 = vmul.f32 %v447, %v464
        %v478 = vmul.f32 %v451, %v464
        %v479 = vmul.f32 %v455, %v464
        %v480 = vmul.f32 %v459, %v464
        %v481 = vadd.f32 %v380, %v465
        %v482 = vadd.f32 %v381, %v466
        %v483 = vadd.f32 %v382, %v467
        %v484 = vadd.f32 %v383, %v468
        %v485 = vadd.f32 %v384, %v469
        %v486 = vadd.f32 %v385, %v470
        %v487 = vadd.f32 %v386, %v471
        %v488 = vadd.f32 %v387, %v472
        %v489 = vadd.f32 %v388, %v473
        %v490 = vadd.f32 %v389, %v474
        %v491 = vadd.f32 %v390, %v475
        %v492 = vadd.f32 %v391, %v476
        %v493 = vadd.f32 %v392, %v477
        %v494 = vadd.f32 %v393, %v478
        %v495 = vadd.f32 %v394, %v479
        %v496 = vadd.f32 %v395, %v480
        %v497 = vld [vmem:[%s2] sm:$0x1]
        %v499 = vlaneseq
        %v500 = vshrl.u32 %v499, 7
        %v501 = vsub.s32 0, %v500
        %v502 = vrot.slane %v497, %v501
        %v504 = vadd.f32 %v481, %v502
        %v505 = vadd.f32 %v482, %v502
        %v506 = vadd.f32 %v483, %v502
        %v507 = vadd.f32 %v484, %v502
        %v508 = vadd.f32 %v485, %v502
        %v509 = vadd.f32 %v486, %v502
        %v510 = vadd.f32 %v487, %v502
        %v511 = vadd.f32 %v488, %v502
        %v512 = vadd.f32 %v489, %v502
        %v513 = vadd.f32 %v490, %v502
        %v514 = vadd.f32 %v491, %v502
        %v515 = vadd.f32 %v492, %v502
        %v516 = vadd.f32 %v493, %v502
        %v517 = vadd.f32 %v494, %v502
        %v518 = vadd.f32 %v495, %v502
        %v519 = vadd.f32 %v496, %v502
        %v520 = vtanh.pop %v504
        %v521 = vtanh.pop %v505
        %v522 = vtanh.pop %v506
        %v523 = vtanh.pop %v507
        %v524 = vtanh.pop %v508
        %v525 = vtanh.pop %v509
        %v526 = vtanh.pop %v510
        %v527 = vtanh.pop %v511
        %v528 = vtanh.pop %v512
        %v529 = vtanh.pop %v513
        %v530 = vtanh.pop %v514
        %v531 = vtanh.pop %v515
        %v532 = vtanh.pop %v516
        %v533 = vtanh.pop %v517
        %v534 = vtanh.pop %v518
        %v535 = vtanh.pop %v519
        %v536 = vld [vmem:[%s3] sm:$0xff]
        %v537 = vld [vmem:[%s3 + $0x8] sm:$0xff]
        %v538 = vld [vmem:[%s3 + $0x10] sm:$0xff]
        %v539 = vld [vmem:[%s3 + $0x18] sm:$0xff]
        %v540 = vld [vmem:[%s3 + $0x20] sm:$0xff]
        %v541 = vld [vmem:[%s3 + $0x28] sm:$0xff]
        %v542 = vld [vmem:[%s3 + $0x30] sm:$0xff]
        %v543 = vld [vmem:[%s3 + $0x38] sm:$0xff]
        %v544 = vld [vmem:[%s3 + $0x40] sm:$0xff]
        %v545 = vld [vmem:[%s3 + $0x48] sm:$0xff]
        %v546 = vld [vmem:[%s3 + $0x50] sm:$0xff]
        %v547 = vld [vmem:[%s3 + $0x58] sm:$0xff]
        %v548 = vld [vmem:[%s3 + $0x60] sm:$0xff]
        %v549 = vld [vmem:[%s3 + $0x68] sm:$0xff]
        %v550 = vld [vmem:[%s3 + $0x70] sm:$0xff]
        %v551 = vld [vmem:[%s3 + $0x78] sm:$0xff]
        %v552 = vld [vmem:[%s4] sm:$0x1]
        %v553 = vlaneseq
        %v554 = vshrl.u32 %v553, 7
        %v555 = vsub.s32 0, %v554
        %v556 = vrot.slane %v552, %v555
        %557 = vmatprep.subr.mxu0 0.0
        %v558 = vand.u32 %v536, 4294901760
        %559 = vmatpush1.msra.mxu0 %v558
        %560 = vmatprep.subr.mxu0 0.0
        %v561 = vand.u32 %v537, 4294901760
        %562 = vmatpush1.msra.mxu0 %v561
        %563 = vmatprep.subr.mxu0 0.0
        %v564 = vand.u32 %v538, 4294901760
        %565 = vmatpush1.msra.mxu0 %v564
        %566 = vmatprep.subr.mxu0 0.0
        %v567 = vand.u32 %v539, 4294901760
        %568 = vmatpush1.msra.mxu0 %v567
        %569 = vmatprep.subr.mxu0 0.0
        %v570 = vand.u32 %v540, 4294901760
        %571 = vmatpush1.msra.mxu0 %v570
        %572 = vmatprep.subr.mxu0 0.0
        %v573 = vand.u32 %v541, 4294901760
        %574 = vmatpush1.msra.mxu0 %v573
        %575 = vmatprep.subr.mxu0 0.0
        %v576 = vand.u32 %v542, 4294901760
        %577 = vmatpush1.msra.mxu0 %v576
        %578 = vmatprep.subr.mxu0 0.0
        %v579 = vand.u32 %v543, 4294901760
        %580 = vmatpush1.msra.mxu0 %v579
        %581 = vmatprep.subr.mxu0 0.0
        %v582 = vand.u32 %v544, 4294901760
        %583 = vmatpush1.msra.mxu0 %v582
        %584 = vmatprep.subr.mxu0 0.0
        %v585 = vand.u32 %v545, 4294901760
        %586 = vmatpush1.msra.mxu0 %v585
        %587 = vmatprep.subr.mxu0 0.0
        %v588 = vand.u32 %v546, 4294901760
        %589 = vmatpush1.msra.mxu0 %v588
        %590 = vmatprep.subr.mxu0 0.0
        %v591 = vand.u32 %v547, 4294901760
        %592 = vmatpush1.msra.mxu0 %v591
        %593 = vmatprep.subr.mxu0 0.0
        %v594 = vand.u32 %v548, 4294901760
        %595 = vmatpush1.msra.mxu0 %v594
        %596 = vmatprep.subr.mxu0 0.0
        %v597 = vand.u32 %v549, 4294901760
        %598 = vmatpush1.msra.mxu0 %v597
        %599 = vmatprep.subr.mxu0 0.0
        %v600 = vand.u32 %v550, 4294901760
        %601 = vmatpush1.msra.mxu0 %v600
        %602 = vmatprep.subr.mxu0 0.0
        %v603 = vand.u32 %v551, 4294901760
        %604 = vmatpush1.msra.mxu0 %v603
        %605 = vmatprep.subr.mxu0 0.0
        %606 = vmatpush1.msra.mxu0 0.0
        %607 = vmatprep.subr.mxu0 0.0
        %608 = vmatpush1.msra.mxu0 0.0
        %609 = vmatprep.subr.mxu0 0.0
        %610 = vmatpush1.msra.mxu0 0.0
        %611 = vmatprep.subr.mxu0 0.0
        %612 = vmatpush1.msra.mxu0 0.0
        %613 = vmatprep.subr.mxu0 0.0
        %614 = vmatpush1.msra.mxu0 0.0
        %615 = vmatprep.subr.mxu0 0.0
        %616 = vmatpush1.msra.mxu0 0.0
        %617 = vmatprep.subr.mxu0 0.0
        %618 = vmatpush1.msra.mxu0 0.0
        %619 = vmatprep.subr.mxu0 0.0
        %620 = vmatpush1.msra.mxu0 0.0
        %621 = vmatprep.subr.mxu0 0.0
        %622 = vmatpush1.msra.mxu0 0.0
        %623 = vmatprep.subr.mxu0 0.0
        %624 = vmatpush1.msra.mxu0 0.0
        %625 = vmatprep.subr.mxu0 0.0
        %626 = vmatpush1.msra.mxu0 0.0
        %627 = vmatprep.subr.mxu0 0.0
        %628 = vmatpush1.msra.mxu0 0.0
        %629 = vmatprep.subr.mxu0 0.0
        %630 = vmatpush1.msra.mxu0 0.0
        %631 = vmatprep.subr.mxu0 0.0
        %632 = vmatpush1.msra.mxu0 0.0
        %633 = vmatprep.subr.mxu0 0.0
        %634 = vmatpush1.msra.mxu0 0.0
        %635 = vmatprep.subr.mxu0 0.0
        %636 = vmatpush1.msra.mxu0 0.0
        %637 = vmatprep.mubr.f32.mxu0 0.0
        %v638 = vand.u32 %v520, 4294901760
        %v639 = vsub.f32 %v520, %v638
        %v640 = vand.u32 %v639, 4294901760
        %v641 = vsub.f32 %v639, %v640
        %v642 = vand.u32 %v641, 4294901760
        %643 = vmatmul.mubr.f32.gmra.mrb[0].mxu0 %v642
        %v644 = vpop.f32.mrb[0].mxu0
        %v645 = vadd.f32 %v556, %v644
        %v646 = vpop.f32.mrb[0].mxu0
        %647 = vmatprep.mubr.f32.mxu0 0.0
        %v648 = vand.u32 %v521, 4294901760
        %v649 = vsub.f32 %v521, %v648
        %v650 = vand.u32 %v649, 4294901760
        %v651 = vsub.f32 %v649, %v650
        %v652 = vand.u32 %v651, 4294901760
        %653 = vmatmul.mubr.f32.gmra.mrb[0].mxu0 %v652
        %v654 = vpop.f32.mrb[0].mxu0
        %v655 = vadd.f32 %v556, %v654
        %v656 = vpop.f32.mrb[0].mxu0
        %657 = vmatprep.mubr.f32.mxu0 0.0
        %v658 = vand.u32 %v522, 4294901760
        %v659 = vsub.f32 %v522, %v658
        %v660 = vand.u32 %v659, 4294901760
        %v661 = vsub.f32 %v659, %v660
        %v662 = vand.u32 %v661, 4294901760
        %663 = vmatmul.mubr.f32.gmra.mrb[0].mxu0 %v662
        %v664 = vpop.f32.mrb[0].mxu0
        %v665 = vadd.f32 %v556, %v664
        %v666 = vpop.f32.mrb[0].mxu0
        %667 = vmatprep.mubr.f32.mxu0 0.0
        %v668 = vand.u32 %v523, 4294901760
        %v669 = vsub.f32 %v523, %v668
        %v670 = vand.u32 %v669, 4294901760
        %v671 = vsub.f32 %v669, %v670
        %v672 = vand.u32 %v671, 4294901760
        %673 = vmatmul.mubr.f32.gmra.mrb[0].mxu0 %v672
        %v674 = vpop.f32.mrb[0].mxu0
        %v675 = vadd.f32 %v556, %v674
        %v676 = vpop.f32.mrb[0].mxu0
        %677 = vmatprep.mubr.f32.mxu0 0.0
        %v678 = vand.u32 %v524, 4294901760
        %v679 = vsub.f32 %v524, %v678
        %v680 = vand.u32 %v679, 4294901760
        %v681 = vsub.f32 %v679, %v680
        %v682 = vand.u32 %v681, 4294901760
        %683 = vmatmul.mubr.f32.gmra.mrb[0].mxu0 %v682
        %v684 = vpop.f32.mrb[0].mxu0
        %v685 = vadd.f32 %v556, %v684
        %v686 = vpop.f32.mrb[0].mxu0
        %687 = vmatprep.mubr.f32.mxu0 0.0
        %v688 = vand.u32 %v525, 4294901760
        %v689 = vsub.f32 %v525, %v688
        %v690 = vand.u32 %v689, 4294901760
        %v691 = vsub.f32 %v689, %v690
        %v692 = vand.u32 %v691, 4294901760
        %693 = vmatmul.mubr.f32.gmra.mrb[0].mxu0 %v692
        %v694 = vpop.f32.mrb[0].mxu0
        %v695 = vadd.f32 %v556, %v694
        %v696 = vpop.f32.mrb[0].mxu0
        %697 = vmatprep.mubr.f32.mxu0 0.0
        %v698 = vand.u32 %v526, 4294901760
        %v699 = vsub.f32 %v526, %v698
        %v700 = vand.u32 %v699, 4294901760
        %v701 = vsub.f32 %v699, %v700
        %v702 = vand.u32 %v701, 4294901760
        %703 = vmatmul.mubr.f32.gmra.mrb[0].mxu0 %v702
        %v704 = vpop.f32.mrb[0].mxu0
        %v705 = vadd.f32 %v556, %v704
        %v706 = vpop.f32.mrb[0].mxu0
        %707 = vmatprep.mubr.f32.mxu0 0.0
        %v708 = vand.u32 %v527, 4294901760
        %v709 = vsub.f32 %v527, %v708
        %v710 = vand.u32 %v709, 4294901760
        %v711 = vsub.f32 %v709, %v710
        %v712 = vand.u32 %v711, 4294901760
        %713 = vmatmul.mubr.f32.gmra.mrb[0].mxu0 %v712
        %v714 = vpop.f32.mrb[0].mxu0
        %v715 = vadd.f32 %v556, %v714
        %v716 = vpop.f32.mrb[0].mxu0
        %717 = vmatprep.mubr.f32.mxu0 0.0
        %v718 = vand.u32 %v528, 4294901760
        %v719 = vsub.f32 %v528, %v718
        %v720 = vand.u32 %v719, 4294901760
        %v721 = vsub.f32 %v719, %v720
        %v722 = vand.u32 %v721, 4294901760
        %723 = vmatmul.mubr.f32.gmra.mrb[0].mxu0 %v722
        %v724 = vpop.f32.mrb[0].mxu0
        %v725 = vadd.f32 %v556, %v724
        %v726 = vpop.f32.mrb[0].mxu0
        %727 = vmatprep.mubr.f32.mxu0 0.0
        %v728 = vand.u32 %v529, 4294901760
        %v729 = vsub.f32 %v529, %v728
        %v730 = vand.u32 %v729, 4294901760
        %v731 = vsub.f32 %v729, %v730
        %v732 = vand.u32 %v731, 4294901760
        %733 = vmatmul.mubr.f32.gmra.mrb[0].mxu0 %v732
        %v734 = vpop.f32.mrb[0].mxu0
        %v735 = vadd.f32 %v556, %v734
        %v736 = vpop.f32.mrb[0].mxu0
        %737 = vmatprep.mubr.f32.mxu0 0.0
        %v738 = vand.u32 %v530, 4294901760
        %v739 = vsub.f32 %v530, %v738
        %v740 = vand.u32 %v739, 4294901760
        %v741 = vsub.f32 %v739, %v740
        %v742 = vand.u32 %v741, 4294901760
        %743 = vmatmul.mubr.f32.gmra.mrb[0].mxu0 %v742
        %v744 = vpop.f32.mrb[0].mxu0
        %v745 = vadd.f32 %v556, %v744
        %v746 = vpop.f32.mrb[0].mxu0
        %747 = vmatprep.mubr.f32.mxu0 0.0
        %v748 = vand.u32 %v531, 4294901760
        %v749 = vsub.f32 %v531, %v748
        %v750 = vand.u32 %v749, 4294901760
        %v751 = vsub.f32 %v749, %v750
        %v752 = vand.u32 %v751, 4294901760
        %753 = vmatmul.mubr.f32.gmra.mrb[0].mxu0 %v752
        %v754 = vpop.f32.mrb[0].mxu0
        %v755 = vadd.f32 %v556, %v754
        %v756 = vpop.f32.mrb[0].mxu0
        %757 = vmatprep.mubr.f32.mxu0 0.0
        %v758 = vand.u32 %v532, 4294901760
        %v759 = vsub.f32 %v532, %v758
        %v760 = vand.u32 %v759, 4294901760
        %v761 = vsub.f32 %v759, %v760
        %v762 = vand.u32 %v761, 4294901760
        %763 = vmatmul.mubr.f32.gmra.mrb[0].mxu0 %v762
        %v764 = vpop.f32.mrb[0].mxu0
        %v765 = vadd.f32 %v556, %v764
        %v766 = vpop.f32.mrb[0].mxu0
        %767 = vmatprep.mubr.f32.mxu0 0.0
        %v768 = vand.u32 %v533, 4294901760
        %v769 = vsub.f32 %v533, %v768
        %v770 = vand.u32 %v769, 4294901760
        %v771 = vsub.f32 %v769, %v770
        %v772 = vand.u32 %v771, 4294901760
        %773 = vmatmul.mubr.f32.gmra.mrb[0].mxu0 %v772
        %v774 = vpop.f32.mrb[0].mxu0
        %v775 = vadd.f32 %v556, %v774
        %v776 = vpop.f32.mrb[0].mxu0
        %777 = vmatprep.mubr.f32.mxu0 0.0
        %v778 = vand.u32 %v534, 4294901760
        %v779 = vsub.f32 %v534, %v778
        %v780 = vand.u32 %v779, 4294901760
        %v781 = vsub.f32 %v779, %v780
        %v782 = vand.u32 %v781, 4294901760
        %783 = vmatmul.mubr.f32.gmra.mrb[0].mxu0 %v782
        %v784 = vpop.f32.mrb[0].mxu0
        %v785 = vadd.f32 %v556, %v784
        %v786 = vpop.f32.mrb[0].mxu0
        %787 = vmatprep.mubr.f32.mxu0 0.0
        %v788 = vand.u32 %v535, 4294901760
        %v789 = vsub.f32 %v535, %v788
        %v790 = vand.u32 %v789, 4294901760
        %v791 = vsub.f32 %v789, %v790
        %v792 = vand.u32 %v791, 4294901760
        %793 = vmatmul.mubr.f32.gmra.mrb[0].mxu0 %v792
        %v794 = vpop.f32.mrb[0].mxu0
        %v795 = vadd.f32 %v556, %v794
        %v796 = vpop.f32.mrb[0].mxu0
        %797 = vdwg.mxu0
        %798 = vmatprep.subr.mxu0 0.0
        %v799 = vand.u32 %v536, 4294901760
        %v800 = vsub.f32 %v536, %v799
        %v801 = vand.u32 %v800, 4294901760
        %v802 = vsub.f32 %v800, %v801
        %v803 = vand.u32 %v802, 4294901760
        %804 = vmatpush1.msra.mxu0 %v803
        %805 = vmatprep.subr.mxu0 0.0
        %v806 = vand.u32 %v537, 4294901760
        %v807 = vsub.f32 %v537, %v806
        %v808 = vand.u32 %v807, 4294901760
        %v809 = vsub.f32 %v807, %v808
        %v810 = vand.u32 %v809, 4294901760
        %811 = vmatpush1.msra.mxu0 %v810
        %812 = vmatprep.subr.mxu0 0.0
        %v813 = vand.u32 %v538, 4294901760
        %v814 = vsub.f32 %v538, %v813
        %v815 = vand.u32 %v814, 4294901760
        %v816 = vsub.f32 %v814, %v815
        %v817 = vand.u32 %v816, 4294901760
        %818 = vmatpush1.msra.mxu0 %v817
        %819 = vmatprep.subr.mxu0 0.0
        %v820 = vand.u32 %v539, 4294901760
        %v821 = vsub.f32 %v539, %v820
        %v822 = vand.u32 %v821, 4294901760
        %v823 = vsub.f32 %v821, %v822
        %v824 = vand.u32 %v823, 4294901760
        %825 = vmatpush1.msra.mxu0 %v824
        %826 = vmatprep.subr.mxu0 0.0
        %v827 = vand.u32 %v540, 4294901760
        %v828 = vsub.f32 %v540, %v827
        %v829 = vand.u32 %v828, 4294901760
        %v830 = vsub.f32 %v828, %v829
        %v831 = vand.u32 %v830, 4294901760
        %832 = vmatpush1.msra.mxu0 %v831
        %833 = vmatprep.subr.mxu0 0.0
        %v834 = vand.u32 %v541, 4294901760
        %v835 = vsub.f32 %v541, %v834
        %v836 = vand.u32 %v835, 4294901760
        %v837 = vsub.f32 %v835, %v836
        %v838 = vand.u32 %v837, 4294901760
        %839 = vmatpush1.msra.mxu0 %v838
        %840 = vmatprep.subr.mxu0 0.0
        %v841 = vand.u32 %v542, 4294901760
        %v842 = vsub.f32 %v542, %v841
        %v843 = vand.u32 %v842, 4294901760
        %v844 = vsub.f32 %v842, %v843
        %v845 = vand.u32 %v844, 4294901760
        %846 = vmatpush1.msra.mxu0 %v845
        %847 = vmatprep.subr.mxu0 0.0
        %v848 = vand.u32 %v543, 4294901760
        %v849 = vsub.f32 %v543, %v848
        %v850 = vand.u32 %v849, 4294901760
        %v851 = vsub.f32 %v849, %v850
        %v852 = vand.u32 %v851, 4294901760
        %853 = vmatpush1.msra.mxu0 %v852
        %854 = vmatprep.subr.mxu0 0.0
        %v855 = vand.u32 %v544, 4294901760
        %v856 = vsub.f32 %v544, %v855
        %v857 = vand.u32 %v856, 4294901760
        %v858 = vsub.f32 %v856, %v857
        %v859 = vand.u32 %v858, 4294901760
        %860 = vmatpush1.msra.mxu0 %v859
        %861 = vmatprep.subr.mxu0 0.0
        %v862 = vand.u32 %v545, 4294901760
        %v863 = vsub.f32 %v545, %v862
        %v864 = vand.u32 %v863, 4294901760
        %v865 = vsub.f32 %v863, %v864
        %v866 = vand.u32 %v865, 4294901760
        %867 = vmatpush1.msra.mxu0 %v866
        %868 = vmatprep.subr.mxu0 0.0
        %v869 = vand.u32 %v546, 4294901760
        %v870 = vsub.f32 %v546, %v869
        %v871 = vand.u32 %v870, 4294901760
        %v872 = vsub.f32 %v870, %v871
        %v873 = vand.u32 %v872, 4294901760
        %874 = vmatpush1.msra.mxu0 %v873
        %875 = vmatprep.subr.mxu0 0.0
        %v876 = vand.u32 %v547, 4294901760
        %v877 = vsub.f32 %v547, %v876
        %v878 = vand.u32 %v877, 4294901760
        %v879 = vsub.f32 %v877, %v878
        %v880 = vand.u32 %v879, 4294901760
        %881 = vmatpush1.msra.mxu0 %v880
        %882 = vmatprep.subr.mxu0 0.0
        %v883 = vand.u32 %v548, 4294901760
        %v884 = vsub.f32 %v548, %v883
        %v885 = vand.u32 %v884, 4294901760
        %v886 = vsub.f32 %v884, %v885
        %v887 = vand.u32 %v886, 4294901760
        %888 = vmatpush1.msra.mxu0 %v887
        %889 = vmatprep.subr.mxu0 0.0
        %v890 = vand.u32 %v549, 4294901760
        %v891 = vsub.f32 %v549, %v890
        %v892 = vand.u32 %v891, 4294901760
        %v893 = vsub.f32 %v891, %v892
        %v894 = vand.u32 %v893, 4294901760
        %895 = vmatpush1.msra.mxu0 %v894
        %896 = vmatprep.subr.mxu0 0.0
        %v897 = vand.u32 %v550, 4294901760
        %v898 = vsub.f32 %v550, %v897
        %v899 = vand.u32 %v898, 4294901760
        %v900 = vsub.f32 %v898, %v899
        %v901 = vand.u32 %v900, 4294901760
        %902 = vmatpush1.msra.mxu0 %v901
        %903 = vmatprep.subr.mxu0 0.0
        %v904 = vand.u32 %v551, 4294901760
        %v905 = vsub.f32 %v551, %v904
        %v906 = vand.u32 %v905, 4294901760
        %v907 = vsub.f32 %v905, %v906
        %v908 = vand.u32 %v907, 4294901760
        %909 = vmatpush1.msra.mxu0 %v908
        %910 = vmatprep.subr.mxu0 0.0
        %911 = vmatpush1.msra.mxu0 0.0
        %912 = vmatprep.subr.mxu0 0.0
        %913 = vmatpush1.msra.mxu0 0.0
        %914 = vmatprep.subr.mxu0 0.0
        %915 = vmatpush1.msra.mxu0 0.0
        %916 = vmatprep.subr.mxu0 0.0
        %917 = vmatpush1.msra.mxu0 0.0
        %918 = vmatprep.subr.mxu0 0.0
        %919 = vmatpush1.msra.mxu0 0.0
        %920 = vmatprep.subr.mxu0 0.0
        %921 = vmatpush1.msra.mxu0 0.0
        %922 = vmatprep.subr.mxu0 0.0
        %923 = vmatpush1.msra.mxu0 0.0
        %924 = vmatprep.subr.mxu0 0.0
        %925 = vmatpush1.msra.mxu0 0.0
        %926 = vmatprep.subr.mxu0 0.0
        %927 = vmatpush1.msra.mxu0 0.0
        %928 = vmatprep.subr.mxu0 0.0
        %929 = vmatpush1.msra.mxu0 0.0
        %930 = vmatprep.subr.mxu0 0.0
        %931 = vmatpush1.msra.mxu0 0.0
        %932 = vmatprep.subr.mxu0 0.0
        %933 = vmatpush1.msra.mxu0 0.0
        %934 = vmatprep.subr.mxu0 0.0
        %935 = vmatpush1.msra.mxu0 0.0
        %936 = vmatprep.subr.mxu0 0.0
        %937 = vmatpush1.msra.mxu0 0.0
        %938 = vmatprep.subr.mxu0 0.0
        %939 = vmatpush1.msra.mxu0 0.0
        %940 = vmatprep.subr.mxu0 0.0
        %941 = vmatpush1.msra.mxu0 0.0
        %942 = vmatprep.mubr.f32.mxu0 0.0
        %v943 = vand.u32 %v520, 4294901760
        %944 = vmatmul.mubr.f32.gmra.mrb[0].mxu0 %v943
        %v945 = vpop.f32.mrb[0].mxu0
        %v946 = vadd.f32 %v645, %v945
        %v947 = vpop.f32.mrb[0].mxu0
        %948 = vmatprep.mubr.f32.mxu0 0.0
        %v949 = vand.u32 %v521, 4294901760
        %950 = vmatmul.mubr.f32.gmra.mrb[0].mxu0 %v949
        %v951 = vpop.f32.mrb[0].mxu0
        %v952 = vadd.f32 %v655, %v951
        %v953 = vpop.f32.mrb[0].mxu0
        %954 = vmatprep.mubr.f32.mxu0 0.0
        %v955 = vand.u32 %v522, 4294901760
        %956 = vmatmul.mubr.f32.gmra.mrb[0].mxu0 %v955
        %v957 = vpop.f32.mrb[0].mxu0
        %v958 = vadd.f32 %v665, %v957
        %v959 = vpop.f32.mrb[0].mxu0
        %960 = vmatprep.mubr.f32.mxu0 0.0
        %v961 = vand.u32 %v523, 4294901760
        %962 = vmatmul.mubr.f32.gmra.mrb[0].mxu0 %v961
        %v963 = vpop.f32.mrb[0].mxu0
        %v964 = vadd.f32 %v675, %v963
        %v965 = vpop.f32.mrb[0].mxu0
        %966 = vmatprep.mubr.f32.mxu0 0.0
        %v967 = vand.u32 %v524, 4294901760
        %968 = vmatmul.mubr.f32.gmra.mrb[0].mxu0 %v967
        %v969 = vpop.f32.mrb[0].mxu0
        %v970 = vadd.f32 %v685, %v969
        %v971 = vpop.f32.mrb[0].mxu0
        %972 = vmatprep.mubr.f32.mxu0 0.0
        %v973 = vand.u32 %v525, 4294901760
        %974 = vmatmul.mubr.f32.gmra.mrb[0].mxu0 %v973
        %v975 = vpop.f32.mrb[0].mxu0
        %v976 = vadd.f32 %v695, %v975
        %v977 = vpop.f32.mrb[0].mxu0
        %978 = vmatprep.mubr.f32.mxu0 0.0
        %v979 = vand.u32 %v526, 4294901760
        %980 = vmatmul.mubr.f32.gmra.mrb[0].mxu0 %v979
        %v981 = vpop.f32.mrb[0].mxu0
        %v982 = vadd.f32 %v705, %v981
        %v983 = vpop.f32.mrb[0].mxu0
        %984 = vmatprep.mubr.f32.mxu0 0.0
        %v985 = vand.u32 %v527, 4294901760
        %986 = vmatmul.mubr.f32.gmra.mrb[0].mxu0 %v985
        %v987 = vpop.f32.mrb[0].mxu0
        %v988 = vadd.f32 %v715, %v987
        %v989 = vpop.f32.mrb[0].mxu0
        %990 = vmatprep.mubr.f32.mxu0 0.0
        %v991 = vand.u32 %v528, 4294901760
        %992 = vmatmul.mubr.f32.gmra.mrb[0].mxu0 %v991
        %v993 = vpop.f32.mrb[0].mxu0
        %v994 = vadd.f32 %v725, %v993
        %v995 = vpop.f32.mrb[0].mxu0
        %996 = vmatprep.mubr.f32.mxu0 0.0
        %v997 = vand.u32 %v529, 4294901760
        %998 = vmatmul.mubr.f32.gmra.mrb[0].mxu0 %v997
        %v999 = vpop.f32.mrb[0].mxu0
        %v1000 = vadd.f32 %v735, %v999
        %v1001 = vpop.f32.mrb[0].mxu0
        %1002 = vmatprep.mubr.f32.mxu0 0.0
        %v1003 = vand.u32 %v530, 4294901760
        %1004 = vmatmul.mubr.f32.gmra.mrb[0].mxu0 %v1003
        %v1005 = vpop.f32.mrb[0].mxu0
        %v1006 = vadd.f32 %v745, %v1005
        %v1007 = vpop.f32.mrb[0].mxu0
        %1008 = vmatprep.mubr.f32.mxu0 0.0
        %v1009 = vand.u32 %v531, 4294901760
        %1010 = vmatmul.mubr.f32.gmra.mrb[0].mxu0 %v1009
        %v1011 = vpop.f32.mrb[0].mxu0
        %v1012 = vadd.f32 %v755, %v1011
        %v1013 = vpop.f32.mrb[0].mxu0
        %1014 = vmatprep.mubr.f32.mxu0 0.0
        %v1015 = vand.u32 %v532, 4294901760
        %1016 = vmatmul.mubr.f32.gmra.mrb[0].mxu0 %v1015
        %v1017 = vpop.f32.mrb[0].mxu0
        %v1018 = vadd.f32 %v765, %v1017
        %v1019 = vpop.f32.mrb[0].mxu0
        %1020 = vmatprep.mubr.f32.mxu0 0.0
        %v1021 = vand.u32 %v533, 4294901760
        %1022 = vmatmul.mubr.f32.gmra.mrb[0].mxu0 %v1021
        %v1023 = vpop.f32.mrb[0].mxu0
        %v1024 = vadd.f32 %v775, %v1023
        %v1025 = vpop.f32.mrb[0].mxu0
        %1026 = vmatprep.mubr.f32.mxu0 0.0
        %v1027 = vand.u32 %v534, 4294901760
        %1028 = vmatmul.mubr.f32.gmra.mrb[0].mxu0 %v1027
        %v1029 = vpop.f32.mrb[0].mxu0
        %v1030 = vadd.f32 %v785, %v1029
        %v1031 = vpop.f32.mrb[0].mxu0
        %1032 = vmatprep.mubr.f32.mxu0 0.0
        %v1033 = vand.u32 %v535, 4294901760
        %1034 = vmatmul.mubr.f32.gmra.mrb[0].mxu0 %v1033
        %v1035 = vpop.f32.mrb[0].mxu0
        %v1036 = vadd.f32 %v795, %v1035
        %v1037 = vpop.f32.mrb[0].mxu0
        %1038 = vdwg.mxu0
        %1039 = vmatprep.subr.mxu0 0.0
        %v1040 = vand.u32 %v536, 4294901760
        %v1041 = vsub.f32 %v536, %v1040
        %1042 = vmatpush1.msra.mxu0 %v1041
        %1043 = vmatprep.subr.mxu0 0.0
        %v1044 = vand.u32 %v537, 4294901760
        %v1045 = vsub.f32 %v537, %v1044
        %1046 = vmatpush1.msra.mxu0 %v1045
        %1047 = vmatprep.subr.mxu0 0.0
        %v1048 = vand.u32 %v538, 4294901760
        %v1049 = vsub.f32 %v538, %v1048
        %1050 = vmatpush1.msra.mxu0 %v1049
        %1051 = vmatprep.subr.mxu0 0.0
        %v1052 = vand.u32 %v539, 4294901760
        %v1053 = vsub.f32 %v539, %v1052
        %1054 = vmatpush1.msra.mxu0 %v1053
        %1055 = vmatprep.subr.mxu0 0.0
        %v1056 = vand.u32 %v540, 4294901760
        %v1057 = vsub.f32 %v540, %v1056
        %1058 = vmatpush1.msra.mxu0 %v1057
        %1059 = vmatprep.subr.mxu0 0.0
        %v1060 = vand.u32 %v541, 4294901760
        %v1061 = vsub.f32 %v541, %v1060
        %1062 = vmatpush1.msra.mxu0 %v1061
        %1063 = vmatprep.subr.mxu0 0.0
        %v1064 = vand.u32 %v542, 4294901760
        %v1065 = vsub.f32 %v542, %v1064
        %1066 = vmatpush1.msra.mxu0 %v1065
        %1067 = vmatprep.subr.mxu0 0.0
        %v1068 = vand.u32 %v543, 4294901760
        %v1069 = vsub.f32 %v543, %v1068
        %1070 = vmatpush1.msra.mxu0 %v1069
        %1071 = vmatprep.subr.mxu0 0.0
        %v1072 = vand.u32 %v544, 4294901760
        %v1073 = vsub.f32 %v544, %v1072
        %1074 = vmatpush1.msra.mxu0 %v1073
        %1075 = vmatprep.subr.mxu0 0.0
        %v1076 = vand.u32 %v545, 4294901760
        %v1077 = vsub.f32 %v545, %v1076
        %1078 = vmatpush1.msra.mxu0 %v1077
        %1079 = vmatprep.subr.mxu0 0.0
        %v1080 = vand.u32 %v546, 4294901760
        %v1081 = vsub.f32 %v546, %v1080
        %1082 = vmatpush1.msra.mxu0 %v1081
        %1083 = vmatprep.subr.mxu0 0.0
        %v1084 = vand.u32 %v547, 4294901760
        %v1085 = vsub.f32 %v547, %v1084
        %1086 = vmatpush1.msra.mxu0 %v1085
        %1087 = vmatprep.subr.mxu0 0.0
        %v1088 = vand.u32 %v548, 4294901760
        %v1089 = vsub.f32 %v548, %v1088
        %1090 = vmatpush1.msra.mxu0 %v1089
        %1091 = vmatprep.subr.mxu0 0.0
        %v1092 = vand.u32 %v549, 4294901760
        %v1093 = vsub.f32 %v549, %v1092
        %1094 = vmatpush1.msra.mxu0 %v1093
        %1095 = vmatprep.subr.mxu0 0.0
        %v1096 = vand.u32 %v550, 4294901760
        %v1097 = vsub.f32 %v550, %v1096
        %1098 = vmatpush1.msra.mxu0 %v1097
        %1099 = vmatprep.subr.mxu0 0.0
        %v1100 = vand.u32 %v551, 4294901760
        %v1101 = vsub.f32 %v551, %v1100
        %1102 = vmatpush1.msra.mxu0 %v1101
        %1103 = vmatprep.subr.mxu0 0.0
        %1104 = vmatpush1.msra.mxu0 0.0
        %1105 = vmatprep.subr.mxu0 0.0
        %1106 = vmatpush1.msra.mxu0 0.0
        %1107 = vmatprep.subr.mxu0 0.0
        %1108 = vmatpush1.msra.mxu0 0.0
        %1109 = vmatprep.subr.mxu0 0.0
        %1110 = vmatpush1.msra.mxu0 0.0
        %1111 = vmatprep.subr.mxu0 0.0
        %1112 = vmatpush1.msra.mxu0 0.0
        %1113 = vmatprep.subr.mxu0 0.0
        %1114 = vmatpush1.msra.mxu0 0.0
        %1115 = vmatprep.subr.mxu0 0.0
        %1116 = vmatpush1.msra.mxu0 0.0
        %1117 = vmatprep.subr.mxu0 0.0
        %1118 = vmatpush1.msra.mxu0 0.0
        %1119 = vmatprep.subr.mxu0 0.0
        %1120 = vmatpush1.msra.mxu0 0.0
        %1121 = vmatprep.subr.mxu0 0.0
        %1122 = vmatpush1.msra.mxu0 0.0
        %1123 = vmatprep.subr.mxu0 0.0
        %1124 = vmatpush1.msra.mxu0 0.0
        %1125 = vmatprep.subr.mxu0 0.0
        %1126 = vmatpush1.msra.mxu0 0.0
        %1127 = vmatprep.subr.mxu0 0.0
        %1128 = vmatpush1.msra.mxu0 0.0
        %1129 = vmatprep.subr.mxu0 0.0
        %1130 = vmatpush1.msra.mxu0 0.0
        %1131 = vmatprep.subr.mxu0 0.0
        %1132 = vmatpush1.msra.mxu0 0.0
        %1133 = vmatprep.subr.mxu0 0.0
        %1134 = vmatpush1.msra.mxu0 0.0
        %1135 = vmatprep.mubr.f32.mxu0 0.0
        %v1136 = vand.u32 %v520, 4294901760
        %v1137 = vsub.f32 %v520, %v1136
        %1138 = vmatmul.mubr.f32.gmra.mrb[0].mxu0 %v1137
        %v1139 = vpop.f32.mrb[0].mxu0
        %v1140 = vadd.f32 %v946, %v1139
        %v1141 = vpop.f32.mrb[0].mxu0
        %1142 = vmatprep.mubr.f32.mxu0 0.0
        %v1143 = vand.u32 %v521, 4294901760
        %v1144 = vsub.f32 %v521, %v1143
        %1145 = vmatmul.mubr.f32.gmra.mrb[0].mxu0 %v1144
        %v1146 = vpop.f32.mrb[0].mxu0
        %v1147 = vadd.f32 %v952, %v1146
        %v1148 = vpop.f32.mrb[0].mxu0
        %1149 = vmatprep.mubr.f32.mxu0 0.0
        %v1150 = vand.u32 %v522, 4294901760
        %v1151 = vsub.f32 %v522, %v1150
        %1152 = vmatmul.mubr.f32.gmra.mrb[0].mxu0 %v1151
        %v1153 = vpop.f32.mrb[0].mxu0
        %v1154 = vadd.f32 %v958, %v1153
        %v1155 = vpop.f32.mrb[0].mxu0
        %1156 = vmatprep.mubr.f32.mxu0 0.0
        %v1157 = vand.u32 %v523, 4294901760
        %v1158 = vsub.f32 %v523, %v1157
        %1159 = vmatmul.mubr.f32.gmra.mrb[0].mxu0 %v1158
        %v1160 = vpop.f32.mrb[0].mxu0
        %v1161 = vadd.f32 %v964, %v1160
        %v1162 = vpop.f32.mrb[0].mxu0
        %1163 = vmatprep.mubr.f32.mxu0 0.0
        %v1164 = vand.u32 %v524, 4294901760
        %v1165 = vsub.f32 %v524, %v1164
        %1166 = vmatmul.mubr.f32.gmra.mrb[0].mxu0 %v1165
        %v1167 = vpop.f32.mrb[0].mxu0
        %v1168 = vadd.f32 %v970, %v1167
        %v1169 = vpop.f32.mrb[0].mxu0
        %1170 = vmatprep.mubr.f32.mxu0 0.0
        %v1171 = vand.u32 %v525, 4294901760
        %v1172 = vsub.f32 %v525, %v1171
        %1173 = vmatmul.mubr.f32.gmra.mrb[0].mxu0 %v1172
        %v1174 = vpop.f32.mrb[0].mxu0
        %v1175 = vadd.f32 %v976, %v1174
        %v1176 = vpop.f32.mrb[0].mxu0
        %1177 = vmatprep.mubr.f32.mxu0 0.0
        %v1178 = vand.u32 %v526, 4294901760
        %v1179 = vsub.f32 %v526, %v1178
        %1180 = vmatmul.mubr.f32.gmra.mrb[0].mxu0 %v1179
        %v1181 = vpop.f32.mrb[0].mxu0
        %v1182 = vadd.f32 %v982, %v1181
        %v1183 = vpop.f32.mrb[0].mxu0
        %1184 = vmatprep.mubr.f32.mxu0 0.0
        %v1185 = vand.u32 %v527, 4294901760
        %v1186 = vsub.f32 %v527, %v1185
        %1187 = vmatmul.mubr.f32.gmra.mrb[0].mxu0 %v1186
        %v1188 = vpop.f32.mrb[0].mxu0
        %v1189 = vadd.f32 %v988, %v1188
        %v1190 = vpop.f32.mrb[0].mxu0
        %1191 = vmatprep.mubr.f32.mxu0 0.0
        %v1192 = vand.u32 %v528, 4294901760
        %v1193 = vsub.f32 %v528, %v1192
        %1194 = vmatmul.mubr.f32.gmra.mrb[0].mxu0 %v1193
        %v1195 = vpop.f32.mrb[0].mxu0
        %v1196 = vadd.f32 %v994, %v1195
        %v1197 = vpop.f32.mrb[0].mxu0
        %1198 = vmatprep.mubr.f32.mxu0 0.0
        %v1199 = vand.u32 %v529, 4294901760
        %v1200 = vsub.f32 %v529, %v1199
        %1201 = vmatmul.mubr.f32.gmra.mrb[0].mxu0 %v1200
        %v1202 = vpop.f32.mrb[0].mxu0
        %v1203 = vadd.f32 %v1000, %v1202
        %v1204 = vpop.f32.mrb[0].mxu0
        %1205 = vmatprep.mubr.f32.mxu0 0.0
        %v1206 = vand.u32 %v530, 4294901760
        %v1207 = vsub.f32 %v530, %v1206
        %1208 = vmatmul.mubr.f32.gmra.mrb[0].mxu0 %v1207
        %v1209 = vpop.f32.mrb[0].mxu0
        %v1210 = vadd.f32 %v1006, %v1209
        %v1211 = vpop.f32.mrb[0].mxu0
        %1212 = vmatprep.mubr.f32.mxu0 0.0
        %v1213 = vand.u32 %v531, 4294901760
        %v1214 = vsub.f32 %v531, %v1213
        %1215 = vmatmul.mubr.f32.gmra.mrb[0].mxu0 %v1214
        %v1216 = vpop.f32.mrb[0].mxu0
        %v1217 = vadd.f32 %v1012, %v1216
        %v1218 = vpop.f32.mrb[0].mxu0
        %1219 = vmatprep.mubr.f32.mxu0 0.0
        %v1220 = vand.u32 %v532, 4294901760
        %v1221 = vsub.f32 %v532, %v1220
        %1222 = vmatmul.mubr.f32.gmra.mrb[0].mxu0 %v1221
        %v1223 = vpop.f32.mrb[0].mxu0
        %v1224 = vadd.f32 %v1018, %v1223
        %v1225 = vpop.f32.mrb[0].mxu0
        %1226 = vmatprep.mubr.f32.mxu0 0.0
        %v1227 = vand.u32 %v533, 4294901760
        %v1228 = vsub.f32 %v533, %v1227
        %1229 = vmatmul.mubr.f32.gmra.mrb[0].mxu0 %v1228
        %v1230 = vpop.f32.mrb[0].mxu0
        %v1231 = vadd.f32 %v1024, %v1230
        %v1232 = vpop.f32.mrb[0].mxu0
        %1233 = vmatprep.mubr.f32.mxu0 0.0
        %v1234 = vand.u32 %v534, 4294901760
        %v1235 = vsub.f32 %v534, %v1234
        %1236 = vmatmul.mubr.f32.gmra.mrb[0].mxu0 %v1235
        %v1237 = vpop.f32.mrb[0].mxu0
        %v1238 = vadd.f32 %v1030, %v1237
        %v1239 = vpop.f32.mrb[0].mxu0
        %1240 = vmatprep.mubr.f32.mxu0 0.0
        %v1241 = vand.u32 %v535, 4294901760
        %v1242 = vsub.f32 %v535, %v1241
        %1243 = vmatmul.mubr.f32.gmra.mrb[0].mxu0 %v1242
        %v1244 = vpop.f32.mrb[0].mxu0
        %v1245 = vadd.f32 %v1036, %v1244
        %v1246 = vpop.f32.mrb[0].mxu0
        %1247 = vdwg.mxu0
        %1248 = vmatprep.subr.mxu0 0.0
        %v1249 = vand.u32 %v536, 4294901760
        %1250 = vmatpush1.msra.mxu0 %v1249
        %1251 = vmatprep.subr.mxu0 0.0
        %v1252 = vand.u32 %v537, 4294901760
        %1253 = vmatpush1.msra.mxu0 %v1252
        %1254 = vmatprep.subr.mxu0 0.0
        %v1255 = vand.u32 %v538, 4294901760
        %1256 = vmatpush1.msra.mxu0 %v1255
        %1257 = vmatprep.subr.mxu0 0.0
        %v1258 = vand.u32 %v539, 4294901760
        %1259 = vmatpush1.msra.mxu0 %v1258
        %1260 = vmatprep.subr.mxu0 0.0
        %v1261 = vand.u32 %v540, 4294901760
        %1262 = vmatpush1.msra.mxu0 %v1261
        %1263 = vmatprep.subr.mxu0 0.0
        %v1264 = vand.u32 %v541, 4294901760
        %1265 = vmatpush1.msra.mxu0 %v1264
        %1266 = vmatprep.subr.mxu0 0.0
        %v1267 = vand.u32 %v542, 4294901760
        %1268 = vmatpush1.msra.mxu0 %v1267
        %1269 = vmatprep.subr.mxu0 0.0
        %v1270 = vand.u32 %v543, 4294901760
        %1271 = vmatpush1.msra.mxu0 %v1270
        %1272 = vmatprep.subr.mxu0 0.0
        %v1273 = vand.u32 %v544, 4294901760
        %1274 = vmatpush1.msra.mxu0 %v1273
        %1275 = vmatprep.subr.mxu0 0.0
        %v1276 = vand.u32 %v545, 4294901760
        %1277 = vmatpush1.msra.mxu0 %v1276
        %1278 = vmatprep.subr.mxu0 0.0
        %v1279 = vand.u32 %v546, 4294901760
        %1280 = vmatpush1.msra.mxu0 %v1279
        %1281 = vmatprep.subr.mxu0 0.0
        %v1282 = vand.u32 %v547, 4294901760
        %1283 = vmatpush1.msra.mxu0 %v1282
        %1284 = vmatprep.subr.mxu0 0.0
        %v1285 = vand.u32 %v548, 4294901760
        %1286 = vmatpush1.msra.mxu0 %v1285
        %1287 = vmatprep.subr.mxu0 0.0
        %v1288 = vand.u32 %v549, 4294901760
        %1289 = vmatpush1.msra.mxu0 %v1288
        %1290 = vmatprep.subr.mxu0 0.0
        %v1291 = vand.u32 %v550, 4294901760
        %1292 = vmatpush1.msra.mxu0 %v1291
        %1293 = vmatprep.subr.mxu0 0.0
        %v1294 = vand.u32 %v551, 4294901760
        %1295 = vmatpush1.msra.mxu0 %v1294
        %1296 = vmatprep.subr.mxu0 0.0
        %1297 = vmatpush1.msra.mxu0 0.0
        %1298 = vmatprep.subr.mxu0 0.0
        %1299 = vmatpush1.msra.mxu0 0.0
        %1300 = vmatprep.subr.mxu0 0.0
        %1301 = vmatpush1.msra.mxu0 0.0
        %1302 = vmatprep.subr.mxu0 0.0
        %1303 = vmatpush1.msra.mxu0 0.0
        %1304 = vmatprep.subr.mxu0 0.0
        %1305 = vmatpush1.msra.mxu0 0.0
        %1306 = vmatprep.subr.mxu0 0.0
        %1307 = vmatpush1.msra.mxu0 0.0
        %1308 = vmatprep.subr.mxu0 0.0
        %1309 = vmatpush1.msra.mxu0 0.0
        %1310 = vmatprep.subr.mxu0 0.0
        %1311 = vmatpush1.msra.mxu0 0.0
        %1312 = vmatprep.subr.mxu0 0.0
        %1313 = vmatpush1.msra.mxu0 0.0
        %1314 = vmatprep.subr.mxu0 0.0
        %1315 = vmatpush1.msra.mxu0 0.0
        %1316 = vmatprep.subr.mxu0 0.0
        %1317 = vmatpush1.msra.mxu0 0.0
        %1318 = vmatprep.subr.mxu0 0.0
        %1319 = vmatpush1.msra.mxu0 0.0
        %1320 = vmatprep.subr.mxu0 0.0
        %1321 = vmatpush1.msra.mxu0 0.0
        %1322 = vmatprep.subr.mxu0 0.0
        %1323 = vmatpush1.msra.mxu0 0.0
        %1324 = vmatprep.subr.mxu0 0.0
        %1325 = vmatpush1.msra.mxu0 0.0
        %1326 = vmatprep.subr.mxu0 0.0
        %1327 = vmatpush1.msra.mxu0 0.0
        %1328 = vmatprep.mubr.f32.mxu0 0.0
        %v1329 = vand.u32 %v520, 4294901760
        %v1330 = vsub.f32 %v520, %v1329
        %v1331 = vand.u32 %v1330, 4294901760
        %1332 = vmatmul.mubr.f32.gmra.mrb[0].mxu0 %v1331
        %v1333 = vpop.f32.mrb[0].mxu0
        %v1334 = vadd.f32 %v1140, %v1333
        %v1335 = vpop.f32.mrb[0].mxu0
        %1336 = vmatprep.mubr.f32.mxu0 0.0
        %v1337 = vand.u32 %v521, 4294901760
        %v1338 = vsub.f32 %v521, %v1337
        %v1339 = vand.u32 %v1338, 4294901760
        %1340 = vmatmul.mubr.f32.gmra.mrb[0].mxu0 %v1339
        %v1341 = vpop.f32.mrb[0].mxu0
        %v1342 = vadd.f32 %v1147, %v1341
        %v1343 = vpop.f32.mrb[0].mxu0
        %1344 = vmatprep.mubr.f32.mxu0 0.0
        %v1345 = vand.u32 %v522, 4294901760
        %v1346 = vsub.f32 %v522, %v1345
        %v1347 = vand.u32 %v1346, 4294901760
        %1348 = vmatmul.mubr.f32.gmra.mrb[0].mxu0 %v1347
        %v1349 = vpop.f32.mrb[0].mxu0
        %v1350 = vadd.f32 %v1154, %v1349
        %v1351 = vpop.f32.mrb[0].mxu0
        %1352 = vmatprep.mubr.f32.mxu0 0.0
        %v1353 = vand.u32 %v523, 4294901760
        %v1354 = vsub.f32 %v523, %v1353
        %v1355 = vand.u32 %v1354, 4294901760
        %1356 = vmatmul.mubr.f32.gmra.mrb[0].mxu0 %v1355
        %v1357 = vpop.f32.mrb[0].mxu0
        %v1358 = vadd.f32 %v1161, %v1357
        %v1359 = vpop.f32.mrb[0].mxu0
        %1360 = vmatprep.mubr.f32.mxu0 0.0
        %v1361 = vand.u32 %v524, 4294901760
        %v1362 = vsub.f32 %v524, %v1361
        %v1363 = vand.u32 %v1362, 4294901760
        %1364 = vmatmul.mubr.f32.gmra.mrb[0].mxu0 %v1363
        %v1365 = vpop.f32.mrb[0].mxu0
        %v1366 = vadd.f32 %v1168, %v1365
        %v1367 = vpop.f32.mrb[0].mxu0
        %1368 = vmatprep.mubr.f32.mxu0 0.0
        %v1369 = vand.u32 %v525, 4294901760
        %v1370 = vsub.f32 %v525, %v1369
        %v1371 = vand.u32 %v1370, 4294901760
        %1372 = vmatmul.mubr.f32.gmra.mrb[0].mxu0 %v1371
        %v1373 = vpop.f32.mrb[0].mxu0
        %v1374 = vadd.f32 %v1175, %v1373
        %v1375 = vpop.f32.mrb[0].mxu0
        %1376 = vmatprep.mubr.f32.mxu0 0.0
        %v1377 = vand.u32 %v526, 4294901760
        %v1378 = vsub.f32 %v526, %v1377
        %v1379 = vand.u32 %v1378, 4294901760
        %1380 = vmatmul.mubr.f32.gmra.mrb[0].mxu0 %v1379
        %v1381 = vpop.f32.mrb[0].mxu0
        %v1382 = vadd.f32 %v1182, %v1381
        %v1383 = vpop.f32.mrb[0].mxu0
        %1384 = vmatprep.mubr.f32.mxu0 0.0
        %v1385 = vand.u32 %v527, 4294901760
        %v1386 = vsub.f32 %v527, %v1385
        %v1387 = vand.u32 %v1386, 4294901760
        %1388 = vmatmul.mubr.f32.gmra.mrb[0].mxu0 %v1387
        %v1389 = vpop.f32.mrb[0].mxu0
        %v1390 = vadd.f32 %v1189, %v1389
        %v1391 = vpop.f32.mrb[0].mxu0
        %1392 = vmatprep.mubr.f32.mxu0 0.0
        %v1393 = vand.u32 %v528, 4294901760
        %v1394 = vsub.f32 %v528, %v1393
        %v1395 = vand.u32 %v1394, 4294901760
        %1396 = vmatmul.mubr.f32.gmra.mrb[0].mxu0 %v1395
        %v1397 = vpop.f32.mrb[0].mxu0
        %v1398 = vadd.f32 %v1196, %v1397
        %v1399 = vpop.f32.mrb[0].mxu0
        %1400 = vmatprep.mubr.f32.mxu0 0.0
        %v1401 = vand.u32 %v529, 4294901760
        %v1402 = vsub.f32 %v529, %v1401
        %v1403 = vand.u32 %v1402, 4294901760
        %1404 = vmatmul.mubr.f32.gmra.mrb[0].mxu0 %v1403
        %v1405 = vpop.f32.mrb[0].mxu0
        %v1406 = vadd.f32 %v1203, %v1405
        %v1407 = vpop.f32.mrb[0].mxu0
        %1408 = vmatprep.mubr.f32.mxu0 0.0
        %v1409 = vand.u32 %v530, 4294901760
        %v1410 = vsub.f32 %v530, %v1409
        %v1411 = vand.u32 %v1410, 4294901760
        %1412 = vmatmul.mubr.f32.gmra.mrb[0].mxu0 %v1411
        %v1413 = vpop.f32.mrb[0].mxu0
        %v1414 = vadd.f32 %v1210, %v1413
        %v1415 = vpop.f32.mrb[0].mxu0
        %1416 = vmatprep.mubr.f32.mxu0 0.0
        %v1417 = vand.u32 %v531, 4294901760
        %v1418 = vsub.f32 %v531, %v1417
        %v1419 = vand.u32 %v1418, 4294901760
        %1420 = vmatmul.mubr.f32.gmra.mrb[0].mxu0 %v1419
        %v1421 = vpop.f32.mrb[0].mxu0
        %v1422 = vadd.f32 %v1217, %v1421
        %v1423 = vpop.f32.mrb[0].mxu0
        %1424 = vmatprep.mubr.f32.mxu0 0.0
        %v1425 = vand.u32 %v532, 4294901760
        %v1426 = vsub.f32 %v532, %v1425
        %v1427 = vand.u32 %v1426, 4294901760
        %1428 = vmatmul.mubr.f32.gmra.mrb[0].mxu0 %v1427
        %v1429 = vpop.f32.mrb[0].mxu0
        %v1430 = vadd.f32 %v1224, %v1429
        %v1431 = vpop.f32.mrb[0].mxu0
        %1432 = vmatprep.mubr.f32.mxu0 0.0
        %v1433 = vand.u32 %v533, 4294901760
        %v1434 = vsub.f32 %v533, %v1433
        %v1435 = vand.u32 %v1434, 4294901760
        %1436 = vmatmul.mubr.f32.gmra.mrb[0].mxu0 %v1435
        %v1437 = vpop.f32.mrb[0].mxu0
        %v1438 = vadd.f32 %v1231, %v1437
        %v1439 = vpop.f32.mrb[0].mxu0
        %1440 = vmatprep.mubr.f32.mxu0 0.0
        %v1441 = vand.u32 %v534, 4294901760
        %v1442 = vsub.f32 %v534, %v1441
        %v1443 = vand.u32 %v1442, 4294901760
        %1444 = vmatmul.mubr.f32.gmra.mrb[0].mxu0 %v1443
        %v1445 = vpop.f32.mrb[0].mxu0
        %v1446 = vadd.f32 %v1238, %v1445
        %v1447 = vpop.f32.mrb[0].mxu0
        %1448 = vmatprep.mubr.f32.mxu0 0.0
        %v1449 = vand.u32 %v535, 4294901760
        %v1450 = vsub.f32 %v535, %v1449
        %v1451 = vand.u32 %v1450, 4294901760
        %1452 = vmatmul.mubr.f32.gmra.mrb[0].mxu0 %v1451
        %v1453 = vpop.f32.mrb[0].mxu0
        %v1454 = vadd.f32 %v1245, %v1453
        %v1455 = vpop.f32.mrb[0].mxu0
        %1456 = vdwg.mxu0
        %1457 = vmatprep.subr.mxu0 0.0
        %v1458 = vand.u32 %v536, 4294901760
        %v1459 = vsub.f32 %v536, %v1458
        %v1460 = vand.u32 %v1459, 4294901760
        %1461 = vmatpush1.msra.mxu0 %v1460
        %1462 = vmatprep.subr.mxu0 0.0
        %v1463 = vand.u32 %v537, 4294901760
        %v1464 = vsub.f32 %v537, %v1463
        %v1465 = vand.u32 %v1464, 4294901760
        %1466 = vmatpush1.msra.mxu0 %v1465
        %1467 = vmatprep.subr.mxu0 0.0
        %v1468 = vand.u32 %v538, 4294901760
        %v1469 = vsub.f32 %v538, %v1468
        %v1470 = vand.u32 %v1469, 4294901760
        %1471 = vmatpush1.msra.mxu0 %v1470
        %1472 = vmatprep.subr.mxu0 0.0
        %v1473 = vand.u32 %v539, 4294901760
        %v1474 = vsub.f32 %v539, %v1473
        %v1475 = vand.u32 %v1474, 4294901760
        %1476 = vmatpush1.msra.mxu0 %v1475
        %1477 = vmatprep.subr.mxu0 0.0
        %v1478 = vand.u32 %v540, 4294901760
        %v1479 = vsub.f32 %v540, %v1478
        %v1480 = vand.u32 %v1479, 4294901760
        %1481 = vmatpush1.msra.mxu0 %v1480
        %1482 = vmatprep.subr.mxu0 0.0
        %v1483 = vand.u32 %v541, 4294901760
        %v1484 = vsub.f32 %v541, %v1483
        %v1485 = vand.u32 %v1484, 4294901760
        %1486 = vmatpush1.msra.mxu0 %v1485
        %1487 = vmatprep.subr.mxu0 0.0
        %v1488 = vand.u32 %v542, 4294901760
        %v1489 = vsub.f32 %v542, %v1488
        %v1490 = vand.u32 %v1489, 4294901760
        %1491 = vmatpush1.msra.mxu0 %v1490
        %1492 = vmatprep.subr.mxu0 0.0
        %v1493 = vand.u32 %v543, 4294901760
        %v1494 = vsub.f32 %v543, %v1493
        %v1495 = vand.u32 %v1494, 4294901760
        %1496 = vmatpush1.msra.mxu0 %v1495
        %1497 = vmatprep.subr.mxu0 0.0
        %v1498 = vand.u32 %v544, 4294901760
        %v1499 = vsub.f32 %v544, %v1498
        %v1500 = vand.u32 %v1499, 4294901760
        %1501 = vmatpush1.msra.mxu0 %v1500
        %1502 = vmatprep.subr.mxu0 0.0
        %v1503 = vand.u32 %v545, 4294901760
        %v1504 = vsub.f32 %v545, %v1503
        %v1505 = vand.u32 %v1504, 4294901760
        %1506 = vmatpush1.msra.mxu0 %v1505
        %1507 = vmatprep.subr.mxu0 0.0
        %v1508 = vand.u32 %v546, 4294901760
        %v1509 = vsub.f32 %v546, %v1508
        %v1510 = vand.u32 %v1509, 4294901760
        %1511 = vmatpush1.msra.mxu0 %v1510
        %1512 = vmatprep.subr.mxu0 0.0
        %v1513 = vand.u32 %v547, 4294901760
        %v1514 = vsub.f32 %v547, %v1513
        %v1515 = vand.u32 %v1514, 4294901760
        %1516 = vmatpush1.msra.mxu0 %v1515
        %1517 = vmatprep.subr.mxu0 0.0
        %v1518 = vand.u32 %v548, 4294901760
        %v1519 = vsub.f32 %v548, %v1518
        %v1520 = vand.u32 %v1519, 4294901760
        %1521 = vmatpush1.msra.mxu0 %v1520
        %1522 = vmatprep.subr.mxu0 0.0
        %v1523 = vand.u32 %v549, 4294901760
        %v1524 = vsub.f32 %v549, %v1523
        %v1525 = vand.u32 %v1524, 4294901760
        %1526 = vmatpush1.msra.mxu0 %v1525
        %1527 = vmatprep.subr.mxu0 0.0
        %v1528 = vand.u32 %v550, 4294901760
        %v1529 = vsub.f32 %v550, %v1528
        %v1530 = vand.u32 %v1529, 4294901760
        %1531 = vmatpush1.msra.mxu0 %v1530
        %1532 = vmatprep.subr.mxu0 0.0
        %v1533 = vand.u32 %v551, 4294901760
        %v1534 = vsub.f32 %v551, %v1533
        %v1535 = vand.u32 %v1534, 4294901760
        %1536 = vmatpush1.msra.mxu0 %v1535
        %1537 = vmatprep.subr.mxu0 0.0
        %1538 = vmatpush1.msra.mxu0 0.0
        %1539 = vmatprep.subr.mxu0 0.0
        %1540 = vmatpush1.msra.mxu0 0.0
        %1541 = vmatprep.subr.mxu0 0.0
        %1542 = vmatpush1.msra.mxu0 0.0
        %1543 = vmatprep.subr.mxu0 0.0
        %1544 = vmatpush1.msra.mxu0 0.0
        %1545 = vmatprep.subr.mxu0 0.0
        %1546 = vmatpush1.msra.mxu0 0.0
        %1547 = vmatprep.subr.mxu0 0.0
        %1548 = vmatpush1.msra.mxu0 0.0
        %1549 = vmatprep.subr.mxu0 0.0
        %1550 = vmatpush1.msra.mxu0 0.0
        %1551 = vmatprep.subr.mxu0 0.0
        %1552 = vmatpush1.msra.mxu0 0.0
        %1553 = vmatprep.subr.mxu0 0.0
        %1554 = vmatpush1.msra.mxu0 0.0
        %1555 = vmatprep.subr.mxu0 0.0
        %1556 = vmatpush1.msra.mxu0 0.0
        %1557 = vmatprep.subr.mxu0 0.0
        %1558 = vmatpush1.msra.mxu0 0.0
        %1559 = vmatprep.subr.mxu0 0.0
        %1560 = vmatpush1.msra.mxu0 0.0
        %1561 = vmatprep.subr.mxu0 0.0
        %1562 = vmatpush1.msra.mxu0 0.0
        %1563 = vmatprep.subr.mxu0 0.0
        %1564 = vmatpush1.msra.mxu0 0.0
        %1565 = vmatprep.subr.mxu0 0.0
        %1566 = vmatpush1.msra.mxu0 0.0
        %1567 = vmatprep.subr.mxu0 0.0
        %1568 = vmatpush1.msra.mxu0 0.0
        %1569 = vmatprep.mubr.f32.mxu0 0.0
        %v1570 = vand.u32 %v520, 4294901760
        %1571 = vmatmul.mubr.f32.gmra.mrb[0].mxu0 %v1570
        %v1572 = vpop.f32.mrb[0].mxu0
        %v1573 = vadd.f32 %v1334, %v1572
        %v1574 = vpop.f32.mrb[0].mxu0
        %1575 = vmatprep.mubr.f32.mxu0 0.0
        %v1576 = vand.u32 %v521, 4294901760
        %1577 = vmatmul.mubr.f32.gmra.mrb[0].mxu0 %v1576
        %v1578 = vpop.f32.mrb[0].mxu0
        %v1579 = vadd.f32 %v1342, %v1578
        %v1580 = vpop.f32.mrb[0].mxu0
        %1581 = vmatprep.mubr.f32.mxu0 0.0
        %v1582 = vand.u32 %v522, 4294901760
        %1583 = vmatmul.mubr.f32.gmra.mrb[0].mxu0 %v1582
        %v1584 = vpop.f32.mrb[0].mxu0
        %v1585 = vadd.f32 %v1350, %v1584
        %v1586 = vpop.f32.mrb[0].mxu0
        %1587 = vmatprep.mubr.f32.mxu0 0.0
        %v1588 = vand.u32 %v523, 4294901760
        %1589 = vmatmul.mubr.f32.gmra.mrb[0].mxu0 %v1588
        %v1590 = vpop.f32.mrb[0].mxu0
        %v1591 = vadd.f32 %v1358, %v1590
        %v1592 = vpop.f32.mrb[0].mxu0
        %1593 = vmatprep.mubr.f32.mxu0 0.0
        %v1594 = vand.u32 %v524, 4294901760
        %1595 = vmatmul.mubr.f32.gmra.mrb[0].mxu0 %v1594
        %v1596 = vpop.f32.mrb[0].mxu0
        %v1597 = vadd.f32 %v1366, %v1596
        %v1598 = vpop.f32.mrb[0].mxu0
        %1599 = vmatprep.mubr.f32.mxu0 0.0
        %v1600 = vand.u32 %v525, 4294901760
        %1601 = vmatmul.mubr.f32.gmra.mrb[0].mxu0 %v1600
        %v1602 = vpop.f32.mrb[0].mxu0
        %v1603 = vadd.f32 %v1374, %v1602
        %v1604 = vpop.f32.mrb[0].mxu0
        %1605 = vmatprep.mubr.f32.mxu0 0.0
        %v1606 = vand.u32 %v526, 4294901760
        %1607 = vmatmul.mubr.f32.gmra.mrb[0].mxu0 %v1606
        %v1608 = vpop.f32.mrb[0].mxu0
        %v1609 = vadd.f32 %v1382, %v1608
        %v1610 = vpop.f32.mrb[0].mxu0
        %1611 = vmatprep.mubr.f32.mxu0 0.0
        %v1612 = vand.u32 %v527, 4294901760
        %1613 = vmatmul.mubr.f32.gmra.mrb[0].mxu0 %v1612
        %v1614 = vpop.f32.mrb[0].mxu0
        %v1615 = vadd.f32 %v1390, %v1614
        %v1616 = vpop.f32.mrb[0].mxu0
        %1617 = vmatprep.mubr.f32.mxu0 0.0
        %v1618 = vand.u32 %v528, 4294901760
        %1619 = vmatmul.mubr.f32.gmra.mrb[0].mxu0 %v1618
        %v1620 = vpop.f32.mrb[0].mxu0
        %v1621 = vadd.f32 %v1398, %v1620
        %v1622 = vpop.f32.mrb[0].mxu0
        %1623 = vmatprep.mubr.f32.mxu0 0.0
        %v1624 = vand.u32 %v529, 4294901760
        %1625 = vmatmul.mubr.f32.gmra.mrb[0].mxu0 %v1624
        %v1626 = vpop.f32.mrb[0].mxu0
        %v1627 = vadd.f32 %v1406, %v1626
        %v1628 = vpop.f32.mrb[0].mxu0
        %1629 = vmatprep.mubr.f32.mxu0 0.0
        %v1630 = vand.u32 %v530, 4294901760
        %1631 = vmatmul.mubr.f32.gmra.mrb[0].mxu0 %v1630
        %v1632 = vpop.f32.mrb[0].mxu0
        %v1633 = vadd.f32 %v1414, %v1632
        %v1634 = vpop.f32.mrb[0].mxu0
        %1635 = vmatprep.mubr.f32.mxu0 0.0
        %v1636 = vand.u32 %v531, 4294901760
        %1637 = vmatmul.mubr.f32.gmra.mrb[0].mxu0 %v1636
        %v1638 = vpop.f32.mrb[0].mxu0
        %v1639 = vadd.f32 %v1422, %v1638
        %v1640 = vpop.f32.mrb[0].mxu0
        %1641 = vmatprep.mubr.f32.mxu0 0.0
        %v1642 = vand.u32 %v532, 4294901760
        %1643 = vmatmul.mubr.f32.gmra.mrb[0].mxu0 %v1642
        %v1644 = vpop.f32.mrb[0].mxu0
        %v1645 = vadd.f32 %v1430, %v1644
        %v1646 = vpop.f32.mrb[0].mxu0
        %1647 = vmatprep.mubr.f32.mxu0 0.0
        %v1648 = vand.u32 %v533, 4294901760
        %1649 = vmatmul.mubr.f32.gmra.mrb[0].mxu0 %v1648
        %v1650 = vpop.f32.mrb[0].mxu0
        %v1651 = vadd.f32 %v1438, %v1650
        %v1652 = vpop.f32.mrb[0].mxu0
        %1653 = vmatprep.mubr.f32.mxu0 0.0
        %v1654 = vand.u32 %v534, 4294901760
        %1655 = vmatmul.mubr.f32.gmra.mrb[0].mxu0 %v1654
        %v1656 = vpop.f32.mrb[0].mxu0
        %v1657 = vadd.f32 %v1446, %v1656
        %v1658 = vpop.f32.mrb[0].mxu0
        %1659 = vmatprep.mubr.f32.mxu0 0.0
        %v1660 = vand.u32 %v535, 4294901760
        %1661 = vmatmul.mubr.f32.gmra.mrb[0].mxu0 %v1660
        %v1662 = vpop.f32.mrb[0].mxu0
        %v1663 = vadd.f32 %v1454, %v1662
        %v1664 = vpop.f32.mrb[0].mxu0
        %1665 = vdwg.mxu0
        %1666 = vmatprep.subr.mxu0 0.0
        %v1667 = vand.u32 %v536, 4294901760
        %1668 = vmatpush1.msra.mxu0 %v1667
        %1669 = vmatprep.subr.mxu0 0.0
        %v1670 = vand.u32 %v537, 4294901760
        %1671 = vmatpush1.msra.mxu0 %v1670
        %1672 = vmatprep.subr.mxu0 0.0
        %v1673 = vand.u32 %v538, 4294901760
        %1674 = vmatpush1.msra.mxu0 %v1673
        %1675 = vmatprep.subr.mxu0 0.0
        %v1676 = vand.u32 %v539, 4294901760
        %1677 = vmatpush1.msra.mxu0 %v1676
        %1678 = vmatprep.subr.mxu0 0.0
        %v1679 = vand.u32 %v540, 4294901760
        %1680 = vmatpush1.msra.mxu0 %v1679
        %1681 = vmatprep.subr.mxu0 0.0
        %v1682 = vand.u32 %v541, 4294901760
        %1683 = vmatpush1.msra.mxu0 %v1682
        %1684 = vmatprep.subr.mxu0 0.0
        %v1685 = vand.u32 %v542, 4294901760
        %1686 = vmatpush1.msra.mxu0 %v1685
        %1687 = vmatprep.subr.mxu0 0.0
        %v1688 = vand.u32 %v543, 4294901760
        %1689 = vmatpush1.msra.mxu0 %v1688
        %1690 = vmatprep.subr.mxu0 0.0
        %v1691 = vand.u32 %v544, 4294901760
        %1692 = vmatpush1.msra.mxu0 %v1691
        %1693 = vmatprep.subr.mxu0 0.0
        %v1694 = vand.u32 %v545, 4294901760
        %1695 = vmatpush1.msra.mxu0 %v1694
        %1696 = vmatprep.subr.mxu0 0.0
        %v1697 = vand.u32 %v546, 4294901760
        %1698 = vmatpush1.msra.mxu0 %v1697
        %1699 = vmatprep.subr.mxu0 0.0
        %v1700 = vand.u32 %v547, 4294901760
        %1701 = vmatpush1.msra.mxu0 %v1700
        %1702 = vmatprep.subr.mxu0 0.0
        %v1703 = vand.u32 %v548, 4294901760
        %1704 = vmatpush1.msra.mxu0 %v1703
        %1705 = vmatprep.subr.mxu0 0.0
        %v1706 = vand.u32 %v549, 4294901760
        %1707 = vmatpush1.msra.mxu0 %v1706
        %1708 = vmatprep.subr.mxu0 0.0
        %v1709 = vand.u32 %v550, 4294901760
        %1710 = vmatpush1.msra.mxu0 %v1709
        %1711 = vmatprep.subr.mxu0 0.0
        %v1712 = vand.u32 %v551, 4294901760
        %1713 = vmatpush1.msra.mxu0 %v1712
        %1714 = vmatprep.subr.mxu0 0.0
        %1715 = vmatpush1.msra.mxu0 0.0
        %1716 = vmatprep.subr.mxu0 0.0
        %1717 = vmatpush1.msra.mxu0 0.0
        %1718 = vmatprep.subr.mxu0 0.0
        %1719 = vmatpush1.msra.mxu0 0.0
        %1720 = vmatprep.subr.mxu0 0.0
        %1721 = vmatpush1.msra.mxu0 0.0
        %1722 = vmatprep.subr.mxu0 0.0
        %1723 = vmatpush1.msra.mxu0 0.0
        %1724 = vmatprep.subr.mxu0 0.0
        %1725 = vmatpush1.msra.mxu0 0.0
        %1726 = vmatprep.subr.mxu0 0.0
        %1727 = vmatpush1.msra.mxu0 0.0
        %1728 = vmatprep.subr.mxu0 0.0
        %1729 = vmatpush1.msra.mxu0 0.0
        %1730 = vmatprep.subr.mxu0 0.0
        %1731 = vmatpush1.msra.mxu0 0.0
        %1732 = vmatprep.subr.mxu0 0.0
        %1733 = vmatpush1.msra.mxu0 0.0
        %1734 = vmatprep.subr.mxu0 0.0
        %1735 = vmatpush1.msra.mxu0 0.0
        %1736 = vmatprep.subr.mxu0 0.0
        %1737 = vmatpush1.msra.mxu0 0.0
        %1738 = vmatprep.subr.mxu0 0.0
        %1739 = vmatpush1.msra.mxu0 0.0
        %1740 = vmatprep.subr.mxu0 0.0
        %1741 = vmatpush1.msra.mxu0 0.0
        %1742 = vmatprep.subr.mxu0 0.0
        %1743 = vmatpush1.msra.mxu0 0.0
        %1744 = vmatprep.subr.mxu0 0.0
        %1745 = vmatpush1.msra.mxu0 0.0
        %1746 = vmatprep.mubr.f32.mxu0 0.0
        %v1747 = vand.u32 %v520, 4294901760
        %1748 = vmatmul.mubr.f32.gmra.mrb[0].mxu0 %v1747
        %v1749 = vpop.f32.mrb[0].mxu0
        %v1750 = vadd.f32 %v1573, %v1749
        %v1751 = vpop.f32.mrb[0].mxu0
        %1752 = vmatprep.mubr.f32.mxu0 0.0
        %v1753 = vand.u32 %v521, 4294901760
        %1754 = vmatmul.mubr.f32.gmra.mrb[0].mxu0 %v1753
        %v1755 = vpop.f32.mrb[0].mxu0
        %v1756 = vadd.f32 %v1579, %v1755
        %v1757 = vpop.f32.mrb[0].mxu0
        %1758 = vmatprep.mubr.f32.mxu0 0.0
        %v1759 = vand.u32 %v522, 4294901760
        %1760 = vmatmul.mubr.f32.gmra.mrb[0].mxu0 %v1759
        %v1761 = vpop.f32.mrb[0].mxu0
        %v1762 = vadd.f32 %v1585, %v1761
        %v1763 = vpop.f32.mrb[0].mxu0
        %1764 = vmatprep.mubr.f32.mxu0 0.0
        %v1765 = vand.u32 %v523, 4294901760
        %1766 = vmatmul.mubr.f32.gmra.mrb[0].mxu0 %v1765
        %v1767 = vpop.f32.mrb[0].mxu0
        %v1768 = vadd.f32 %v1591, %v1767
        %v1769 = vpop.f32.mrb[0].mxu0
        %1770 = vmatprep.mubr.f32.mxu0 0.0
        %v1771 = vand.u32 %v524, 4294901760
        %1772 = vmatmul.mubr.f32.gmra.mrb[0].mxu0 %v1771
        %v1773 = vpop.f32.mrb[0].mxu0
        %v1774 = vadd.f32 %v1597, %v1773
        %v1775 = vpop.f32.mrb[0].mxu0
        %1776 = vmatprep.mubr.f32.mxu0 0.0
        %v1777 = vand.u32 %v525, 4294901760
        %1778 = vmatmul.mubr.f32.gmra.mrb[0].mxu0 %v1777
        %v1779 = vpop.f32.mrb[0].mxu0
        %v1780 = vadd.f32 %v1603, %v1779
        %v1781 = vpop.f32.mrb[0].mxu0
        %1782 = vmatprep.mubr.f32.mxu0 0.0
        %v1783 = vand.u32 %v526, 4294901760
        %1784 = vmatmul.mubr.f32.gmra.mrb[0].mxu0 %v1783
        %v1785 = vpop.f32.mrb[0].mxu0
        %v1786 = vadd.f32 %v1609, %v1785
        %v1787 = vpop.f32.mrb[0].mxu0
        %1788 = vmatprep.mubr.f32.mxu0 0.0
        %v1789 = vand.u32 %v527, 4294901760
        %1790 = vmatmul.mubr.f32.gmra.mrb[0].mxu0 %v1789
        %v1791 = vpop.f32.mrb[0].mxu0
        %v1792 = vadd.f32 %v1615, %v1791
        %v1793 = vpop.f32.mrb[0].mxu0
        %1794 = vmatprep.mubr.f32.mxu0 0.0
        %v1795 = vand.u32 %v528, 4294901760
        %1796 = vmatmul.mubr.f32.gmra.mrb[0].mxu0 %v1795
        %v1797 = vpop.f32.mrb[0].mxu0
        %v1798 = vadd.f32 %v1621, %v1797
        %v1799 = vpop.f32.mrb[0].mxu0
        %1800 = vmatprep.mubr.f32.mxu0 0.0
        %v1801 = vand.u32 %v529, 4294901760
        %1802 = vmatmul.mubr.f32.gmra.mrb[0].mxu0 %v1801
        %v1803 = vpop.f32.mrb[0].mxu0
        %v1804 = vadd.f32 %v1627, %v1803
        %v1805 = vpop.f32.mrb[0].mxu0
        %1806 = vmatprep.mubr.f32.mxu0 0.0
        %v1807 = vand.u32 %v530, 4294901760
        %1808 = vmatmul.mubr.f32.gmra.mrb[0].mxu0 %v1807
        %v1809 = vpop.f32.mrb[0].mxu0
        %v1810 = vadd.f32 %v1633, %v1809
        %v1811 = vpop.f32.mrb[0].mxu0
        %1812 = vmatprep.mubr.f32.mxu0 0.0
        %v1813 = vand.u32 %v531, 4294901760
        %1814 = vmatmul.mubr.f32.gmra.mrb[0].mxu0 %v1813
        %v1815 = vpop.f32.mrb[0].mxu0
        %v1816 = vadd.f32 %v1639, %v1815
        %v1817 = vpop.f32.mrb[0].mxu0
        %1818 = vmatprep.mubr.f32.mxu0 0.0
        %v1819 = vand.u32 %v532, 4294901760
        %1820 = vmatmul.mubr.f32.gmra.mrb[0].mxu0 %v1819
        %v1821 = vpop.f32.mrb[0].mxu0
        %v1822 = vadd.f32 %v1645, %v1821
        %v1823 = vpop.f32.mrb[0].mxu0
        %1824 = vmatprep.mubr.f32.mxu0 0.0
        %v1825 = vand.u32 %v533, 4294901760
        %1826 = vmatmul.mubr.f32.gmra.mrb[0].mxu0 %v1825
        %v1827 = vpop.f32.mrb[0].mxu0
        %v1828 = vadd.f32 %v1651, %v1827
        %v1829 = vpop.f32.mrb[0].mxu0
        %1830 = vmatprep.mubr.f32.mxu0 0.0
        %v1831 = vand.u32 %v534, 4294901760
        %1832 = vmatmul.mubr.f32.gmra.mrb[0].mxu0 %v1831
        %v1833 = vpop.f32.mrb[0].mxu0
        %v1834 = vadd.f32 %v1657, %v1833
        %v1835 = vpop.f32.mrb[0].mxu0
        %1836 = vmatprep.mubr.f32.mxu0 0.0
        %v1837 = vand.u32 %v535, 4294901760
        %1838 = vmatmul.mubr.f32.gmra.mrb[0].mxu0 %v1837
        %v1839 = vpop.f32.mrb[0].mxu0
        %v1840 = vadd.f32 %v1663, %v1839
        %v1841 = vpop.f32.mrb[0].mxu0
        %1842 = vdwg.mxu0
        %v1843 = vtanh.pop %v1750
        %v1844 = vtanh.pop %v1756
        %v1845 = vtanh.pop %v1762
        %v1846 = vtanh.pop %v1768
        %v1847 = vtanh.pop %v1774
        %v1848 = vtanh.pop %v1780
        %v1849 = vtanh.pop %v1786
        %v1850 = vtanh.pop %v1792
        %v1851 = vtanh.pop %v1798
        %v1852 = vtanh.pop %v1804
        %v1853 = vtanh.pop %v1810
        %v1854 = vtanh.pop %v1816
        %v1855 = vtanh.pop %v1822
        %v1856 = vtanh.pop %v1828
        %v1857 = vtanh.pop %v1834
        %v1858 = vtanh.pop %v1840
        %s1859 = scalar_lea.vmem %s3, 128
        %v1860 = vld [vmem:[%s1859] sm:$0xff]
        %v1861 = vld [vmem:[%s1859 + $0x8] sm:$0xff]
        %v1862 = vld [vmem:[%s1859 + $0x10] sm:$0xff]
        %v1863 = vld [vmem:[%s1859 + $0x18] sm:$0xff]
        %v1864 = vld [vmem:[%s1859 + $0x20] sm:$0xff]
        %v1865 = vld [vmem:[%s1859 + $0x28] sm:$0xff]
        %v1866 = vld [vmem:[%s1859 + $0x30] sm:$0xff]
        %v1867 = vld [vmem:[%s1859 + $0x38] sm:$0xff]
        %v1868 = vld [vmem:[%s1859 + $0x40] sm:$0xff]
        %v1869 = vld [vmem:[%s1859 + $0x48] sm:$0xff]
        %v1870 = vld [vmem:[%s1859 + $0x50] sm:$0xff]
        %v1871 = vld [vmem:[%s1859 + $0x58] sm:$0xff]
        %v1872 = vld [vmem:[%s1859 + $0x60] sm:$0xff]
        %v1873 = vld [vmem:[%s1859 + $0x68] sm:$0xff]
        %v1874 = vld [vmem:[%s1859 + $0x70] sm:$0xff]
        %v1875 = vld [vmem:[%s1859 + $0x78] sm:$0xff]
        %v1876 = vld [vmem:[%s4 + $0x1] sm:$0x1]
        %v1877 = vlaneseq
        %v1878 = vshrl.u32 %v1877, 7
        %v1879 = vsub.s32 0, %v1878
        %v1880 = vrot.slane %v1876, %v1879
        %1881 = vmatprep.subr.mxu0 0.0
        %v1882 = vand.u32 %v1860, 4294901760
        %1883 = vmatpush1.msra.mxu0 %v1882
        %1884 = vmatprep.subr.mxu0 0.0
        %v1885 = vand.u32 %v1861, 4294901760
        %1886 = vmatpush1.msra.mxu0 %v1885
        %1887 = vmatprep.subr.mxu0 0.0
        %v1888 = vand.u32 %v1862, 4294901760
        %1889 = vmatpush1.msra.mxu0 %v1888
        %1890 = vmatprep.subr.mxu0 0.0
        %v1891 = vand.u32 %v1863, 4294901760
        %1892 = vmatpush1.msra.mxu0 %v1891
        %1893 = vmatprep.subr.mxu0 0.0
        %v1894 = vand.u32 %v1864, 4294901760
        %1895 = vmatpush1.msra.mxu0 %v1894
        %1896 = vmatprep.subr.mxu0 0.0
        %v1897 = vand.u32 %v1865, 4294901760
        %1898 = vmatpush1.msra.mxu0 %v1897
        %1899 = vmatprep.subr.mxu0 0.0
        %v1900 = vand.u32 %v1866, 4294901760
        %1901 = vmatpush1.msra.mxu0 %v1900
        %1902 = vmatprep.subr.mxu0 0.0
        %v1903 = vand.u32 %v1867, 4294901760
        %1904 = vmatpush1.msra.mxu0 %v1903
        %1905 = vmatprep.subr.mxu0 0.0
        %v1906 = vand.u32 %v1868, 4294901760
        %1907 = vmatpush1.msra.mxu0 %v1906
        %1908 = vmatprep.subr.mxu0 0.0
        %v1909 = vand.u32 %v1869, 4294901760
        %1910 = vmatpush1.msra.mxu0 %v1909
        %1911 = vmatprep.subr.mxu0 0.0
        %v1912 = vand.u32 %v1870, 4294901760
        %1913 = vmatpush1.msra.mxu0 %v1912
        %1914 = vmatprep.subr.mxu0 0.0
        %v1915 = vand.u32 %v1871, 4294901760
        %1916 = vmatpush1.msra.mxu0 %v1915
        %1917 = vmatprep.subr.mxu0 0.0
        %v1918 = vand.u32 %v1872, 4294901760
        %1919 = vmatpush1.msra.mxu0 %v1918
        %1920 = vmatprep.subr.mxu0 0.0
        %v1921 = vand.u32 %v1873, 4294901760
        %1922 = vmatpush1.msra.mxu0 %v1921
        %1923 = vmatprep.subr.mxu0 0.0
        %v1924 = vand.u32 %v1874, 4294901760
        %1925 = vmatpush1.msra.mxu0 %v1924
        %1926 = vmatprep.subr.mxu0 0.0
        %v1927 = vand.u32 %v1875, 4294901760
        %1928 = vmatpush1.msra.mxu0 %v1927
        %1929 = vmatprep.subr.mxu0 0.0
        %1930 = vmatpush1.msra.mxu0 0.0
        %1931 = vmatprep.subr.mxu0 0.0
        %1932 = vmatpush1.msra.mxu0 0.0
        %1933 = vmatprep.subr.mxu0 0.0
        %1934 = vmatpush1.msra.mxu0 0.0
        %1935 = vmatprep.subr.mxu0 0.0
        %1936 = vmatpush1.msra.mxu0 0.0
        %1937 = vmatprep.subr.mxu0 0.0
        %1938 = vmatpush1.msra.mxu0 0.0
        %1939 = vmatprep.subr.mxu0 0.0
        %1940 = vmatpush1.msra.mxu0 0.0
        %1941 = vmatprep.subr.mxu0 0.0
        %1942 = vmatpush1.msra.mxu0 0.0
        %1943 = vmatprep.subr.mxu0 0.0
        %1944 = vmatpush1.msra.mxu0 0.0
        %1945 = vmatprep.subr.mxu0 0.0
        %1946 = vmatpush1.msra.mxu0 0.0
        %1947 = vmatprep.subr.mxu0 0.0
        %1948 = vmatpush1.msra.mxu0 0.0
        %1949 = vmatprep.subr.mxu0 0.0
        %1950 = vmatpush1.msra.mxu0 0.0
        %1951 = vmatprep.subr.mxu0 0.0
        %1952 = vmatpush1.msra.mxu0 0.0
        %1953 = vmatprep.subr.mxu0 0.0
        %1954 = vmatpush1.msra.mxu0 0.0
        %1955 = vmatprep.subr.mxu0 0.0
        %1956 = vmatpush1.msra.mxu0 0.0
        %1957 = vmatprep.subr.mxu0 0.0
        %1958 = vmatpush1.msra.mxu0 0.0
        %1959 = vmatprep.subr.mxu0 0.0
        %1960 = vmatpush1.msra.mxu0 0.0
        %1961 = vmatprep.mubr.f32.mxu0 0.0
        %v1962 = vand.u32 %v1843, 4294901760
        %v1963 = vsub.f32 %v1843, %v1962
        %v1964 = vand.u32 %v1963, 4294901760
        %v1965 = vsub.f32 %v1963, %v1964
        %v1966 = vand.u32 %v1965, 4294901760
        %1967 = vmatmul.mubr.f32.gmra.mrb[0].mxu0 %v1966
        %v1968 = vpop.f32.mrb[0].mxu0
        %v1969 = vadd.f32 %v1880, %v1968
        %v1970 = vpop.f32.mrb[0].mxu0
        %1971 = vmatprep.mubr.f32.mxu0 0.0
        %v1972 = vand.u32 %v1844, 4294901760
        %v1973 = vsub.f32 %v1844, %v1972
        %v1974 = vand.u32 %v1973, 4294901760
        %v1975 = vsub.f32 %v1973, %v1974
        %v1976 = vand.u32 %v1975, 4294901760
        %1977 = vmatmul.mubr.f32.gmra.mrb[0].mxu0 %v1976
        %v1978 = vpop.f32.mrb[0].mxu0
        %v1979 = vadd.f32 %v1880, %v1978
        %v1980 = vpop.f32.mrb[0].mxu0
        %1981 = vmatprep.mubr.f32.mxu0 0.0
        %v1982 = vand.u32 %v1845, 4294901760
        %v1983 = vsub.f32 %v1845, %v1982
        %v1984 = vand.u32 %v1983, 4294901760
        %v1985 = vsub.f32 %v1983, %v1984
        %v1986 = vand.u32 %v1985, 4294901760
        %1987 = vmatmul.mubr.f32.gmra.mrb[0].mxu0 %v1986
        %v1988 = vpop.f32.mrb[0].mxu0
        %v1989 = vadd.f32 %v1880, %v1988
        %v1990 = vpop.f32.mrb[0].mxu0
        %1991 = vmatprep.mubr.f32.mxu0 0.0
        %v1992 = vand.u32 %v1846, 4294901760
        %v1993 = vsub.f32 %v1846, %v1992
        %v1994 = vand.u32 %v1993, 4294901760
        %v1995 = vsub.f32 %v1993, %v1994
        %v1996 = vand.u32 %v1995, 4294901760
        %1997 = vmatmul.mubr.f32.gmra.mrb[0].mxu0 %v1996
        %v1998 = vpop.f32.mrb[0].mxu0
        %v1999 = vadd.f32 %v1880, %v1998
        %v2000 = vpop.f32.mrb[0].mxu0
        %2001 = vmatprep.mubr.f32.mxu0 0.0
        %v2002 = vand.u32 %v1847, 4294901760
        %v2003 = vsub.f32 %v1847, %v2002
        %v2004 = vand.u32 %v2003, 4294901760
        %v2005 = vsub.f32 %v2003, %v2004
        %v2006 = vand.u32 %v2005, 4294901760
        %2007 = vmatmul.mubr.f32.gmra.mrb[0].mxu0 %v2006
        %v2008 = vpop.f32.mrb[0].mxu0
        %v2009 = vadd.f32 %v1880, %v2008
        %v2010 = vpop.f32.mrb[0].mxu0
        %2011 = vmatprep.mubr.f32.mxu0 0.0
        %v2012 = vand.u32 %v1848, 4294901760
        %v2013 = vsub.f32 %v1848, %v2012
        %v2014 = vand.u32 %v2013, 4294901760
        %v2015 = vsub.f32 %v2013, %v2014
        %v2016 = vand.u32 %v2015, 4294901760
        %2017 = vmatmul.mubr.f32.gmra.mrb[0].mxu0 %v2016
        %v2018 = vpop.f32.mrb[0].mxu0
        %v2019 = vadd.f32 %v1880, %v2018
        %v2020 = vpop.f32.mrb[0].mxu0
        %2021 = vmatprep.mubr.f32.mxu0 0.0
        %v2022 = vand.u32 %v1849, 4294901760
        %v2023 = vsub.f32 %v1849, %v2022
        %v2024 = vand.u32 %v2023, 4294901760
        %v2025 = vsub.f32 %v2023, %v2024
        %v2026 = vand.u32 %v2025, 4294901760
        %2027 = vmatmul.mubr.f32.gmra.mrb[0].mxu0 %v2026
        %v2028 = vpop.f32.mrb[0].mxu0
        %v2029 = vadd.f32 %v1880, %v2028
        %v2030 = vpop.f32.mrb[0].mxu0
        %2031 = vmatprep.mubr.f32.mxu0 0.0
        %v2032 = vand.u32 %v1850, 4294901760
        %v2033 = vsub.f32 %v1850, %v2032
        %v2034 = vand.u32 %v2033, 4294901760
        %v2035 = vsub.f32 %v2033, %v2034
        %v2036 = vand.u32 %v2035, 4294901760
        %2037 = vmatmul.mubr.f32.gmra.mrb[0].mxu0 %v2036
        %v2038 = vpop.f32.mrb[0].mxu0
        %v2039 = vadd.f32 %v1880, %v2038
        %v2040 = vpop.f32.mrb[0].mxu0
        %2041 = vmatprep.mubr.f32.mxu0 0.0
        %v2042 = vand.u32 %v1851, 4294901760
        %v2043 = vsub.f32 %v1851, %v2042
        %v2044 = vand.u32 %v2043, 4294901760
        %v2045 = vsub.f32 %v2043, %v2044
        %v2046 = vand.u32 %v2045, 4294901760
        %2047 = vmatmul.mubr.f32.gmra.mrb[0].mxu0 %v2046
        %v2048 = vpop.f32.mrb[0].mxu0
        %v2049 = vadd.f32 %v1880, %v2048
        %v2050 = vpop.f32.mrb[0].mxu0
        %2051 = vmatprep.mubr.f32.mxu0 0.0
        %v2052 = vand.u32 %v1852, 4294901760
        %v2053 = vsub.f32 %v1852, %v2052
        %v2054 = vand.u32 %v2053, 4294901760
        %v2055 = vsub.f32 %v2053, %v2054
        %v2056 = vand.u32 %v2055, 4294901760
        %2057 = vmatmul.mubr.f32.gmra.mrb[0].mxu0 %v2056
        %v2058 = vpop.f32.mrb[0].mxu0
        %v2059 = vadd.f32 %v1880, %v2058
        %v2060 = vpop.f32.mrb[0].mxu0
        %2061 = vmatprep.mubr.f32.mxu0 0.0
        %v2062 = vand.u32 %v1853, 4294901760
        %v2063 = vsub.f32 %v1853, %v2062
        %v2064 = vand.u32 %v2063, 4294901760
        %v2065 = vsub.f32 %v2063, %v2064
        %v2066 = vand.u32 %v2065, 4294901760
        %2067 = vmatmul.mubr.f32.gmra.mrb[0].mxu0 %v2066
        %v2068 = vpop.f32.mrb[0].mxu0
        %v2069 = vadd.f32 %v1880, %v2068
        %v2070 = vpop.f32.mrb[0].mxu0
        %2071 = vmatprep.mubr.f32.mxu0 0.0
        %v2072 = vand.u32 %v1854, 4294901760
        %v2073 = vsub.f32 %v1854, %v2072
        %v2074 = vand.u32 %v2073, 4294901760
        %v2075 = vsub.f32 %v2073, %v2074
        %v2076 = vand.u32 %v2075, 4294901760
        %2077 = vmatmul.mubr.f32.gmra.mrb[0].mxu0 %v2076
        %v2078 = vpop.f32.mrb[0].mxu0
        %v2079 = vadd.f32 %v1880, %v2078
        %v2080 = vpop.f32.mrb[0].mxu0
        %2081 = vmatprep.mubr.f32.mxu0 0.0
        %v2082 = vand.u32 %v1855, 4294901760
        %v2083 = vsub.f32 %v1855, %v2082
        %v2084 = vand.u32 %v2083, 4294901760
        %v2085 = vsub.f32 %v2083, %v2084
        %v2086 = vand.u32 %v2085, 4294901760
        %2087 = vmatmul.mubr.f32.gmra.mrb[0].mxu0 %v2086
        %v2088 = vpop.f32.mrb[0].mxu0
        %v2089 = vadd.f32 %v1880, %v2088
        %v2090 = vpop.f32.mrb[0].mxu0
        %2091 = vmatprep.mubr.f32.mxu0 0.0
        %v2092 = vand.u32 %v1856, 4294901760
        %v2093 = vsub.f32 %v1856, %v2092
        %v2094 = vand.u32 %v2093, 4294901760
        %v2095 = vsub.f32 %v2093, %v2094
        %v2096 = vand.u32 %v2095, 4294901760
        %2097 = vmatmul.mubr.f32.gmra.mrb[0].mxu0 %v2096
        %v2098 = vpop.f32.mrb[0].mxu0
        %v2099 = vadd.f32 %v1880, %v2098
        %v2100 = vpop.f32.mrb[0].mxu0
        %2101 = vmatprep.mubr.f32.mxu0 0.0
        %v2102 = vand.u32 %v1857, 4294901760
        %v2103 = vsub.f32 %v1857, %v2102
        %v2104 = vand.u32 %v2103, 4294901760
        %v2105 = vsub.f32 %v2103, %v2104
        %v2106 = vand.u32 %v2105, 4294901760
        %2107 = vmatmul.mubr.f32.gmra.mrb[0].mxu0 %v2106
        %v2108 = vpop.f32.mrb[0].mxu0
        %v2109 = vadd.f32 %v1880, %v2108
        %v2110 = vpop.f32.mrb[0].mxu0
        %2111 = vmatprep.mubr.f32.mxu0 0.0
        %v2112 = vand.u32 %v1858, 4294901760
        %v2113 = vsub.f32 %v1858, %v2112
        %v2114 = vand.u32 %v2113, 4294901760
        %v2115 = vsub.f32 %v2113, %v2114
        %v2116 = vand.u32 %v2115, 4294901760
        %2117 = vmatmul.mubr.f32.gmra.mrb[0].mxu0 %v2116
        %v2118 = vpop.f32.mrb[0].mxu0
        %v2119 = vadd.f32 %v1880, %v2118
        %v2120 = vpop.f32.mrb[0].mxu0
        %2121 = vdwg.mxu0
        %2122 = vmatprep.subr.mxu0 0.0
        %v2123 = vand.u32 %v1860, 4294901760
        %v2124 = vsub.f32 %v1860, %v2123
        %v2125 = vand.u32 %v2124, 4294901760
        %v2126 = vsub.f32 %v2124, %v2125
        %v2127 = vand.u32 %v2126, 4294901760
        %2128 = vmatpush1.msra.mxu0 %v2127
        %2129 = vmatprep.subr.mxu0 0.0
        %v2130 = vand.u32 %v1861, 4294901760
        %v2131 = vsub.f32 %v1861, %v2130
        %v2132 = vand.u32 %v2131, 4294901760
        %v2133 = vsub.f32 %v2131, %v2132
        %v2134 = vand.u32 %v2133, 4294901760
        %2135 = vmatpush1.msra.mxu0 %v2134
        %2136 = vmatprep.subr.mxu0 0.0
        %v2137 = vand.u32 %v1862, 4294901760
        %v2138 = vsub.f32 %v1862, %v2137
        %v2139 = vand.u32 %v2138, 4294901760
        %v2140 = vsub.f32 %v2138, %v2139
        %v2141 = vand.u32 %v2140, 4294901760
        %2142 = vmatpush1.msra.mxu0 %v2141
        %2143 = vmatprep.subr.mxu0 0.0
        %v2144 = vand.u32 %v1863, 4294901760
        %v2145 = vsub.f32 %v1863, %v2144
        %v2146 = vand.u32 %v2145, 4294901760
        %v2147 = vsub.f32 %v2145, %v2146
        %v2148 = vand.u32 %v2147, 4294901760
        %2149 = vmatpush1.msra.mxu0 %v2148
        %2150 = vmatprep.subr.mxu0 0.0
        %v2151 = vand.u32 %v1864, 4294901760
        %v2152 = vsub.f32 %v1864, %v2151
        %v2153 = vand.u32 %v2152, 4294901760
        %v2154 = vsub.f32 %v2152, %v2153
        %v2155 = vand.u32 %v2154, 4294901760
        %2156 = vmatpush1.msra.mxu0 %v2155
        %2157 = vmatprep.subr.mxu0 0.0
        %v2158 = vand.u32 %v1865, 4294901760
        %v2159 = vsub.f32 %v1865, %v2158
        %v2160 = vand.u32 %v2159, 4294901760
        %v2161 = vsub.f32 %v2159, %v2160
        %v2162 = vand.u32 %v2161, 4294901760
        %2163 = vmatpush1.msra.mxu0 %v2162
        %2164 = vmatprep.subr.mxu0 0.0
        %v2165 = vand.u32 %v1866, 4294901760
        %v2166 = vsub.f32 %v1866, %v2165
        %v2167 = vand.u32 %v2166, 4294901760
        %v2168 = vsub.f32 %v2166, %v2167
        %v2169 = vand.u32 %v2168, 4294901760
        %2170 = vmatpush1.msra.mxu0 %v2169
        %2171 = vmatprep.subr.mxu0 0.0
        %v2172 = vand.u32 %v1867, 4294901760
        %v2173 = vsub.f32 %v1867, %v2172
        %v2174 = vand.u32 %v2173, 4294901760
        %v2175 = vsub.f32 %v2173, %v2174
        %v2176 = vand.u32 %v2175, 4294901760
        %2177 = vmatpush1.msra.mxu0 %v2176
        %2178 = vmatprep.subr.mxu0 0.0
        %v2179 = vand.u32 %v1868, 4294901760
        %v2180 = vsub.f32 %v1868, %v2179
        %v2181 = vand.u32 %v2180, 4294901760
        %v2182 = vsub.f32 %v2180, %v2181
        %v2183 = vand.u32 %v2182, 4294901760
        %2184 = vmatpush1.msra.mxu0 %v2183
        %2185 = vmatprep.subr.mxu0 0.0
        %v2186 = vand.u32 %v1869, 4294901760
        %v2187 = vsub.f32 %v1869, %v2186
        %v2188 = vand.u32 %v2187, 4294901760
        %v2189 = vsub.f32 %v2187, %v2188
        %v2190 = vand.u32 %v2189, 4294901760
        %2191 = vmatpush1.msra.mxu0 %v2190
        %2192 = vmatprep.subr.mxu0 0.0
        %v2193 = vand.u32 %v1870, 4294901760
        %v2194 = vsub.f32 %v1870, %v2193
        %v2195 = vand.u32 %v2194, 4294901760
        %v2196 = vsub.f32 %v2194, %v2195
        %v2197 = vand.u32 %v2196, 4294901760
        %2198 = vmatpush1.msra.mxu0 %v2197
        %2199 = vmatprep.subr.mxu0 0.0
        %v2200 = vand.u32 %v1871, 4294901760
        %v2201 = vsub.f32 %v1871, %v2200
        %v2202 = vand.u32 %v2201, 4294901760
        %v2203 = vsub.f32 %v2201, %v2202
        %v2204 = vand.u32 %v2203, 4294901760
        %2205 = vmatpush1.msra.mxu0 %v2204
        %2206 = vmatprep.subr.mxu0 0.0
        %v2207 = vand.u32 %v1872, 4294901760
        %v2208 = vsub.f32 %v1872, %v2207
        %v2209 = vand.u32 %v2208, 4294901760
        %v2210 = vsub.f32 %v2208, %v2209
        %v2211 = vand.u32 %v2210, 4294901760
        %2212 = vmatpush1.msra.mxu0 %v2211
        %2213 = vmatprep.subr.mxu0 0.0
        %v2214 = vand.u32 %v1873, 4294901760
        %v2215 = vsub.f32 %v1873, %v2214
        %v2216 = vand.u32 %v2215, 4294901760
        %v2217 = vsub.f32 %v2215, %v2216
        %v2218 = vand.u32 %v2217, 4294901760
        %2219 = vmatpush1.msra.mxu0 %v2218
        %2220 = vmatprep.subr.mxu0 0.0
        %v2221 = vand.u32 %v1874, 4294901760
        %v2222 = vsub.f32 %v1874, %v2221
        %v2223 = vand.u32 %v2222, 4294901760
        %v2224 = vsub.f32 %v2222, %v2223
        %v2225 = vand.u32 %v2224, 4294901760
        %2226 = vmatpush1.msra.mxu0 %v2225
        %2227 = vmatprep.subr.mxu0 0.0
        %v2228 = vand.u32 %v1875, 4294901760
        %v2229 = vsub.f32 %v1875, %v2228
        %v2230 = vand.u32 %v2229, 4294901760
        %v2231 = vsub.f32 %v2229, %v2230
        %v2232 = vand.u32 %v2231, 4294901760
        %2233 = vmatpush1.msra.mxu0 %v2232
        %2234 = vmatprep.subr.mxu0 0.0
        %2235 = vmatpush1.msra.mxu0 0.0
        %2236 = vmatprep.subr.mxu0 0.0
        %2237 = vmatpush1.msra.mxu0 0.0
        %2238 = vmatprep.subr.mxu0 0.0
        %2239 = vmatpush1.msra.mxu0 0.0
        %2240 = vmatprep.subr.mxu0 0.0
        %2241 = vmatpush1.msra.mxu0 0.0
        %2242 = vmatprep.subr.mxu0 0.0
        %2243 = vmatpush1.msra.mxu0 0.0
        %2244 = vmatprep.subr.mxu0 0.0
        %2245 = vmatpush1.msra.mxu0 0.0
        %2246 = vmatprep.subr.mxu0 0.0
        %2247 = vmatpush1.msra.mxu0 0.0
        %2248 = vmatprep.subr.mxu0 0.0
        %2249 = vmatpush1.msra.mxu0 0.0
        %2250 = vmatprep.subr.mxu0 0.0
        %2251 = vmatpush1.msra.mxu0 0.0
        %2252 = vmatprep.subr.mxu0 0.0
        %2253 = vmatpush1.msra.mxu0 0.0
        %2254 = vmatprep.subr.mxu0 0.0
        %2255 = vmatpush1.msra.mxu0 0.0
        %2256 = vmatprep.subr.mxu0 0.0
        %2257 = vmatpush1.msra.mxu0 0.0
        %2258 = vmatprep.subr.mxu0 0.0
        %2259 = vmatpush1.msra.mxu0 0.0
        %2260 = vmatprep.subr.mxu0 0.0
        %2261 = vmatpush1.msra.mxu0 0.0
        %2262 = vmatprep.subr.mxu0 0.0
        %2263 = vmatpush1.msra.mxu0 0.0
        %2264 = vmatprep.subr.mxu0 0.0
        %2265 = vmatpush1.msra.mxu0 0.0
        %2266 = vmatprep.mubr.f32.mxu0 0.0
        %v2267 = vand.u32 %v1843, 4294901760
        %2268 = vmatmul.mubr.f32.gmra.mrb[0].mxu0 %v2267
        %v2269 = vpop.f32.mrb[0].mxu0
        %v2270 = vadd.f32 %v1969, %v2269
        %v2271 = vpop.f32.mrb[0].mxu0
        %2272 = vmatprep.mubr.f32.mxu0 0.0
        %v2273 = vand.u32 %v1844, 4294901760
        %2274 = vmatmul.mubr.f32.gmra.mrb[0].mxu0 %v2273
        %v2275 = vpop.f32.mrb[0].mxu0
        %v2276 = vadd.f32 %v1979, %v2275
        %v2277 = vpop.f32.mrb[0].mxu0
        %2278 = vmatprep.mubr.f32.mxu0 0.0
        %v2279 = vand.u32 %v1845, 4294901760
        %2280 = vmatmul.mubr.f32.gmra.mrb[0].mxu0 %v2279
        %v2281 = vpop.f32.mrb[0].mxu0
        %v2282 = vadd.f32 %v1989, %v2281
        %v2283 = vpop.f32.mrb[0].mxu0
        %2284 = vmatprep.mubr.f32.mxu0 0.0
        %v2285 = vand.u32 %v1846, 4294901760
        %2286 = vmatmul.mubr.f32.gmra.mrb[0].mxu0 %v2285
        %v2287 = vpop.f32.mrb[0].mxu0
        %v2288 = vadd.f32 %v1999, %v2287
        %v2289 = vpop.f32.mrb[0].mxu0
        %2290 = vmatprep.mubr.f32.mxu0 0.0
        %v2291 = vand.u32 %v1847, 4294901760
        %2292 = vmatmul.mubr.f32.gmra.mrb[0].mxu0 %v2291
        %v2293 = vpop.f32.mrb[0].mxu0
        %v2294 = vadd.f32 %v2009, %v2293
        %v2295 = vpop.f32.mrb[0].mxu0
        %2296 = vmatprep.mubr.f32.mxu0 0.0
        %v2297 = vand.u32 %v1848, 4294901760
        %2298 = vmatmul.mubr.f32.gmra.mrb[0].mxu0 %v2297
        %v2299 = vpop.f32.mrb[0].mxu0
        %v2300 = vadd.f32 %v2019, %v2299
        %v2301 = vpop.f32.mrb[0].mxu0
        %2302 = vmatprep.mubr.f32.mxu0 0.0
        %v2303 = vand.u32 %v1849, 4294901760
        %2304 = vmatmul.mubr.f32.gmra.mrb[0].mxu0 %v2303
        %v2305 = vpop.f32.mrb[0].mxu0
        %v2306 = vadd.f32 %v2029, %v2305
        %v2307 = vpop.f32.mrb[0].mxu0
        %2308 = vmatprep.mubr.f32.mxu0 0.0
        %v2309 = vand.u32 %v1850, 4294901760
        %2310 = vmatmul.mubr.f32.gmra.mrb[0].mxu0 %v2309
        %v2311 = vpop.f32.mrb[0].mxu0
        %v2312 = vadd.f32 %v2039, %v2311
        %v2313 = vpop.f32.mrb[0].mxu0
        %2314 = vmatprep.mubr.f32.mxu0 0.0
        %v2315 = vand.u32 %v1851, 4294901760
        %2316 = vmatmul.mubr.f32.gmra.mrb[0].mxu0 %v2315
        %v2317 = vpop.f32.mrb[0].mxu0
        %v2318 = vadd.f32 %v2049, %v2317
        %v2319 = vpop.f32.mrb[0].mxu0
        %2320 = vmatprep.mubr.f32.mxu0 0.0
        %v2321 = vand.u32 %v1852, 4294901760
        %2322 = vmatmul.mubr.f32.gmra.mrb[0].mxu0 %v2321
        %v2323 = vpop.f32.mrb[0].mxu0
        %v2324 = vadd.f32 %v2059, %v2323
        %v2325 = vpop.f32.mrb[0].mxu0
        %2326 = vmatprep.mubr.f32.mxu0 0.0
        %v2327 = vand.u32 %v1853, 4294901760
        %2328 = vmatmul.mubr.f32.gmra.mrb[0].mxu0 %v2327
        %v2329 = vpop.f32.mrb[0].mxu0
        %v2330 = vadd.f32 %v2069, %v2329
        %v2331 = vpop.f32.mrb[0].mxu0
        %2332 = vmatprep.mubr.f32.mxu0 0.0
        %v2333 = vand.u32 %v1854, 4294901760
        %2334 = vmatmul.mubr.f32.gmra.mrb[0].mxu0 %v2333
        %v2335 = vpop.f32.mrb[0].mxu0
        %v2336 = vadd.f32 %v2079, %v2335
        %v2337 = vpop.f32.mrb[0].mxu0
        %2338 = vmatprep.mubr.f32.mxu0 0.0
        %v2339 = vand.u32 %v1855, 4294901760
        %2340 = vmatmul.mubr.f32.gmra.mrb[0].mxu0 %v2339
        %v2341 = vpop.f32.mrb[0].mxu0
        %v2342 = vadd.f32 %v2089, %v2341
        %v2343 = vpop.f32.mrb[0].mxu0
        %2344 = vmatprep.mubr.f32.mxu0 0.0
        %v2345 = vand.u32 %v1856, 4294901760
        %2346 = vmatmul.mubr.f32.gmra.mrb[0].mxu0 %v2345
        %v2347 = vpop.f32.mrb[0].mxu0
        %v2348 = vadd.f32 %v2099, %v2347
        %v2349 = vpop.f32.mrb[0].mxu0
        %2350 = vmatprep.mubr.f32.mxu0 0.0
        %v2351 = vand.u32 %v1857, 4294901760
        %2352 = vmatmul.mubr.f32.gmra.mrb[0].mxu0 %v2351
        %v2353 = vpop.f32.mrb[0].mxu0
        %v2354 = vadd.f32 %v2109, %v2353
        %v2355 = vpop.f32.mrb[0].mxu0
        %2356 = vmatprep.mubr.f32.mxu0 0.0
        %v2357 = vand.u32 %v1858, 4294901760
        %2358 = vmatmul.mubr.f32.gmra.mrb[0].mxu0 %v2357
        %v2359 = vpop.f32.mrb[0].mxu0
        %v2360 = vadd.f32 %v2119, %v2359
        %v2361 = vpop.f32.mrb[0].mxu0
        %2362 = vdwg.mxu0
        %2363 = vmatprep.subr.mxu0 0.0
        %v2364 = vand.u32 %v1860, 4294901760
        %v2365 = vsub.f32 %v1860, %v2364
        %2366 = vmatpush1.msra.mxu0 %v2365
        %2367 = vmatprep.subr.mxu0 0.0
        %v2368 = vand.u32 %v1861, 4294901760
        %v2369 = vsub.f32 %v1861, %v2368
        %2370 = vmatpush1.msra.mxu0 %v2369
        %2371 = vmatprep.subr.mxu0 0.0
        %v2372 = vand.u32 %v1862, 4294901760
        %v2373 = vsub.f32 %v1862, %v2372
        %2374 = vmatpush1.msra.mxu0 %v2373
        %2375 = vmatprep.subr.mxu0 0.0
        %v2376 = vand.u32 %v1863, 4294901760
        %v2377 = vsub.f32 %v1863, %v2376
        %2378 = vmatpush1.msra.mxu0 %v2377
        %2379 = vmatprep.subr.mxu0 0.0
        %v2380 = vand.u32 %v1864, 4294901760
        %v2381 = vsub.f32 %v1864, %v2380
        %2382 = vmatpush1.msra.mxu0 %v2381
        %2383 = vmatprep.subr.mxu0 0.0
        %v2384 = vand.u32 %v1865, 4294901760
        %v2385 = vsub.f32 %v1865, %v2384
        %2386 = vmatpush1.msra.mxu0 %v2385
        %2387 = vmatprep.subr.mxu0 0.0
        %v2388 = vand.u32 %v1866, 4294901760
        %v2389 = vsub.f32 %v1866, %v2388
        %2390 = vmatpush1.msra.mxu0 %v2389
        %2391 = vmatprep.subr.mxu0 0.0
        %v2392 = vand.u32 %v1867, 4294901760
        %v2393 = vsub.f32 %v1867, %v2392
        %2394 = vmatpush1.msra.mxu0 %v2393
        %2395 = vmatprep.subr.mxu0 0.0
        %v2396 = vand.u32 %v1868, 4294901760
        %v2397 = vsub.f32 %v1868, %v2396
        %2398 = vmatpush1.msra.mxu0 %v2397
        %2399 = vmatprep.subr.mxu0 0.0
        %v2400 = vand.u32 %v1869, 4294901760
        %v2401 = vsub.f32 %v1869, %v2400
        %2402 = vmatpush1.msra.mxu0 %v2401
        %2403 = vmatprep.subr.mxu0 0.0
        %v2404 = vand.u32 %v1870, 4294901760
        %v2405 = vsub.f32 %v1870, %v2404
        %2406 = vmatpush1.msra.mxu0 %v2405
        %2407 = vmatprep.subr.mxu0 0.0
        %v2408 = vand.u32 %v1871, 4294901760
        %v2409 = vsub.f32 %v1871, %v2408
        %2410 = vmatpush1.msra.mxu0 %v2409
        %2411 = vmatprep.subr.mxu0 0.0
        %v2412 = vand.u32 %v1872, 4294901760
        %v2413 = vsub.f32 %v1872, %v2412
        %2414 = vmatpush1.msra.mxu0 %v2413
        %2415 = vmatprep.subr.mxu0 0.0
        %v2416 = vand.u32 %v1873, 4294901760
        %v2417 = vsub.f32 %v1873, %v2416
        %2418 = vmatpush1.msra.mxu0 %v2417
        %2419 = vmatprep.subr.mxu0 0.0
        %v2420 = vand.u32 %v1874, 4294901760
        %v2421 = vsub.f32 %v1874, %v2420
        %2422 = vmatpush1.msra.mxu0 %v2421
        %2423 = vmatprep.subr.mxu0 0.0
        %v2424 = vand.u32 %v1875, 4294901760
        %v2425 = vsub.f32 %v1875, %v2424
        %2426 = vmatpush1.msra.mxu0 %v2425
        %2427 = vmatprep.subr.mxu0 0.0
        %2428 = vmatpush1.msra.mxu0 0.0
        %2429 = vmatprep.subr.mxu0 0.0
        %2430 = vmatpush1.msra.mxu0 0.0
        %2431 = vmatprep.subr.mxu0 0.0
        %2432 = vmatpush1.msra.mxu0 0.0
        %2433 = vmatprep.subr.mxu0 0.0
        %2434 = vmatpush1.msra.mxu0 0.0
        %2435 = vmatprep.subr.mxu0 0.0
        %2436 = vmatpush1.msra.mxu0 0.0
        %2437 = vmatprep.subr.mxu0 0.0
        %2438 = vmatpush1.msra.mxu0 0.0
        %2439 = vmatprep.subr.mxu0 0.0
        %2440 = vmatpush1.msra.mxu0 0.0
        %2441 = vmatprep.subr.mxu0 0.0
        %2442 = vmatpush1.msra.mxu0 0.0
        %2443 = vmatprep.subr.mxu0 0.0
        %2444 = vmatpush1.msra.mxu0 0.0
        %2445 = vmatprep.subr.mxu0 0.0
        %2446 = vmatpush1.msra.mxu0 0.0
        %2447 = vmatprep.subr.mxu0 0.0
        %2448 = vmatpush1.msra.mxu0 0.0
        %2449 = vmatprep.subr.mxu0 0.0
        %2450 = vmatpush1.msra.mxu0 0.0
        %2451 = vmatprep.subr.mxu0 0.0
        %2452 = vmatpush1.msra.mxu0 0.0
        %2453 = vmatprep.subr.mxu0 0.0
        %2454 = vmatpush1.msra.mxu0 0.0
        %2455 = vmatprep.subr.mxu0 0.0
        %2456 = vmatpush1.msra.mxu0 0.0
        %2457 = vmatprep.subr.mxu0 0.0
        %2458 = vmatpush1.msra.mxu0 0.0
        %2459 = vmatprep.mubr.f32.mxu0 0.0
        %v2460 = vand.u32 %v1843, 4294901760
        %v2461 = vsub.f32 %v1843, %v2460
        %2462 = vmatmul.mubr.f32.gmra.mrb[0].mxu0 %v2461
        %v2463 = vpop.f32.mrb[0].mxu0
        %v2464 = vadd.f32 %v2270, %v2463
        %v2465 = vpop.f32.mrb[0].mxu0
        %2466 = vmatprep.mubr.f32.mxu0 0.0
        %v2467 = vand.u32 %v1844, 4294901760
        %v2468 = vsub.f32 %v1844, %v2467
        %2469 = vmatmul.mubr.f32.gmra.mrb[0].mxu0 %v2468
        %v2470 = vpop.f32.mrb[0].mxu0
        %v2471 = vadd.f32 %v2276, %v2470
        %v2472 = vpop.f32.mrb[0].mxu0
        %2473 = vmatprep.mubr.f32.mxu0 0.0
        %v2474 = vand.u32 %v1845, 4294901760
        %v2475 = vsub.f32 %v1845, %v2474
        %2476 = vmatmul.mubr.f32.gmra.mrb[0].mxu0 %v2475
        %v2477 = vpop.f32.mrb[0].mxu0
        %v2478 = vadd.f32 %v2282, %v2477
        %v2479 = vpop.f32.mrb[0].mxu0
        %2480 = vmatprep.mubr.f32.mxu0 0.0
        %v2481 = vand.u32 %v1846, 4294901760
        %v2482 = vsub.f32 %v1846, %v2481
        %2483 = vmatmul.mubr.f32.gmra.mrb[0].mxu0 %v2482
        %v2484 = vpop.f32.mrb[0].mxu0
        %v2485 = vadd.f32 %v2288, %v2484
        %v2486 = vpop.f32.mrb[0].mxu0
        %2487 = vmatprep.mubr.f32.mxu0 0.0
        %v2488 = vand.u32 %v1847, 4294901760
        %v2489 = vsub.f32 %v1847, %v2488
        %2490 = vmatmul.mubr.f32.gmra.mrb[0].mxu0 %v2489
        %v2491 = vpop.f32.mrb[0].mxu0
        %v2492 = vadd.f32 %v2294, %v2491
        %v2493 = vpop.f32.mrb[0].mxu0
        %2494 = vmatprep.mubr.f32.mxu0 0.0
        %v2495 = vand.u32 %v1848, 4294901760
        %v2496 = vsub.f32 %v1848, %v2495
        %2497 = vmatmul.mubr.f32.gmra.mrb[0].mxu0 %v2496
        %v2498 = vpop.f32.mrb[0].mxu0
        %v2499 = vadd.f32 %v2300, %v2498
        %v2500 = vpop.f32.mrb[0].mxu0
        %2501 = vmatprep.mubr.f32.mxu0 0.0
        %v2502 = vand.u32 %v1849, 4294901760
        %v2503 = vsub.f32 %v1849, %v2502
        %2504 = vmatmul.mubr.f32.gmra.mrb[0].mxu0 %v2503
        %v2505 = vpop.f32.mrb[0].mxu0
        %v2506 = vadd.f32 %v2306, %v2505
        %v2507 = vpop.f32.mrb[0].mxu0
        %2508 = vmatprep.mubr.f32.mxu0 0.0
        %v2509 = vand.u32 %v1850, 4294901760
        %v2510 = vsub.f32 %v1850, %v2509
        %2511 = vmatmul.mubr.f32.gmra.mrb[0].mxu0 %v2510
        %v2512 = vpop.f32.mrb[0].mxu0
        %v2513 = vadd.f32 %v2312, %v2512
        %v2514 = vpop.f32.mrb[0].mxu0
        %2515 = vmatprep.mubr.f32.mxu0 0.0
        %v2516 = vand.u32 %v1851, 4294901760
        %v2517 = vsub.f32 %v1851, %v2516
        %2518 = vmatmul.mubr.f32.gmra.mrb[0].mxu0 %v2517
        %v2519 = vpop.f32.mrb[0].mxu0
        %v2520 = vadd.f32 %v2318, %v2519
        %v2521 = vpop.f32.mrb[0].mxu0
        %2522 = vmatprep.mubr.f32.mxu0 0.0
        %v2523 = vand.u32 %v1852, 4294901760
        %v2524 = vsub.f32 %v1852, %v2523
        %2525 = vmatmul.mubr.f32.gmra.mrb[0].mxu0 %v2524
        %v2526 = vpop.f32.mrb[0].mxu0
        %v2527 = vadd.f32 %v2324, %v2526
        %v2528 = vpop.f32.mrb[0].mxu0
        %2529 = vmatprep.mubr.f32.mxu0 0.0
        %v2530 = vand.u32 %v1853, 4294901760
        %v2531 = vsub.f32 %v1853, %v2530
        %2532 = vmatmul.mubr.f32.gmra.mrb[0].mxu0 %v2531
        %v2533 = vpop.f32.mrb[0].mxu0
        %v2534 = vadd.f32 %v2330, %v2533
        %v2535 = vpop.f32.mrb[0].mxu0
        %2536 = vmatprep.mubr.f32.mxu0 0.0
        %v2537 = vand.u32 %v1854, 4294901760
        %v2538 = vsub.f32 %v1854, %v2537
        %2539 = vmatmul.mubr.f32.gmra.mrb[0].mxu0 %v2538
        %v2540 = vpop.f32.mrb[0].mxu0
        %v2541 = vadd.f32 %v2336, %v2540
        %v2542 = vpop.f32.mrb[0].mxu0
        %2543 = vmatprep.mubr.f32.mxu0 0.0
        %v2544 = vand.u32 %v1855, 4294901760
        %v2545 = vsub.f32 %v1855, %v2544
        %2546 = vmatmul.mubr.f32.gmra.mrb[0].mxu0 %v2545
        %v2547 = vpop.f32.mrb[0].mxu0
        %v2548 = vadd.f32 %v2342, %v2547
        %v2549 = vpop.f32.mrb[0].mxu0
        %2550 = vmatprep.mubr.f32.mxu0 0.0
        %v2551 = vand.u32 %v1856, 4294901760
        %v2552 = vsub.f32 %v1856, %v2551
        %2553 = vmatmul.mubr.f32.gmra.mrb[0].mxu0 %v2552
        %v2554 = vpop.f32.mrb[0].mxu0
        %v2555 = vadd.f32 %v2348, %v2554
        %v2556 = vpop.f32.mrb[0].mxu0
        %2557 = vmatprep.mubr.f32.mxu0 0.0
        %v2558 = vand.u32 %v1857, 4294901760
        %v2559 = vsub.f32 %v1857, %v2558
        %2560 = vmatmul.mubr.f32.gmra.mrb[0].mxu0 %v2559
        %v2561 = vpop.f32.mrb[0].mxu0
        %v2562 = vadd.f32 %v2354, %v2561
        %v2563 = vpop.f32.mrb[0].mxu0
        %2564 = vmatprep.mubr.f32.mxu0 0.0
        %v2565 = vand.u32 %v1858, 4294901760
        %v2566 = vsub.f32 %v1858, %v2565
        %2567 = vmatmul.mubr.f32.gmra.mrb[0].mxu0 %v2566
        %v2568 = vpop.f32.mrb[0].mxu0
        %v2569 = vadd.f32 %v2360, %v2568
        %v2570 = vpop.f32.mrb[0].mxu0
        %2571 = vdwg.mxu0
        %2572 = vmatprep.subr.mxu0 0.0
        %v2573 = vand.u32 %v1860, 4294901760
        %2574 = vmatpush1.msra.mxu0 %v2573
        %2575 = vmatprep.subr.mxu0 0.0
        %v2576 = vand.u32 %v1861, 4294901760
        %2577 = vmatpush1.msra.mxu0 %v2576
        %2578 = vmatprep.subr.mxu0 0.0
        %v2579 = vand.u32 %v1862, 4294901760
        %2580 = vmatpush1.msra.mxu0 %v2579
        %2581 = vmatprep.subr.mxu0 0.0
        %v2582 = vand.u32 %v1863, 4294901760
        %2583 = vmatpush1.msra.mxu0 %v2582
        %2584 = vmatprep.subr.mxu0 0.0
        %v2585 = vand.u32 %v1864, 4294901760
        %2586 = vmatpush1.msra.mxu0 %v2585
        %2587 = vmatprep.subr.mxu0 0.0
        %v2588 = vand.u32 %v1865, 4294901760
        %2589 = vmatpush1.msra.mxu0 %v2588
        %2590 = vmatprep.subr.mxu0 0.0
        %v2591 = vand.u32 %v1866, 4294901760
        %2592 = vmatpush1.msra.mxu0 %v2591
        %2593 = vmatprep.subr.mxu0 0.0
        %v2594 = vand.u32 %v1867, 4294901760
        %2595 = vmatpush1.msra.mxu0 %v2594
        %2596 = vmatprep.subr.mxu0 0.0
        %v2597 = vand.u32 %v1868, 4294901760
        %2598 = vmatpush1.msra.mxu0 %v2597
        %2599 = vmatprep.subr.mxu0 0.0
        %v2600 = vand.u32 %v1869, 4294901760
        %2601 = vmatpush1.msra.mxu0 %v2600
        %2602 = vmatprep.subr.mxu0 0.0
        %v2603 = vand.u32 %v1870, 4294901760
        %2604 = vmatpush1.msra.mxu0 %v2603
        %2605 = vmatprep.subr.mxu0 0.0
        %v2606 = vand.u32 %v1871, 4294901760
        %2607 = vmatpush1.msra.mxu0 %v2606
        %2608 = vmatprep.subr.mxu0 0.0
        %v2609 = vand.u32 %v1872, 4294901760
        %2610 = vmatpush1.msra.mxu0 %v2609
        %2611 = vmatprep.subr.mxu0 0.0
        %v2612 = vand.u32 %v1873, 4294901760
        %2613 = vmatpush1.msra.mxu0 %v2612
        %2614 = vmatprep.subr.mxu0 0.0
        %v2615 = vand.u32 %v1874, 4294901760
        %2616 = vmatpush1.msra.mxu0 %v2615
        %2617 = vmatprep.subr.mxu0 0.0
        %v2618 = vand.u32 %v1875, 4294901760
        %2619 = vmatpush1.msra.mxu0 %v2618
        %2620 = vmatprep.subr.mxu0 0.0
        %2621 = vmatpush1.msra.mxu0 0.0
        %2622 = vmatprep.subr.mxu0 0.0
        %2623 = vmatpush1.msra.mxu0 0.0
        %2624 = vmatprep.subr.mxu0 0.0
        %2625 = vmatpush1.msra.mxu0 0.0
        %2626 = vmatprep.subr.mxu0 0.0
        %2627 = vmatpush1.msra.mxu0 0.0
        %2628 = vmatprep.subr.mxu0 0.0
        %2629 = vmatpush1.msra.mxu0 0.0
        %2630 = vmatprep.subr.mxu0 0.0
        %2631 = vmatpush1.msra.mxu0 0.0
        %2632 = vmatprep.subr.mxu0 0.0
        %2633 = vmatpush1.msra.mxu0 0.0
        %2634 = vmatprep.subr.mxu0 0.0
        %2635 = vmatpush1.msra.mxu0 0.0
        %2636 = vmatprep.subr.mxu0 0.0
        %2637 = vmatpush1.msra.mxu0 0.0
        %2638 = vmatprep.subr.mxu0 0.0
        %2639 = vmatpush1.msra.mxu0 0.0
        %2640 = vmatprep.subr.mxu0 0.0
        %2641 = vmatpush1.msra.mxu0 0.0
        %2642 = vmatprep.subr.mxu0 0.0
        %2643 = vmatpush1.msra.mxu0 0.0
        %2644 = vmatprep.subr.mxu0 0.0
        %2645 = vmatpush1.msra.mxu0 0.0
        %2646 = vmatprep.subr.mxu0 0.0
        %2647 = vmatpush1.msra.mxu0 0.0
        %2648 = vmatprep.subr.mxu0 0.0
        %2649 = vmatpush1.msra.mxu0 0.0
        %2650 = vmatprep.subr.mxu0 0.0
        %2651 = vmatpush1.msra.mxu0 0.0
        %2652 = vmatprep.mubr.f32.mxu0 0.0
        %v2653 = vand.u32 %v1843, 4294901760
        %v2654 = vsub.f32 %v1843, %v2653
        %v2655 = vand.u32 %v2654, 4294901760
        %2656 = vmatmul.mubr.f32.gmra.mrb[0].mxu0 %v2655
        %v2657 = vpop.f32.mrb[0].mxu0
        %v2658 = vadd.f32 %v2464, %v2657
        %v2659 = vpop.f32.mrb[0].mxu0
        %2660 = vmatprep.mubr.f32.mxu0 0.0
        %v2661 = vand.u32 %v1844, 4294901760
        %v2662 = vsub.f32 %v1844, %v2661
        %v2663 = vand.u32 %v2662, 4294901760
        %2664 = vmatmul.mubr.f32.gmra.mrb[0].mxu0 %v2663
        %v2665 = vpop.f32.mrb[0].mxu0
        %v2666 = vadd.f32 %v2471, %v2665
        %v2667 = vpop.f32.mrb[0].mxu0
        %2668 = vmatprep.mubr.f32.mxu0 0.0
        %v2669 = vand.u32 %v1845, 4294901760
        %v2670 = vsub.f32 %v1845, %v2669
        %v2671 = vand.u32 %v2670, 4294901760
        %2672 = vmatmul.mubr.f32.gmra.mrb[0].mxu0 %v2671
        %v2673 = vpop.f32.mrb[0].mxu0
        %v2674 = vadd.f32 %v2478, %v2673
        %v2675 = vpop.f32.mrb[0].mxu0
        %2676 = vmatprep.mubr.f32.mxu0 0.0
        %v2677 = vand.u32 %v1846, 4294901760
        %v2678 = vsub.f32 %v1846, %v2677
        %v2679 = vand.u32 %v2678, 4294901760
        %2680 = vmatmul.mubr.f32.gmra.mrb[0].mxu0 %v2679
        %v2681 = vpop.f32.mrb[0].mxu0
        %v2682 = vadd.f32 %v2485, %v2681
        %v2683 = vpop.f32.mrb[0].mxu0
        %2684 = vmatprep.mubr.f32.mxu0 0.0
        %v2685 = vand.u32 %v1847, 4294901760
        %v2686 = vsub.f32 %v1847, %v2685
        %v2687 = vand.u32 %v2686, 4294901760
        %2688 = vmatmul.mubr.f32.gmra.mrb[0].mxu0 %v2687
        %v2689 = vpop.f32.mrb[0].mxu0
        %v2690 = vadd.f32 %v2492, %v2689
        %v2691 = vpop.f32.mrb[0].mxu0
        %2692 = vmatprep.mubr.f32.mxu0 0.0
        %v2693 = vand.u32 %v1848, 4294901760
        %v2694 = vsub.f32 %v1848, %v2693
        %v2695 = vand.u32 %v2694, 4294901760
        %2696 = vmatmul.mubr.f32.gmra.mrb[0].mxu0 %v2695
        %v2697 = vpop.f32.mrb[0].mxu0
        %v2698 = vadd.f32 %v2499, %v2697
        %v2699 = vpop.f32.mrb[0].mxu0
        %2700 = vmatprep.mubr.f32.mxu0 0.0
        %v2701 = vand.u32 %v1849, 4294901760
        %v2702 = vsub.f32 %v1849, %v2701
        %v2703 = vand.u32 %v2702, 4294901760
        %2704 = vmatmul.mubr.f32.gmra.mrb[0].mxu0 %v2703
        %v2705 = vpop.f32.mrb[0].mxu0
        %v2706 = vadd.f32 %v2506, %v2705
        %v2707 = vpop.f32.mrb[0].mxu0
        %2708 = vmatprep.mubr.f32.mxu0 0.0
        %v2709 = vand.u32 %v1850, 4294901760
        %v2710 = vsub.f32 %v1850, %v2709
        %v2711 = vand.u32 %v2710, 4294901760
        %2712 = vmatmul.mubr.f32.gmra.mrb[0].mxu0 %v2711
        %v2713 = vpop.f32.mrb[0].mxu0
        %v2714 = vadd.f32 %v2513, %v2713
        %v2715 = vpop.f32.mrb[0].mxu0
        %2716 = vmatprep.mubr.f32.mxu0 0.0
        %v2717 = vand.u32 %v1851, 4294901760
        %v2718 = vsub.f32 %v1851, %v2717
        %v2719 = vand.u32 %v2718, 4294901760
        %2720 = vmatmul.mubr.f32.gmra.mrb[0].mxu0 %v2719
        %v2721 = vpop.f32.mrb[0].mxu0
        %v2722 = vadd.f32 %v2520, %v2721
        %v2723 = vpop.f32.mrb[0].mxu0
        %2724 = vmatprep.mubr.f32.mxu0 0.0
        %v2725 = vand.u32 %v1852, 4294901760
        %v2726 = vsub.f32 %v1852, %v2725
        %v2727 = vand.u32 %v2726, 4294901760
        %2728 = vmatmul.mubr.f32.gmra.mrb[0].mxu0 %v2727
        %v2729 = vpop.f32.mrb[0].mxu0
        %v2730 = vadd.f32 %v2527, %v2729
        %v2731 = vpop.f32.mrb[0].mxu0
        %2732 = vmatprep.mubr.f32.mxu0 0.0
        %v2733 = vand.u32 %v1853, 4294901760
        %v2734 = vsub.f32 %v1853, %v2733
        %v2735 = vand.u32 %v2734, 4294901760
        %2736 = vmatmul.mubr.f32.gmra.mrb[0].mxu0 %v2735
        %v2737 = vpop.f32.mrb[0].mxu0
        %v2738 = vadd.f32 %v2534, %v2737
        %v2739 = vpop.f32.mrb[0].mxu0
        %2740 = vmatprep.mubr.f32.mxu0 0.0
        %v2741 = vand.u32 %v1854, 4294901760
        %v2742 = vsub.f32 %v1854, %v2741
        %v2743 = vand.u32 %v2742, 4294901760
        %2744 = vmatmul.mubr.f32.gmra.mrb[0].mxu0 %v2743
        %v2745 = vpop.f32.mrb[0].mxu0
        %v2746 = vadd.f32 %v2541, %v2745
        %v2747 = vpop.f32.mrb[0].mxu0
        %2748 = vmatprep.mubr.f32.mxu0 0.0
        %v2749 = vand.u32 %v1855, 4294901760
        %v2750 = vsub.f32 %v1855, %v2749
        %v2751 = vand.u32 %v2750, 4294901760
        %2752 = vmatmul.mubr.f32.gmra.mrb[0].mxu0 %v2751
        %v2753 = vpop.f32.mrb[0].mxu0
        %v2754 = vadd.f32 %v2548, %v2753
        %v2755 = vpop.f32.mrb[0].mxu0
        %2756 = vmatprep.mubr.f32.mxu0 0.0
        %v2757 = vand.u32 %v1856, 4294901760
        %v2758 = vsub.f32 %v1856, %v2757
        %v2759 = vand.u32 %v2758, 4294901760
        %2760 = vmatmul.mubr.f32.gmra.mrb[0].mxu0 %v2759
        %v2761 = vpop.f32.mrb[0].mxu0
        %v2762 = vadd.f32 %v2555, %v2761
        %v2763 = vpop.f32.mrb[0].mxu0
        %2764 = vmatprep.mubr.f32.mxu0 0.0
        %v2765 = vand.u32 %v1857, 4294901760
        %v2766 = vsub.f32 %v1857, %v2765
        %v2767 = vand.u32 %v2766, 4294901760
        %2768 = vmatmul.mubr.f32.gmra.mrb[0].mxu0 %v2767
        %v2769 = vpop.f32.mrb[0].mxu0
        %v2770 = vadd.f32 %v2562, %v2769
        %v2771 = vpop.f32.mrb[0].mxu0
        %2772 = vmatprep.mubr.f32.mxu0 0.0
        %v2773 = vand.u32 %v1858, 4294901760
        %v2774 = vsub.f32 %v1858, %v2773
        %v2775 = vand.u32 %v2774, 4294901760
        %2776 = vmatmul.mubr.f32.gmra.mrb[0].mxu0 %v2775
        %v2777 = vpop.f32.mrb[0].mxu0
        %v2778 = vadd.f32 %v2569, %v2777
        %v2779 = vpop.f32.mrb[0].mxu0
        %2780 = vdwg.mxu0
        %2781 = vmatprep.subr.mxu0 0.0
        %v2782 = vand.u32 %v1860, 4294901760
        %v2783 = vsub.f32 %v1860, %v2782
        %v2784 = vand.u32 %v2783, 4294901760
        %2785 = vmatpush1.msra.mxu0 %v2784
        %2786 = vmatprep.subr.mxu0 0.0
        %v2787 = vand.u32 %v1861, 4294901760
        %v2788 = vsub.f32 %v1861, %v2787
        %v2789 = vand.u32 %v2788, 4294901760
        %2790 = vmatpush1.msra.mxu0 %v2789
        %2791 = vmatprep.subr.mxu0 0.0
        %v2792 = vand.u32 %v1862, 4294901760
        %v2793 = vsub.f32 %v1862, %v2792
        %v2794 = vand.u32 %v2793, 4294901760
        %2795 = vmatpush1.msra.mxu0 %v2794
        %2796 = vmatprep.subr.mxu0 0.0
        %v2797 = vand.u32 %v1863, 4294901760
        %v2798 = vsub.f32 %v1863, %v2797
        %v2799 = vand.u32 %v2798, 4294901760
        %2800 = vmatpush1.msra.mxu0 %v2799
        %2801 = vmatprep.subr.mxu0 0.0
        %v2802 = vand.u32 %v1864, 4294901760
        %v2803 = vsub.f32 %v1864, %v2802
        %v2804 = vand.u32 %v2803, 4294901760
        %2805 = vmatpush1.msra.mxu0 %v2804
        %2806 = vmatprep.subr.mxu0 0.0
        %v2807 = vand.u32 %v1865, 4294901760
        %v2808 = vsub.f32 %v1865, %v2807
        %v2809 = vand.u32 %v2808, 4294901760
        %2810 = vmatpush1.msra.mxu0 %v2809
        %2811 = vmatprep.subr.mxu0 0.0
        %v2812 = vand.u32 %v1866, 4294901760
        %v2813 = vsub.f32 %v1866, %v2812
        %v2814 = vand.u32 %v2813, 4294901760
        %2815 = vmatpush1.msra.mxu0 %v2814
        %2816 = vmatprep.subr.mxu0 0.0
        %v2817 = vand.u32 %v1867, 4294901760
        %v2818 = vsub.f32 %v1867, %v2817
        %v2819 = vand.u32 %v2818, 4294901760
        %2820 = vmatpush1.msra.mxu0 %v2819
        %2821 = vmatprep.subr.mxu0 0.0
        %v2822 = vand.u32 %v1868, 4294901760
        %v2823 = vsub.f32 %v1868, %v2822
        %v2824 = vand.u32 %v2823, 4294901760
        %2825 = vmatpush1.msra.mxu0 %v2824
        %2826 = vmatprep.subr.mxu0 0.0
        %v2827 = vand.u32 %v1869, 4294901760
        %v2828 = vsub.f32 %v1869, %v2827
        %v2829 = vand.u32 %v2828, 4294901760
        %2830 = vmatpush1.msra.mxu0 %v2829
        %2831 = vmatprep.subr.mxu0 0.0
        %v2832 = vand.u32 %v1870, 4294901760
        %v2833 = vsub.f32 %v1870, %v2832
        %v2834 = vand.u32 %v2833, 4294901760
        %2835 = vmatpush1.msra.mxu0 %v2834
        %2836 = vmatprep.subr.mxu0 0.0
        %v2837 = vand.u32 %v1871, 4294901760
        %v2838 = vsub.f32 %v1871, %v2837
        %v2839 = vand.u32 %v2838, 4294901760
        %2840 = vmatpush1.msra.mxu0 %v2839
        %2841 = vmatprep.subr.mxu0 0.0
        %v2842 = vand.u32 %v1872, 4294901760
        %v2843 = vsub.f32 %v1872, %v2842
        %v2844 = vand.u32 %v2843, 4294901760
        %2845 = vmatpush1.msra.mxu0 %v2844
        %2846 = vmatprep.subr.mxu0 0.0
        %v2847 = vand.u32 %v1873, 4294901760
        %v2848 = vsub.f32 %v1873, %v2847
        %v2849 = vand.u32 %v2848, 4294901760
        %2850 = vmatpush1.msra.mxu0 %v2849
        %2851 = vmatprep.subr.mxu0 0.0
        %v2852 = vand.u32 %v1874, 4294901760
        %v2853 = vsub.f32 %v1874, %v2852
        %v2854 = vand.u32 %v2853, 4294901760
        %2855 = vmatpush1.msra.mxu0 %v2854
        %2856 = vmatprep.subr.mxu0 0.0
        %v2857 = vand.u32 %v1875, 4294901760
        %v2858 = vsub.f32 %v1875, %v2857
        %v2859 = vand.u32 %v2858, 4294901760
        %2860 = vmatpush1.msra.mxu0 %v2859
        %2861 = vmatprep.subr.mxu0 0.0
        %2862 = vmatpush1.msra.mxu0 0.0
        %2863 = vmatprep.subr.mxu0 0.0
        %2864 = vmatpush1.msra.mxu0 0.0
        %2865 = vmatprep.subr.mxu0 0.0
        %2866 = vmatpush1.msra.mxu0 0.0
        %2867 = vmatprep.subr.mxu0 0.0
        %2868 = vmatpush1.msra.mxu0 0.0
        %2869 = vmatprep.subr.mxu0 0.0
        %2870 = vmatpush1.msra.mxu0 0.0
        %2871 = vmatprep.subr.mxu0 0.0
        %2872 = vmatpush1.msra.mxu0 0.0
        %2873 = vmatprep.subr.mxu0 0.0
        %2874 = vmatpush1.msra.mxu0 0.0
        %2875 = vmatprep.subr.mxu0 0.0
        %2876 = vmatpush1.msra.mxu0 0.0
        %2877 = vmatprep.subr.mxu0 0.0
        %2878 = vmatpush1.msra.mxu0 0.0
        %2879 = vmatprep.subr.mxu0 0.0
        %2880 = vmatpush1.msra.mxu0 0.0
        %2881 = vmatprep.subr.mxu0 0.0
        %2882 = vmatpush1.msra.mxu0 0.0
        %2883 = vmatprep.subr.mxu0 0.0
        %2884 = vmatpush1.msra.mxu0 0.0
        %2885 = vmatprep.subr.mxu0 0.0
        %2886 = vmatpush1.msra.mxu0 0.0
        %2887 = vmatprep.subr.mxu0 0.0
        %2888 = vmatpush1.msra.mxu0 0.0
        %2889 = vmatprep.subr.mxu0 0.0
        %2890 = vmatpush1.msra.mxu0 0.0
        %2891 = vmatprep.subr.mxu0 0.0
        %2892 = vmatpush1.msra.mxu0 0.0
        %2893 = vmatprep.mubr.f32.mxu0 0.0
        %v2894 = vand.u32 %v1843, 4294901760
        %2895 = vmatmul.mubr.f32.gmra.mrb[0].mxu0 %v2894
        %v2896 = vpop.f32.mrb[0].mxu0
        %v2897 = vadd.f32 %v2658, %v2896
        %v2898 = vpop.f32.mrb[0].mxu0
        %2899 = vmatprep.mubr.f32.mxu0 0.0
        %v2900 = vand.u32 %v1844, 4294901760
        %2901 = vmatmul.mubr.f32.gmra.mrb[0].mxu0 %v2900
        %v2902 = vpop.f32.mrb[0].mxu0
        %v2903 = vadd.f32 %v2666, %v2902
        %v2904 = vpop.f32.mrb[0].mxu0
        %2905 = vmatprep.mubr.f32.mxu0 0.0
        %v2906 = vand.u32 %v1845, 4294901760
        %2907 = vmatmul.mubr.f32.gmra.mrb[0].mxu0 %v2906
        %v2908 = vpop.f32.mrb[0].mxu0
        %v2909 = vadd.f32 %v2674, %v2908
        %v2910 = vpop.f32.mrb[0].mxu0
        %2911 = vmatprep.mubr.f32.mxu0 0.0
        %v2912 = vand.u32 %v1846, 4294901760
        %2913 = vmatmul.mubr.f32.gmra.mrb[0].mxu0 %v2912
        %v2914 = vpop.f32.mrb[0].mxu0
        %v2915 = vadd.f32 %v2682, %v2914
        %v2916 = vpop.f32.mrb[0].mxu0
        %2917 = vmatprep.mubr.f32.mxu0 0.0
        %v2918 = vand.u32 %v1847, 4294901760
        %2919 = vmatmul.mubr.f32.gmra.mrb[0].mxu0 %v2918
        %v2920 = vpop.f32.mrb[0].mxu0
        %v2921 = vadd.f32 %v2690, %v2920
        %v2922 = vpop.f32.mrb[0].mxu0
        %2923 = vmatprep.mubr.f32.mxu0 0.0
        %v2924 = vand.u32 %v1848, 4294901760
        %2925 = vmatmul.mubr.f32.gmra.mrb[0].mxu0 %v2924
        %v2926 = vpop.f32.mrb[0].mxu0
        %v2927 = vadd.f32 %v2698, %v2926
        %v2928 = vpop.f32.mrb[0].mxu0
        %2929 = vmatprep.mubr.f32.mxu0 0.0
        %v2930 = vand.u32 %v1849, 4294901760
        %2931 = vmatmul.mubr.f32.gmra.mrb[0].mxu0 %v2930
        %v2932 = vpop.f32.mrb[0].mxu0
        %v2933 = vadd.f32 %v2706, %v2932
        %v2934 = vpop.f32.mrb[0].mxu0
        %2935 = vmatprep.mubr.f32.mxu0 0.0
        %v2936 = vand.u32 %v1850, 4294901760
        %2937 = vmatmul.mubr.f32.gmra.mrb[0].mxu0 %v2936
        %v2938 = vpop.f32.mrb[0].mxu0
        %v2939 = vadd.f32 %v2714, %v2938
        %v2940 = vpop.f32.mrb[0].mxu0
        %2941 = vmatprep.mubr.f32.mxu0 0.0
        %v2942 = vand.u32 %v1851, 4294901760
        %2943 = vmatmul.mubr.f32.gmra.mrb[0].mxu0 %v2942
        %v2944 = vpop.f32.mrb[0].mxu0
        %v2945 = vadd.f32 %v2722, %v2944
        %v2946 = vpop.f32.mrb[0].mxu0
        %2947 = vmatprep.mubr.f32.mxu0 0.0
        %v2948 = vand.u32 %v1852, 4294901760
        %2949 = vmatmul.mubr.f32.gmra.mrb[0].mxu0 %v2948
        %v2950 = vpop.f32.mrb[0].mxu0
        %v2951 = vadd.f32 %v2730, %v2950
        %v2952 = vpop.f32.mrb[0].mxu0
        %2953 = vmatprep.mubr.f32.mxu0 0.0
        %v2954 = vand.u32 %v1853, 4294901760
        %2955 = vmatmul.mubr.f32.gmra.mrb[0].mxu0 %v2954
        %v2956 = vpop.f32.mrb[0].mxu0
        %v2957 = vadd.f32 %v2738, %v2956
        %v2958 = vpop.f32.mrb[0].mxu0
        %2959 = vmatprep.mubr.f32.mxu0 0.0
        %v2960 = vand.u32 %v1854, 4294901760
        %2961 = vmatmul.mubr.f32.gmra.mrb[0].mxu0 %v2960
        %v2962 = vpop.f32.mrb[0].mxu0
        %v2963 = vadd.f32 %v2746, %v2962
        %v2964 = vpop.f32.mrb[0].mxu0
        %2965 = vmatprep.mubr.f32.mxu0 0.0
        %v2966 = vand.u32 %v1855, 4294901760
        %2967 = vmatmul.mubr.f32.gmra.mrb[0].mxu0 %v2966
        %v2968 = vpop.f32.mrb[0].mxu0
        %v2969 = vadd.f32 %v2754, %v2968
        %v2970 = vpop.f32.mrb[0].mxu0
        %2971 = vmatprep.mubr.f32.mxu0 0.0
        %v2972 = vand.u32 %v1856, 4294901760
        %2973 = vmatmul.mubr.f32.gmra.mrb[0].mxu0 %v2972
        %v2974 = vpop.f32.mrb[0].mxu0
        %v2975 = vadd.f32 %v2762, %v2974
        %v2976 = vpop.f32.mrb[0].mxu0
        %2977 = vmatprep.mubr.f32.mxu0 0.0
        %v2978 = vand.u32 %v1857, 4294901760
        %2979 = vmatmul.mubr.f32.gmra.mrb[0].mxu0 %v2978
        %v2980 = vpop.f32.mrb[0].mxu0
        %v2981 = vadd.f32 %v2770, %v2980
        %v2982 = vpop.f32.mrb[0].mxu0
        %2983 = vmatprep.mubr.f32.mxu0 0.0
        %v2984 = vand.u32 %v1858, 4294901760
        %2985 = vmatmul.mubr.f32.gmra.mrb[0].mxu0 %v2984
        %v2986 = vpop.f32.mrb[0].mxu0
        %v2987 = vadd.f32 %v2778, %v2986
        %v2988 = vpop.f32.mrb[0].mxu0
        %2989 = vdwg.mxu0
        %2990 = vmatprep.subr.mxu0 0.0
        %v2991 = vand.u32 %v1860, 4294901760
        %2992 = vmatpush1.msra.mxu0 %v2991
        %2993 = vmatprep.subr.mxu0 0.0
        %v2994 = vand.u32 %v1861, 4294901760
        %2995 = vmatpush1.msra.mxu0 %v2994
        %2996 = vmatprep.subr.mxu0 0.0
        %v2997 = vand.u32 %v1862, 4294901760
        %2998 = vmatpush1.msra.mxu0 %v2997
        %2999 = vmatprep.subr.mxu0 0.0
        %v3000 = vand.u32 %v1863, 4294901760
        %3001 = vmatpush1.msra.mxu0 %v3000
        %3002 = vmatprep.subr.mxu0 0.0
        %v3003 = vand.u32 %v1864, 4294901760
        %3004 = vmatpush1.msra.mxu0 %v3003
        %3005 = vmatprep.subr.mxu0 0.0
        %v3006 = vand.u32 %v1865, 4294901760
        %3007 = vmatpush1.msra.mxu0 %v3006
        %3008 = vmatprep.subr.mxu0 0.0
        %v3009 = vand.u32 %v1866, 4294901760
        %3010 = vmatpush1.msra.mxu0 %v3009
        %3011 = vmatprep.subr.mxu0 0.0
        %v3012 = vand.u32 %v1867, 4294901760
        %3013 = vmatpush1.msra.mxu0 %v3012
        %3014 = vmatprep.subr.mxu0 0.0
        %v3015 = vand.u32 %v1868, 4294901760
        %3016 = vmatpush1.msra.mxu0 %v3015
        %3017 = vmatprep.subr.mxu0 0.0
        %v3018 = vand.u32 %v1869, 4294901760
        %3019 = vmatpush1.msra.mxu0 %v3018
        %3020 = vmatprep.subr.mxu0 0.0
        %v3021 = vand.u32 %v1870, 4294901760
        %3022 = vmatpush1.msra.mxu0 %v3021
        %3023 = vmatprep.subr.mxu0 0.0
        %v3024 = vand.u32 %v1871, 4294901760
        %3025 = vmatpush1.msra.mxu0 %v3024
        %3026 = vmatprep.subr.mxu0 0.0
        %v3027 = vand.u32 %v1872, 4294901760
        %3028 = vmatpush1.msra.mxu0 %v3027
        %3029 = vmatprep.subr.mxu0 0.0
        %v3030 = vand.u32 %v1873, 4294901760
        %3031 = vmatpush1.msra.mxu0 %v3030
        %3032 = vmatprep.subr.mxu0 0.0
        %v3033 = vand.u32 %v1874, 4294901760
        %3034 = vmatpush1.msra.mxu0 %v3033
        %3035 = vmatprep.subr.mxu0 0.0
        %v3036 = vand.u32 %v1875, 4294901760
        %3037 = vmatpush1.msra.mxu0 %v3036
        %3038 = vmatprep.subr.mxu0 0.0
        %3039 = vmatpush1.msra.mxu0 0.0
        %3040 = vmatprep.subr.mxu0 0.0
        %3041 = vmatpush1.msra.mxu0 0.0
        %3042 = vmatprep.subr.mxu0 0.0
        %3043 = vmatpush1.msra.mxu0 0.0
        %3044 = vmatprep.subr.mxu0 0.0
        %3045 = vmatpush1.msra.mxu0 0.0
        %3046 = vmatprep.subr.mxu0 0.0
        %3047 = vmatpush1.msra.mxu0 0.0
        %3048 = vmatprep.subr.mxu0 0.0
        %3049 = vmatpush1.msra.mxu0 0.0
        %3050 = vmatprep.subr.mxu0 0.0
        %3051 = vmatpush1.msra.mxu0 0.0
        %3052 = vmatprep.subr.mxu0 0.0
        %3053 = vmatpush1.msra.mxu0 0.0
        %3054 = vmatprep.subr.mxu0 0.0
        %3055 = vmatpush1.msra.mxu0 0.0
        %3056 = vmatprep.subr.mxu0 0.0
        %3057 = vmatpush1.msra.mxu0 0.0
        %3058 = vmatprep.subr.mxu0 0.0
        %3059 = vmatpush1.msra.mxu0 0.0
        %3060 = vmatprep.subr.mxu0 0.0
        %3061 = vmatpush1.msra.mxu0 0.0
        %3062 = vmatprep.subr.mxu0 0.0
        %3063 = vmatpush1.msra.mxu0 0.0
        %3064 = vmatprep.subr.mxu0 0.0
        %3065 = vmatpush1.msra.mxu0 0.0
        %3066 = vmatprep.subr.mxu0 0.0
        %3067 = vmatpush1.msra.mxu0 0.0
        %3068 = vmatprep.subr.mxu0 0.0
        %3069 = vmatpush1.msra.mxu0 0.0
        %3070 = vmatprep.mubr.f32.mxu0 0.0
        %v3071 = vand.u32 %v1843, 4294901760
        %3072 = vmatmul.mubr.f32.gmra.mrb[0].mxu0 %v3071
        %v3073 = vpop.f32.mrb[0].mxu0
        %v3074 = vadd.f32 %v2897, %v3073
        %v3075 = vpop.f32.mrb[0].mxu0
        %3076 = vmatprep.mubr.f32.mxu0 0.0
        %v3077 = vand.u32 %v1844, 4294901760
        %3078 = vmatmul.mubr.f32.gmra.mrb[0].mxu0 %v3077
        %v3079 = vpop.f32.mrb[0].mxu0
        %v3080 = vadd.f32 %v2903, %v3079
        %v3081 = vpop.f32.mrb[0].mxu0
        %3082 = vmatprep.mubr.f32.mxu0 0.0
        %v3083 = vand.u32 %v1845, 4294901760
        %3084 = vmatmul.mubr.f32.gmra.mrb[0].mxu0 %v3083
        %v3085 = vpop.f32.mrb[0].mxu0
        %v3086 = vadd.f32 %v2909, %v3085
        %v3087 = vpop.f32.mrb[0].mxu0
        %3088 = vmatprep.mubr.f32.mxu0 0.0
        %v3089 = vand.u32 %v1846, 4294901760
        %3090 = vmatmul.mubr.f32.gmra.mrb[0].mxu0 %v3089
        %v3091 = vpop.f32.mrb[0].mxu0
        %v3092 = vadd.f32 %v2915, %v3091
        %v3093 = vpop.f32.mrb[0].mxu0
        %3094 = vmatprep.mubr.f32.mxu0 0.0
        %v3095 = vand.u32 %v1847, 4294901760
        %3096 = vmatmul.mubr.f32.gmra.mrb[0].mxu0 %v3095
        %v3097 = vpop.f32.mrb[0].mxu0
        %v3098 = vadd.f32 %v2921, %v3097
        %v3099 = vpop.f32.mrb[0].mxu0
        %3100 = vmatprep.mubr.f32.mxu0 0.0
        %v3101 = vand.u32 %v1848, 4294901760
        %3102 = vmatmul.mubr.f32.gmra.mrb[0].mxu0 %v3101
        %v3103 = vpop.f32.mrb[0].mxu0
        %v3104 = vadd.f32 %v2927, %v3103
        %v3105 = vpop.f32.mrb[0].mxu0
        %3106 = vmatprep.mubr.f32.mxu0 0.0
        %v3107 = vand.u32 %v1849, 4294901760
        %3108 = vmatmul.mubr.f32.gmra.mrb[0].mxu0 %v3107
        %v3109 = vpop.f32.mrb[0].mxu0
        %v3110 = vadd.f32 %v2933, %v3109
        %v3111 = vpop.f32.mrb[0].mxu0
        %3112 = vmatprep.mubr.f32.mxu0 0.0
        %v3113 = vand.u32 %v1850, 4294901760
        %3114 = vmatmul.mubr.f32.gmra.mrb[0].mxu0 %v3113
        %v3115 = vpop.f32.mrb[0].mxu0
        %v3116 = vadd.f32 %v2939, %v3115
        %v3117 = vpop.f32.mrb[0].mxu0
        %3118 = vmatprep.mubr.f32.mxu0 0.0
        %v3119 = vand.u32 %v1851, 4294901760
        %3120 = vmatmul.mubr.f32.gmra.mrb[0].mxu0 %v3119
        %v3121 = vpop.f32.mrb[0].mxu0
        %v3122 = vadd.f32 %v2945, %v3121
        %v3123 = vpop.f32.mrb[0].mxu0
        %3124 = vmatprep.mubr.f32.mxu0 0.0
        %v3125 = vand.u32 %v1852, 4294901760
        %3126 = vmatmul.mubr.f32.gmra.mrb[0].mxu0 %v3125
        %v3127 = vpop.f32.mrb[0].mxu0
        %v3128 = vadd.f32 %v2951, %v3127
        %v3129 = vpop.f32.mrb[0].mxu0
        %3130 = vmatprep.mubr.f32.mxu0 0.0
        %v3131 = vand.u32 %v1853, 4294901760
        %3132 = vmatmul.mubr.f32.gmra.mrb[0].mxu0 %v3131
        %v3133 = vpop.f32.mrb[0].mxu0
        %v3134 = vadd.f32 %v2957, %v3133
        %v3135 = vpop.f32.mrb[0].mxu0
        %3136 = vmatprep.mubr.f32.mxu0 0.0
        %v3137 = vand.u32 %v1854, 4294901760
        %3138 = vmatmul.mubr.f32.gmra.mrb[0].mxu0 %v3137
        %v3139 = vpop.f32.mrb[0].mxu0
        %v3140 = vadd.f32 %v2963, %v3139
        %v3141 = vpop.f32.mrb[0].mxu0
        %3142 = vmatprep.mubr.f32.mxu0 0.0
        %v3143 = vand.u32 %v1855, 4294901760
        %3144 = vmatmul.mubr.f32.gmra.mrb[0].mxu0 %v3143
        %v3145 = vpop.f32.mrb[0].mxu0
        %v3146 = vadd.f32 %v2969, %v3145
        %v3147 = vpop.f32.mrb[0].mxu0
        %3148 = vmatprep.mubr.f32.mxu0 0.0
        %v3149 = vand.u32 %v1856, 4294901760
        %3150 = vmatmul.mubr.f32.gmra.mrb[0].mxu0 %v3149
        %v3151 = vpop.f32.mrb[0].mxu0
        %v3152 = vadd.f32 %v2975, %v3151
        %v3153 = vpop.f32.mrb[0].mxu0
        %3154 = vmatprep.mubr.f32.mxu0 0.0
        %v3155 = vand.u32 %v1857, 4294901760
        %3156 = vmatmul.mubr.f32.gmra.mrb[0].mxu0 %v3155
        %v3157 = vpop.f32.mrb[0].mxu0
        %v3158 = vadd.f32 %v2981, %v3157
        %v3159 = vpop.f32.mrb[0].mxu0
        %3160 = vmatprep.mubr.f32.mxu0 0.0
        %v3161 = vand.u32 %v1858, 4294901760
        %3162 = vmatmul.mubr.f32.gmra.mrb[0].mxu0 %v3161
        %v3163 = vpop.f32.mrb[0].mxu0
        %v3164 = vadd.f32 %v2987, %v3163
        %v3165 = vpop.f32.mrb[0].mxu0
        %3166 = vdwg.mxu0
        %v3167 = vtanh.pop %v3074
        %v3168 = vtanh.pop %v3080
        %v3169 = vtanh.pop %v3086
        %v3170 = vtanh.pop %v3092
        %v3171 = vtanh.pop %v3098
        %v3172 = vtanh.pop %v3104
        %v3173 = vtanh.pop %v3110
        %v3174 = vtanh.pop %v3116
        %v3175 = vtanh.pop %v3122
        %v3176 = vtanh.pop %v3128
        %v3177 = vtanh.pop %v3134
        %v3178 = vtanh.pop %v3140
        %v3179 = vtanh.pop %v3146
        %v3180 = vtanh.pop %v3152
        %v3181 = vtanh.pop %v3158
        %v3182 = vtanh.pop %v3164
        %v3183 = vld [vmem:[%s5] sm:$0xff]
        %v3184 = vld [vmem:[%s6] sm:$0xff]
        %3186 = vset.pattern.permute.xlu0 0
        %3187 = vperm.xlu0 %3186, %v3184
        %v3188 = vpop.permute.xlu0 %3187
        %3190 = vmatprep.subr.mxu0 0.0
        %v3191 = vand.u32 %v3167, 4294901760
        %3192 = vmatpush1.xpose.msra.mxu0 %v3191
        %3193 = vmatprep.subr.mxu0 0.0
        %v3194 = vand.u32 %v3168, 4294901760
        %3195 = vmatpush1.xpose.msra.mxu0 %v3194
        %3196 = vmatprep.subr.mxu0 0.0
        %v3197 = vand.u32 %v3169, 4294901760
        %3198 = vmatpush1.xpose.msra.mxu0 %v3197
        %3199 = vmatprep.subr.mxu0 0.0
        %v3200 = vand.u32 %v3170, 4294901760
        %3201 = vmatpush1.xpose.msra.mxu0 %v3200
        %3202 = vmatprep.subr.mxu0 0.0
        %v3203 = vand.u32 %v3171, 4294901760
        %3204 = vmatpush1.xpose.msra.mxu0 %v3203
        %3205 = vmatprep.subr.mxu0 0.0
        %v3206 = vand.u32 %v3172, 4294901760
        %3207 = vmatpush1.xpose.msra.mxu0 %v3206
        %3208 = vmatprep.subr.mxu0 0.0
        %v3209 = vand.u32 %v3173, 4294901760
        %3210 = vmatpush1.xpose.msra.mxu0 %v3209
        %3211 = vmatprep.subr.mxu0 0.0
        %v3212 = vand.u32 %v3174, 4294901760
        %3213 = vmatpush1.xpose.msra.mxu0 %v3212
        %3214 = vmatprep.subr.mxu0 0.0
        %v3215 = vand.u32 %v3175, 4294901760
        %3216 = vmatpush1.xpose.msra.mxu0 %v3215
        %3217 = vmatprep.subr.mxu0 0.0
        %v3218 = vand.u32 %v3176, 4294901760
        %3219 = vmatpush1.xpose.msra.mxu0 %v3218
        %3220 = vmatprep.subr.mxu0 0.0
        %v3221 = vand.u32 %v3177, 4294901760
        %3222 = vmatpush1.xpose.msra.mxu0 %v3221
        %3223 = vmatprep.subr.mxu0 0.0
        %v3224 = vand.u32 %v3178, 4294901760
        %3225 = vmatpush1.xpose.msra.mxu0 %v3224
        %3226 = vmatprep.subr.mxu0 0.0
        %v3227 = vand.u32 %v3179, 4294901760
        %3228 = vmatpush1.xpose.msra.mxu0 %v3227
        %3229 = vmatprep.subr.mxu0 0.0
        %v3230 = vand.u32 %v3180, 4294901760
        %3231 = vmatpush1.xpose.msra.mxu0 %v3230
        %3232 = vmatprep.subr.mxu0 0.0
        %v3233 = vand.u32 %v3181, 4294901760
        %3234 = vmatpush1.xpose.msra.mxu0 %v3233
        %3235 = vmatprep.subr.mxu0 0.0
        %v3236 = vand.u32 %v3182, 4294901760
        %3237 = vmatpush1.xpose.msra.mxu0 %v3236
        %3238 = vmatprep.subr.mxu0 0.0
        %3239 = vmatpush1.xpose.msra.mxu0 0.0
        %3240 = vmatprep.subr.mxu0 0.0
        %3241 = vmatpush1.xpose.msra.mxu0 0.0
        %3242 = vmatprep.subr.mxu0 0.0
        %3243 = vmatpush1.xpose.msra.mxu0 0.0
        %3244 = vmatprep.subr.mxu0 0.0
        %3245 = vmatpush1.xpose.msra.mxu0 0.0
        %3246 = vmatprep.subr.mxu0 0.0
        %3247 = vmatpush1.xpose.msra.mxu0 0.0
        %3248 = vmatprep.subr.mxu0 0.0
        %3249 = vmatpush1.xpose.msra.mxu0 0.0
        %3250 = vmatprep.subr.mxu0 0.0
        %3251 = vmatpush1.xpose.msra.mxu0 0.0
        %3252 = vmatprep.subr.mxu0 0.0
        %3253 = vmatpush1.xpose.msra.mxu0 0.0
        %3254 = vmatprep.subr.mxu0 0.0
        %3255 = vmatpush1.xpose.msra.mxu0 0.0
        %3256 = vmatprep.subr.mxu0 0.0
        %3257 = vmatpush1.xpose.msra.mxu0 0.0
        %3258 = vmatprep.subr.mxu0 0.0
        %3259 = vmatpush1.xpose.msra.mxu0 0.0
        %3260 = vmatprep.subr.mxu0 0.0
        %3261 = vmatpush1.xpose.msra.mxu0 0.0
        %3262 = vmatprep.subr.mxu0 0.0
        %3263 = vmatpush1.xpose.msra.mxu0 0.0
        %3264 = vmatprep.subr.mxu0 0.0
        %3265 = vmatpush1.xpose.msra.mxu0 0.0
        %3266 = vmatprep.subr.mxu0 0.0
        %3267 = vmatpush1.xpose.msra.mxu0 0.0
        %3268 = vmatprep.subr.mxu0 0.0
        %3269 = vmatpush1.xpose.msra.mxu0 0.0
        %3270 = vmatprep.mubr.f32.mxu0 0.0
        %v3271 = vand.u32 %v3183, 4294901760
        %v3272 = vsub.f32 %v3183, %v3271
        %v3273 = vand.u32 %v3272, 4294901760
        %v3274 = vsub.f32 %v3272, %v3273
        %v3275 = vand.u32 %v3274, 4294901760
        %3276 = vmatmul.mubr.f32.gmra.mrb[0].mxu0 %v3275
        %v3277 = vpop.f32.mrb[0].mxu0
        %v3278 = vadd.f32 %v3188, %v3277
        %v3279 = vpop.f32.mrb[0].mxu0
        %3280 = vdwg.mxu0
        %3281 = vmatprep.subr.mxu0 0.0
        %v3282 = vand.u32 %v3167, 4294901760
        %v3283 = vsub.f32 %v3167, %v3282
        %v3284 = vand.u32 %v3283, 4294901760
        %v3285 = vsub.f32 %v3283, %v3284
        %v3286 = vand.u32 %v3285, 4294901760
        %3287 = vmatpush1.xpose.msra.mxu0 %v3286
        %3288 = vmatprep.subr.mxu0 0.0
        %v3289 = vand.u32 %v3168, 4294901760
        %v3290 = vsub.f32 %v3168, %v3289
        %v3291 = vand.u32 %v3290, 4294901760
        %v3292 = vsub.f32 %v3290, %v3291
        %v3293 = vand.u32 %v3292, 4294901760
        %3294 = vmatpush1.xpose.msra.mxu0 %v3293
        %3295 = vmatprep.subr.mxu0 0.0
        %v3296 = vand.u32 %v3169, 4294901760
        %v3297 = vsub.f32 %v3169, %v3296
        %v3298 = vand.u32 %v3297, 4294901760
        %v3299 = vsub.f32 %v3297, %v3298
        %v3300 = vand.u32 %v3299, 4294901760
        %3301 = vmatpush1.xpose.msra.mxu0 %v3300
        %3302 = vmatprep.subr.mxu0 0.0
        %v3303 = vand.u32 %v3170, 4294901760
        %v3304 = vsub.f32 %v3170, %v3303
        %v3305 = vand.u32 %v3304, 4294901760
        %v3306 = vsub.f32 %v3304, %v3305
        %v3307 = vand.u32 %v3306, 4294901760
        %3308 = vmatpush1.xpose.msra.mxu0 %v3307
        %3309 = vmatprep.subr.mxu0 0.0
        %v3310 = vand.u32 %v3171, 4294901760
        %v3311 = vsub.f32 %v3171, %v3310
        %v3312 = vand.u32 %v3311, 4294901760
        %v3313 = vsub.f32 %v3311, %v3312
        %v3314 = vand.u32 %v3313, 4294901760
        %3315 = vmatpush1.xpose.msra.mxu0 %v3314
        %3316 = vmatprep.subr.mxu0 0.0
        %v3317 = vand.u32 %v3172, 4294901760
        %v3318 = vsub.f32 %v3172, %v3317
        %v3319 = vand.u32 %v3318, 4294901760
        %v3320 = vsub.f32 %v3318, %v3319
        %v3321 = vand.u32 %v3320, 4294901760
        %3322 = vmatpush1.xpose.msra.mxu0 %v3321
        %3323 = vmatprep.subr.mxu0 0.0
        %v3324 = vand.u32 %v3173, 4294901760
        %v3325 = vsub.f32 %v3173, %v3324
        %v3326 = vand.u32 %v3325, 4294901760
        %v3327 = vsub.f32 %v3325, %v3326
        %v3328 = vand.u32 %v3327, 4294901760
        %3329 = vmatpush1.xpose.msra.mxu0 %v3328
        %3330 = vmatprep.subr.mxu0 0.0
        %v3331 = vand.u32 %v3174, 4294901760
        %v3332 = vsub.f32 %v3174, %v3331
        %v3333 = vand.u32 %v3332, 4294901760
        %v3334 = vsub.f32 %v3332, %v3333
        %v3335 = vand.u32 %v3334, 4294901760
        %3336 = vmatpush1.xpose.msra.mxu0 %v3335
        %3337 = vmatprep.subr.mxu0 0.0
        %v3338 = vand.u32 %v3175, 4294901760
        %v3339 = vsub.f32 %v3175, %v3338
        %v3340 = vand.u32 %v3339, 4294901760
        %v3341 = vsub.f32 %v3339, %v3340
        %v3342 = vand.u32 %v3341, 4294901760
        %3343 = vmatpush1.xpose.msra.mxu0 %v3342
        %3344 = vmatprep.subr.mxu0 0.0
        %v3345 = vand.u32 %v3176, 4294901760
        %v3346 = vsub.f32 %v3176, %v3345
        %v3347 = vand.u32 %v3346, 4294901760
        %v3348 = vsub.f32 %v3346, %v3347
        %v3349 = vand.u32 %v3348, 4294901760
        %3350 = vmatpush1.xpose.msra.mxu0 %v3349
        %3351 = vmatprep.subr.mxu0 0.0
        %v3352 = vand.u32 %v3177, 4294901760
        %v3353 = vsub.f32 %v3177, %v3352
        %v3354 = vand.u32 %v3353, 4294901760
        %v3355 = vsub.f32 %v3353, %v3354
        %v3356 = vand.u32 %v3355, 4294901760
        %3357 = vmatpush1.xpose.msra.mxu0 %v3356
        %3358 = vmatprep.subr.mxu0 0.0
        %v3359 = vand.u32 %v3178, 4294901760
        %v3360 = vsub.f32 %v3178, %v3359
        %v3361 = vand.u32 %v3360, 4294901760
        %v3362 = vsub.f32 %v3360, %v3361
        %v3363 = vand.u32 %v3362, 4294901760
        %3364 = vmatpush1.xpose.msra.mxu0 %v3363
        %3365 = vmatprep.subr.mxu0 0.0
        %v3366 = vand.u32 %v3179, 4294901760
        %v3367 = vsub.f32 %v3179, %v3366
        %v3368 = vand.u32 %v3367, 4294901760
        %v3369 = vsub.f32 %v3367, %v3368
        %v3370 = vand.u32 %v3369, 4294901760
        %3371 = vmatpush1.xpose.msra.mxu0 %v3370
        %3372 = vmatprep.subr.mxu0 0.0
        %v3373 = vand.u32 %v3180, 4294901760
        %v3374 = vsub.f32 %v3180, %v3373
        %v3375 = vand.u32 %v3374, 4294901760
        %v3376 = vsub.f32 %v3374, %v3375
        %v3377 = vand.u32 %v3376, 4294901760
        %3378 = vmatpush1.xpose.msra.mxu0 %v3377
        %3379 = vmatprep.subr.mxu0 0.0
        %v3380 = vand.u32 %v3181, 4294901760
        %v3381 = vsub.f32 %v3181, %v3380
        %v3382 = vand.u32 %v3381, 4294901760
        %v3383 = vsub.f32 %v3381, %v3382
        %v3384 = vand.u32 %v3383, 4294901760
        %3385 = vmatpush1.xpose.msra.mxu0 %v3384
        %3386 = vmatprep.subr.mxu0 0.0
        %v3387 = vand.u32 %v3182, 4294901760
        %v3388 = vsub.f32 %v3182, %v3387
        %v3389 = vand.u32 %v3388, 4294901760
        %v3390 = vsub.f32 %v3388, %v3389
        %v3391 = vand.u32 %v3390, 4294901760
        %3392 = vmatpush1.xpose.msra.mxu0 %v3391
        %3393 = vmatprep.subr.mxu0 0.0
        %3394 = vmatpush1.xpose.msra.mxu0 0.0
        %3395 = vmatprep.subr.mxu0 0.0
        %3396 = vmatpush1.xpose.msra.mxu0 0.0
        %3397 = vmatprep.subr.mxu0 0.0
        %3398 = vmatpush1.xpose.msra.mxu0 0.0
        %3399 = vmatprep.subr.mxu0 0.0
        %3400 = vmatpush1.xpose.msra.mxu0 0.0
        %3401 = vmatprep.subr.mxu0 0.0
        %3402 = vmatpush1.xpose.msra.mxu0 0.0
        %3403 = vmatprep.subr.mxu0 0.0
        %3404 = vmatpush1.xpose.msra.mxu0 0.0
        %3405 = vmatprep.subr.mxu0 0.0
        %3406 = vmatpush1.xpose.msra.mxu0 0.0
        %3407 = vmatprep.subr.mxu0 0.0
        %3408 = vmatpush1.xpose.msra.mxu0 0.0
        %3409 = vmatprep.subr.mxu0 0.0
        %3410 = vmatpush1.xpose.msra.mxu0 0.0
        %3411 = vmatprep.subr.mxu0 0.0
        %3412 = vmatpush1.xpose.msra.mxu0 0.0
        %3413 = vmatprep.subr.mxu0 0.0
        %3414 = vmatpush1.xpose.msra.mxu0 0.0
        %3415 = vmatprep.subr.mxu0 0.0
        %3416 = vmatpush1.xpose.msra.mxu0 0.0
        %3417 = vmatprep.subr.mxu0 0.0
        %3418 = vmatpush1.xpose.msra.mxu0 0.0
        %3419 = vmatprep.subr.mxu0 0.0
        %3420 = vmatpush1.xpose.msra.mxu0 0.0
        %3421 = vmatprep.subr.mxu0 0.0
        %3422 = vmatpush1.xpose.msra.mxu0 0.0
        %3423 = vmatprep.subr.mxu0 0.0
        %3424 = vmatpush1.xpose.msra.mxu0 0.0
        %3425 = vmatprep.mubr.f32.mxu0 0.0
        %v3426 = vand.u32 %v3183, 4294901760
        %3427 = vmatmul.mubr.f32.gmra.mrb[0].mxu0 %v3426
        %v3428 = vpop.f32.mrb[0].mxu0
        %v3429 = vadd.f32 %v3278, %v3428
        %v3430 = vpop.f32.mrb[0].mxu0
        %3431 = vdwg.mxu0
        %3432 = vmatprep.subr.mxu0 0.0
        %v3433 = vand.u32 %v3167, 4294901760
        %v3434 = vsub.f32 %v3167, %v3433
        %3435 = vmatpush1.xpose.msra.mxu0 %v3434
        %3436 = vmatprep.subr.mxu0 0.0
        %v3437 = vand.u32 %v3168, 4294901760
        %v3438 = vsub.f32 %v3168, %v3437
        %3439 = vmatpush1.xpose.msra.mxu0 %v3438
        %3440 = vmatprep.subr.mxu0 0.0
        %v3441 = vand.u32 %v3169, 4294901760
        %v3442 = vsub.f32 %v3169, %v3441
        %3443 = vmatpush1.xpose.msra.mxu0 %v3442
        %3444 = vmatprep.subr.mxu0 0.0
        %v3445 = vand.u32 %v3170, 4294901760
        %v3446 = vsub.f32 %v3170, %v3445
        %3447 = vmatpush1.xpose.msra.mxu0 %v3446
        %3448 = vmatprep.subr.mxu0 0.0
        %v3449 = vand.u32 %v3171, 4294901760
        %v3450 = vsub.f32 %v3171, %v3449
        %3451 = vmatpush1.xpose.msra.mxu0 %v3450
        %3452 = vmatprep.subr.mxu0 0.0
        %v3453 = vand.u32 %v3172, 4294901760
        %v3454 = vsub.f32 %v3172, %v3453
        %3455 = vmatpush1.xpose.msra.mxu0 %v3454
        %3456 = vmatprep.subr.mxu0 0.0
        %v3457 = vand.u32 %v3173, 4294901760
        %v3458 = vsub.f32 %v3173, %v3457
        %3459 = vmatpush1.xpose.msra.mxu0 %v3458
        %3460 = vmatprep.subr.mxu0 0.0
        %v3461 = vand.u32 %v3174, 4294901760
        %v3462 = vsub.f32 %v3174, %v3461
        %3463 = vmatpush1.xpose.msra.mxu0 %v3462
        %3464 = vmatprep.subr.mxu0 0.0
        %v3465 = vand.u32 %v3175, 4294901760
        %v3466 = vsub.f32 %v3175, %v3465
        %3467 = vmatpush1.xpose.msra.mxu0 %v3466
        %3468 = vmatprep.subr.mxu0 0.0
        %v3469 = vand.u32 %v3176, 4294901760
        %v3470 = vsub.f32 %v3176, %v3469
        %3471 = vmatpush1.xpose.msra.mxu0 %v3470
        %3472 = vmatprep.subr.mxu0 0.0
        %v3473 = vand.u32 %v3177, 4294901760
        %v3474 = vsub.f32 %v3177, %v3473
        %3475 = vmatpush1.xpose.msra.mxu0 %v3474
        %3476 = vmatprep.subr.mxu0 0.0
        %v3477 = vand.u32 %v3178, 4294901760
        %v3478 = vsub.f32 %v3178, %v3477
        %3479 = vmatpush1.xpose.msra.mxu0 %v3478
        %3480 = vmatprep.subr.mxu0 0.0
        %v3481 = vand.u32 %v3179, 4294901760
        %v3482 = vsub.f32 %v3179, %v3481
        %3483 = vmatpush1.xpose.msra.mxu0 %v3482
        %3484 = vmatprep.subr.mxu0 0.0
        %v3485 = vand.u32 %v3180, 4294901760
        %v3486 = vsub.f32 %v3180, %v3485
        %3487 = vmatpush1.xpose.msra.mxu0 %v3486
        %3488 = vmatprep.subr.mxu0 0.0
        %v3489 = vand.u32 %v3181, 4294901760
        %v3490 = vsub.f32 %v3181, %v3489
        %3491 = vmatpush1.xpose.msra.mxu0 %v3490
        %3492 = vmatprep.subr.mxu0 0.0
        %v3493 = vand.u32 %v3182, 4294901760
        %v3494 = vsub.f32 %v3182, %v3493
        %3495 = vmatpush1.xpose.msra.mxu0 %v3494
        %3496 = vmatprep.subr.mxu0 0.0
        %3497 = vmatpush1.xpose.msra.mxu0 0.0
        %3498 = vmatprep.subr.mxu0 0.0
        %3499 = vmatpush1.xpose.msra.mxu0 0.0
        %3500 = vmatprep.subr.mxu0 0.0
        %3501 = vmatpush1.xpose.msra.mxu0 0.0
        %3502 = vmatprep.subr.mxu0 0.0
        %3503 = vmatpush1.xpose.msra.mxu0 0.0
        %3504 = vmatprep.subr.mxu0 0.0
        %3505 = vmatpush1.xpose.msra.mxu0 0.0
        %3506 = vmatprep.subr.mxu0 0.0
        %3507 = vmatpush1.xpose.msra.mxu0 0.0
        %3508 = vmatprep.subr.mxu0 0.0
        %3509 = vmatpush1.xpose.msra.mxu0 0.0
        %3510 = vmatprep.subr.mxu0 0.0
        %3511 = vmatpush1.xpose.msra.mxu0 0.0
        %3512 = vmatprep.subr.mxu0 0.0
        %3513 = vmatpush1.xpose.msra.mxu0 0.0
        %3514 = vmatprep.subr.mxu0 0.0
        %3515 = vmatpush1.xpose.msra.mxu0 0.0
        %3516 = vmatprep.subr.mxu0 0.0
        %3517 = vmatpush1.xpose.msra.mxu0 0.0
        %3518 = vmatprep.subr.mxu0 0.0
        %3519 = vmatpush1.xpose.msra.mxu0 0.0
        %3520 = vmatprep.subr.mxu0 0.0
        %3521 = vmatpush1.xpose.msra.mxu0 0.0
        %3522 = vmatprep.subr.mxu0 0.0
        %3523 = vmatpush1.xpose.msra.mxu0 0.0
        %3524 = vmatprep.subr.mxu0 0.0
        %3525 = vmatpush1.xpose.msra.mxu0 0.0
        %3526 = vmatprep.subr.mxu0 0.0
        %3527 = vmatpush1.xpose.msra.mxu0 0.0
        %3528 = vmatprep.mubr.f32.mxu0 0.0
        %v3529 = vand.u32 %v3183, 4294901760
        %v3530 = vsub.f32 %v3183, %v3529
        %3531 = vmatmul.mubr.f32.gmra.mrb[0].mxu0 %v3530
        %v3532 = vpop.f32.mrb[0].mxu0
        %v3533 = vadd.f32 %v3429, %v3532
        %v3534 = vpop.f32.mrb[0].mxu0
        %3535 = vdwg.mxu0
        %3536 = vmatprep.subr.mxu0 0.0
        %v3537 = vand.u32 %v3167, 4294901760
        %3538 = vmatpush1.xpose.msra.mxu0 %v3537
        %3539 = vmatprep.subr.mxu0 0.0
        %v3540 = vand.u32 %v3168, 4294901760
        %3541 = vmatpush1.xpose.msra.mxu0 %v3540
        %3542 = vmatprep.subr.mxu0 0.0
        %v3543 = vand.u32 %v3169, 4294901760
        %3544 = vmatpush1.xpose.msra.mxu0 %v3543
        %3545 = vmatprep.subr.mxu0 0.0
        %v3546 = vand.u32 %v3170, 4294901760
        %3547 = vmatpush1.xpose.msra.mxu0 %v3546
        %3548 = vmatprep.subr.mxu0 0.0
        %v3549 = vand.u32 %v3171, 4294901760
        %3550 = vmatpush1.xpose.msra.mxu0 %v3549
        %3551 = vmatprep.subr.mxu0 0.0
        %v3552 = vand.u32 %v3172, 4294901760
        %3553 = vmatpush1.xpose.msra.mxu0 %v3552
        %3554 = vmatprep.subr.mxu0 0.0
        %v3555 = vand.u32 %v3173, 4294901760
        %3556 = vmatpush1.xpose.msra.mxu0 %v3555
        %3557 = vmatprep.subr.mxu0 0.0
        %v3558 = vand.u32 %v3174, 4294901760
        %3559 = vmatpush1.xpose.msra.mxu0 %v3558
        %3560 = vmatprep.subr.mxu0 0.0
        %v3561 = vand.u32 %v3175, 4294901760
        %3562 = vmatpush1.xpose.msra.mxu0 %v3561
        %3563 = vmatprep.subr.mxu0 0.0
        %v3564 = vand.u32 %v3176, 4294901760
        %3565 = vmatpush1.xpose.msra.mxu0 %v3564
        %3566 = vmatprep.subr.mxu0 0.0
        %v3567 = vand.u32 %v3177, 4294901760
        %3568 = vmatpush1.xpose.msra.mxu0 %v3567
        %3569 = vmatprep.subr.mxu0 0.0
        %v3570 = vand.u32 %v3178, 4294901760
        %3571 = vmatpush1.xpose.msra.mxu0 %v3570
        %3572 = vmatprep.subr.mxu0 0.0
        %v3573 = vand.u32 %v3179, 4294901760
        %3574 = vmatpush1.xpose.msra.mxu0 %v3573
        %3575 = vmatprep.subr.mxu0 0.0
        %v3576 = vand.u32 %v3180, 4294901760
        %3577 = vmatpush1.xpose.msra.mxu0 %v3576
        %3578 = vmatprep.subr.mxu0 0.0
        %v3579 = vand.u32 %v3181, 4294901760
        %3580 = vmatpush1.xpose.msra.mxu0 %v3579
        %3581 = vmatprep.subr.mxu0 0.0
        %v3582 = vand.u32 %v3182, 4294901760
        %3583 = vmatpush1.xpose.msra.mxu0 %v3582
        %3584 = vmatprep.subr.mxu0 0.0
        %3585 = vmatpush1.xpose.msra.mxu0 0.0
        %3586 = vmatprep.subr.mxu0 0.0
        %3587 = vmatpush1.xpose.msra.mxu0 0.0
        %3588 = vmatprep.subr.mxu0 0.0
        %3589 = vmatpush1.xpose.msra.mxu0 0.0
        %3590 = vmatprep.subr.mxu0 0.0
        %3591 = vmatpush1.xpose.msra.mxu0 0.0
        %3592 = vmatprep.subr.mxu0 0.0
        %3593 = vmatpush1.xpose.msra.mxu0 0.0
        %3594 = vmatprep.subr.mxu0 0.0
        %3595 = vmatpush1.xpose.msra.mxu0 0.0
        %3596 = vmatprep.subr.mxu0 0.0
        %3597 = vmatpush1.xpose.msra.mxu0 0.0
        %3598 = vmatprep.subr.mxu0 0.0
        %3599 = vmatpush1.xpose.msra.mxu0 0.0
        %3600 = vmatprep.subr.mxu0 0.0
        %3601 = vmatpush1.xpose.msra.mxu0 0.0
        %3602 = vmatprep.subr.mxu0 0.0
        %3603 = vmatpush1.xpose.msra.mxu0 0.0
        %3604 = vmatprep.subr.mxu0 0.0
        %3605 = vmatpush1.xpose.msra.mxu0 0.0
        %3606 = vmatprep.subr.mxu0 0.0
        %3607 = vmatpush1.xpose.msra.mxu0 0.0
        %3608 = vmatprep.subr.mxu0 0.0
        %3609 = vmatpush1.xpose.msra.mxu0 0.0
        %3610 = vmatprep.subr.mxu0 0.0
        %3611 = vmatpush1.xpose.msra.mxu0 0.0
        %3612 = vmatprep.subr.mxu0 0.0
        %3613 = vmatpush1.xpose.msra.mxu0 0.0
        %3614 = vmatprep.subr.mxu0 0.0
        %3615 = vmatpush1.xpose.msra.mxu0 0.0
        %3616 = vmatprep.mubr.f32.mxu0 0.0
        %v3617 = vand.u32 %v3183, 4294901760
        %v3618 = vsub.f32 %v3183, %v3617
        %v3619 = vand.u32 %v3618, 4294901760
        %3620 = vmatmul.mubr.f32.gmra.mrb[0].mxu0 %v3619
        %v3621 = vpop.f32.mrb[0].mxu0
        %v3622 = vadd.f32 %v3533, %v3621
        %v3623 = vpop.f32.mrb[0].mxu0
        %3624 = vdwg.mxu0
        %3625 = vmatprep.subr.mxu0 0.0
        %v3626 = vand.u32 %v3167, 4294901760
        %v3627 = vsub.f32 %v3167, %v3626
        %v3628 = vand.u32 %v3627, 4294901760
        %3629 = vmatpush1.xpose.msra.mxu0 %v3628
        %3630 = vmatprep.subr.mxu0 0.0
        %v3631 = vand.u32 %v3168, 4294901760
        %v3632 = vsub.f32 %v3168, %v3631
        %v3633 = vand.u32 %v3632, 4294901760
        %3634 = vmatpush1.xpose.msra.mxu0 %v3633
        %3635 = vmatprep.subr.mxu0 0.0
        %v3636 = vand.u32 %v3169, 4294901760
        %v3637 = vsub.f32 %v3169, %v3636
        %v3638 = vand.u32 %v3637, 4294901760
        %3639 = vmatpush1.xpose.msra.mxu0 %v3638
        %3640 = vmatprep.subr.mxu0 0.0
        %v3641 = vand.u32 %v3170, 4294901760
        %v3642 = vsub.f32 %v3170, %v3641
        %v3643 = vand.u32 %v3642, 4294901760
        %3644 = vmatpush1.xpose.msra.mxu0 %v3643
        %3645 = vmatprep.subr.mxu0 0.0
        %v3646 = vand.u32 %v3171, 4294901760
        %v3647 = vsub.f32 %v3171, %v3646
        %v3648 = vand.u32 %v3647, 4294901760
        %3649 = vmatpush1.xpose.msra.mxu0 %v3648
        %3650 = vmatprep.subr.mxu0 0.0
        %v3651 = vand.u32 %v3172, 4294901760
        %v3652 = vsub.f32 %v3172, %v3651
        %v3653 = vand.u32 %v3652, 4294901760
        %3654 = vmatpush1.xpose.msra.mxu0 %v3653
        %3655 = vmatprep.subr.mxu0 0.0
        %v3656 = vand.u32 %v3173, 4294901760
        %v3657 = vsub.f32 %v3173, %v3656
        %v3658 = vand.u32 %v3657, 4294901760
        %3659 = vmatpush1.xpose.msra.mxu0 %v3658
        %3660 = vmatprep.subr.mxu0 0.0
        %v3661 = vand.u32 %v3174, 4294901760
        %v3662 = vsub.f32 %v3174, %v3661
        %v3663 = vand.u32 %v3662, 4294901760
        %3664 = vmatpush1.xpose.msra.mxu0 %v3663
        %3665 = vmatprep.subr.mxu0 0.0
        %v3666 = vand.u32 %v3175, 4294901760
        %v3667 = vsub.f32 %v3175, %v3666
        %v3668 = vand.u32 %v3667, 4294901760
        %3669 = vmatpush1.xpose.msra.mxu0 %v3668
        %3670 = vmatprep.subr.mxu0 0.0
        %v3671 = vand.u32 %v3176, 4294901760
        %v3672 = vsub.f32 %v3176, %v3671
        %v3673 = vand.u32 %v3672, 4294901760
        %3674 = vmatpush1.xpose.msra.mxu0 %v3673
        %3675 = vmatprep.subr.mxu0 0.0
        %v3676 = vand.u32 %v3177, 4294901760
        %v3677 = vsub.f32 %v3177, %v3676
        %v3678 = vand.u32 %v3677, 4294901760
        %3679 = vmatpush1.xpose.msra.mxu0 %v3678
        %3680 = vmatprep.subr.mxu0 0.0
        %v3681 = vand.u32 %v3178, 4294901760
        %v3682 = vsub.f32 %v3178, %v3681
        %v3683 = vand.u32 %v3682, 4294901760
        %3684 = vmatpush1.xpose.msra.mxu0 %v3683
        %3685 = vmatprep.subr.mxu0 0.0
        %v3686 = vand.u32 %v3179, 4294901760
        %v3687 = vsub.f32 %v3179, %v3686
        %v3688 = vand.u32 %v3687, 4294901760
        %3689 = vmatpush1.xpose.msra.mxu0 %v3688
        %3690 = vmatprep.subr.mxu0 0.0
        %v3691 = vand.u32 %v3180, 4294901760
        %v3692 = vsub.f32 %v3180, %v3691
        %v3693 = vand.u32 %v3692, 4294901760
        %3694 = vmatpush1.xpose.msra.mxu0 %v3693
        %3695 = vmatprep.subr.mxu0 0.0
        %v3696 = vand.u32 %v3181, 4294901760
        %v3697 = vsub.f32 %v3181, %v3696
        %v3698 = vand.u32 %v3697, 4294901760
        %3699 = vmatpush1.xpose.msra.mxu0 %v3698
        %3700 = vmatprep.subr.mxu0 0.0
        %v3701 = vand.u32 %v3182, 4294901760
        %v3702 = vsub.f32 %v3182, %v3701
        %v3703 = vand.u32 %v3702, 4294901760
        %3704 = vmatpush1.xpose.msra.mxu0 %v3703
        %3705 = vmatprep.subr.mxu0 0.0
        %3706 = vmatpush1.xpose.msra.mxu0 0.0
        %3707 = vmatprep.subr.mxu0 0.0
        %3708 = vmatpush1.xpose.msra.mxu0 0.0
        %3709 = vmatprep.subr.mxu0 0.0
        %3710 = vmatpush1.xpose.msra.mxu0 0.0
        %3711 = vmatprep.subr.mxu0 0.0
        %3712 = vmatpush1.xpose.msra.mxu0 0.0
        %3713 = vmatprep.subr.mxu0 0.0
        %3714 = vmatpush1.xpose.msra.mxu0 0.0
        %3715 = vmatprep.subr.mxu0 0.0
        %3716 = vmatpush1.xpose.msra.mxu0 0.0
        %3717 = vmatprep.subr.mxu0 0.0
        %3718 = vmatpush1.xpose.msra.mxu0 0.0
        %3719 = vmatprep.subr.mxu0 0.0
        %3720 = vmatpush1.xpose.msra.mxu0 0.0
        %3721 = vmatprep.subr.mxu0 0.0
        %3722 = vmatpush1.xpose.msra.mxu0 0.0
        %3723 = vmatprep.subr.mxu0 0.0
        %3724 = vmatpush1.xpose.msra.mxu0 0.0
        %3725 = vmatprep.subr.mxu0 0.0
        %3726 = vmatpush1.xpose.msra.mxu0 0.0
        %3727 = vmatprep.subr.mxu0 0.0
        %3728 = vmatpush1.xpose.msra.mxu0 0.0
        %3729 = vmatprep.subr.mxu0 0.0
        %3730 = vmatpush1.xpose.msra.mxu0 0.0
        %3731 = vmatprep.subr.mxu0 0.0
        %3732 = vmatpush1.xpose.msra.mxu0 0.0
        %3733 = vmatprep.subr.mxu0 0.0
        %3734 = vmatpush1.xpose.msra.mxu0 0.0
        %3735 = vmatprep.subr.mxu0 0.0
        %3736 = vmatpush1.xpose.msra.mxu0 0.0
        %3737 = vmatprep.mubr.f32.mxu0 0.0
        %v3738 = vand.u32 %v3183, 4294901760
        %3739 = vmatmul.mubr.f32.gmra.mrb[0].mxu0 %v3738
        %v3740 = vpop.f32.mrb[0].mxu0
        %v3741 = vadd.f32 %v3622, %v3740
        %v3742 = vpop.f32.mrb[0].mxu0
        %3743 = vdwg.mxu0
        %3744 = vmatprep.subr.mxu0 0.0
        %v3745 = vand.u32 %v3167, 4294901760
        %3746 = vmatpush1.xpose.msra.mxu0 %v3745
        %3747 = vmatprep.subr.mxu0 0.0
        %v3748 = vand.u32 %v3168, 4294901760
        %3749 = vmatpush1.xpose.msra.mxu0 %v3748
        %3750 = vmatprep.subr.mxu0 0.0
        %v3751 = vand.u32 %v3169, 4294901760
        %3752 = vmatpush1.xpose.msra.mxu0 %v3751
        %3753 = vmatprep.subr.mxu0 0.0
        %v3754 = vand.u32 %v3170, 4294901760
        %3755 = vmatpush1.xpose.msra.mxu0 %v3754
        %3756 = vmatprep.subr.mxu0 0.0
        %v3757 = vand.u32 %v3171, 4294901760
        %3758 = vmatpush1.xpose.msra.mxu0 %v3757
        %3759 = vmatprep.subr.mxu0 0.0
        %v3760 = vand.u32 %v3172, 4294901760
        %3761 = vmatpush1.xpose.msra.mxu0 %v3760
        %3762 = vmatprep.subr.mxu0 0.0
        %v3763 = vand.u32 %v3173, 4294901760
        %3764 = vmatpush1.xpose.msra.mxu0 %v3763
        %3765 = vmatprep.subr.mxu0 0.0
        %v3766 = vand.u32 %v3174, 4294901760
        %3767 = vmatpush1.xpose.msra.mxu0 %v3766
        %3768 = vmatprep.subr.mxu0 0.0
        %v3769 = vand.u32 %v3175, 4294901760
        %3770 = vmatpush1.xpose.msra.mxu0 %v3769
        %3771 = vmatprep.subr.mxu0 0.0
        %v3772 = vand.u32 %v3176, 4294901760
        %3773 = vmatpush1.xpose.msra.mxu0 %v3772
        %3774 = vmatprep.subr.mxu0 0.0
        %v3775 = vand.u32 %v3177, 4294901760
        %3776 = vmatpush1.xpose.msra.mxu0 %v3775
        %3777 = vmatprep.subr.mxu0 0.0
        %v3778 = vand.u32 %v3178, 4294901760
        %3779 = vmatpush1.xpose.msra.mxu0 %v3778
        %3780 = vmatprep.subr.mxu0 0.0
        %v3781 = vand.u32 %v3179, 4294901760
        %3782 = vmatpush1.xpose.msra.mxu0 %v3781
        %3783 = vmatprep.subr.mxu0 0.0
        %v3784 = vand.u32 %v3180, 4294901760
        %3785 = vmatpush1.xpose.msra.mxu0 %v3784
        %3786 = vmatprep.subr.mxu0 0.0
        %v3787 = vand.u32 %v3181, 4294901760
        %3788 = vmatpush1.xpose.msra.mxu0 %v3787
        %3789 = vmatprep.subr.mxu0 0.0
        %v3790 = vand.u32 %v3182, 4294901760
        %3791 = vmatpush1.xpose.msra.mxu0 %v3790
        %3792 = vmatprep.subr.mxu0 0.0
        %3793 = vmatpush1.xpose.msra.mxu0 0.0
        %3794 = vmatprep.subr.mxu0 0.0
        %3795 = vmatpush1.xpose.msra.mxu0 0.0
        %3796 = vmatprep.subr.mxu0 0.0
        %3797 = vmatpush1.xpose.msra.mxu0 0.0
        %3798 = vmatprep.subr.mxu0 0.0
        %3799 = vmatpush1.xpose.msra.mxu0 0.0
        %3800 = vmatprep.subr.mxu0 0.0
        %3801 = vmatpush1.xpose.msra.mxu0 0.0
        %3802 = vmatprep.subr.mxu0 0.0
        %3803 = vmatpush1.xpose.msra.mxu0 0.0
        %3804 = vmatprep.subr.mxu0 0.0
        %3805 = vmatpush1.xpose.msra.mxu0 0.0
        %3806 = vmatprep.subr.mxu0 0.0
        %3807 = vmatpush1.xpose.msra.mxu0 0.0
        %3808 = vmatprep.subr.mxu0 0.0
        %3809 = vmatpush1.xpose.msra.mxu0 0.0
        %3810 = vmatprep.subr.mxu0 0.0
        %3811 = vmatpush1.xpose.msra.mxu0 0.0
        %3812 = vmatprep.subr.mxu0 0.0
        %3813 = vmatpush1.xpose.msra.mxu0 0.0
        %3814 = vmatprep.subr.mxu0 0.0
        %3815 = vmatpush1.xpose.msra.mxu0 0.0
        %3816 = vmatprep.subr.mxu0 0.0
        %3817 = vmatpush1.xpose.msra.mxu0 0.0
        %3818 = vmatprep.subr.mxu0 0.0
        %3819 = vmatpush1.xpose.msra.mxu0 0.0
        %3820 = vmatprep.subr.mxu0 0.0
        %3821 = vmatpush1.xpose.msra.mxu0 0.0
        %3822 = vmatprep.subr.mxu0 0.0
        %3823 = vmatpush1.xpose.msra.mxu0 0.0
        %3824 = vmatprep.mubr.f32.mxu0 0.0
        %v3825 = vand.u32 %v3183, 4294901760
        %3826 = vmatmul.mubr.f32.gmra.mrb[0].mxu0 %v3825
        %v3827 = vpop.f32.mrb[0].mxu0
        %v3828 = vadd.f32 %v3741, %v3827
        %v3829 = vpop.f32.mrb[0].mxu0
        %3830 = vdwg.mxu0
        %3831 = vst [vmem:[%s272] sm:$0xff] %v3828
        %s3832 = sand.u32 %s181, 1
        %s3833 = scalar_lea.sflag [#allocation3], %s3832
        %s3834 = sand.u32 %s181, 1
        %s3835 = smul.addr %s3834, 8
        %s3836 = scalar_lea.vmem [#allocation2], %s3835
        // Predicated region
        $region49: #{tpu_custom_call.1} parent=47 // pred_check
          %p3837 = pneg %p191
        $region50: #{tpu_custom_call.1} parent=47 // pred_check_branch
          %3839 = sbr.rel (%p3837) target = $region52
        $region51: #{tpu_custom_call.1} parent=47 // pred_region
          %s3841 = ssub.s32 128, 128
          %3842 = vsyncadd %s3833, %s3841
          %s3843 = smul.addr %s21, 128
          %s3844 = scalar_lea.hbm %s7, %s3843
          %s3846 = sshll.u32 %s3836, 4
          %s3847 = int_to_ptr.vmem [resolvable:$true] %s3846
          %3849 = dma.vmem_to_hbm [thread:$0]  %s3847, 128, %s3844, %s3833
        $region52: #{tpu_custom_call.1} parent=47 // pred_fallthru
          _
      $region48: #{tpu_custom_call.1} parent=5 // pred_fallthru
        _
      %p3850 = scmp.le.s32.totalorder 2, %s16
      // Predicated region
      $region53: #{tpu_custom_call.1} parent=5 // pred_check
        %p3851 = pneg %p3850
      $region54: #{tpu_custom_call.1} parent=5 // pred_check_branch
        %3853 = sbr.rel (%p3851) target = $region56
      $region55: #{tpu_custom_call.1} parent=5 // pred_region
        %s3854 = ssub.s32 %s16, 2
        // Predicated region
        $region57: #{tpu_custom_call.1} parent=55 // pred_check
          %p3855 = pneg %p197
        $region58: #{tpu_custom_call.1} parent=55 // pred_check_branch
          %3857 = sbr.rel (%p3855) target = $region60
        $region59: #{tpu_custom_call.1} parent=55 // pred_region
          %s3858 = sand.u32 %s182, 1
          %s3859 = scalar_lea.sflag [#allocation3], %s3858
          %s3860 = sand.u32 %s182, 1
          %s3861 = smul.addr %s3860, 8
          %s3862 = scalar_lea.vmem [#allocation2], %s3861
          %3863 = dma.done %s3859, 128
        $region60: #{tpu_custom_call.1} parent=55 // pred_fallthru
          _
      $region56: #{tpu_custom_call.1} parent=5 // pred_fallthru
        _
    $region6: #{tpu_custom_call.1} parent=1 // loop_footer
      %s20 = sadd.s32 1, %s16
    $region7: #{tpu_custom_call.1} parent=1 // loop_footer_branch
      %15 = sbr.rel target = $region3
    $region8: #{tpu_custom_call.1} parent=1 // loop_exit
      _
    %3864 = vsyncpa [#allocation3], 1
    %s3865 = scalar_lea.sflag [#allocation3], 1
    %3866 = vsyncpa %s3865, 1

// kernel: tpu_custom_call.1
$region0: #{tpu_custom_call.1}
  #allocation0 [shape = 'u32[]', space=smem, size = 0x4, offset = 0x4, fixed_abs, tag = 'smem constant byte address 0x4 - core index']
  #allocation1 [shape = 'u32[144,128]{1,0:T(1,128)}', space=vmem, size = 0x12000, scoped, tag = 'internal scratch']
  %s0 = inlined_call_operand.vmem [shape: f32[256,2], index: 0, kind: input, shape index: {}]
  %s1 = inlined_call_operand.vmem [shape: f32[2,128], index: 1, kind: input, shape index: {}]
  %s2 = inlined_call_operand.vmem [shape: f32[1,128], index: 2, kind: input, shape index: {}]
  %s3 = inlined_call_operand.vmem [shape: f32[2,128,128], index: 3, kind: input, shape index: {}]
  %s4 = inlined_call_operand.vmem [shape: f32[2,128], index: 4, kind: input, shape index: {}]
  %s5 = inlined_call_operand.vmem [shape: f32[8,128], index: 5, kind: input, shape index: {}]
  %s6 = inlined_call_operand.vmem [shape: f32[8,1], index: 6, kind: input, shape index: {}]
  %s7 = inlined_call_operand.hbm [shape: f32[8,256], index: 7, kind: output, shape index: {}]
  %s8 = sld [smem:[#allocation0]]
  $region61: #{tpu_custom_call.1} parent=0
    _
  %s10 = ssub.s32 1, %s8
  %s11 = scalar_select 0, %s10, %s8
  $region1: #{tpu_custom_call.1} parent=0
    #allocation2 [shape = 'u8[8192]{0}', space=vmem, size = 0x2000, scoped, tag = 'output window, operand 0']
    #allocation3 [shape = 's32[2]{0}', space=sflag, size = 0x8, scoped, tag = 'scoped memory for tpu_custom_call.1']
    %12 = vsyncpa [#allocation3], 0
    %s13 = scalar_lea.sflag [#allocation3], 1
    %14 = vsyncpa %s13, 0
    loop: start=0, step=1, limit=4
    $region2: #{tpu_custom_call.1} parent=1 // loop_pre_header
      _
    $region3: #{tpu_custom_call.1} parent=1 // loop_header
      %s16 = sphi 0, %s20
      %p17 = scmp.ge.s32.totalorder %s16, 4
      %s26 = sphi 0, %s28
      %s29 = sphi 0, %s26
      %s30 = sphi 0, %s29
      %s46 = sphi 0, %s30
      %s50 = sphi 0, %s50
      %s52 = sphi 0, %s50
      %s53 = sphi 0, %s52
      %s67 = sphi 0, %s53
      %s71 = sphi 0, %s71
      %s73 = sphi 0, %s71
      %s74 = sphi 0, %s73
      %s88 = sphi 0, %s74
      %s92 = sphi 0, %s92
      %s94 = sphi 0, %s92
      %s95 = sphi 0, %s94
      %s109 = sphi 0, %s95
      %s113 = sphi 0, %s113
      %s115 = sphi 0, %s113
      %s116 = sphi 0, %s115
      %s130 = sphi 0, %s116
      %s134 = sphi 0, %s134
      %s136 = sphi 0, %s134
      %s137 = sphi 0, %s136
      %s151 = sphi 0, %s137
      %s155 = sphi 0, %s155
      %s157 = sphi 0, %s155
      %s158 = sphi 0, %s157
      %s172 = sphi 0, %s158
      %s178 = sphi 0, %s180
      %s181 = sphi 0, %s178
      %s182 = sphi 0, %s181
      %s198 = sphi 0, %s182
    $region4: #{tpu_custom_call.1} parent=1 // loop_header_branch
      %19 = sbr.rel (%p17) target = $region8
    $region5: #{tpu_custom_call.1} parent=1 // loop_body
      %s21 = ssub.s32 %s16, 1
      %s22 = ssub.s32 %s16, 2
      %s23 = sadd.s32 %s16, 1
      %s24 = ssub.s32 %s16, %s23
      %p25 = scmp.eq.s32.totalorder %s24, 0
      %s27 = sadd.s32 %s26, 1
      %s28 = scalar_select %p25, %s26, %s27
      %p31 = pneg %p25
      %p32 = scmp.eq.s32.totalorder %s16, 1
      %p33 = por %p31, %p32
      %p34 = scmp.ne.s32.totalorder %s26, %s29
      %p35 = scmp.eq.s32.totalorder %s16, 0
      %p36 = por %p34, %p35
      %p37 = scmp.ne.s32.totalorder %s26, %s29
      %p38 = scmp.eq.s32.totalorder %s21, 1
      %p39 = por %p37, %p38
      %p40 = scmp.ne.s32.totalorder %s29, %s30
      %p41 = scmp.eq.s32.totalorder %s21, 0
      %p42 = por %p40, %p41
      %p43 = scmp.ne.s32.totalorder %s29, %s30
      %p44 = scmp.eq.s32.totalorder %s22, 1
      %p45 = por %p43, %p44
      %p47 = scmp.ne.s32.totalorder %s30, %s46
      %p48 = scmp.eq.s32.totalorder %s22, 0
      %p49 = por %p47, %p48
      %s51 = sadd.s32 %s50, 1
      %p54 = scmp.eq.s32.totalorder %s16, 1
      %p55 = scmp.ne.s32.totalorder %s50, %s52
      %p56 = scmp.eq.s32.totalorder %s16, 0
      %p57 = por %p55, %p56
      %p58 = scmp.ne.s32.totalorder %s50, %s52
      %p59 = scmp.eq.s32.totalorder %s21, 1
      %p60 = por %p58, %p59
      %p61 = scmp.ne.s32.totalorder %s52, %s53
      %p62 = scmp.eq.s32.totalorder %s21, 0
      %p63 = por %p61, %p62
      %p64 = scmp.ne.s32.totalorder %s52, %s53
      %p65 = scmp.eq.s32.totalorder %s22, 1
      %p66 = por %p64, %p65
      %p68 = scmp.ne.s32.totalorder %s53, %s67
      %p69 = scmp.eq.s32.totalorder %s22, 0
      %p70 = por %p68, %p69
      %s72 = sadd.s32 %s71, 1
      %p75 = scmp.eq.s32.totalorder %s16, 1
      %p76 = scmp.ne.s32.totalorder %s71, %s73
      %p77 = scmp.eq.s32.totalorder %s16, 0
      %p78 = por %p76, %p77
      %p79 = scmp.ne.s32.totalorder %s71, %s73
      %p80 = scmp.eq.s32.totalorder %s21, 1
      %p81 = por %p79, %p80
      %p82 = scmp.ne.s32.totalorder %s73, %s74
      %p83 = scmp.eq.s32.totalorder %s21, 0
      %p84 = por %p82, %p83
      %p85 = scmp.ne.s32.totalorder %s73, %s74
      %p86 = scmp.eq.s32.totalorder %s22, 1
      %p87 = por %p85, %p86
      %p89 = scmp.ne.s32.totalorder %s74, %s88
      %p90 = scmp.eq.s32.totalorder %s22, 0
      %p91 = por %p89, %p90
      %s93 = sadd.s32 %s92, 1
      %p96 = scmp.eq.s32.totalorder %s16, 1
      %p97 = scmp.ne.s32.totalorder %s92, %s94
      %p98 = scmp.eq.s32.totalorder %s16, 0
      %p99 = por %p97, %p98
      %p100 = scmp.ne.s32.totalorder %s92, %s94
      %p101 = scmp.eq.s32.totalorder %s21, 1
      %p102 = por %p100, %p101
      %p103 = scmp.ne.s32.totalorder %s94, %s95
      %p104 = scmp.eq.s32.totalorder %s21, 0
      %p105 = por %p103, %p104
      %p106 = scmp.ne.s32.totalorder %s94, %s95
      %p107 = scmp.eq.s32.totalorder %s22, 1
      %p108 = por %p106, %p107
      %p110 = scmp.ne.s32.totalorder %s95, %s109
      %p111 = scmp.eq.s32.totalorder %s22, 0
      %p112 = por %p110, %p111
      %s114 = sadd.s32 %s113, 1
      %p117 = scmp.eq.s32.totalorder %s16, 1
      %p118 = scmp.ne.s32.totalorder %s113, %s115
      %p119 = scmp.eq.s32.totalorder %s16, 0
      %p120 = por %p118, %p119
      %p121 = scmp.ne.s32.totalorder %s113, %s115
      %p122 = scmp.eq.s32.totalorder %s21, 1
      %p123 = por %p121, %p122
      %p124 = scmp.ne.s32.totalorder %s115, %s116
      %p125 = scmp.eq.s32.totalorder %s21, 0
      %p126 = por %p124, %p125
      %p127 = scmp.ne.s32.totalorder %s115, %s116
      %p128 = scmp.eq.s32.totalorder %s22, 1
      %p129 = por %p127, %p128
      %p131 = scmp.ne.s32.totalorder %s116, %s130
      %p132 = scmp.eq.s32.totalorder %s22, 0
      %p133 = por %p131, %p132
      %s135 = sadd.s32 %s134, 1
      %p138 = scmp.eq.s32.totalorder %s16, 1
      %p139 = scmp.ne.s32.totalorder %s134, %s136
      %p140 = scmp.eq.s32.totalorder %s16, 0
      %p141 = por %p139, %p140
      %p142 = scmp.ne.s32.totalorder %s134, %s136
      %p143 = scmp.eq.s32.totalorder %s21, 1
      %p144 = por %p142, %p143
      %p145 = scmp.ne.s32.totalorder %s136, %s137
      %p146 = scmp.eq.s32.totalorder %s21, 0
      %p147 = por %p145, %p146
      %p148 = scmp.ne.s32.totalorder %s136, %s137
      %p149 = scmp.eq.s32.totalorder %s22, 1
      %p150 = por %p148, %p149
      %p152 = scmp.ne.s32.totalorder %s137, %s151
      %p153 = scmp.eq.s32.totalorder %s22, 0
      %p154 = por %p152, %p153
      %s156 = sadd.s32 %s155, 1
      %p159 = scmp.eq.s32.totalorder %s16, 1
      %p160 = scmp.ne.s32.totalorder %s155, %s157
      %p161 = scmp.eq.s32.totalorder %s16, 0
      %p162 = por %p160, %p161
      %p163 = scmp.ne.s32.totalorder %s155, %s157
      %p164 = scmp.eq.s32.totalorder %s21, 1
      %p165 = por %p163, %p164
      %p166 = scmp.ne.s32.totalorder %s157, %s158
      %p167 = scmp.eq.s32.totalorder %s21, 0
      %p168 = por %p166, %p167
      %p169 = scmp.ne.s32.totalorder %s157, %s158
      %p170 = scmp.eq.s32.totalorder %s22, 1
      %p171 = por %p169, %p170
      %p173 = scmp.ne.s32.totalorder %s158, %s172
      %p174 = scmp.eq.s32.totalorder %s22, 0
      %p175 = por %p173, %p174
      %s176 = ssub.s32 %s16, %s23
      %p177 = scmp.eq.s32.totalorder %s176, 0
      %s179 = sadd.s32 %s178, 1
      %s180 = scalar_select %p177, %s178, %s179
      %p183 = pneg %p177
      %p184 = scmp.eq.s32.totalorder %s16, 1
      %p185 = por %p183, %p184
      %p186 = scmp.ne.s32.totalorder %s178, %s181
      %p187 = scmp.eq.s32.totalorder %s16, 0
      %p188 = por %p186, %p187
      %p189 = scmp.ne.s32.totalorder %s178, %s181
      %p190 = scmp.eq.s32.totalorder %s21, 1
      %p191 = por %p189, %p190
      %p192 = scmp.ne.s32.totalorder %s181, %s182
      %p193 = scmp.eq.s32.totalorder %s21, 0
      %p194 = por %p192, %p193
      %p195 = scmp.ne.s32.totalorder %s181, %s182
      %p196 = scmp.eq.s32.totalorder %s22, 1
      %p197 = por %p195, %p196
      %p199 = scmp.ne.s32.totalorder %s182, %s198
      %p200 = scmp.eq.s32.totalorder %s22, 0
      %p201 = por %p199, %p200
      %p202 = scmp.le.s32.totalorder 1, %s16
      %p203 = scmp.lt.s32.totalorder %s16, 3
      %p204 = pnand %p202, %p203
      %p205 = pneg %p204
      // Predicated region
      $region9: #{tpu_custom_call.1} parent=5 // pred_check
        _
      $region10: #{tpu_custom_call.1} parent=5 // pred_check_branch
        %207 = sbr.rel (%p204) target = $region12
      $region11: #{tpu_custom_call.1} parent=5 // pred_region
        %s208 = ssub.s32 %s16, 1
        // Predicated region
        $region13: #{tpu_custom_call.1} parent=11 // pred_check
          %p209 = pneg %p63
        $region14: #{tpu_custom_call.1} parent=11 // pred_check_branch
          %211 = sbr.rel (%p209) target = $region16
        $region15: #{tpu_custom_call.1} parent=11 // pred_region
          _
        $region16: #{tpu_custom_call.1} parent=11 // pred_fallthru
          _
        // Predicated region
        $region17: #{tpu_custom_call.1} parent=11 // pred_check
          %p212 = pneg %p84
        $region18: #{tpu_custom_call.1} parent=11 // pred_check_branch
          %214 = sbr.rel (%p212) target = $region20
        $region19: #{tpu_custom_call.1} parent=11 // pred_region
          _
        $region20: #{tpu_custom_call.1} parent=11 // pred_fallthru
          _
        // Predicated region
        $region21: #{tpu_custom_call.1} parent=11 // pred_check
          %p215 = pneg %p105
        $region22: #{tpu_custom_call.1} parent=11 // pred_check_branch
          %217 = sbr.rel (%p215) target = $region24
        $region23: #{tpu_custom_call.1} parent=11 // pred_region
          _
        $region24: #{tpu_custom_call.1} parent=11 // pred_fallthru
          _
        // Predicated region
        $region25: #{tpu_custom_call.1} parent=11 // pred_check
          %p218 = pneg %p126
        $region26: #{tpu_custom_call.1} parent=11 // pred_check_branch
          %220 = sbr.rel (%p218) target = $region28
        $region27: #{tpu_custom_call.1} parent=11 // pred_region
          _
        $region28: #{tpu_custom_call.1} parent=11 // pred_fallthru
          _
        // Predicated region
        $region29: #{tpu_custom_call.1} parent=11 // pred_check
          %p221 = pneg %p147
        $region30: #{tpu_custom_call.1} parent=11 // pred_check_branch
          %223 = sbr.rel (%p221) target = $region32
        $region31: #{tpu_custom_call.1} parent=11 // pred_region
          _
        $region32: #{tpu_custom_call.1} parent=11 // pred_fallthru
          _
        // Predicated region
        $region33: #{tpu_custom_call.1} parent=11 // pred_check
          %p224 = pneg %p168
        $region34: #{tpu_custom_call.1} parent=11 // pred_check_branch
          %226 = sbr.rel (%p224) target = $region36
        $region35: #{tpu_custom_call.1} parent=11 // pred_region
          _
        $region36: #{tpu_custom_call.1} parent=11 // pred_fallthru
          _
      $region12: #{tpu_custom_call.1} parent=5 // pred_fallthru
        _
      %p227 = scmp.lt.s32.totalorder %s16, 2
      // Predicated region
      $region37: #{tpu_custom_call.1} parent=5 // pred_check
        %p228 = pneg %p227
      $region38: #{tpu_custom_call.1} parent=5 // pred_check_branch
        %230 = sbr.rel (%p228) target = $region40
      $region39: #{tpu_custom_call.1} parent=5 // pred_region
        // Predicated region
        $region41: #{tpu_custom_call.1} parent=39 // pred_check
          %p231 = pneg %p36
        $region42: #{tpu_custom_call.1} parent=39 // pred_check_branch
          %233 = sbr.rel (%p231) target = $region44
        $region43: #{tpu_custom_call.1} parent=39 // pred_region
          %s234 = smul.u32 16, %s16
          %p235 = scmp.lt.s32.totalorder %s234, 31
          %s236 = scalar_select %p235, %s234, 31
          %s237 = smul.addr %s236, 8
          %s238 = scalar_lea.vmem %s0, %s237
          %s239 = smul.u32 16, %s16
        $region44: #{tpu_custom_call.1} parent=39 // pred_fallthru
          _
      $region40: #{tpu_custom_call.1} parent=5 // pred_fallthru
        _
      %p240 = scmp.le.s32.totalorder 1, %s16
      %p241 = scmp.lt.s32.totalorder %s16, 3
      %p242 = pnand %p240, %p241
      %p243 = pneg %p242
      // Predicated region
      $region45: #{tpu_custom_call.1} parent=5 // pred_check
        _
      $region46: #{tpu_custom_call.1} parent=5 // pred_check_branch
        %245 = sbr.rel (%p242) target = $region48
      $region47: #{tpu_custom_call.1} parent=5 // pred_region
        %s246 = ssub.s32 %s16, 1
        %s247 = smul.u32 16, %s21
        %p248 = scmp.lt.s32.totalorder %s247, 31
        %s249 = scalar_select %p248, %s247, 31
        %s250 = smul.addr %s249, 8
        %s251 = scalar_lea.vmem %s0, %s250
        %p252 = pneg %p42
        %p253 = pneg %p39
        %p254 = pneg %p63
        %p255 = pneg %p60
        %p256 = pneg %p84
        %p257 = pneg %p81
        %p258 = pneg %p105
        %p259 = pneg %p102
        %p260 = pneg %p126
        %p261 = pneg %p123
        %p262 = pneg %p147
        %p263 = pneg %p144
        %p264 = pneg %p168
        %p265 = pneg %p165
        %p266 = pneg %p194
        %p267 = pneg %p191
        %s268 = sand.u32 %s181, 1
        %s269 = scalar_lea.sflag [#allocation3], %s268
        %s270 = sand.u32 %s181, 1
        %s271 = smul.addr %s270, 8
        %s272 = scalar_lea.vmem [#allocation2], %s271
        %s273 = smul.u32 16, %s21
        %p274 = scmp.lt.s32.totalorder %s273, 31
        %s275 = scalar_select %p274, %s273, 31
        %s276 = smul.addr %s275, 8
        %s277 = scalar_lea.vmem %s0, %s276
        %s278 = smul.u32 16, %s21
        %v279 = vld [vmem:[%s277] sm:$0xff]
        %v280 = vld [vmem:[%s277 + $0x8] sm:$0xff]
        %v281 = vld [vmem:[%s277 + $0x10] sm:$0xff]
        %v282 = vld [vmem:[%s277 + $0x18] sm:$0xff]
        %v283 = vld [vmem:[%s277 + $0x20] sm:$0xff]
        %v284 = vld [vmem:[%s277 + $0x28] sm:$0xff]
        %v285 = vld [vmem:[%s277 + $0x30] sm:$0xff]
        %v286 = vld [vmem:[%s277 + $0x38] sm:$0xff]
        %v287 = vld [vmem:[%s277 + $0x40] sm:$0xff]
        %v288 = vld [vmem:[%s277 + $0x48] sm:$0xff]
        %v289 = vld [vmem:[%s277 + $0x50] sm:$0xff]
        %v290 = vld [vmem:[%s277 + $0x58] sm:$0xff]
        %v291 = vld [vmem:[%s277 + $0x60] sm:$0xff]
        %v292 = vld [vmem:[%s277 + $0x68] sm:$0xff]
        %v293 = vld [vmem:[%s277 + $0x70] sm:$0xff]
        %v294 = vld [vmem:[%s277 + $0x78] sm:$0xff]
        %v295 = vld [vmem:[%s1] sm:$0x1]
        %297 = vset.pattern.permute.xlu0 0
        %298 = vperm.xlu0 %297, %v279
        %v299 = vpop.permute.xlu0 %298
        %302 = vset.pattern.permute.xlu0 0
        %303 = vperm.xlu0 %302, %v280
        %v304 = vpop.permute.xlu0 %303
        %307 = vset.pattern.permute.xlu0 0
        %308 = vperm.xlu0 %307, %v281
        %v309 = vpop.permute.xlu0 %308
        %312 = vset.pattern.permute.xlu0 0
        %313 = vperm.xlu0 %312, %v282
        %v314 = vpop.permute.xlu0 %313
        %317 = vset.pattern.permute.xlu0 0
        %318 = vperm.xlu0 %317, %v283
        %v319 = vpop.permute.xlu0 %318
        %322 = vset.pattern.permute.xlu0 0
        %323 = vperm.xlu0 %322, %v284
        %v324 = vpop.permute.xlu0 %323
        %327 = vset.pattern.permute.xlu0 0
        %328 = vperm.xlu0 %327, %v285
        %v329 = vpop.permute.xlu0 %328
        %332 = vset.pattern.permute.xlu0 0
        %333 = vperm.xlu0 %332, %v286
        %v334 = vpop.permute.xlu0 %333
        %337 = vset.pattern.permute.xlu0 0
        %338 = vperm.xlu0 %337, %v287
        %v339 = vpop.permute.xlu0 %338
        %342 = vset.pattern.permute.xlu0 0
        %343 = vperm.xlu0 %342, %v288
        %v344 = vpop.permute.xlu0 %343
        %347 = vset.pattern.permute.xlu0 0
        %348 = vperm.xlu0 %347, %v289
        %v349 = vpop.permute.xlu0 %348
        %352 = vset.pattern.permute.xlu0 0
        %353 = vperm.xlu0 %352, %v290
        %v354 = vpop.permute.xlu0 %353
        %357 = vset.pattern.permute.xlu0 0
        %358 = vperm.xlu0 %357, %v291
        %v359 = vpop.permute.xlu0 %358
        %362 = vset.pattern.permute.xlu0 0
        %363 = vperm.xlu0 %362, %v292
        %v364 = vpop.permute.xlu0 %363
        %367 = vset.pattern.permute.xlu0 0
        %368 = vperm.xlu0 %367, %v293
        %v369 = vpop.permute.xlu0 %368
        %372 = vset.pattern.permute.xlu0 0
        %373 = vperm.xlu0 %372, %v294
        %v374 = vpop.permute.xlu0 %373
        %v376 = vlaneseq
        %v377 = vshrl.u32 %v376, 7
        %v378 = vsub.s32 0, %v377
        %v379 = vrot.slane %v295, %v378
        %v380 = vmul.f32 %v299, %v379
        %v381 = vmul.f32 %v304, %v379
        %v382 = vmul.f32 %v309, %v379
        %v383 = vmul.f32 %v314, %v379
        %v384 = vmul.f32 %v319, %v379
        %v385 = vmul.f32 %v324, %v379
        %v386 = vmul.f32 %v329, %v379
        %v387 = vmul.f32 %v334, %v379
        %v388 = vmul.f32 %v339, %v379
        %v389 = vmul.f32 %v344, %v379
        %v390 = vmul.f32 %v349, %v379
        %v391 = vmul.f32 %v354, %v379
        %v392 = vmul.f32 %v359, %v379
        %v393 = vmul.f32 %v364, %v379
        %v394 = vmul.f32 %v369, %v379
        %v395 = vmul.f32 %v374, %v379
        %v396 = vld [vmem:[%s1 + $0x1] sm:$0x1]
        %397 = vset.pattern.permute.xlu0 1
        %398 = vperm.xlu0 %397, %v279
        %v399 = vpop.permute.xlu0 %398
        %401 = vset.pattern.permute.xlu0 1
        %402 = vperm.xlu0 %401, %v280
        %v403 = vpop.permute.xlu0 %402
        %405 = vset.pattern.permute.xlu0 1
        %406 = vperm.xlu0 %405, %v281
        %v407 = vpop.permute.xlu0 %406
        %409 = vset.pattern.permute.xlu0 1
        %410 = vperm.xlu0 %409, %v282
        %v411 = vpop.permute.xlu0 %410
        %413 = vset.pattern.permute.xlu0 1
        %414 = vperm.xlu0 %413, %v283
        %v415 = vpop.permute.xlu0 %414
        %417 = vset.pattern.permute.xlu0 1
        %418 = vperm.xlu0 %417, %v284
        %v419 = vpop.permute.xlu0 %418
        %421 = vset.pattern.permute.xlu0 1
        %422 = vperm.xlu0 %421, %v285
        %v423 = vpop.permute.xlu0 %422
        %425 = vset.pattern.permute.xlu0 1
        %426 = vperm.xlu0 %425, %v286
        %v427 = vpop.permute.xlu0 %426
        %429 = vset.pattern.permute.xlu0 1
        %430 = vperm.xlu0 %429, %v287
        %v431 = vpop.permute.xlu0 %430
        %433 = vset.pattern.permute.xlu0 1
        %434 = vperm.xlu0 %433, %v288
        %v435 = vpop.permute.xlu0 %434
        %437 = vset.pattern.permute.xlu0 1
        %438 = vperm.xlu0 %437, %v289
        %v439 = vpop.permute.xlu0 %438
        %441 = vset.pattern.permute.xlu0 1
        %442 = vperm.xlu0 %441, %v290
        %v443 = vpop.permute.xlu0 %442
        %445 = vset.pattern.permute.xlu0 1
        %446 = vperm.xlu0 %445, %v291
        %v447 = vpop.permute.xlu0 %446
        %449 = vset.pattern.permute.xlu0 1
        %450 = vperm.xlu0 %449, %v292
        %v451 = vpop.permute.xlu0 %450
        %453 = vset.pattern.permute.xlu0 1
        %454 = vperm.xlu0 %453, %v293
        %v455 = vpop.permute.xlu0 %454
        %457 = vset.pattern.permute.xlu0 1
        %458 = vperm.xlu0 %457, %v294
        %v459 = vpop.permute.xlu0 %458
        %v461 = vlaneseq
        %v462 = vshrl.u32 %v461, 7
        %v463 = vsub.s32 0, %v462
        %v464 = vrot.slane %v396, %v463
        %v465 = vmul.f32 %v399, %v464
        %v466 = vmul.f32 %v403, %v464
        %v467 = vmul.f32 %v407, %v464
        %v468 = vmul.f32 %v411, %v464
        %v469 = vmul.f32 %v415, %v464
        %v470 = vmul.f32 %v419, %v464
        %v471 = vmul.f32 %v423, %v464
        %v472 = vmul.f32 %v427, %v464
        %v473 = vmul.f32 %v431, %v464
        %v474 = vmul.f32 %v435, %v464
        %v475 = vmul.f32 %v439, %v464
        %v476 = vmul.f32 %v443, %v464
        %v477 = vmul.f32 %v447, %v464
        %v478 = vmul.f32 %v451, %v464
        %v479 = vmul.f32 %v455, %v464
        %v480 = vmul.f32 %v459, %v464
        %v481 = vadd.f32 %v380, %v465
        %v482 = vadd.f32 %v381, %v466
        %v483 = vadd.f32 %v382, %v467
        %v484 = vadd.f32 %v383, %v468
        %v485 = vadd.f32 %v384, %v469
        %v486 = vadd.f32 %v385, %v470
        %v487 = vadd.f32 %v386, %v471
        %v488 = vadd.f32 %v387, %v472
        %v489 = vadd.f32 %v388, %v473
        %v490 = vadd.f32 %v389, %v474
        %v491 = vadd.f32 %v390, %v475
        %v492 = vadd.f32 %v391, %v476
        %v493 = vadd.f32 %v392, %v477
        %v494 = vadd.f32 %v393, %v478
        %v495 = vadd.f32 %v394, %v479
        %v496 = vadd.f32 %v395, %v480
        %v497 = vld [vmem:[%s2] sm:$0x1]
        %v499 = vlaneseq
        %v500 = vshrl.u32 %v499, 7
        %v501 = vsub.s32 0, %v500
        %v502 = vrot.slane %v497, %v501
        %v504 = vadd.f32 %v481, %v502
        %v505 = vadd.f32 %v482, %v502
        %v506 = vadd.f32 %v483, %v502
        %v507 = vadd.f32 %v484, %v502
        %v508 = vadd.f32 %v485, %v502
        %v509 = vadd.f32 %v486, %v502
        %v510 = vadd.f32 %v487, %v502
        %v511 = vadd.f32 %v488, %v502
        %v512 = vadd.f32 %v489, %v502
        %v513 = vadd.f32 %v490, %v502
        %v514 = vadd.f32 %v491, %v502
        %v515 = vadd.f32 %v492, %v502
        %v516 = vadd.f32 %v493, %v502
        %v517 = vadd.f32 %v494, %v502
        %v518 = vadd.f32 %v495, %v502
        %v519 = vadd.f32 %v496, %v502
        %v520 = vtanh.pop %v504
        %v521 = vtanh.pop %v505
        %v522 = vtanh.pop %v506
        %v523 = vtanh.pop %v507
        %v524 = vtanh.pop %v508
        %v525 = vtanh.pop %v509
        %v526 = vtanh.pop %v510
        %v527 = vtanh.pop %v511
        %v528 = vtanh.pop %v512
        %v529 = vtanh.pop %v513
        %v530 = vtanh.pop %v514
        %v531 = vtanh.pop %v515
        %v532 = vtanh.pop %v516
        %v533 = vtanh.pop %v517
        %v534 = vtanh.pop %v518
        %v535 = vtanh.pop %v519
        %v536 = vld [vmem:[%s3] sm:$0xff]
        %v537 = vld [vmem:[%s3 + $0x8] sm:$0xff]
        %v538 = vld [vmem:[%s3 + $0x10] sm:$0xff]
        %v539 = vld [vmem:[%s3 + $0x18] sm:$0xff]
        %v540 = vld [vmem:[%s3 + $0x20] sm:$0xff]
        %v541 = vld [vmem:[%s3 + $0x28] sm:$0xff]
        %v542 = vld [vmem:[%s3 + $0x30] sm:$0xff]
        %v543 = vld [vmem:[%s3 + $0x38] sm:$0xff]
        %v544 = vld [vmem:[%s3 + $0x40] sm:$0xff]
        %v545 = vld [vmem:[%s3 + $0x48] sm:$0xff]
        %v546 = vld [vmem:[%s3 + $0x50] sm:$0xff]
        %v547 = vld [vmem:[%s3 + $0x58] sm:$0xff]
        %v548 = vld [vmem:[%s3 + $0x60] sm:$0xff]
        %v549 = vld [vmem:[%s3 + $0x68] sm:$0xff]
        %v550 = vld [vmem:[%s3 + $0x70] sm:$0xff]
        %v551 = vld [vmem:[%s3 + $0x78] sm:$0xff]
        %v552 = vld [vmem:[%s4] sm:$0x1]
        %v553 = vlaneseq
        %v554 = vshrl.u32 %v553, 7
        %v555 = vsub.s32 0, %v554
        %v556 = vrot.slane %v552, %v555
        %557 = vmatprep.subr.mxu0 0.0
        %v558 = vand.u32 %v536, 4294901760
        %559 = vmatpush1.msra.mxu0 %v558
        %560 = vmatprep.subr.mxu0 0.0
        %v561 = vand.u32 %v537, 4294901760
        %562 = vmatpush1.msra.mxu0 %v561
        %563 = vmatprep.subr.mxu0 0.0
        %v564 = vand.u32 %v538, 4294901760
        %565 = vmatpush1.msra.mxu0 %v564
        %566 = vmatprep.subr.mxu0 0.0
        %v567 = vand.u32 %v539, 4294901760
        %568 = vmatpush1.msra.mxu0 %v567
        %569 = vmatprep.subr.mxu0 0.0
        %v570 = vand.u32 %v540, 4294901760
        %571 = vmatpush1.msra.mxu0 %v570
        %572 = vmatprep.subr.mxu0 0.0
        %v573 = vand.u32 %v541, 4294901760
        %574 = vmatpush1.msra.mxu0 %v573
        %575 = vmatprep.subr.mxu0 0.0
        %v576 = vand.u32 %v542, 4294901760
        %577 = vmatpush1.msra.mxu0 %v576
        %578 = vmatprep.subr.mxu0 0.0
        %v579 = vand.u32 %v543, 4294901760
        %580 = vmatpush1.msra.mxu0 %v579
        %581 = vmatprep.subr.mxu0 0.0
        %v582 = vand.u32 %v544, 4294901760
        %583 = vmatpush1.msra.mxu0 %v582
        %584 = vmatprep.subr.mxu0 0.0
        %v585 = vand.u32 %v545, 4294901760
        %586 = vmatpush1.msra.mxu0 %v585
        %587 = vmatprep.subr.mxu0 0.0
        %v588 = vand.u32 %v546, 4294901760
        %589 = vmatpush1.msra.mxu0 %v588
        %590 = vmatprep.subr.mxu0 0.0
        %v591 = vand.u32 %v547, 4294901760
        %592 = vmatpush1.msra.mxu0 %v591
        %593 = vmatprep.subr.mxu0 0.0
        %v594 = vand.u32 %v548, 4294901760
        %595 = vmatpush1.msra.mxu0 %v594
        %596 = vmatprep.subr.mxu0 0.0
        %v597 = vand.u32 %v549, 4294901760
        %598 = vmatpush1.msra.mxu0 %v597
        %599 = vmatprep.subr.mxu0 0.0
        %v600 = vand.u32 %v550, 4294901760
        %601 = vmatpush1.msra.mxu0 %v600
        %602 = vmatprep.subr.mxu0 0.0
        %v603 = vand.u32 %v551, 4294901760
        %604 = vmatpush1.msra.mxu0 %v603
        %605 = vmatprep.subr.mxu0 0.0
        %606 = vmatpush1.msra.mxu0 0.0
        %607 = vmatprep.subr.mxu0 0.0
        %608 = vmatpush1.msra.mxu0 0.0
        %609 = vmatprep.subr.mxu0 0.0
        %610 = vmatpush1.msra.mxu0 0.0
        %611 = vmatprep.subr.mxu0 0.0
        %612 = vmatpush1.msra.mxu0 0.0
        %613 = vmatprep.subr.mxu0 0.0
        %614 = vmatpush1.msra.mxu0 0.0
        %615 = vmatprep.subr.mxu0 0.0
        %616 = vmatpush1.msra.mxu0 0.0
        %617 = vmatprep.subr.mxu0 0.0
        %618 = vmatpush1.msra.mxu0 0.0
        %619 = vmatprep.subr.mxu0 0.0
        %620 = vmatpush1.msra.mxu0 0.0
        %621 = vmatprep.subr.mxu0 0.0
        %622 = vmatpush1.msra.mxu0 0.0
        %623 = vmatprep.subr.mxu0 0.0
        %624 = vmatpush1.msra.mxu0 0.0
        %625 = vmatprep.subr.mxu0 0.0
        %626 = vmatpush1.msra.mxu0 0.0
        %627 = vmatprep.subr.mxu0 0.0
        %628 = vmatpush1.msra.mxu0 0.0
        %629 = vmatprep.subr.mxu0 0.0
        %630 = vmatpush1.msra.mxu0 0.0
        %631 = vmatprep.subr.mxu0 0.0
        %632 = vmatpush1.msra.mxu0 0.0
        %633 = vmatprep.subr.mxu0 0.0
        %634 = vmatpush1.msra.mxu0 0.0
        %635 = vmatprep.subr.mxu0 0.0
        %636 = vmatpush1.msra.mxu0 0.0
        %637 = vmatprep.mubr.f32.mxu0 0.0
        %v638 = vand.u32 %v520, 4294901760
        %v639 = vsub.f32 %v520, %v638
        %v640 = vand.u32 %v639, 4294901760
        %v641 = vsub.f32 %v639, %v640
        %v642 = vand.u32 %v641, 4294901760
        %643 = vmatmul.mubr.f32.gmra.mrb[0].mxu0 %v642
        %v644 = vpop.f32.mrb[0].mxu0
        %v645 = vadd.f32 %v556, %v644
        %v646 = vpop.f32.mrb[0].mxu0
        %647 = vmatprep.mubr.f32.mxu0 0.0
        %v648 = vand.u32 %v521, 4294901760
        %v649 = vsub.f32 %v521, %v648
        %v650 = vand.u32 %v649, 4294901760
        %v651 = vsub.f32 %v649, %v650
        %v652 = vand.u32 %v651, 4294901760
        %653 = vmatmul.mubr.f32.gmra.mrb[0].mxu0 %v652
        %v654 = vpop.f32.mrb[0].mxu0
        %v655 = vadd.f32 %v556, %v654
        %v656 = vpop.f32.mrb[0].mxu0
        %657 = vmatprep.mubr.f32.mxu0 0.0
        %v658 = vand.u32 %v522, 4294901760
        %v659 = vsub.f32 %v522, %v658
        %v660 = vand.u32 %v659, 4294901760
        %v661 = vsub.f32 %v659, %v660
        %v662 = vand.u32 %v661, 4294901760
        %663 = vmatmul.mubr.f32.gmra.mrb[0].mxu0 %v662
        %v664 = vpop.f32.mrb[0].mxu0
        %v665 = vadd.f32 %v556, %v664
        %v666 = vpop.f32.mrb[0].mxu0
        %667 = vmatprep.mubr.f32.mxu0 0.0
        %v668 = vand.u32 %v523, 4294901760
        %v669 = vsub.f32 %v523, %v668
        %v670 = vand.u32 %v669, 4294901760
        %v671 = vsub.f32 %v669, %v670
        %v672 = vand.u32 %v671, 4294901760
        %673 = vmatmul.mubr.f32.gmra.mrb[0].mxu0 %v672
        %v674 = vpop.f32.mrb[0].mxu0
        %v675 = vadd.f32 %v556, %v674
        %v676 = vpop.f32.mrb[0].mxu0
        %677 = vmatprep.mubr.f32.mxu0 0.0
        %v678 = vand.u32 %v524, 4294901760
        %v679 = vsub.f32 %v524, %v678
        %v680 = vand.u32 %v679, 4294901760
        %v681 = vsub.f32 %v679, %v680
        %v682 = vand.u32 %v681, 4294901760
        %683 = vmatmul.mubr.f32.gmra.mrb[0].mxu0 %v682
        %v684 = vpop.f32.mrb[0].mxu0
        %v685 = vadd.f32 %v556, %v684
        %v686 = vpop.f32.mrb[0].mxu0
        %687 = vmatprep.mubr.f32.mxu0 0.0
        %v688 = vand.u32 %v525, 4294901760
        %v689 = vsub.f32 %v525, %v688
        %v690 = vand.u32 %v689, 4294901760
        %v691 = vsub.f32 %v689, %v690
        %v692 = vand.u32 %v691, 4294901760
        %693 = vmatmul.mubr.f32.gmra.mrb[0].mxu0 %v692
        %v694 = vpop.f32.mrb[0].mxu0
        %v695 = vadd.f32 %v556, %v694
        %v696 = vpop.f32.mrb[0].mxu0
        %697 = vmatprep.mubr.f32.mxu0 0.0
        %v698 = vand.u32 %v526, 4294901760
        %v699 = vsub.f32 %v526, %v698
        %v700 = vand.u32 %v699, 4294901760
        %v701 = vsub.f32 %v699, %v700
        %v702 = vand.u32 %v701, 4294901760
        %703 = vmatmul.mubr.f32.gmra.mrb[0].mxu0 %v702
        %v704 = vpop.f32.mrb[0].mxu0
        %v705 = vadd.f32 %v556, %v704
        %v706 = vpop.f32.mrb[0].mxu0
        %707 = vmatprep.mubr.f32.mxu0 0.0
        %v708 = vand.u32 %v527, 4294901760
        %v709 = vsub.f32 %v527, %v708
        %v710 = vand.u32 %v709, 4294901760
        %v711 = vsub.f32 %v709, %v710
        %v712 = vand.u32 %v711, 4294901760
        %713 = vmatmul.mubr.f32.gmra.mrb[0].mxu0 %v712
        %v714 = vpop.f32.mrb[0].mxu0
        %v715 = vadd.f32 %v556, %v714
        %v716 = vpop.f32.mrb[0].mxu0
        %717 = vmatprep.mubr.f32.mxu0 0.0
        %v718 = vand.u32 %v528, 4294901760
        %v719 = vsub.f32 %v528, %v718
        %v720 = vand.u32 %v719, 4294901760
        %v721 = vsub.f32 %v719, %v720
        %v722 = vand.u32 %v721, 4294901760
        %723 = vmatmul.mubr.f32.gmra.mrb[0].mxu0 %v722
        %v724 = vpop.f32.mrb[0].mxu0
        %v725 = vadd.f32 %v556, %v724
        %v726 = vpop.f32.mrb[0].mxu0
        %727 = vmatprep.mubr.f32.mxu0 0.0
        %v728 = vand.u32 %v529, 4294901760
        %v729 = vsub.f32 %v529, %v728
        %v730 = vand.u32 %v729, 4294901760
        %v731 = vsub.f32 %v729, %v730
        %v732 = vand.u32 %v731, 4294901760
        %733 = vmatmul.mubr.f32.gmra.mrb[0].mxu0 %v732
        %v734 = vpop.f32.mrb[0].mxu0
        %v735 = vadd.f32 %v556, %v734
        %v736 = vpop.f32.mrb[0].mxu0
        %737 = vmatprep.mubr.f32.mxu0 0.0
        %v738 = vand.u32 %v530, 4294901760
        %v739 = vsub.f32 %v530, %v738
        %v740 = vand.u32 %v739, 4294901760
        %v741 = vsub.f32 %v739, %v740
        %v742 = vand.u32 %v741, 4294901760
        %743 = vmatmul.mubr.f32.gmra.mrb[0].mxu0 %v742
        %v744 = vpop.f32.mrb[0].mxu0
        %v745 = vadd.f32 %v556, %v744
        %v746 = vpop.f32.mrb[0].mxu0
        %747 = vmatprep.mubr.f32.mxu0 0.0
        %v748 = vand.u32 %v531, 4294901760
        %v749 = vsub.f32 %v531, %v748
        %v750 = vand.u32 %v749, 4294901760
        %v751 = vsub.f32 %v749, %v750
        %v752 = vand.u32 %v751, 4294901760
        %753 = vmatmul.mubr.f32.gmra.mrb[0].mxu0 %v752
        %v754 = vpop.f32.mrb[0].mxu0
        %v755 = vadd.f32 %v556, %v754
        %v756 = vpop.f32.mrb[0].mxu0
        %757 = vmatprep.mubr.f32.mxu0 0.0
        %v758 = vand.u32 %v532, 4294901760
        %v759 = vsub.f32 %v532, %v758
        %v760 = vand.u32 %v759, 4294901760
        %v761 = vsub.f32 %v759, %v760
        %v762 = vand.u32 %v761, 4294901760
        %763 = vmatmul.mubr.f32.gmra.mrb[0].mxu0 %v762
        %v764 = vpop.f32.mrb[0].mxu0
        %v765 = vadd.f32 %v556, %v764
        %v766 = vpop.f32.mrb[0].mxu0
        %767 = vmatprep.mubr.f32.mxu0 0.0
        %v768 = vand.u32 %v533, 4294901760
        %v769 = vsub.f32 %v533, %v768
        %v770 = vand.u32 %v769, 4294901760
        %v771 = vsub.f32 %v769, %v770
        %v772 = vand.u32 %v771, 4294901760
        %773 = vmatmul.mubr.f32.gmra.mrb[0].mxu0 %v772
        %v774 = vpop.f32.mrb[0].mxu0
        %v775 = vadd.f32 %v556, %v774
        %v776 = vpop.f32.mrb[0].mxu0
        %777 = vmatprep.mubr.f32.mxu0 0.0
        %v778 = vand.u32 %v534, 4294901760
        %v779 = vsub.f32 %v534, %v778
        %v780 = vand.u32 %v779, 4294901760
        %v781 = vsub.f32 %v779, %v780
        %v782 = vand.u32 %v781, 4294901760
        %783 = vmatmul.mubr.f32.gmra.mrb[0].mxu0 %v782
        %v784 = vpop.f32.mrb[0].mxu0
        %v785 = vadd.f32 %v556, %v784
        %v786 = vpop.f32.mrb[0].mxu0
        %787 = vmatprep.mubr.f32.mxu0 0.0
        %v788 = vand.u32 %v535, 4294901760
        %v789 = vsub.f32 %v535, %v788
        %v790 = vand.u32 %v789, 4294901760
        %v791 = vsub.f32 %v789, %v790
        %v792 = vand.u32 %v791, 4294901760
        %793 = vmatmul.mubr.f32.gmra.mrb[0].mxu0 %v792
        %v794 = vpop.f32.mrb[0].mxu0
        %v795 = vadd.f32 %v556, %v794
        %v796 = vpop.f32.mrb[0].mxu0
        %797 = vdwg.mxu0
        %798 = vmatprep.subr.mxu0 0.0
        %v799 = vand.u32 %v536, 4294901760
        %v800 = vsub.f32 %v536, %v799
        %v801 = vand.u32 %v800, 4294901760
        %v802 = vsub.f32 %v800, %v801
        %v803 = vand.u32 %v802, 4294901760
        %804 = vmatpush1.msra.mxu0 %v803
        %805 = vmatprep.subr.mxu0 0.0
        %v806 = vand.u32 %v537, 4294901760
        %v807 = vsub.f32 %v537, %v806
        %v808 = vand.u32 %v807, 4294901760
        %v809 = vsub.f32 %v807, %v808
        %v810 = vand.u32 %v809, 4294901760
        %811 = vmatpush1.msra.mxu0 %v810
        %812 = vmatprep.subr.mxu0 0.0
        %v813 = vand.u32 %v538, 4294901760
        %v814 = vsub.f32 %v538, %v813
        %v815 = vand.u32 %v814, 4294901760
        %v816 = vsub.f32 %v814, %v815
        %v817 = vand.u32 %v816, 4294901760
        %818 = vmatpush1.msra.mxu0 %v817
        %819 = vmatprep.subr.mxu0 0.0
        %v820 = vand.u32 %v539, 4294901760
        %v821 = vsub.f32 %v539, %v820
        %v822 = vand.u32 %v821, 4294901760
        %v823 = vsub.f32 %v821, %v822
        %v824 = vand.u32 %v823, 4294901760
        %825 = vmatpush1.msra.mxu0 %v824
        %826 = vmatprep.subr.mxu0 0.0
        %v827 = vand.u32 %v540, 4294901760
        %v828 = vsub.f32 %v540, %v827
        %v829 = vand.u32 %v828, 4294901760
        %v830 = vsub.f32 %v828, %v829
        %v831 = vand.u32 %v830, 4294901760
        %832 = vmatpush1.msra.mxu0 %v831
        %833 = vmatprep.subr.mxu0 0.0
        %v834 = vand.u32 %v541, 4294901760
        %v835 = vsub.f32 %v541, %v834
        %v836 = vand.u32 %v835, 4294901760
        %v837 = vsub.f32 %v835, %v836
        %v838 = vand.u32 %v837, 4294901760
        %839 = vmatpush1.msra.mxu0 %v838
        %840 = vmatprep.subr.mxu0 0.0
        %v841 = vand.u32 %v542, 4294901760
        %v842 = vsub.f32 %v542, %v841
        %v843 = vand.u32 %v842, 4294901760
        %v844 = vsub.f32 %v842, %v843
        %v845 = vand.u32 %v844, 4294901760
        %846 = vmatpush1.msra.mxu0 %v845
        %847 = vmatprep.subr.mxu0 0.0
        %v848 = vand.u32 %v543, 4294901760
        %v849 = vsub.f32 %v543, %v848
        %v850 = vand.u32 %v849, 4294901760
        %v851 = vsub.f32 %v849, %v850
        %v852 = vand.u32 %v851, 4294901760
        %853 = vmatpush1.msra.mxu0 %v852
        %854 = vmatprep.subr.mxu0 0.0
        %v855 = vand.u32 %v544, 4294901760
        %v856 = vsub.f32 %v544, %v855
        %v857 = vand.u32 %v856, 4294901760
        %v858 = vsub.f32 %v856, %v857
        %v859 = vand.u32 %v858, 4294901760
        %860 = vmatpush1.msra.mxu0 %v859
        %861 = vmatprep.subr.mxu0 0.0
        %v862 = vand.u32 %v545, 4294901760
        %v863 = vsub.f32 %v545, %v862
        %v864 = vand.u32 %v863, 4294901760
        %v865 = vsub.f32 %v863, %v864
        %v866 = vand.u32 %v865, 4294901760
        %867 = vmatpush1.msra.mxu0 %v866
        %868 = vmatprep.subr.mxu0 0.0
        %v869 = vand.u32 %v546, 4294901760
        %v870 = vsub.f32 %v546, %v869
        %v871 = vand.u32 %v870, 4294901760
        %v872 = vsub.f32 %v870, %v871
        %v873 = vand.u32 %v872, 4294901760
        %874 = vmatpush1.msra.mxu0 %v873
        %875 = vmatprep.subr.mxu0 0.0
        %v876 = vand.u32 %v547, 4294901760
        %v877 = vsub.f32 %v547, %v876
        %v878 = vand.u32 %v877, 4294901760
        %v879 = vsub.f32 %v877, %v878
        %v880 = vand.u32 %v879, 4294901760
        %881 = vmatpush1.msra.mxu0 %v880
        %882 = vmatprep.subr.mxu0 0.0
        %v883 = vand.u32 %v548, 4294901760
        %v884 = vsub.f32 %v548, %v883
        %v885 = vand.u32 %v884, 4294901760
        %v886 = vsub.f32 %v884, %v885
        %v887 = vand.u32 %v886, 4294901760
        %888 = vmatpush1.msra.mxu0 %v887
        %889 = vmatprep.subr.mxu0 0.0
        %v890 = vand.u32 %v549, 4294901760
        %v891 = vsub.f32 %v549, %v890
        %v892 = vand.u32 %v891, 4294901760
        %v893 = vsub.f32 %v891, %v892
        %v894 = vand.u32 %v893, 4294901760
        %895 = vmatpush1.msra.mxu0 %v894
        %896 = vmatprep.subr.mxu0 0.0
        %v897 = vand.u32 %v550, 4294901760
        %v898 = vsub.f32 %v550, %v897
        %v899 = vand.u32 %v898, 4294901760
        %v900 = vsub.f32 %v898, %v899
        %v901 = vand.u32 %v900, 4294901760
        %902 = vmatpush1.msra.mxu0 %v901
        %903 = vmatprep.subr.mxu0 0.0
        %v904 = vand.u32 %v551, 4294901760
        %v905 = vsub.f32 %v551, %v904
        %v906 = vand.u32 %v905, 4294901760
        %v907 = vsub.f32 %v905, %v906
        %v908 = vand.u32 %v907, 4294901760
        %909 = vmatpush1.msra.mxu0 %v908
        %910 = vmatprep.subr.mxu0 0.0
        %911 = vmatpush1.msra.mxu0 0.0
        %912 = vmatprep.subr.mxu0 0.0
        %913 = vmatpush1.msra.mxu0 0.0
        %914 = vmatprep.subr.mxu0 0.0
        %915 = vmatpush1.msra.mxu0 0.0
        %916 = vmatprep.subr.mxu0 0.0
        %917 = vmatpush1.msra.mxu0 0.0
        %918 = vmatprep.subr.mxu0 0.0
        %919 = vmatpush1.msra.mxu0 0.0
        %920 = vmatprep.subr.mxu0 0.0
        %921 = vmatpush1.msra.mxu0 0.0
        %922 = vmatprep.subr.mxu0 0.0
        %923 = vmatpush1.msra.mxu0 0.0
        %924 = vmatprep.subr.mxu0 0.0
        %925 = vmatpush1.msra.mxu0 0.0
        %926 = vmatprep.subr.mxu0 0.0
        %927 = vmatpush1.msra.mxu0 0.0
        %928 = vmatprep.subr.mxu0 0.0
        %929 = vmatpush1.msra.mxu0 0.0
        %930 = vmatprep.subr.mxu0 0.0
        %931 = vmatpush1.msra.mxu0 0.0
        %932 = vmatprep.subr.mxu0 0.0
        %933 = vmatpush1.msra.mxu0 0.0
        %934 = vmatprep.subr.mxu0 0.0
        %935 = vmatpush1.msra.mxu0 0.0
        %936 = vmatprep.subr.mxu0 0.0
        %937 = vmatpush1.msra.mxu0 0.0
        %938 = vmatprep.subr.mxu0 0.0
        %939 = vmatpush1.msra.mxu0 0.0
        %940 = vmatprep.subr.mxu0 0.0
        %941 = vmatpush1.msra.mxu0 0.0
        %942 = vmatprep.mubr.f32.mxu0 0.0
        %v943 = vand.u32 %v520, 4294901760
        %944 = vmatmul.mubr.f32.gmra.mrb[0].mxu0 %v943
        %v945 = vpop.f32.mrb[0].mxu0
        %v946 = vadd.f32 %v645, %v945
        %v947 = vpop.f32.mrb[0].mxu0
        %948 = vmatprep.mubr.f32.mxu0 0.0
        %v949 = vand.u32 %v521, 4294901760
        %950 = vmatmul.mubr.f32.gmra.mrb[0].mxu0 %v949
        %v951 = vpop.f32.mrb[0].mxu0
        %v952 = vadd.f32 %v655, %v951
        %v953 = vpop.f32.mrb[0].mxu0
        %954 = vmatprep.mubr.f32.mxu0 0.0
        %v955 = vand.u32 %v522, 4294901760
        %956 = vmatmul.mubr.f32.gmra.mrb[0].mxu0 %v955
        %v957 = vpop.f32.mrb[0].mxu0
        %v958 = vadd.f32 %v665, %v957
        %v959 = vpop.f32.mrb[0].mxu0
        %960 = vmatprep.mubr.f32.mxu0 0.0
        %v961 = vand.u32 %v523, 4294901760
        %962 = vmatmul.mubr.f32.gmra.mrb[0].mxu0 %v961
        %v963 = vpop.f32.mrb[0].mxu0
        %v964 = vadd.f32 %v675, %v963
        %v965 = vpop.f32.mrb[0].mxu0
        %966 = vmatprep.mubr.f32.mxu0 0.0
        %v967 = vand.u32 %v524, 4294901760
        %968 = vmatmul.mubr.f32.gmra.mrb[0].mxu0 %v967
        %v969 = vpop.f32.mrb[0].mxu0
        %v970 = vadd.f32 %v685, %v969
        %v971 = vpop.f32.mrb[0].mxu0
        %972 = vmatprep.mubr.f32.mxu0 0.0
        %v973 = vand.u32 %v525, 4294901760
        %974 = vmatmul.mubr.f32.gmra.mrb[0].mxu0 %v973
        %v975 = vpop.f32.mrb[0].mxu0
        %v976 = vadd.f32 %v695, %v975
        %v977 = vpop.f32.mrb[0].mxu0
        %978 = vmatprep.mubr.f32.mxu0 0.0
        %v979 = vand.u32 %v526, 4294901760
        %980 = vmatmul.mubr.f32.gmra.mrb[0].mxu0 %v979
        %v981 = vpop.f32.mrb[0].mxu0
        %v982 = vadd.f32 %v705, %v981
        %v983 = vpop.f32.mrb[0].mxu0
        %984 = vmatprep.mubr.f32.mxu0 0.0
        %v985 = vand.u32 %v527, 4294901760
        %986 = vmatmul.mubr.f32.gmra.mrb[0].mxu0 %v985
        %v987 = vpop.f32.mrb[0].mxu0
        %v988 = vadd.f32 %v715, %v987
        %v989 = vpop.f32.mrb[0].mxu0
        %990 = vmatprep.mubr.f32.mxu0 0.0
        %v991 = vand.u32 %v528, 4294901760
        %992 = vmatmul.mubr.f32.gmra.mrb[0].mxu0 %v991
        %v993 = vpop.f32.mrb[0].mxu0
        %v994 = vadd.f32 %v725, %v993
        %v995 = vpop.f32.mrb[0].mxu0
        %996 = vmatprep.mubr.f32.mxu0 0.0
        %v997 = vand.u32 %v529, 4294901760
        %998 = vmatmul.mubr.f32.gmra.mrb[0].mxu0 %v997
        %v999 = vpop.f32.mrb[0].mxu0
        %v1000 = vadd.f32 %v735, %v999
        %v1001 = vpop.f32.mrb[0].mxu0
        %1002 = vmatprep.mubr.f32.mxu0 0.0
        %v1003 = vand.u32 %v530, 4294901760
        %1004 = vmatmul.mubr.f32.gmra.mrb[0].mxu0 %v1003
        %v1005 = vpop.f32.mrb[0].mxu0
        %v1006 = vadd.f32 %v745, %v1005
        %v1007 = vpop.f32.mrb[0].mxu0
        %1008 = vmatprep.mubr.f32.mxu0 0.0
        %v1009 = vand.u32 %v531, 4294901760
        %1010 = vmatmul.mubr.f32.gmra.mrb[0].mxu0 %v1009
        %v1011 = vpop.f32.mrb[0].mxu0
        %v1012 = vadd.f32 %v755, %v1011
        %v1013 = vpop.f32.mrb[0].mxu0
        %1014 = vmatprep.mubr.f32.mxu0 0.0
        %v1015 = vand.u32 %v532, 4294901760
        %1016 = vmatmul.mubr.f32.gmra.mrb[0].mxu0 %v1015
        %v1017 = vpop.f32.mrb[0].mxu0
        %v1018 = vadd.f32 %v765, %v1017
        %v1019 = vpop.f32.mrb[0].mxu0
        %1020 = vmatprep.mubr.f32.mxu0 0.0
        %v1021 = vand.u32 %v533, 4294901760
        %1022 = vmatmul.mubr.f32.gmra.mrb[0].mxu0 %v1021
        %v1023 = vpop.f32.mrb[0].mxu0
        %v1024 = vadd.f32 %v775, %v1023
        %v1025 = vpop.f32.mrb[0].mxu0
        %1026 = vmatprep.mubr.f32.mxu0 0.0
        %v1027 = vand.u32 %v534, 4294901760
        %1028 = vmatmul.mubr.f32.gmra.mrb[0].mxu0 %v1027
        %v1029 = vpop.f32.mrb[0].mxu0
        %v1030 = vadd.f32 %v785, %v1029
        %v1031 = vpop.f32.mrb[0].mxu0
        %1032 = vmatprep.mubr.f32.mxu0 0.0
        %v1033 = vand.u32 %v535, 4294901760
        %1034 = vmatmul.mubr.f32.gmra.mrb[0].mxu0 %v1033
        %v1035 = vpop.f32.mrb[0].mxu0
        %v1036 = vadd.f32 %v795, %v1035
        %v1037 = vpop.f32.mrb[0].mxu0
        %1038 = vdwg.mxu0
        %1039 = vmatprep.subr.mxu0 0.0
        %v1040 = vand.u32 %v536, 4294901760
        %v1041 = vsub.f32 %v536, %v1040
        %1042 = vmatpush1.msra.mxu0 %v1041
        %1043 = vmatprep.subr.mxu0 0.0
        %v1044 = vand.u32 %v537, 4294901760
        %v1045 = vsub.f32 %v537, %v1044
        %1046 = vmatpush1.msra.mxu0 %v1045
        %1047 = vmatprep.subr.mxu0 0.0
        %v1048 = vand.u32 %v538, 4294901760
        %v1049 = vsub.f32 %v538, %v1048
        %1050 = vmatpush1.msra.mxu0 %v1049
        %1051 = vmatprep.subr.mxu0 0.0
        %v1052 = vand.u32 %v539, 4294901760
        %v1053 = vsub.f32 %v539, %v1052
        %1054 = vmatpush1.msra.mxu0 %v1053
        %1055 = vmatprep.subr.mxu0 0.0
        %v1056 = vand.u32 %v540, 4294901760
        %v1057 = vsub.f32 %v540, %v1056
        %1058 = vmatpush1.msra.mxu0 %v1057
        %1059 = vmatprep.subr.mxu0 0.0
        %v1060 = vand.u32 %v541, 4294901760
        %v1061 = vsub.f32 %v541, %v1060
        %1062 = vmatpush1.msra.mxu0 %v1061
        %1063 = vmatprep.subr.mxu0 0.0
        %v1064 = vand.u32 %v542, 4294901760
        %v1065 = vsub.f32 %v542, %v1064
        %1066 = vmatpush1.msra.mxu0 %v1065
        %1067 = vmatprep.subr.mxu0 0.0
        %v1068 = vand.u32 %v543, 4294901760
        %v1069 = vsub.f32 %v543, %v1068
        %1070 = vmatpush1.msra.mxu0 %v1069
        %1071 = vmatprep.subr.mxu0 0.0
        %v1072 = vand.u32 %v544, 4294901760
        %v1073 = vsub.f32 %v544, %v1072
        %1074 = vmatpush1.msra.mxu0 %v1073
        %1075 = vmatprep.subr.mxu0 0.0
        %v1076 = vand.u32 %v545, 4294901760
        %v1077 = vsub.f32 %v545, %v1076
        %1078 = vmatpush1.msra.mxu0 %v1077
        %1079 = vmatprep.subr.mxu0 0.0
        %v1080 = vand.u32 %v546, 4294901760
        %v1081 = vsub.f32 %v546, %v1080
        %1082 = vmatpush1.msra.mxu0 %v1081
        %1083 = vmatprep.subr.mxu0 0.0
        %v1084 = vand.u32 %v547, 4294901760
        %v1085 = vsub.f32 %v547, %v1084
        %1086 = vmatpush1.msra.mxu0 %v1085
        %1087 = vmatprep.subr.mxu0 0.0
        %v1088 = vand.u32 %v548, 4294901760
        %v1089 = vsub.f32 %v548, %v1088
        %1090 = vmatpush1.msra.mxu0 %v1089
        %1091 = vmatprep.subr.mxu0 0.0
        %v1092 = vand.u32 %v549, 4294901760
        %v1093 = vsub.f32 %v549, %v1092
        %1094 = vmatpush1.msra.mxu0 %v1093
        %1095 = vmatprep.subr.mxu0 0.0
        %v1096 = vand.u32 %v550, 4294901760
        %v1097 = vsub.f32 %v550, %v1096
        %1098 = vmatpush1.msra.mxu0 %v1097
        %1099 = vmatprep.subr.mxu0 0.0
        %v1100 = vand.u32 %v551, 4294901760
        %v1101 = vsub.f32 %v551, %v1100
        %1102 = vmatpush1.msra.mxu0 %v1101
        %1103 = vmatprep.subr.mxu0 0.0
        %1104 = vmatpush1.msra.mxu0 0.0
        %1105 = vmatprep.subr.mxu0 0.0
        %1106 = vmatpush1.msra.mxu0 0.0
        %1107 = vmatprep.subr.mxu0 0.0
        %1108 = vmatpush1.msra.mxu0 0.0
        %1109 = vmatprep.subr.mxu0 0.0
        %1110 = vmatpush1.msra.mxu0 0.0
        %1111 = vmatprep.subr.mxu0 0.0
        %1112 = vmatpush1.msra.mxu0 0.0
        %1113 = vmatprep.subr.mxu0 0.0
        %1114 = vmatpush1.msra.mxu0 0.0
        %1115 = vmatprep.subr.mxu0 0.0
        %1116 = vmatpush1.msra.mxu0 0.0
        %1117 = vmatprep.subr.mxu0 0.0
        %1118 = vmatpush1.msra.mxu0 0.0
        %1119 = vmatprep.subr.mxu0 0.0
        %1120 = vmatpush1.msra.mxu0 0.0
        %1121 = vmatprep.subr.mxu0 0.0
        %1122 = vmatpush1.msra.mxu0 0.0
        %1123 = vmatprep.subr.mxu0 0.0
        %1124 = vmatpush1.msra.mxu0 0.0
        %1125 = vmatprep.subr.mxu0 0.0
        %1126 = vmatpush1.msra.mxu0 0.0
        %1127 = vmatprep.subr.mxu0 0.0
        %1128 = vmatpush1.msra.mxu0 0.0
        %1129 = vmatprep.subr.mxu0 0.0
        %1130 = vmatpush1.msra.mxu0 0.0
        %1131 = vmatprep.subr.mxu0 0.0
        %1132 = vmatpush1.msra.mxu0 0.0
        %1133 = vmatprep.subr.mxu0 0.0
        %1134 = vmatpush1.msra.mxu0 0.0
        %1135 = vmatprep.mubr.f32.mxu0 0.0
        %v1136 = vand.u32 %v520, 4294901760
        %v1137 = vsub.f32 %v520, %v1136
        %1138 = vmatmul.mubr.f32.gmra.mrb[0].mxu0 %v1137
        %v1139 = vpop.f32.mrb[0].mxu0
        %v1140 = vadd.f32 %v946, %v1139
        %v1141 = vpop.f32.mrb[0].mxu0
        %1142 = vmatprep.mubr.f32.mxu0 0.0
        %v1143 = vand.u32 %v521, 4294901760
        %v1144 = vsub.f32 %v521, %v1143
        %1145 = vmatmul.mubr.f32.gmra.mrb[0].mxu0 %v1144
        %v1146 = vpop.f32.mrb[0].mxu0
        %v1147 = vadd.f32 %v952, %v1146
        %v1148 = vpop.f32.mrb[0].mxu0
        %1149 = vmatprep.mubr.f32.mxu0 0.0
        %v1150 = vand.u32 %v522, 4294901760
        %v1151 = vsub.f32 %v522, %v1150
        %1152 = vmatmul.mubr.f32.gmra.mrb[0].mxu0 %v1151
        %v1153 = vpop.f32.mrb[0].mxu0
        %v1154 = vadd.f32 %v958, %v1153
        %v1155 = vpop.f32.mrb[0].mxu0
        %1156 = vmatprep.mubr.f32.mxu0 0.0
        %v1157 = vand.u32 %v523, 4294901760
        %v1158 = vsub.f32 %v523, %v1157
        %1159 = vmatmul.mubr.f32.gmra.mrb[0].mxu0 %v1158
        %v1160 = vpop.f32.mrb[0].mxu0
        %v1161 = vadd.f32 %v964, %v1160
        %v1162 = vpop.f32.mrb[0].mxu0
        %1163 = vmatprep.mubr.f32.mxu0 0.0
        %v1164 = vand.u32 %v524, 4294901760
        %v1165 = vsub.f32 %v524, %v1164
        %1166 = vmatmul.mubr.f32.gmra.mrb[0].mxu0 %v1165
        %v1167 = vpop.f32.mrb[0].mxu0
        %v1168 = vadd.f32 %v970, %v1167
        %v1169 = vpop.f32.mrb[0].mxu0
        %1170 = vmatprep.mubr.f32.mxu0 0.0
        %v1171 = vand.u32 %v525, 4294901760
        %v1172 = vsub.f32 %v525, %v1171
        %1173 = vmatmul.mubr.f32.gmra.mrb[0].mxu0 %v1172
        %v1174 = vpop.f32.mrb[0].mxu0
        %v1175 = vadd.f32 %v976, %v1174
        %v1176 = vpop.f32.mrb[0].mxu0
        %1177 = vmatprep.mubr.f32.mxu0 0.0
        %v1178 = vand.u32 %v526, 4294901760
        %v1179 = vsub.f32 %v526, %v1178
        %1180 = vmatmul.mubr.f32.gmra.mrb[0].mxu0 %v1179
        %v1181 = vpop.f32.mrb[0].mxu0
        %v1182 = vadd.f32 %v982, %v1181
        %v1183 = vpop.f32.mrb[0].mxu0
        %1184 = vmatprep.mubr.f32.mxu0 0.0
        %v1185 = vand.u32 %v527, 4294901760
        %v1186 = vsub.f32 %v527, %v1185
        %1187 = vmatmul.mubr.f32.gmra.mrb[0].mxu0 %v1186
        %v1188 = vpop.f32.mrb[0].mxu0
        %v1189 = vadd.f32 %v988, %v1188
        %v1190 = vpop.f32.mrb[0].mxu0
        %1191 = vmatprep.mubr.f32.mxu0 0.0
        %v1192 = vand.u32 %v528, 4294901760
        %v1193 = vsub.f32 %v528, %v1192
        %1194 = vmatmul.mubr.f32.gmra.mrb[0].mxu0 %v1193
        %v1195 = vpop.f32.mrb[0].mxu0
        %v1196 = vadd.f32 %v994, %v1195
        %v1197 = vpop.f32.mrb[0].mxu0
        %1198 = vmatprep.mubr.f32.mxu0 0.0
        %v1199 = vand.u32 %v529, 4294901760
        %v1200 = vsub.f32 %v529, %v1199
        %1201 = vmatmul.mubr.f32.gmra.mrb[0].mxu0 %v1200
        %v1202 = vpop.f32.mrb[0].mxu0
        %v1203 = vadd.f32 %v1000, %v1202
        %v1204 = vpop.f32.mrb[0].mxu0
        %1205 = vmatprep.mubr.f32.mxu0 0.0
        %v1206 = vand.u32 %v530, 4294901760
        %v1207 = vsub.f32 %v530, %v1206
        %1208 = vmatmul.mubr.f32.gmra.mrb[0].mxu0 %v1207
        %v1209 = vpop.f32.mrb[0].mxu0
        %v1210 = vadd.f32 %v1006, %v1209
        %v1211 = vpop.f32.mrb[0].mxu0
        %1212 = vmatprep.mubr.f32.mxu0 0.0
        %v1213 = vand.u32 %v531, 4294901760
        %v1214 = vsub.f32 %v531, %v1213
        %1215 = vmatmul.mubr.f32.gmra.mrb[0].mxu0 %v1214
        %v1216 = vpop.f32.mrb[0].mxu0
        %v1217 = vadd.f32 %v1012, %v1216
        %v1218 = vpop.f32.mrb[0].mxu0
        %1219 = vmatprep.mubr.f32.mxu0 0.0
        %v1220 = vand.u32 %v532, 4294901760
        %v1221 = vsub.f32 %v532, %v1220
        %1222 = vmatmul.mubr.f32.gmra.mrb[0].mxu0 %v1221
        %v1223 = vpop.f32.mrb[0].mxu0
        %v1224 = vadd.f32 %v1018, %v1223
        %v1225 = vpop.f32.mrb[0].mxu0
        %1226 = vmatprep.mubr.f32.mxu0 0.0
        %v1227 = vand.u32 %v533, 4294901760
        %v1228 = vsub.f32 %v533, %v1227
        %1229 = vmatmul.mubr.f32.gmra.mrb[0].mxu0 %v1228
        %v1230 = vpop.f32.mrb[0].mxu0
        %v1231 = vadd.f32 %v1024, %v1230
        %v1232 = vpop.f32.mrb[0].mxu0
        %1233 = vmatprep.mubr.f32.mxu0 0.0
        %v1234 = vand.u32 %v534, 4294901760
        %v1235 = vsub.f32 %v534, %v1234
        %1236 = vmatmul.mubr.f32.gmra.mrb[0].mxu0 %v1235
        %v1237 = vpop.f32.mrb[0].mxu0
        %v1238 = vadd.f32 %v1030, %v1237
        %v1239 = vpop.f32.mrb[0].mxu0
        %1240 = vmatprep.mubr.f32.mxu0 0.0
        %v1241 = vand.u32 %v535, 4294901760
        %v1242 = vsub.f32 %v535, %v1241
        %1243 = vmatmul.mubr.f32.gmra.mrb[0].mxu0 %v1242
        %v1244 = vpop.f32.mrb[0].mxu0
        %v1245 = vadd.f32 %v1036, %v1244
        %v1246 = vpop.f32.mrb[0].mxu0
        %1247 = vdwg.mxu0
        %1248 = vmatprep.subr.mxu0 0.0
        %v1249 = vand.u32 %v536, 4294901760
        %1250 = vmatpush1.msra.mxu0 %v1249
        %1251 = vmatprep.subr.mxu0 0.0
        %v1252 = vand.u32 %v537, 4294901760
        %1253 = vmatpush1.msra.mxu0 %v1252
        %1254 = vmatprep.subr.mxu0 0.0
        %v1255 = vand.u32 %v538, 4294901760
        %1256 = vmatpush1.msra.mxu0 %v1255
        %1257 = vmatprep.subr.mxu0 0.0
        %v1258 = vand.u32 %v539, 4294901760
        %1259 = vmatpush1.msra.mxu0 %v1258
        %1260 = vmatprep.subr.mxu0 0.0
        %v1261 = vand.u32 %v540, 4294901760
        %1262 = vmatpush1.msra.mxu0 %v1261
        %1263 = vmatprep.subr.mxu0 0.0
        %v1264 = vand.u32 %v541, 4294901760
        %1265 = vmatpush1.msra.mxu0 %v1264
        %1266 = vmatprep.subr.mxu0 0.0
        %v1267 = vand.u32 %v542, 4294901760
        %1268 = vmatpush1.msra.mxu0 %v1267
        %1269 = vmatprep.subr.mxu0 0.0
        %v1270 = vand.u32 %v543, 4294901760
        %1271 = vmatpush1.msra.mxu0 %v1270
        %1272 = vmatprep.subr.mxu0 0.0
        %v1273 = vand.u32 %v544, 4294901760
        %1274 = vmatpush1.msra.mxu0 %v1273
        %1275 = vmatprep.subr.mxu0 0.0
        %v1276 = vand.u32 %v545, 4294901760
        %1277 = vmatpush1.msra.mxu0 %v1276
        %1278 = vmatprep.subr.mxu0 0.0
        %v1279 = vand.u32 %v546, 4294901760
        %1280 = vmatpush1.msra.mxu0 %v1279
        %1281 = vmatprep.subr.mxu0 0.0
        %v1282 = vand.u32 %v547, 4294901760
        %1283 = vmatpush1.msra.mxu0 %v1282
        %1284 = vmatprep.subr.mxu0 0.0
        %v1285 = vand.u32 %v548, 4294901760
        %1286 = vmatpush1.msra.mxu0 %v1285
        %1287 = vmatprep.subr.mxu0 0.0
        %v1288 = vand.u32 %v549, 4294901760
        %1289 = vmatpush1.msra.mxu0 %v1288
        %1290 = vmatprep.subr.mxu0 0.0
        %v1291 = vand.u32 %v550, 4294901760
        %1292 = vmatpush1.msra.mxu0 %v1291
        %1293 = vmatprep.subr.mxu0 0.0
        %v1294 = vand.u32 %v551, 4294901760
        %1295 = vmatpush1.msra.mxu0 %v1294
        %1296 = vmatprep.subr.mxu0 0.0
        %1297 = vmatpush1.msra.mxu0 0.0
        %1298 = vmatprep.subr.mxu0 0.0
        %1299 = vmatpush1.msra.mxu0 0.0
        %1300 = vmatprep.subr.mxu0 0.0
        %1301 = vmatpush1.msra.mxu0 0.0
        %1302 = vmatprep.subr.mxu0 0.0
        %1303 = vmatpush1.msra.mxu0 0.0
        %1304 = vmatprep.subr.mxu0 0.0
        %1305 = vmatpush1.msra.mxu0 0.0
        %1306 = vmatprep.subr.mxu0 0.0
        %1307 = vmatpush1.msra.mxu0 0.0
        %1308 = vmatprep.subr.mxu0 0.0
        %1309 = vmatpush1.msra.mxu0 0.0
        %1310 = vmatprep.subr.mxu0 0.0
        %1311 = vmatpush1.msra.mxu0 0.0
        %1312 = vmatprep.subr.mxu0 0.0
        %1313 = vmatpush1.msra.mxu0 0.0
        %1314 = vmatprep.subr.mxu0 0.0
        %1315 = vmatpush1.msra.mxu0 0.0
        %1316 = vmatprep.subr.mxu0 0.0
        %1317 = vmatpush1.msra.mxu0 0.0
        %1318 = vmatprep.subr.mxu0 0.0
        %1319 = vmatpush1.msra.mxu0 0.0
        %1320 = vmatprep.subr.mxu0 0.0
        %1321 = vmatpush1.msra.mxu0 0.0
        %1322 = vmatprep.subr.mxu0 0.0
        %1323 = vmatpush1.msra.mxu0 0.0
        %1324 = vmatprep.subr.mxu0 0.0
        %1325 = vmatpush1.msra.mxu0 0.0
        %1326 = vmatprep.subr.mxu0 0.0
        %1327 = vmatpush1.msra.mxu0 0.0
        %1328 = vmatprep.mubr.f32.mxu0 0.0
        %v1329 = vand.u32 %v520, 4294901760
        %v1330 = vsub.f32 %v520, %v1329
        %v1331 = vand.u32 %v1330, 4294901760
        %1332 = vmatmul.mubr.f32.gmra.mrb[0].mxu0 %v1331
        %v1333 = vpop.f32.mrb[0].mxu0
        %v1334 = vadd.f32 %v1140, %v1333
        %v1335 = vpop.f32.mrb[0].mxu0
        %1336 = vmatprep.mubr.f32.mxu0 0.0
        %v1337 = vand.u32 %v521, 4294901760
        %v1338 = vsub.f32 %v521, %v1337
        %v1339 = vand.u32 %v1338, 4294901760
        %1340 = vmatmul.mubr.f32.gmra.mrb[0].mxu0 %v1339
        %v1341 = vpop.f32.mrb[0].mxu0
        %v1342 = vadd.f32 %v1147, %v1341
        %v1343 = vpop.f32.mrb[0].mxu0
        %1344 = vmatprep.mubr.f32.mxu0 0.0
        %v1345 = vand.u32 %v522, 4294901760
        %v1346 = vsub.f32 %v522, %v1345
        %v1347 = vand.u32 %v1346, 4294901760
        %1348 = vmatmul.mubr.f32.gmra.mrb[0].mxu0 %v1347
        %v1349 = vpop.f32.mrb[0].mxu0
        %v1350 = vadd.f32 %v1154, %v1349
        %v1351 = vpop.f32.mrb[0].mxu0
        %1352 = vmatprep.mubr.f32.mxu0 0.0
        %v1353 = vand.u32 %v523, 4294901760
        %v1354 = vsub.f32 %v523, %v1353
        %v1355 = vand.u32 %v1354, 4294901760
        %1356 = vmatmul.mubr.f32.gmra.mrb[0].mxu0 %v1355
        %v1357 = vpop.f32.mrb[0].mxu0
        %v1358 = vadd.f32 %v1161, %v1357
        %v1359 = vpop.f32.mrb[0].mxu0
        %1360 = vmatprep.mubr.f32.mxu0 0.0
        %v1361 = vand.u32 %v524, 4294901760
        %v1362 = vsub.f32 %v524, %v1361
        %v1363 = vand.u32 %v1362, 4294901760
        %1364 = vmatmul.mubr.f32.gmra.mrb[0].mxu0 %v1363
        %v1365 = vpop.f32.mrb[0].mxu0
        %v1366 = vadd.f32 %v1168, %v1365
        %v1367 = vpop.f32.mrb[0].mxu0
        %1368 = vmatprep.mubr.f32.mxu0 0.0
        %v1369 = vand.u32 %v525, 4294901760
        %v1370 = vsub.f32 %v525, %v1369
        %v1371 = vand.u32 %v1370, 4294901760
        %1372 = vmatmul.mubr.f32.gmra.mrb[0].mxu0 %v1371
        %v1373 = vpop.f32.mrb[0].mxu0
        %v1374 = vadd.f32 %v1175, %v1373
        %v1375 = vpop.f32.mrb[0].mxu0
        %1376 = vmatprep.mubr.f32.mxu0 0.0
        %v1377 = vand.u32 %v526, 4294901760
        %v1378 = vsub.f32 %v526, %v1377
        %v1379 = vand.u32 %v1378, 4294901760
        %1380 = vmatmul.mubr.f32.gmra.mrb[0].mxu0 %v1379
        %v1381 = vpop.f32.mrb[0].mxu0
        %v1382 = vadd.f32 %v1182, %v1381
        %v1383 = vpop.f32.mrb[0].mxu0
        %1384 = vmatprep.mubr.f32.mxu0 0.0
        %v1385 = vand.u32 %v527, 4294901760
        %v1386 = vsub.f32 %v527, %v1385
        %v1387 = vand.u32 %v1386, 4294901760
        %1388 = vmatmul.mubr.f32.gmra.mrb[0].mxu0 %v1387
        %v1389 = vpop.f32.mrb[0].mxu0
        %v1390 = vadd.f32 %v1189, %v1389
        %v1391 = vpop.f32.mrb[0].mxu0
        %1392 = vmatprep.mubr.f32.mxu0 0.0
        %v1393 = vand.u32 %v528, 4294901760
        %v1394 = vsub.f32 %v528, %v1393
        %v1395 = vand.u32 %v1394, 4294901760
        %1396 = vmatmul.mubr.f32.gmra.mrb[0].mxu0 %v1395
        %v1397 = vpop.f32.mrb[0].mxu0
        %v1398 = vadd.f32 %v1196, %v1397
        %v1399 = vpop.f32.mrb[0].mxu0
        %1400 = vmatprep.mubr.f32.mxu0 0.0
        %v1401 = vand.u32 %v529, 4294901760
        %v1402 = vsub.f32 %v529, %v1401
        %v1403 = vand.u32 %v1402, 4294901760
        %1404 = vmatmul.mubr.f32.gmra.mrb[0].mxu0 %v1403
        %v1405 = vpop.f32.mrb[0].mxu0
        %v1406 = vadd.f32 %v1203, %v1405
        %v1407 = vpop.f32.mrb[0].mxu0
        %1408 = vmatprep.mubr.f32.mxu0 0.0
        %v1409 = vand.u32 %v530, 4294901760
        %v1410 = vsub.f32 %v530, %v1409
        %v1411 = vand.u32 %v1410, 4294901760
        %1412 = vmatmul.mubr.f32.gmra.mrb[0].mxu0 %v1411
        %v1413 = vpop.f32.mrb[0].mxu0
        %v1414 = vadd.f32 %v1210, %v1413
        %v1415 = vpop.f32.mrb[0].mxu0
        %1416 = vmatprep.mubr.f32.mxu0 0.0
        %v1417 = vand.u32 %v531, 4294901760
        %v1418 = vsub.f32 %v531, %v1417
        %v1419 = vand.u32 %v1418, 4294901760
        %1420 = vmatmul.mubr.f32.gmra.mrb[0].mxu0 %v1419
        %v1421 = vpop.f32.mrb[0].mxu0
        %v1422 = vadd.f32 %v1217, %v1421
        %v1423 = vpop.f32.mrb[0].mxu0
        %1424 = vmatprep.mubr.f32.mxu0 0.0
        %v1425 = vand.u32 %v532, 4294901760
        %v1426 = vsub.f32 %v532, %v1425
        %v1427 = vand.u32 %v1426, 4294901760
        %1428 = vmatmul.mubr.f32.gmra.mrb[0].mxu0 %v1427
        %v1429 = vpop.f32.mrb[0].mxu0
        %v1430 = vadd.f32 %v1224, %v1429
        %v1431 = vpop.f32.mrb[0].mxu0
        %1432 = vmatprep.mubr.f32.mxu0 0.0
        %v1433 = vand.u32 %v533, 4294901760
        %v1434 = vsub.f32 %v533, %v1433
        %v1435 = vand.u32 %v1434, 4294901760
        %1436 = vmatmul.mubr.f32.gmra.mrb[0].mxu0 %v1435
        %v1437 = vpop.f32.mrb[0].mxu0
        %v1438 = vadd.f32 %v1231, %v1437
        %v1439 = vpop.f32.mrb[0].mxu0
        %1440 = vmatprep.mubr.f32.mxu0 0.0
        %v1441 = vand.u32 %v534, 4294901760
        %v1442 = vsub.f32 %v534, %v1441
        %v1443 = vand.u32 %v1442, 4294901760
        %1444 = vmatmul.mubr.f32.gmra.mrb[0].mxu0 %v1443
        %v1445 = vpop.f32.mrb[0].mxu0
        %v1446 = vadd.f32 %v1238, %v1445
        %v1447 = vpop.f32.mrb[0].mxu0
        %1448 = vmatprep.mubr.f32.mxu0 0.0
        %v1449 = vand.u32 %v535, 4294901760
        %v1450 = vsub.f32 %v535, %v1449
        %v1451 = vand.u32 %v1450, 4294901760
        %1452 = vmatmul.mubr.f32.gmra.mrb[0].mxu0 %v1451
        %v1453 = vpop.f32.mrb[0].mxu0
        %v1454 = vadd.f32 %v1245, %v1453
        %v1455 = vpop.f32.mrb[0].mxu0
        %1456 = vdwg.mxu0
        %1457 = vmatprep.subr.mxu0 0.0
        %v1458 = vand.u32 %v536, 4294901760
        %v1459 = vsub.f32 %v536, %v1458
        %v1460 = vand.u32 %v1459, 4294901760
        %1461 = vmatpush1.msra.mxu0 %v1460
        %1462 = vmatprep.subr.mxu0 0.0
        %v1463 = vand.u32 %v537, 4294901760
        %v1464 = vsub.f32 %v537, %v1463
        %v1465 = vand.u32 %v1464, 4294901760
        %1466 = vmatpush1.msra.mxu0 %v1465
        %1467 = vmatprep.subr.mxu0 0.0
        %v1468 = vand.u32 %v538, 4294901760
        %v1469 = vsub.f32 %v538, %v1468
        %v1470 = vand.u32 %v1469, 4294901760
        %1471 = vmatpush1.msra.mxu0 %v1470
        %1472 = vmatprep.subr.mxu0 0.0
        %v1473 = vand.u32 %v539, 4294901760
        %v1474 = vsub.f32 %v539, %v1473
        %v1475 = vand.u32 %v1474, 4294901760
        %1476 = vmatpush1.msra.mxu0 %v1475
        %1477 = vmatprep.subr.mxu0 0.0
        %v1478 = vand.u32 %v540, 4294901760
        %v1479 = vsub.f32 %v540, %v1478
        %v1480 = vand.u32 %v1479, 4294901760
        %1481 = vmatpush1.msra.mxu0 %v1480
        %1482 = vmatprep.subr.mxu0 0.0
        %v1483 = vand.u32 %v541, 4294901760
        %v1484 = vsub.f32 %v541, %v1483
        %v1485 = vand.u32 %v1484, 4294901760
        %1486 = vmatpush1.msra.mxu0 %v1485
        %1487 = vmatprep.subr.mxu0 0.0
        %v1488 = vand.u32 %v542, 4294901760
        %v1489 = vsub.f32 %v542, %v1488
        %v1490 = vand.u32 %v1489, 4294901760
        %1491 = vmatpush1.msra.mxu0 %v1490
        %1492 = vmatprep.subr.mxu0 0.0
        %v1493 = vand.u32 %v543, 4294901760
        %v1494 = vsub.f32 %v543, %v1493
        %v1495 = vand.u32 %v1494, 4294901760
        %1496 = vmatpush1.msra.mxu0 %v1495
        %1497 = vmatprep.subr.mxu0 0.0
        %v1498 = vand.u32 %v544, 4294901760
        %v1499 = vsub.f32 %v544, %v1498
        %v1500 = vand.u32 %v1499, 4294901760
        %1501 = vmatpush1.msra.mxu0 %v1500
        %1502 = vmatprep.subr.mxu0 0.0
        %v1503 = vand.u32 %v545, 4294901760
        %v1504 = vsub.f32 %v545, %v1503
        %v1505 = vand.u32 %v1504, 4294901760
        %1506 = vmatpush1.msra.mxu0 %v1505
        %1507 = vmatprep.subr.mxu0 0.0
        %v1508 = vand.u32 %v546, 4294901760
        %v1509 = vsub.f32 %v546, %v1508
        %v1510 = vand.u32 %v1509, 4294901760
        %1511 = vmatpush1.msra.mxu0 %v1510
        %1512 = vmatprep.subr.mxu0 0.0
        %v1513 = vand.u32 %v547, 4294901760
        %v1514 = vsub.f32 %v547, %v1513
        %v1515 = vand.u32 %v1514, 4294901760
        %1516 = vmatpush1.msra.mxu0 %v1515
        %1517 = vmatprep.subr.mxu0 0.0
        %v1518 = vand.u32 %v548, 4294901760
        %v1519 = vsub.f32 %v548, %v1518
        %v1520 = vand.u32 %v1519, 4294901760
        %1521 = vmatpush1.msra.mxu0 %v1520
        %1522 = vmatprep.subr.mxu0 0.0
        %v1523 = vand.u32 %v549, 4294901760
        %v1524 = vsub.f32 %v549, %v1523
        %v1525 = vand.u32 %v1524, 4294901760
        %1526 = vmatpush1.msra.mxu0 %v1525
        %1527 = vmatprep.subr.mxu0 0.0
        %v1528 = vand.u32 %v550, 4294901760
        %v1529 = vsub.f32 %v550, %v1528
        %v1530 = vand.u32 %v1529, 4294901760
        %1531 = vmatpush1.msra.mxu0 %v1530
        %1532 = vmatprep.subr.mxu0 0.0
        %v1533 = vand.u32 %v551, 4294901760
        %v1534 = vsub.f32 %v551, %v1533
        %v1535 = vand.u32 %v1534, 4294901760
        %1536 = vmatpush1.msra.mxu0 %v1535
        %1537 = vmatprep.subr.mxu0 0.0
        %1538 = vmatpush1.msra.mxu0 0.0
        %1539 = vmatprep.subr.mxu0 0.0
        %1540 = vmatpush1.msra.mxu0 0.0
        %1541 = vmatprep.subr.mxu0 0.0
        %1542 = vmatpush1.msra.mxu0 0.0
        %1543 = vmatprep.subr.mxu0 0.0
        %1544 = vmatpush1.msra.mxu0 0.0
        %1545 = vmatprep.subr.mxu0 0.0
        %1546 = vmatpush1.msra.mxu0 0.0
        %1547 = vmatprep.subr.mxu0 0.0
        %1548 = vmatpush1.msra.mxu0 0.0
        %1549 = vmatprep.subr.mxu0 0.0
        %1550 = vmatpush1.msra.mxu0 0.0
        %1551 = vmatprep.subr.mxu0 0.0
        %1552 = vmatpush1.msra.mxu0 0.0
        %1553 = vmatprep.subr.mxu0 0.0
        %1554 = vmatpush1.msra.mxu0 0.0
        %1555 = vmatprep.subr.mxu0 0.0
        %1556 = vmatpush1.msra.mxu0 0.0
        %1557 = vmatprep.subr.mxu0 0.0
        %1558 = vmatpush1.msra.mxu0 0.0
        %1559 = vmatprep.subr.mxu0 0.0
        %1560 = vmatpush1.msra.mxu0 0.0
        %1561 = vmatprep.subr.mxu0 0.0
        %1562 = vmatpush1.msra.mxu0 0.0
        %1563 = vmatprep.subr.mxu0 0.0
        %1564 = vmatpush1.msra.mxu0 0.0
        %1565 = vmatprep.subr.mxu0 0.0
        %1566 = vmatpush1.msra.mxu0 0.0
        %1567 = vmatprep.subr.mxu0 0.0
        %1568 = vmatpush1.msra.mxu0 0.0
        %1569 = vmatprep.mubr.f32.mxu0 0.0
        %v1570 = vand.u32 %v520, 4294901760
        %1571 = vmatmul.mubr.f32.gmra.mrb[0].mxu0 %v1570
        %v1572 = vpop.f32.mrb[0].mxu0
        %v1573 = vadd.f32 %v1334, %v1572
        %v1574 = vpop.f32.mrb[0].mxu0
        %1575 = vmatprep.mubr.f32.mxu0 0.0
        %v1576 = vand.u32 %v521, 4294901760
        %1577 = vmatmul.mubr.f32.gmra.mrb[0].mxu0 %v1576
        %v1578 = vpop.f32.mrb[0].mxu0
        %v1579 = vadd.f32 %v1342, %v1578
        %v1580 = vpop.f32.mrb[0].mxu0
        %1581 = vmatprep.mubr.f32.mxu0 0.0
        %v1582 = vand.u32 %v522, 4294901760
        %1583 = vmatmul.mubr.f32.gmra.mrb[0].mxu0 %v1582
        %v1584 = vpop.f32.mrb[0].mxu0
        %v1585 = vadd.f32 %v1350, %v1584
        %v1586 = vpop.f32.mrb[0].mxu0
        %1587 = vmatprep.mubr.f32.mxu0 0.0
        %v1588 = vand.u32 %v523, 4294901760
        %1589 = vmatmul.mubr.f32.gmra.mrb[0].mxu0 %v1588
        %v1590 = vpop.f32.mrb[0].mxu0
        %v1591 = vadd.f32 %v1358, %v1590
        %v1592 = vpop.f32.mrb[0].mxu0
        %1593 = vmatprep.mubr.f32.mxu0 0.0
        %v1594 = vand.u32 %v524, 4294901760
        %1595 = vmatmul.mubr.f32.gmra.mrb[0].mxu0 %v1594
        %v1596 = vpop.f32.mrb[0].mxu0
        %v1597 = vadd.f32 %v1366, %v1596
        %v1598 = vpop.f32.mrb[0].mxu0
        %1599 = vmatprep.mubr.f32.mxu0 0.0
        %v1600 = vand.u32 %v525, 4294901760
        %1601 = vmatmul.mubr.f32.gmra.mrb[0].mxu0 %v1600
        %v1602 = vpop.f32.mrb[0].mxu0
        %v1603 = vadd.f32 %v1374, %v1602
        %v1604 = vpop.f32.mrb[0].mxu0
        %1605 = vmatprep.mubr.f32.mxu0 0.0
        %v1606 = vand.u32 %v526, 4294901760
        %1607 = vmatmul.mubr.f32.gmra.mrb[0].mxu0 %v1606
        %v1608 = vpop.f32.mrb[0].mxu0
        %v1609 = vadd.f32 %v1382, %v1608
        %v1610 = vpop.f32.mrb[0].mxu0
        %1611 = vmatprep.mubr.f32.mxu0 0.0
        %v1612 = vand.u32 %v527, 4294901760
        %1613 = vmatmul.mubr.f32.gmra.mrb[0].mxu0 %v1612
        %v1614 = vpop.f32.mrb[0].mxu0
        %v1615 = vadd.f32 %v1390, %v1614
        %v1616 = vpop.f32.mrb[0].mxu0
        %1617 = vmatprep.mubr.f32.mxu0 0.0
        %v1618 = vand.u32 %v528, 4294901760
        %1619 = vmatmul.mubr.f32.gmra.mrb[0].mxu0 %v1618
        %v1620 = vpop.f32.mrb[0].mxu0
        %v1621 = vadd.f32 %v1398, %v1620
        %v1622 = vpop.f32.mrb[0].mxu0
        %1623 = vmatprep.mubr.f32.mxu0 0.0
        %v1624 = vand.u32 %v529, 4294901760
        %1625 = vmatmul.mubr.f32.gmra.mrb[0].mxu0 %v1624
        %v1626 = vpop.f32.mrb[0].mxu0
        %v1627 = vadd.f32 %v1406, %v1626
        %v1628 = vpop.f32.mrb[0].mxu0
        %1629 = vmatprep.mubr.f32.mxu0 0.0
        %v1630 = vand.u32 %v530, 4294901760
        %1631 = vmatmul.mubr.f32.gmra.mrb[0].mxu0 %v1630
        %v1632 = vpop.f32.mrb[0].mxu0
        %v1633 = vadd.f32 %v1414, %v1632
        %v1634 = vpop.f32.mrb[0].mxu0
        %1635 = vmatprep.mubr.f32.mxu0 0.0
        %v1636 = vand.u32 %v531, 4294901760
        %1637 = vmatmul.mubr.f32.gmra.mrb[0].mxu0 %v1636
        %v1638 = vpop.f32.mrb[0].mxu0
        %v1639 = vadd.f32 %v1422, %v1638
        %v1640 = vpop.f32.mrb[0].mxu0
        %1641 = vmatprep.mubr.f32.mxu0 0.0
        %v1642 = vand.u32 %v532, 4294901760
        %1643 = vmatmul.mubr.f32.gmra.mrb[0].mxu0 %v1642
        %v1644 = vpop.f32.mrb[0].mxu0
        %v1645 = vadd.f32 %v1430, %v1644
        %v1646 = vpop.f32.mrb[0].mxu0
        %1647 = vmatprep.mubr.f32.mxu0 0.0
        %v1648 = vand.u32 %v533, 4294901760
        %1649 = vmatmul.mubr.f32.gmra.mrb[0].mxu0 %v1648
        %v1650 = vpop.f32.mrb[0].mxu0
        %v1651 = vadd.f32 %v1438, %v1650
        %v1652 = vpop.f32.mrb[0].mxu0
        %1653 = vmatprep.mubr.f32.mxu0 0.0
        %v1654 = vand.u32 %v534, 4294901760
        %1655 = vmatmul.mubr.f32.gmra.mrb[0].mxu0 %v1654
        %v1656 = vpop.f32.mrb[0].mxu0
        %v1657 = vadd.f32 %v1446, %v1656
        %v1658 = vpop.f32.mrb[0].mxu0
        %1659 = vmatprep.mubr.f32.mxu0 0.0
        %v1660 = vand.u32 %v535, 4294901760
        %1661 = vmatmul.mubr.f32.gmra.mrb[0].mxu0 %v1660
        %v1662 = vpop.f32.mrb[0].mxu0
        %v1663 = vadd.f32 %v1454, %v1662
        %v1664 = vpop.f32.mrb[0].mxu0
        %1665 = vdwg.mxu0
        %1666 = vmatprep.subr.mxu0 0.0
        %v1667 = vand.u32 %v536, 4294901760
        %1668 = vmatpush1.msra.mxu0 %v1667
        %1669 = vmatprep.subr.mxu0 0.0
        %v1670 = vand.u32 %v537, 4294901760
        %1671 = vmatpush1.msra.mxu0 %v1670
        %1672 = vmatprep.subr.mxu0 0.0
        %v1673 = vand.u32 %v538, 4294901760
        %1674 = vmatpush1.msra.mxu0 %v1673
        %1675 = vmatprep.subr.mxu0 0.0
        %v1676 = vand.u32 %v539, 4294901760
        %1677 = vmatpush1.msra.mxu0 %v1676
        %1678 = vmatprep.subr.mxu0 0.0
        %v1679 = vand.u32 %v540, 4294901760
        %1680 = vmatpush1.msra.mxu0 %v1679
        %1681 = vmatprep.subr.mxu0 0.0
        %v1682 = vand.u32 %v541, 4294901760
        %1683 = vmatpush1.msra.mxu0 %v1682
        %1684 = vmatprep.subr.mxu0 0.0
        %v1685 = vand.u32 %v542, 4294901760
        %1686 = vmatpush1.msra.mxu0 %v1685
        %1687 = vmatprep.subr.mxu0 0.0
        %v1688 = vand.u32 %v543, 4294901760
        %1689 = vmatpush1.msra.mxu0 %v1688
        %1690 = vmatprep.subr.mxu0 0.0
        %v1691 = vand.u32 %v544, 4294901760
        %1692 = vmatpush1.msra.mxu0 %v1691
        %1693 = vmatprep.subr.mxu0 0.0
        %v1694 = vand.u32 %v545, 4294901760
        %1695 = vmatpush1.msra.mxu0 %v1694
        %1696 = vmatprep.subr.mxu0 0.0
        %v1697 = vand.u32 %v546, 4294901760
        %1698 = vmatpush1.msra.mxu0 %v1697
        %1699 = vmatprep.subr.mxu0 0.0
        %v1700 = vand.u32 %v547, 4294901760
        %1701 = vmatpush1.msra.mxu0 %v1700
        %1702 = vmatprep.subr.mxu0 0.0
        %v1703 = vand.u32 %v548, 4294901760
        %1704 = vmatpush1.msra.mxu0 %v1703
        %1705 = vmatprep.subr.mxu0 0.0
        %v1706 = vand.u32 %v549, 4294901760
        %1707 = vmatpush1.msra.mxu0 %v1706
        %1708 = vmatprep.subr.mxu0 0.0
        %v1709 = vand.u32 %v550, 4294901760
        %1710 = vmatpush1.msra.mxu0 %v1709
        %1711 = vmatprep.subr.mxu0 0.0
        %v1712 = vand.u32 %v551, 4294901760
        %1713 = vmatpush1.msra.mxu0 %v1712
        %1714 = vmatprep.subr.mxu0 0.0
        %1715 = vmatpush1.msra.mxu0 0.0
        %1716 = vmatprep.subr.mxu0 0.0
        %1717 = vmatpush1.msra.mxu0 0.0
        %1718 = vmatprep.subr.mxu0 0.0
        %1719 = vmatpush1.msra.mxu0 0.0
        %1720 = vmatprep.subr.mxu0 0.0
        %1721 = vmatpush1.msra.mxu0 0.0
        %1722 = vmatprep.subr.mxu0 0.0
        %1723 = vmatpush1.msra.mxu0 0.0
        %1724 = vmatprep.subr.mxu0 0.0
        %1725 = vmatpush1.msra.mxu0 0.0
        %1726 = vmatprep.subr.mxu0 0.0
        %1727 = vmatpush1.msra.mxu0 0.0
        %1728 = vmatprep.subr.mxu0 0.0
        %1729 = vmatpush1.msra.mxu0 0.0
        %1730 = vmatprep.subr.mxu0 0.0
        %1731 = vmatpush1.msra.mxu0 0.0
        %1732 = vmatprep.subr.mxu0 0.0
        %1733 = vmatpush1.msra.mxu0 0.0
        %1734 = vmatprep.subr.mxu0 0.0
        %1735 = vmatpush1.msra.mxu0 0.0
        %1736 = vmatprep.subr.mxu0 0.0
        %1737 = vmatpush1.msra.mxu0 0.0
        %1738 = vmatprep.subr.mxu0 0.0
        %1739 = vmatpush1.msra.mxu0 0.0
        %1740 = vmatprep.subr.mxu0 0.0
        %1741 = vmatpush1.msra.mxu0 0.0
        %1742 = vmatprep.subr.mxu0 0.0
        %1743 = vmatpush1.msra.mxu0 0.0
        %1744 = vmatprep.subr.mxu0 0.0
        %1745 = vmatpush1.msra.mxu0 0.0
        %1746 = vmatprep.mubr.f32.mxu0 0.0
        %v1747 = vand.u32 %v520, 4294901760
        %1748 = vmatmul.mubr.f32.gmra.mrb[0].mxu0 %v1747
        %v1749 = vpop.f32.mrb[0].mxu0
        %v1750 = vadd.f32 %v1573, %v1749
        %v1751 = vpop.f32.mrb[0].mxu0
        %1752 = vmatprep.mubr.f32.mxu0 0.0
        %v1753 = vand.u32 %v521, 4294901760
        %1754 = vmatmul.mubr.f32.gmra.mrb[0].mxu0 %v1753
        %v1755 = vpop.f32.mrb[0].mxu0
        %v1756 = vadd.f32 %v1579, %v1755
        %v1757 = vpop.f32.mrb[0].mxu0
        %1758 = vmatprep.mubr.f32.mxu0 0.0
        %v1759 = vand.u32 %v522, 4294901760
        %1760 = vmatmul.mubr.f32.gmra.mrb[0].mxu0 %v1759
        %v1761 = vpop.f32.mrb[0].mxu0
        %v1762 = vadd.f32 %v1585, %v1761
        %v1763 = vpop.f32.mrb[0].mxu0
        %1764 = vmatprep.mubr.f32.mxu0 0.0
        %v1765 = vand.u32 %v523, 4294901760
        %1766 = vmatmul.mubr.f32.gmra.mrb[0].mxu0 %v1765
        %v1767 = vpop.f32.mrb[0].mxu0
        %v1768 = vadd.f32 %v1591, %v1767
        %v1769 = vpop.f32.mrb[0].mxu0
        %1770 = vmatprep.mubr.f32.mxu0 0.0
        %v1771 = vand.u32 %v524, 4294901760
        %1772 = vmatmul.mubr.f32.gmra.mrb[0].mxu0 %v1771
        %v1773 = vpop.f32.mrb[0].mxu0
        %v1774 = vadd.f32 %v1597, %v1773
        %v1775 = vpop.f32.mrb[0].mxu0
        %1776 = vmatprep.mubr.f32.mxu0 0.0
        %v1777 = vand.u32 %v525, 4294901760
        %1778 = vmatmul.mubr.f32.gmra.mrb[0].mxu0 %v1777
        %v1779 = vpop.f32.mrb[0].mxu0
        %v1780 = vadd.f32 %v1603, %v1779
        %v1781 = vpop.f32.mrb[0].mxu0
        %1782 = vmatprep.mubr.f32.mxu0 0.0
        %v1783 = vand.u32 %v526, 4294901760
        %1784 = vmatmul.mubr.f32.gmra.mrb[0].mxu0 %v1783
        %v1785 = vpop.f32.mrb[0].mxu0
        %v1786 = vadd.f32 %v1609, %v1785
        %v1787 = vpop.f32.mrb[0].mxu0
        %1788 = vmatprep.mubr.f32.mxu0 0.0
        %v1789 = vand.u32 %v527, 4294901760
        %1790 = vmatmul.mubr.f32.gmra.mrb[0].mxu0 %v1789
        %v1791 = vpop.f32.mrb[0].mxu0
        %v1792 = vadd.f32 %v1615, %v1791
        %v1793 = vpop.f32.mrb[0].mxu0
        %1794 = vmatprep.mubr.f32.mxu0 0.0
        %v1795 = vand.u32 %v528, 4294901760
        %1796 = vmatmul.mubr.f32.gmra.mrb[0].mxu0 %v1795
        %v1797 = vpop.f32.mrb[0].mxu0
        %v1798 = vadd.f32 %v1621, %v1797
        %v1799 = vpop.f32.mrb[0].mxu0
        %1800 = vmatprep.mubr.f32.mxu0 0.0
        %v1801 = vand.u32 %v529, 4294901760
        %1802 = vmatmul.mubr.f32.gmra.mrb[0].mxu0 %v1801
        %v1803 = vpop.f32.mrb[0].mxu0
        %v1804 = vadd.f32 %v1627, %v1803
        %v1805 = vpop.f32.mrb[0].mxu0
        %1806 = vmatprep.mubr.f32.mxu0 0.0
        %v1807 = vand.u32 %v530, 4294901760
        %1808 = vmatmul.mubr.f32.gmra.mrb[0].mxu0 %v1807
        %v1809 = vpop.f32.mrb[0].mxu0
        %v1810 = vadd.f32 %v1633, %v1809
        %v1811 = vpop.f32.mrb[0].mxu0
        %1812 = vmatprep.mubr.f32.mxu0 0.0
        %v1813 = vand.u32 %v531, 4294901760
        %1814 = vmatmul.mubr.f32.gmra.mrb[0].mxu0 %v1813
        %v1815 = vpop.f32.mrb[0].mxu0
        %v1816 = vadd.f32 %v1639, %v1815
        %v1817 = vpop.f32.mrb[0].mxu0
        %1818 = vmatprep.mubr.f32.mxu0 0.0
        %v1819 = vand.u32 %v532, 4294901760
        %1820 = vmatmul.mubr.f32.gmra.mrb[0].mxu0 %v1819
        %v1821 = vpop.f32.mrb[0].mxu0
        %v1822 = vadd.f32 %v1645, %v1821
        %v1823 = vpop.f32.mrb[0].mxu0
        %1824 = vmatprep.mubr.f32.mxu0 0.0
        %v1825 = vand.u32 %v533, 4294901760
        %1826 = vmatmul.mubr.f32.gmra.mrb[0].mxu0 %v1825
        %v1827 = vpop.f32.mrb[0].mxu0
        %v1828 = vadd.f32 %v1651, %v1827
        %v1829 = vpop.f32.mrb[0].mxu0
        %1830 = vmatprep.mubr.f32.mxu0 0.0
        %v1831 = vand.u32 %v534, 4294901760
        %1832 = vmatmul.mubr.f32.gmra.mrb[0].mxu0 %v1831
        %v1833 = vpop.f32.mrb[0].mxu0
        %v1834 = vadd.f32 %v1657, %v1833
        %v1835 = vpop.f32.mrb[0].mxu0
        %1836 = vmatprep.mubr.f32.mxu0 0.0
        %v1837 = vand.u32 %v535, 4294901760
        %1838 = vmatmul.mubr.f32.gmra.mrb[0].mxu0 %v1837
        %v1839 = vpop.f32.mrb[0].mxu0
        %v1840 = vadd.f32 %v1663, %v1839
        %v1841 = vpop.f32.mrb[0].mxu0
        %1842 = vdwg.mxu0
        %v1843 = vtanh.pop %v1750
        %v1844 = vtanh.pop %v1756
        %v1845 = vtanh.pop %v1762
        %v1846 = vtanh.pop %v1768
        %v1847 = vtanh.pop %v1774
        %v1848 = vtanh.pop %v1780
        %v1849 = vtanh.pop %v1786
        %v1850 = vtanh.pop %v1792
        %v1851 = vtanh.pop %v1798
        %v1852 = vtanh.pop %v1804
        %v1853 = vtanh.pop %v1810
        %v1854 = vtanh.pop %v1816
        %v1855 = vtanh.pop %v1822
        %v1856 = vtanh.pop %v1828
        %v1857 = vtanh.pop %v1834
        %v1858 = vtanh.pop %v1840
        %s1859 = scalar_lea.vmem %s3, 128
        %v1860 = vld [vmem:[%s1859] sm:$0xff]
        %v1861 = vld [vmem:[%s1859 + $0x8] sm:$0xff]
        %v1862 = vld [vmem:[%s1859 + $0x10] sm:$0xff]
        %v1863 = vld [vmem:[%s1859 + $0x18] sm:$0xff]
        %v1864 = vld [vmem:[%s1859 + $0x20] sm:$0xff]
        %v1865 = vld [vmem:[%s1859 + $0x28] sm:$0xff]
        %v1866 = vld [vmem:[%s1859 + $0x30] sm:$0xff]
        %v1867 = vld [vmem:[%s1859 + $0x38] sm:$0xff]
        %v1868 = vld [vmem:[%s1859 + $0x40] sm:$0xff]
        %v1869 = vld [vmem:[%s1859 + $0x48] sm:$0xff]
        %v1870 = vld [vmem:[%s1859 + $0x50] sm:$0xff]
        %v1871 = vld [vmem:[%s1859 + $0x58] sm:$0xff]
        %v1872 = vld [vmem:[%s1859 + $0x60] sm:$0xff]
        %v1873 = vld [vmem:[%s1859 + $0x68] sm:$0xff]
        %v1874 = vld [vmem:[%s1859 + $0x70] sm:$0xff]
        %v1875 = vld [vmem:[%s1859 + $0x78] sm:$0xff]
        %v1876 = vld [vmem:[%s4 + $0x1] sm:$0x1]
        %v1877 = vlaneseq
        %v1878 = vshrl.u32 %v1877, 7
        %v1879 = vsub.s32 0, %v1878
        %v1880 = vrot.slane %v1876, %v1879
        %1881 = vmatprep.subr.mxu0 0.0
        %v1882 = vand.u32 %v1860, 4294901760
        %1883 = vmatpush1.msra.mxu0 %v1882
        %1884 = vmatprep.subr.mxu0 0.0
        %v1885 = vand.u32 %v1861, 4294901760
        %1886 = vmatpush1.msra.mxu0 %v1885
        %1887 = vmatprep.subr.mxu0 0.0
        %v1888 = vand.u32 %v1862, 4294901760
        %1889 = vmatpush1.msra.mxu0 %v1888
        %1890 = vmatprep.subr.mxu0 0.0
        %v1891 = vand.u32 %v1863, 4294901760
        %1892 = vmatpush1.msra.mxu0 %v1891
        %1893 = vmatprep.subr.mxu0 0.0
        %v1894 = vand.u32 %v1864, 4294901760
        %1895 = vmatpush1.msra.mxu0 %v1894
        %1896 = vmatprep.subr.mxu0 0.0
        %v1897 = vand.u32 %v1865, 4294901760
        %1898 = vmatpush1.msra.mxu0 %v1897
        %1899 = vmatprep.subr.mxu0 0.0
        %v1900 = vand.u32 %v1866, 4294901760
        %1901 = vmatpush1.msra.mxu0 %v1900
        %1902 = vmatprep.subr.mxu0 0.0
        %v1903 = vand.u32 %v1867, 4294901760
        %1904 = vmatpush1.msra.mxu0 %v1903
        %1905 = vmatprep.subr.mxu0 0.0
        %v1906 = vand.u32 %v1868, 4294901760
        %1907 = vmatpush1.msra.mxu0 %v1906
        %1908 = vmatprep.subr.mxu0 0.0
        %v1909 = vand.u32 %v1869, 4294901760
        %1910 = vmatpush1.msra.mxu0 %v1909
        %1911 = vmatprep.subr.mxu0 0.0
        %v1912 = vand.u32 %v1870, 4294901760
        %1913 = vmatpush1.msra.mxu0 %v1912
        %1914 = vmatprep.subr.mxu0 0.0
        %v1915 = vand.u32 %v1871, 4294901760
        %1916 = vmatpush1.msra.mxu0 %v1915
        %1917 = vmatprep.subr.mxu0 0.0
        %v1918 = vand.u32 %v1872, 4294901760
        %1919 = vmatpush1.msra.mxu0 %v1918
        %1920 = vmatprep.subr.mxu0 0.0
        %v1921 = vand.u32 %v1873, 4294901760
        %1922 = vmatpush1.msra.mxu0 %v1921
        %1923 = vmatprep.subr.mxu0 0.0
        %v1924 = vand.u32 %v1874, 4294901760
        %1925 = vmatpush1.msra.mxu0 %v1924
        %1926 = vmatprep.subr.mxu0 0.0
        %v1927 = vand.u32 %v1875, 4294901760
        %1928 = vmatpush1.msra.mxu0 %v1927
        %1929 = vmatprep.subr.mxu0 0.0
        %1930 = vmatpush1.msra.mxu0 0.0
        %1931 = vmatprep.subr.mxu0 0.0
        %1932 = vmatpush1.msra.mxu0 0.0
        %1933 = vmatprep.subr.mxu0 0.0
        %1934 = vmatpush1.msra.mxu0 0.0
        %1935 = vmatprep.subr.mxu0 0.0
        %1936 = vmatpush1.msra.mxu0 0.0
        %1937 = vmatprep.subr.mxu0 0.0
        %1938 = vmatpush1.msra.mxu0 0.0
        %1939 = vmatprep.subr.mxu0 0.0
        %1940 = vmatpush1.msra.mxu0 0.0
        %1941 = vmatprep.subr.mxu0 0.0
        %1942 = vmatpush1.msra.mxu0 0.0
        %1943 = vmatprep.subr.mxu0 0.0
        %1944 = vmatpush1.msra.mxu0 0.0
        %1945 = vmatprep.subr.mxu0 0.0
        %1946 = vmatpush1.msra.mxu0 0.0
        %1947 = vmatprep.subr.mxu0 0.0
        %1948 = vmatpush1.msra.mxu0 0.0
        %1949 = vmatprep.subr.mxu0 0.0
        %1950 = vmatpush1.msra.mxu0 0.0
        %1951 = vmatprep.subr.mxu0 0.0
        %1952 = vmatpush1.msra.mxu0 0.0
        %1953 = vmatprep.subr.mxu0 0.0
        %1954 = vmatpush1.msra.mxu0 0.0
        %1955 = vmatprep.subr.mxu0 0.0
        %1956 = vmatpush1.msra.mxu0 0.0
        %1957 = vmatprep.subr.mxu0 0.0
        %1958 = vmatpush1.msra.mxu0 0.0
        %1959 = vmatprep.subr.mxu0 0.0
        %1960 = vmatpush1.msra.mxu0 0.0
        %1961 = vmatprep.mubr.f32.mxu0 0.0
        %v1962 = vand.u32 %v1843, 4294901760
        %v1963 = vsub.f32 %v1843, %v1962
        %v1964 = vand.u32 %v1963, 4294901760
        %v1965 = vsub.f32 %v1963, %v1964
        %v1966 = vand.u32 %v1965, 4294901760
        %1967 = vmatmul.mubr.f32.gmra.mrb[0].mxu0 %v1966
        %v1968 = vpop.f32.mrb[0].mxu0
        %v1969 = vadd.f32 %v1880, %v1968
        %v1970 = vpop.f32.mrb[0].mxu0
        %1971 = vmatprep.mubr.f32.mxu0 0.0
        %v1972 = vand.u32 %v1844, 4294901760
        %v1973 = vsub.f32 %v1844, %v1972
        %v1974 = vand.u32 %v1973, 4294901760
        %v1975 = vsub.f32 %v1973, %v1974
        %v1976 = vand.u32 %v1975, 4294901760
        %1977 = vmatmul.mubr.f32.gmra.mrb[0].mxu0 %v1976
        %v1978 = vpop.f32.mrb[0].mxu0
        %v1979 = vadd.f32 %v1880, %v1978
        %v1980 = vpop.f32.mrb[0].mxu0
        %1981 = vmatprep.mubr.f32.mxu0 0.0
        %v1982 = vand.u32 %v1845, 4294901760
        %v1983 = vsub.f32 %v1845, %v1982
        %v1984 = vand.u32 %v1983, 4294901760
        %v1985 = vsub.f32 %v1983, %v1984
        %v1986 = vand.u32 %v1985, 4294901760
        %1987 = vmatmul.mubr.f32.gmra.mrb[0].mxu0 %v1986
        %v1988 = vpop.f32.mrb[0].mxu0
        %v1989 = vadd.f32 %v1880, %v1988
        %v1990 = vpop.f32.mrb[0].mxu0
        %1991 = vmatprep.mubr.f32.mxu0 0.0
        %v1992 = vand.u32 %v1846, 4294901760
        %v1993 = vsub.f32 %v1846, %v1992
        %v1994 = vand.u32 %v1993, 4294901760
        %v1995 = vsub.f32 %v1993, %v1994
        %v1996 = vand.u32 %v1995, 4294901760
        %1997 = vmatmul.mubr.f32.gmra.mrb[0].mxu0 %v1996
        %v1998 = vpop.f32.mrb[0].mxu0
        %v1999 = vadd.f32 %v1880, %v1998
        %v2000 = vpop.f32.mrb[0].mxu0
        %2001 = vmatprep.mubr.f32.mxu0 0.0
        %v2002 = vand.u32 %v1847, 4294901760
        %v2003 = vsub.f32 %v1847, %v2002
        %v2004 = vand.u32 %v2003, 4294901760
        %v2005 = vsub.f32 %v2003, %v2004
        %v2006 = vand.u32 %v2005, 4294901760
        %2007 = vmatmul.mubr.f32.gmra.mrb[0].mxu0 %v2006
        %v2008 = vpop.f32.mrb[0].mxu0
        %v2009 = vadd.f32 %v1880, %v2008
        %v2010 = vpop.f32.mrb[0].mxu0
        %2011 = vmatprep.mubr.f32.mxu0 0.0
        %v2012 = vand.u32 %v1848, 4294901760
        %v2013 = vsub.f32 %v1848, %v2012
        %v2014 = vand.u32 %v2013, 4294901760
        %v2015 = vsub.f32 %v2013, %v2014
        %v2016 = vand.u32 %v2015, 4294901760
        %2017 = vmatmul.mubr.f32.gmra.mrb[0].mxu0 %v2016
        %v2018 = vpop.f32.mrb[0].mxu0
        %v2019 = vadd.f32 %v1880, %v2018
        %v2020 = vpop.f32.mrb[0].mxu0
        %2021 = vmatprep.mubr.f32.mxu0 0.0
        %v2022 = vand.u32 %v1849, 4294901760
        %v2023 = vsub.f32 %v1849, %v2022
        %v2024 = vand.u32 %v2023, 4294901760
        %v2025 = vsub.f32 %v2023, %v2024
        %v2026 = vand.u32 %v2025, 4294901760
        %2027 = vmatmul.mubr.f32.gmra.mrb[0].mxu0 %v2026
        %v2028 = vpop.f32.mrb[0].mxu0
        %v2029 = vadd.f32 %v1880, %v2028
        %v2030 = vpop.f32.mrb[0].mxu0
        %2031 = vmatprep.mubr.f32.mxu0 0.0
        %v2032 = vand.u32 %v1850, 4294901760
        %v2033 = vsub.f32 %v1850, %v2032
        %v2034 = vand.u32 %v2033, 4294901760
        %v2035 = vsub.f32 %v2033, %v2034
        %v2036 = vand.u32 %v2035, 4294901760
        %2037 = vmatmul.mubr.f32.gmra.mrb[0].mxu0 %v2036
        %v2038 = vpop.f32.mrb[0].mxu0
        %v2039 = vadd.f32 %v1880, %v2038
        %v2040 = vpop.f32.mrb[0].mxu0
        %2041 = vmatprep.mubr.f32.mxu0 0.0
        %v2042 = vand.u32 %v1851, 4294901760
        %v2043 = vsub.f32 %v1851, %v2042
        %v2044 = vand.u32 %v2043, 4294901760
        %v2045 = vsub.f32 %v2043, %v2044
        %v2046 = vand.u32 %v2045, 4294901760
        %2047 = vmatmul.mubr.f32.gmra.mrb[0].mxu0 %v2046
        %v2048 = vpop.f32.mrb[0].mxu0
        %v2049 = vadd.f32 %v1880, %v2048
        %v2050 = vpop.f32.mrb[0].mxu0
        %2051 = vmatprep.mubr.f32.mxu0 0.0
        %v2052 = vand.u32 %v1852, 4294901760
        %v2053 = vsub.f32 %v1852, %v2052
        %v2054 = vand.u32 %v2053, 4294901760
        %v2055 = vsub.f32 %v2053, %v2054
        %v2056 = vand.u32 %v2055, 4294901760
        %2057 = vmatmul.mubr.f32.gmra.mrb[0].mxu0 %v2056
        %v2058 = vpop.f32.mrb[0].mxu0
        %v2059 = vadd.f32 %v1880, %v2058
        %v2060 = vpop.f32.mrb[0].mxu0
        %2061 = vmatprep.mubr.f32.mxu0 0.0
        %v2062 = vand.u32 %v1853, 4294901760
        %v2063 = vsub.f32 %v1853, %v2062
        %v2064 = vand.u32 %v2063, 4294901760
        %v2065 = vsub.f32 %v2063, %v2064
        %v2066 = vand.u32 %v2065, 4294901760
        %2067 = vmatmul.mubr.f32.gmra.mrb[0].mxu0 %v2066
        %v2068 = vpop.f32.mrb[0].mxu0
        %v2069 = vadd.f32 %v1880, %v2068
        %v2070 = vpop.f32.mrb[0].mxu0
        %2071 = vmatprep.mubr.f32.mxu0 0.0
        %v2072 = vand.u32 %v1854, 4294901760
        %v2073 = vsub.f32 %v1854, %v2072
        %v2074 = vand.u32 %v2073, 4294901760
        %v2075 = vsub.f32 %v2073, %v2074
        %v2076 = vand.u32 %v2075, 4294901760
        %2077 = vmatmul.mubr.f32.gmra.mrb[0].mxu0 %v2076
        %v2078 = vpop.f32.mrb[0].mxu0
        %v2079 = vadd.f32 %v1880, %v2078
        %v2080 = vpop.f32.mrb[0].mxu0
        %2081 = vmatprep.mubr.f32.mxu0 0.0
        %v2082 = vand.u32 %v1855, 4294901760
        %v2083 = vsub.f32 %v1855, %v2082
        %v2084 = vand.u32 %v2083, 4294901760
        %v2085 = vsub.f32 %v2083, %v2084
        %v2086 = vand.u32 %v2085, 4294901760
        %2087 = vmatmul.mubr.f32.gmra.mrb[0].mxu0 %v2086
        %v2088 = vpop.f32.mrb[0].mxu0
        %v2089 = vadd.f32 %v1880, %v2088
        %v2090 = vpop.f32.mrb[0].mxu0
        %2091 = vmatprep.mubr.f32.mxu0 0.0
        %v2092 = vand.u32 %v1856, 4294901760
        %v2093 = vsub.f32 %v1856, %v2092
        %v2094 = vand.u32 %v2093, 4294901760
        %v2095 = vsub.f32 %v2093, %v2094
        %v2096 = vand.u32 %v2095, 4294901760
        %2097 = vmatmul.mubr.f32.gmra.mrb[0].mxu0 %v2096
        %v2098 = vpop.f32.mrb[0].mxu0
        %v2099 = vadd.f32 %v1880, %v2098
        %v2100 = vpop.f32.mrb[0].mxu0
        %2101 = vmatprep.mubr.f32.mxu0 0.0
        %v2102 = vand.u32 %v1857, 4294901760
        %v2103 = vsub.f32 %v1857, %v2102
        %v2104 = vand.u32 %v2103, 4294901760
        %v2105 = vsub.f32 %v2103, %v2104
        %v2106 = vand.u32 %v2105, 4294901760
        %2107 = vmatmul.mubr.f32.gmra.mrb[0].mxu0 %v2106
        %v2108 = vpop.f32.mrb[0].mxu0
        %v2109 = vadd.f32 %v1880, %v2108
        %v2110 = vpop.f32.mrb[0].mxu0
        %2111 = vmatprep.mubr.f32.mxu0 0.0
        %v2112 = vand.u32 %v1858, 4294901760
        %v2113 = vsub.f32 %v1858, %v2112
        %v2114 = vand.u32 %v2113, 4294901760
        %v2115 = vsub.f32 %v2113, %v2114
        %v2116 = vand.u32 %v2115, 4294901760
        %2117 = vmatmul.mubr.f32.gmra.mrb[0].mxu0 %v2116
        %v2118 = vpop.f32.mrb[0].mxu0
        %v2119 = vadd.f32 %v1880, %v2118
        %v2120 = vpop.f32.mrb[0].mxu0
        %2121 = vdwg.mxu0
        %2122 = vmatprep.subr.mxu0 0.0
        %v2123 = vand.u32 %v1860, 4294901760
        %v2124 = vsub.f32 %v1860, %v2123
        %v2125 = vand.u32 %v2124, 4294901760
        %v2126 = vsub.f32 %v2124, %v2125
        %v2127 = vand.u32 %v2126, 4294901760
        %2128 = vmatpush1.msra.mxu0 %v2127
        %2129 = vmatprep.subr.mxu0 0.0
        %v2130 = vand.u32 %v1861, 4294901760
        %v2131 = vsub.f32 %v1861, %v2130
        %v2132 = vand.u32 %v2131, 4294901760
        %v2133 = vsub.f32 %v2131, %v2132
        %v2134 = vand.u32 %v2133, 4294901760
        %2135 = vmatpush1.msra.mxu0 %v2134
        %2136 = vmatprep.subr.mxu0 0.0
        %v2137 = vand.u32 %v1862, 4294901760
        %v2138 = vsub.f32 %v1862, %v2137
        %v2139 = vand.u32 %v2138, 4294901760
        %v2140 = vsub.f32 %v2138, %v2139
        %v2141 = vand.u32 %v2140, 4294901760
        %2142 = vmatpush1.msra.mxu0 %v2141
        %2143 = vmatprep.subr.mxu0 0.0
        %v2144 = vand.u32 %v1863, 4294901760
        %v2145 = vsub.f32 %v1863, %v2144
        %v2146 = vand.u32 %v2145, 4294901760
        %v2147 = vsub.f32 %v2145, %v2146
        %v2148 = vand.u32 %v2147, 4294901760
        %2149 = vmatpush1.msra.mxu0 %v2148
        %2150 = vmatprep.subr.mxu0 0.0
        %v2151 = vand.u32 %v1864, 4294901760
        %v2152 = vsub.f32 %v1864, %v2151
        %v2153 = vand.u32 %v2152, 4294901760
        %v2154 = vsub.f32 %v2152, %v2153
        %v2155 = vand.u32 %v2154, 4294901760
        %2156 = vmatpush1.msra.mxu0 %v2155
        %2157 = vmatprep.subr.mxu0 0.0
        %v2158 = vand.u32 %v1865, 4294901760
        %v2159 = vsub.f32 %v1865, %v2158
        %v2160 = vand.u32 %v2159, 4294901760
        %v2161 = vsub.f32 %v2159, %v2160
        %v2162 = vand.u32 %v2161, 4294901760
        %2163 = vmatpush1.msra.mxu0 %v2162
        %2164 = vmatprep.subr.mxu0 0.0
        %v2165 = vand.u32 %v1866, 4294901760
        %v2166 = vsub.f32 %v1866, %v2165
        %v2167 = vand.u32 %v2166, 4294901760
        %v2168 = vsub.f32 %v2166, %v2167
        %v2169 = vand.u32 %v2168, 4294901760
        %2170 = vmatpush1.msra.mxu0 %v2169
        %2171 = vmatprep.subr.mxu0 0.0
        %v2172 = vand.u32 %v1867, 4294901760
        %v2173 = vsub.f32 %v1867, %v2172
        %v2174 = vand.u32 %v2173, 4294901760
        %v2175 = vsub.f32 %v2173, %v2174
        %v2176 = vand.u32 %v2175, 4294901760
        %2177 = vmatpush1.msra.mxu0 %v2176
        %2178 = vmatprep.subr.mxu0 0.0
        %v2179 = vand.u32 %v1868, 4294901760
        %v2180 = vsub.f32 %v1868, %v2179
        %v2181 = vand.u32 %v2180, 4294901760
        %v2182 = vsub.f32 %v2180, %v2181
        %v2183 = vand.u32 %v2182, 4294901760
        %2184 = vmatpush1.msra.mxu0 %v2183
        %2185 = vmatprep.subr.mxu0 0.0
        %v2186 = vand.u32 %v1869, 4294901760
        %v2187 = vsub.f32 %v1869, %v2186
        %v2188 = vand.u32 %v2187, 4294901760
        %v2189 = vsub.f32 %v2187, %v2188
        %v2190 = vand.u32 %v2189, 4294901760
        %2191 = vmatpush1.msra.mxu0 %v2190
        %2192 = vmatprep.subr.mxu0 0.0
        %v2193 = vand.u32 %v1870, 4294901760
        %v2194 = vsub.f32 %v1870, %v2193
        %v2195 = vand.u32 %v2194, 4294901760
        %v2196 = vsub.f32 %v2194, %v2195
        %v2197 = vand.u32 %v2196, 4294901760
        %2198 = vmatpush1.msra.mxu0 %v2197
        %2199 = vmatprep.subr.mxu0 0.0
        %v2200 = vand.u32 %v1871, 4294901760
        %v2201 = vsub.f32 %v1871, %v2200
        %v2202 = vand.u32 %v2201, 4294901760
        %v2203 = vsub.f32 %v2201, %v2202
        %v2204 = vand.u32 %v2203, 4294901760
        %2205 = vmatpush1.msra.mxu0 %v2204
        %2206 = vmatprep.subr.mxu0 0.0
        %v2207 = vand.u32 %v1872, 4294901760
        %v2208 = vsub.f32 %v1872, %v2207
        %v2209 = vand.u32 %v2208, 4294901760
        %v2210 = vsub.f32 %v2208, %v2209
        %v2211 = vand.u32 %v2210, 4294901760
        %2212 = vmatpush1.msra.mxu0 %v2211
        %2213 = vmatprep.subr.mxu0 0.0
        %v2214 = vand.u32 %v1873, 4294901760
        %v2215 = vsub.f32 %v1873, %v2214
        %v2216 = vand.u32 %v2215, 4294901760
        %v2217 = vsub.f32 %v2215, %v2216
        %v2218 = vand.u32 %v2217, 4294901760
        %2219 = vmatpush1.msra.mxu0 %v2218
        %2220 = vmatprep.subr.mxu0 0.0
        %v2221 = vand.u32 %v1874, 4294901760
        %v2222 = vsub.f32 %v1874, %v2221
        %v2223 = vand.u32 %v2222, 4294901760
        %v2224 = vsub.f32 %v2222, %v2223
        %v2225 = vand.u32 %v2224, 4294901760
        %2226 = vmatpush1.msra.mxu0 %v2225
        %2227 = vmatprep.subr.mxu0 0.0
        %v2228 = vand.u32 %v1875, 4294901760
        %v2229 = vsub.f32 %v1875, %v2228
        %v2230 = vand.u32 %v2229, 4294901760
        %v2231 = vsub.f32 %v2229, %v2230
        %v2232 = vand.u32 %v2231, 4294901760
        %2233 = vmatpush1.msra.mxu0 %v2232
        %2234 = vmatprep.subr.mxu0 0.0
        %2235 = vmatpush1.msra.mxu0 0.0
        %2236 = vmatprep.subr.mxu0 0.0
        %2237 = vmatpush1.msra.mxu0 0.0
        %2238 = vmatprep.subr.mxu0 0.0
        %2239 = vmatpush1.msra.mxu0 0.0
        %2240 = vmatprep.subr.mxu0 0.0
        %2241 = vmatpush1.msra.mxu0 0.0
        %2242 = vmatprep.subr.mxu0 0.0
        %2243 = vmatpush1.msra.mxu0 0.0
        %2244 = vmatprep.subr.mxu0 0.0
        %2245 = vmatpush1.msra.mxu0 0.0
        %2246 = vmatprep.subr.mxu0 0.0
        %2247 = vmatpush1.msra.mxu0 0.0
        %2248 = vmatprep.subr.mxu0 0.0
        %2249 = vmatpush1.msra.mxu0 0.0
        %2250 = vmatprep.subr.mxu0 0.0
        %2251 = vmatpush1.msra.mxu0 0.0
        %2252 = vmatprep.subr.mxu0 0.0
        %2253 = vmatpush1.msra.mxu0 0.0
        %2254 = vmatprep.subr.mxu0 0.0
        %2255 = vmatpush1.msra.mxu0 0.0
        %2256 = vmatprep.subr.mxu0 0.0
        %2257 = vmatpush1.msra.mxu0 0.0
        %2258 = vmatprep.subr.mxu0 0.0
        %2259 = vmatpush1.msra.mxu0 0.0
        %2260 = vmatprep.subr.mxu0 0.0
        %2261 = vmatpush1.msra.mxu0 0.0
        %2262 = vmatprep.subr.mxu0 0.0
        %2263 = vmatpush1.msra.mxu0 0.0
        %2264 = vmatprep.subr.mxu0 0.0
        %2265 = vmatpush1.msra.mxu0 0.0
        %2266 = vmatprep.mubr.f32.mxu0 0.0
        %v2267 = vand.u32 %v1843, 4294901760
        %2268 = vmatmul.mubr.f32.gmra.mrb[0].mxu0 %v2267
        %v2269 = vpop.f32.mrb[0].mxu0
        %v2270 = vadd.f32 %v1969, %v2269
        %v2271 = vpop.f32.mrb[0].mxu0
        %2272 = vmatprep.mubr.f32.mxu0 0.0
        %v2273 = vand.u32 %v1844, 4294901760
        %2274 = vmatmul.mubr.f32.gmra.mrb[0].mxu0 %v2273
        %v2275 = vpop.f32.mrb[0].mxu0
        %v2276 = vadd.f32 %v1979, %v2275
        %v2277 = vpop.f32.mrb[0].mxu0
        %2278 = vmatprep.mubr.f32.mxu0 0.0
        %v2279 = vand.u32 %v1845, 4294901760
        %2280 = vmatmul.mubr.f32.gmra.mrb[0].mxu0 %v2279
        %v2281 = vpop.f32.mrb[0].mxu0
        %v2282 = vadd.f32 %v1989, %v2281
        %v2283 = vpop.f32.mrb[0].mxu0
        %2284 = vmatprep.mubr.f32.mxu0 0.0
        %v2285 = vand.u32 %v1846, 4294901760
        %2286 = vmatmul.mubr.f32.gmra.mrb[0].mxu0 %v2285
        %v2287 = vpop.f32.mrb[0].mxu0
        %v2288 = vadd.f32 %v1999, %v2287
        %v2289 = vpop.f32.mrb[0].mxu0
        %2290 = vmatprep.mubr.f32.mxu0 0.0
        %v2291 = vand.u32 %v1847, 4294901760
        %2292 = vmatmul.mubr.f32.gmra.mrb[0].mxu0 %v2291
        %v2293 = vpop.f32.mrb[0].mxu0
        %v2294 = vadd.f32 %v2009, %v2293
        %v2295 = vpop.f32.mrb[0].mxu0
        %2296 = vmatprep.mubr.f32.mxu0 0.0
        %v2297 = vand.u32 %v1848, 4294901760
        %2298 = vmatmul.mubr.f32.gmra.mrb[0].mxu0 %v2297
        %v2299 = vpop.f32.mrb[0].mxu0
        %v2300 = vadd.f32 %v2019, %v2299
        %v2301 = vpop.f32.mrb[0].mxu0
        %2302 = vmatprep.mubr.f32.mxu0 0.0
        %v2303 = vand.u32 %v1849, 4294901760
        %2304 = vmatmul.mubr.f32.gmra.mrb[0].mxu0 %v2303
        %v2305 = vpop.f32.mrb[0].mxu0
        %v2306 = vadd.f32 %v2029, %v2305
        %v2307 = vpop.f32.mrb[0].mxu0
        %2308 = vmatprep.mubr.f32.mxu0 0.0
        %v2309 = vand.u32 %v1850, 4294901760
        %2310 = vmatmul.mubr.f32.gmra.mrb[0].mxu0 %v2309
        %v2311 = vpop.f32.mrb[0].mxu0
        %v2312 = vadd.f32 %v2039, %v2311
        %v2313 = vpop.f32.mrb[0].mxu0
        %2314 = vmatprep.mubr.f32.mxu0 0.0
        %v2315 = vand.u32 %v1851, 4294901760
        %2316 = vmatmul.mubr.f32.gmra.mrb[0].mxu0 %v2315
        %v2317 = vpop.f32.mrb[0].mxu0
        %v2318 = vadd.f32 %v2049, %v2317
        %v2319 = vpop.f32.mrb[0].mxu0
        %2320 = vmatprep.mubr.f32.mxu0 0.0
        %v2321 = vand.u32 %v1852, 4294901760
        %2322 = vmatmul.mubr.f32.gmra.mrb[0].mxu0 %v2321
        %v2323 = vpop.f32.mrb[0].mxu0
        %v2324 = vadd.f32 %v2059, %v2323
        %v2325 = vpop.f32.mrb[0].mxu0
        %2326 = vmatprep.mubr.f32.mxu0 0.0
        %v2327 = vand.u32 %v1853, 4294901760
        %2328 = vmatmul.mubr.f32.gmra.mrb[0].mxu0 %v2327
        %v2329 = vpop.f32.mrb[0].mxu0
        %v2330 = vadd.f32 %v2069, %v2329
        %v2331 = vpop.f32.mrb[0].mxu0
        %2332 = vmatprep.mubr.f32.mxu0 0.0
        %v2333 = vand.u32 %v1854, 4294901760
        %2334 = vmatmul.mubr.f32.gmra.mrb[0].mxu0 %v2333
        %v2335 = vpop.f32.mrb[0].mxu0
        %v2336 = vadd.f32 %v2079, %v2335
        %v2337 = vpop.f32.mrb[0].mxu0
        %2338 = vmatprep.mubr.f32.mxu0 0.0
        %v2339 = vand.u32 %v1855, 4294901760
        %2340 = vmatmul.mubr.f32.gmra.mrb[0].mxu0 %v2339
        %v2341 = vpop.f32.mrb[0].mxu0
        %v2342 = vadd.f32 %v2089, %v2341
        %v2343 = vpop.f32.mrb[0].mxu0
        %2344 = vmatprep.mubr.f32.mxu0 0.0
        %v2345 = vand.u32 %v1856, 4294901760
        %2346 = vmatmul.mubr.f32.gmra.mrb[0].mxu0 %v2345
        %v2347 = vpop.f32.mrb[0].mxu0
        %v2348 = vadd.f32 %v2099, %v2347
        %v2349 = vpop.f32.mrb[0].mxu0
        %2350 = vmatprep.mubr.f32.mxu0 0.0
        %v2351 = vand.u32 %v1857, 4294901760
        %2352 = vmatmul.mubr.f32.gmra.mrb[0].mxu0 %v2351
        %v2353 = vpop.f32.mrb[0].mxu0
        %v2354 = vadd.f32 %v2109, %v2353
        %v2355 = vpop.f32.mrb[0].mxu0
        %2356 = vmatprep.mubr.f32.mxu0 0.0
        %v2357 = vand.u32 %v1858, 4294901760
        %2358 = vmatmul.mubr.f32.gmra.mrb[0].mxu0 %v2357
        %v2359 = vpop.f32.mrb[0].mxu0
        %v2360 = vadd.f32 %v2119, %v2359
        %v2361 = vpop.f32.mrb[0].mxu0
        %2362 = vdwg.mxu0
        %2363 = vmatprep.subr.mxu0 0.0
        %v2364 = vand.u32 %v1860, 4294901760
        %v2365 = vsub.f32 %v1860, %v2364
        %2366 = vmatpush1.msra.mxu0 %v2365
        %2367 = vmatprep.subr.mxu0 0.0
        %v2368 = vand.u32 %v1861, 4294901760
        %v2369 = vsub.f32 %v1861, %v2368
        %2370 = vmatpush1.msra.mxu0 %v2369
        %2371 = vmatprep.subr.mxu0 0.0
        %v2372 = vand.u32 %v1862, 4294901760
        %v2373 = vsub.f32 %v1862, %v2372
        %2374 = vmatpush1.msra.mxu0 %v2373
        %2375 = vmatprep.subr.mxu0 0.0
        %v2376 = vand.u32 %v1863, 4294901760
        %v2377 = vsub.f32 %v1863, %v2376
        %2378 = vmatpush1.msra.mxu0 %v2377
        %2379 = vmatprep.subr.mxu0 0.0
        %v2380 = vand.u32 %v1864, 4294901760
        %v2381 = vsub.f32 %v1864, %v2380
        %2382 = vmatpush1.msra.mxu0 %v2381
        %2383 = vmatprep.subr.mxu0 0.0
        %v2384 = vand.u32 %v1865, 4294901760
        %v2385 = vsub.f32 %v1865, %v2384
        %2386 = vmatpush1.msra.mxu0 %v2385
        %2387 = vmatprep.subr.mxu0 0.0
        %v2388 = vand.u32 %v1866, 4294901760
        %v2389 = vsub.f32 %v1866, %v2388
        %2390 = vmatpush1.msra.mxu0 %v2389
        %2391 = vmatprep.subr.mxu0 0.0
        %v2392 = vand.u32 %v1867, 4294901760
        %v2393 = vsub.f32 %v1867, %v2392
        %2394 = vmatpush1.msra.mxu0 %v2393
        %2395 = vmatprep.subr.mxu0 0.0
        %v2396 = vand.u32 %v1868, 4294901760
        %v2397 = vsub.f32 %v1868, %v2396
        %2398 = vmatpush1.msra.mxu0 %v2397
        %2399 = vmatprep.subr.mxu0 0.0
        %v2400 = vand.u32 %v1869, 4294901760
        %v2401 = vsub.f32 %v1869, %v2400
        %2402 = vmatpush1.msra.mxu0 %v2401
        %2403 = vmatprep.subr.mxu0 0.0
        %v2404 = vand.u32 %v1870, 4294901760
        %v2405 = vsub.f32 %v1870, %v2404
        %2406 = vmatpush1.msra.mxu0 %v2405
        %2407 = vmatprep.subr.mxu0 0.0
        %v2408 = vand.u32 %v1871, 4294901760
        %v2409 = vsub.f32 %v1871, %v2408
        %2410 = vmatpush1.msra.mxu0 %v2409
        %2411 = vmatprep.subr.mxu0 0.0
        %v2412 = vand.u32 %v1872, 4294901760
        %v2413 = vsub.f32 %v1872, %v2412
        %2414 = vmatpush1.msra.mxu0 %v2413
        %2415 = vmatprep.subr.mxu0 0.0
        %v2416 = vand.u32 %v1873, 4294901760
        %v2417 = vsub.f32 %v1873, %v2416
        %2418 = vmatpush1.msra.mxu0 %v2417
        %2419 = vmatprep.subr.mxu0 0.0
        %v2420 = vand.u32 %v1874, 4294901760
        %v2421 = vsub.f32 %v1874, %v2420
        %2422 = vmatpush1.msra.mxu0 %v2421
        %2423 = vmatprep.subr.mxu0 0.0
        %v2424 = vand.u32 %v1875, 4294901760
        %v2425 = vsub.f32 %v1875, %v2424
        %2426 = vmatpush1.msra.mxu0 %v2425
        %2427 = vmatprep.subr.mxu0 0.0
        %2428 = vmatpush1.msra.mxu0 0.0
        %2429 = vmatprep.subr.mxu0 0.0
        %2430 = vmatpush1.msra.mxu0 0.0
        %2431 = vmatprep.subr.mxu0 0.0
        %2432 = vmatpush1.msra.mxu0 0.0
        %2433 = vmatprep.subr.mxu0 0.0
        %2434 = vmatpush1.msra.mxu0 0.0
        %2435 = vmatprep.subr.mxu0 0.0
        %2436 = vmatpush1.msra.mxu0 0.0
        %2437 = vmatprep.subr.mxu0 0.0
        %2438 = vmatpush1.msra.mxu0 0.0
        %2439 = vmatprep.subr.mxu0 0.0
        %2440 = vmatpush1.msra.mxu0 0.0
        %2441 = vmatprep.subr.mxu0 0.0
        %2442 = vmatpush1.msra.mxu0 0.0
        %2443 = vmatprep.subr.mxu0 0.0
        %2444 = vmatpush1.msra.mxu0 0.0
        %2445 = vmatprep.subr.mxu0 0.0
        %2446 = vmatpush1.msra.mxu0 0.0
        %2447 = vmatprep.subr.mxu0 0.0
        %2448 = vmatpush1.msra.mxu0 0.0
        %2449 = vmatprep.subr.mxu0 0.0
        %2450 = vmatpush1.msra.mxu0 0.0
        %2451 = vmatprep.subr.mxu0 0.0
        %2452 = vmatpush1.msra.mxu0 0.0
        %2453 = vmatprep.subr.mxu0 0.0
        %2454 = vmatpush1.msra.mxu0 0.0
        %2455 = vmatprep.subr.mxu0 0.0
        %2456 = vmatpush1.msra.mxu0 0.0
        %2457 = vmatprep.subr.mxu0 0.0
        %2458 = vmatpush1.msra.mxu0 0.0
        %2459 = vmatprep.mubr.f32.mxu0 0.0
        %v2460 = vand.u32 %v1843, 4294901760
        %v2461 = vsub.f32 %v1843, %v2460
        %2462 = vmatmul.mubr.f32.gmra.mrb[0].mxu0 %v2461
        %v2463 = vpop.f32.mrb[0].mxu0
        %v2464 = vadd.f32 %v2270, %v2463
        %v2465 = vpop.f32.mrb[0].mxu0
        %2466 = vmatprep.mubr.f32.mxu0 0.0
        %v2467 = vand.u32 %v1844, 4294901760
        %v2468 = vsub.f32 %v1844, %v2467
        %2469 = vmatmul.mubr.f32.gmra.mrb[0].mxu0 %v2468
        %v2470 = vpop.f32.mrb[0].mxu0
        %v2471 = vadd.f32 %v2276, %v2470
        %v2472 = vpop.f32.mrb[0].mxu0
        %2473 = vmatprep.mubr.f32.mxu0 0.0
        %v2474 = vand.u32 %v1845, 4294901760
        %v2475 = vsub.f32 %v1845, %v2474
        %2476 = vmatmul.mubr.f32.gmra.mrb[0].mxu0 %v2475
        %v2477 = vpop.f32.mrb[0].mxu0
        %v2478 = vadd.f32 %v2282, %v2477
        %v2479 = vpop.f32.mrb[0].mxu0
        %2480 = vmatprep.mubr.f32.mxu0 0.0
        %v2481 = vand.u32 %v1846, 4294901760
        %v2482 = vsub.f32 %v1846, %v2481
        %2483 = vmatmul.mubr.f32.gmra.mrb[0].mxu0 %v2482
        %v2484 = vpop.f32.mrb[0].mxu0
        %v2485 = vadd.f32 %v2288, %v2484
        %v2486 = vpop.f32.mrb[0].mxu0
        %2487 = vmatprep.mubr.f32.mxu0 0.0
        %v2488 = vand.u32 %v1847, 4294901760
        %v2489 = vsub.f32 %v1847, %v2488
        %2490 = vmatmul.mubr.f32.gmra.mrb[0].mxu0 %v2489
        %v2491 = vpop.f32.mrb[0].mxu0
        %v2492 = vadd.f32 %v2294, %v2491
        %v2493 = vpop.f32.mrb[0].mxu0
        %2494 = vmatprep.mubr.f32.mxu0 0.0
        %v2495 = vand.u32 %v1848, 4294901760
        %v2496 = vsub.f32 %v1848, %v2495
        %2497 = vmatmul.mubr.f32.gmra.mrb[0].mxu0 %v2496
        %v2498 = vpop.f32.mrb[0].mxu0
        %v2499 = vadd.f32 %v2300, %v2498
        %v2500 = vpop.f32.mrb[0].mxu0
        %2501 = vmatprep.mubr.f32.mxu0 0.0
        %v2502 = vand.u32 %v1849, 4294901760
        %v2503 = vsub.f32 %v1849, %v2502
        %2504 = vmatmul.mubr.f32.gmra.mrb[0].mxu0 %v2503
        %v2505 = vpop.f32.mrb[0].mxu0
        %v2506 = vadd.f32 %v2306, %v2505
        %v2507 = vpop.f32.mrb[0].mxu0
        %2508 = vmatprep.mubr.f32.mxu0 0.0
        %v2509 = vand.u32 %v1850, 4294901760
        %v2510 = vsub.f32 %v1850, %v2509
        %2511 = vmatmul.mubr.f32.gmra.mrb[0].mxu0 %v2510
        %v2512 = vpop.f32.mrb[0].mxu0
        %v2513 = vadd.f32 %v2312, %v2512
        %v2514 = vpop.f32.mrb[0].mxu0
        %2515 = vmatprep.mubr.f32.mxu0 0.0
        %v2516 = vand.u32 %v1851, 4294901760
        %v2517 = vsub.f32 %v1851, %v2516
        %2518 = vmatmul.mubr.f32.gmra.mrb[0].mxu0 %v2517
        %v2519 = vpop.f32.mrb[0].mxu0
        %v2520 = vadd.f32 %v2318, %v2519
        %v2521 = vpop.f32.mrb[0].mxu0
        %2522 = vmatprep.mubr.f32.mxu0 0.0
        %v2523 = vand.u32 %v1852, 4294901760
        %v2524 = vsub.f32 %v1852, %v2523
        %2525 = vmatmul.mubr.f32.gmra.mrb[0].mxu0 %v2524
        %v2526 = vpop.f32.mrb[0].mxu0
        %v2527 = vadd.f32 %v2324, %v2526
        %v2528 = vpop.f32.mrb[0].mxu0
        %2529 = vmatprep.mubr.f32.mxu0 0.0
        %v2530 = vand.u32 %v1853, 4294901760
        %v2531 = vsub.f32 %v1853, %v2530
        %2532 = vmatmul.mubr.f32.gmra.mrb[0].mxu0 %v2531
        %v2533 = vpop.f32.mrb[0].mxu0
        %v2534 = vadd.f32 %v2330, %v2533
        %v2535 = vpop.f32.mrb[0].mxu0
        %2536 = vmatprep.mubr.f32.mxu0 0.0
        %v2537 = vand.u32 %v1854, 4294901760
        %v2538 = vsub.f32 %v1854, %v2537
        %2539 = vmatmul.mubr.f32.gmra.mrb[0].mxu0 %v2538
        %v2540 = vpop.f32.mrb[0].mxu0
        %v2541 = vadd.f32 %v2336, %v2540
        %v2542 = vpop.f32.mrb[0].mxu0
        %2543 = vmatprep.mubr.f32.mxu0 0.0
        %v2544 = vand.u32 %v1855, 4294901760
        %v2545 = vsub.f32 %v1855, %v2544
        %2546 = vmatmul.mubr.f32.gmra.mrb[0].mxu0 %v2545
        %v2547 = vpop.f32.mrb[0].mxu0
        %v2548 = vadd.f32 %v2342, %v2547
        %v2549 = vpop.f32.mrb[0].mxu0
        %2550 = vmatprep.mubr.f32.mxu0 0.0
        %v2551 = vand.u32 %v1856, 4294901760
        %v2552 = vsub.f32 %v1856, %v2551
        %2553 = vmatmul.mubr.f32.gmra.mrb[0].mxu0 %v2552
        %v2554 = vpop.f32.mrb[0].mxu0
        %v2555 = vadd.f32 %v2348, %v2554
        %v2556 = vpop.f32.mrb[0].mxu0
        %2557 = vmatprep.mubr.f32.mxu0 0.0
        %v2558 = vand.u32 %v1857, 4294901760
        %v2559 = vsub.f32 %v1857, %v2558
        %2560 = vmatmul.mubr.f32.gmra.mrb[0].mxu0 %v2559
        %v2561 = vpop.f32.mrb[0].mxu0
        %v2562 = vadd.f32 %v2354, %v2561
        %v2563 = vpop.f32.mrb[0].mxu0
        %2564 = vmatprep.mubr.f32.mxu0 0.0
        %v2565 = vand.u32 %v1858, 4294901760
        %v2566 = vsub.f32 %v1858, %v2565
        %2567 = vmatmul.mubr.f32.gmra.mrb[0].mxu0 %v2566
        %v2568 = vpop.f32.mrb[0].mxu0
        %v2569 = vadd.f32 %v2360, %v2568
        %v2570 = vpop.f32.mrb[0].mxu0
        %2571 = vdwg.mxu0
        %2572 = vmatprep.subr.mxu0 0.0
        %v2573 = vand.u32 %v1860, 4294901760
        %2574 = vmatpush1.msra.mxu0 %v2573
        %2575 = vmatprep.subr.mxu0 0.0
        %v2576 = vand.u32 %v1861, 4294901760
        %2577 = vmatpush1.msra.mxu0 %v2576
        %2578 = vmatprep.subr.mxu0 0.0
        %v2579 = vand.u32 %v1862, 4294901760
        %2580 = vmatpush1.msra.mxu0 %v2579
        %2581 = vmatprep.subr.mxu0 0.0
        %v2582 = vand.u32 %v1863, 4294901760
        %2583 = vmatpush1.msra.mxu0 %v2582
        %2584 = vmatprep.subr.mxu0 0.0
        %v2585 = vand.u32 %v1864, 4294901760
        %2586 = vmatpush1.msra.mxu0 %v2585
        %2587 = vmatprep.subr.mxu0 0.0
        %v2588 = vand.u32 %v1865, 4294901760
        %2589 = vmatpush1.msra.mxu0 %v2588
        %2590 = vmatprep.subr.mxu0 0.0
        %v2591 = vand.u32 %v1866, 4294901760
        %2592 = vmatpush1.msra.mxu0 %v2591
        %2593 = vmatprep.subr.mxu0 0.0
        %v2594 = vand.u32 %v1867, 4294901760
        %2595 = vmatpush1.msra.mxu0 %v2594
        %2596 = vmatprep.subr.mxu0 0.0
        %v2597 = vand.u32 %v1868, 4294901760
        %2598 = vmatpush1.msra.mxu0 %v2597
        %2599 = vmatprep.subr.mxu0 0.0
        %v2600 = vand.u32 %v1869, 4294901760
        %2601 = vmatpush1.msra.mxu0 %v2600
        %2602 = vmatprep.subr.mxu0 0.0
        %v2603 = vand.u32 %v1870, 4294901760
        %2604 = vmatpush1.msra.mxu0 %v2603
        %2605 = vmatprep.subr.mxu0 0.0
        %v2606 = vand.u32 %v1871, 4294901760
        %2607 = vmatpush1.msra.mxu0 %v2606
        %2608 = vmatprep.subr.mxu0 0.0
        %v2609 = vand.u32 %v1872, 4294901760
        %2610 = vmatpush1.msra.mxu0 %v2609
        %2611 = vmatprep.subr.mxu0 0.0
        %v2612 = vand.u32 %v1873, 4294901760
        %2613 = vmatpush1.msra.mxu0 %v2612
        %2614 = vmatprep.subr.mxu0 0.0
        %v2615 = vand.u32 %v1874, 4294901760
        %2616 = vmatpush1.msra.mxu0 %v2615
        %2617 = vmatprep.subr.mxu0 0.0
        %v2618 = vand.u32 %v1875, 4294901760
        %2619 = vmatpush1.msra.mxu0 %v2618
        %2620 = vmatprep.subr.mxu0 0.0
        %2621 = vmatpush1.msra.mxu0 0.0
        %2622 = vmatprep.subr.mxu0 0.0
        %2623 = vmatpush1.msra.mxu0 0.0
        %2624 = vmatprep.subr.mxu0 0.0
        %2625 = vmatpush1.msra.mxu0 0.0
        %2626 = vmatprep.subr.mxu0 0.0
        %2627 = vmatpush1.msra.mxu0 0.0
        %2628 = vmatprep.subr.mxu0 0.0
        %2629 = vmatpush1.msra.mxu0 0.0
        %2630 = vmatprep.subr.mxu0 0.0
        %2631 = vmatpush1.msra.mxu0 0.0
        %2632 = vmatprep.subr.mxu0 0.0
        %2633 = vmatpush1.msra.mxu0 0.0
        %2634 = vmatprep.subr.mxu0 0.0
        %2635 = vmatpush1.msra.mxu0 0.0
        %2636 = vmatprep.subr.mxu0 0.0
        %2637 = vmatpush1.msra.mxu0 0.0
        %2638 = vmatprep.subr.mxu0 0.0
        %2639 = vmatpush1.msra.mxu0 0.0
        %2640 = vmatprep.subr.mxu0 0.0
        %2641 = vmatpush1.msra.mxu0 0.0
        %2642 = vmatprep.subr.mxu0 0.0
        %2643 = vmatpush1.msra.mxu0 0.0
        %2644 = vmatprep.subr.mxu0 0.0
        %2645 = vmatpush1.msra.mxu0 0.0
        %2646 = vmatprep.subr.mxu0 0.0
        %2647 = vmatpush1.msra.mxu0 0.0
        %2648 = vmatprep.subr.mxu0 0.0
        %2649 = vmatpush1.msra.mxu0 0.0
        %2650 = vmatprep.subr.mxu0 0.0
        %2651 = vmatpush1.msra.mxu0 0.0
        %2652 = vmatprep.mubr.f32.mxu0 0.0
        %v2653 = vand.u32 %v1843, 4294901760
        %v2654 = vsub.f32 %v1843, %v2653
        %v2655 = vand.u32 %v2654, 4294901760
        %2656 = vmatmul.mubr.f32.gmra.mrb[0].mxu0 %v2655
        %v2657 = vpop.f32.mrb[0].mxu0
        %v2658 = vadd.f32 %v2464, %v2657
        %v2659 = vpop.f32.mrb[0].mxu0
        %2660 = vmatprep.mubr.f32.mxu0 0.0
        %v2661 = vand.u32 %v1844, 4294901760
        %v2662 = vsub.f32 %v1844, %v2661
        %v2663 = vand.u32 %v2662, 4294901760
        %2664 = vmatmul.mubr.f32.gmra.mrb[0].mxu0 %v2663
        %v2665 = vpop.f32.mrb[0].mxu0
        %v2666 = vadd.f32 %v2471, %v2665
        %v2667 = vpop.f32.mrb[0].mxu0
        %2668 = vmatprep.mubr.f32.mxu0 0.0
        %v2669 = vand.u32 %v1845, 4294901760
        %v2670 = vsub.f32 %v1845, %v2669
        %v2671 = vand.u32 %v2670, 4294901760
        %2672 = vmatmul.mubr.f32.gmra.mrb[0].mxu0 %v2671
        %v2673 = vpop.f32.mrb[0].mxu0
        %v2674 = vadd.f32 %v2478, %v2673
        %v2675 = vpop.f32.mrb[0].mxu0
        %2676 = vmatprep.mubr.f32.mxu0 0.0
        %v2677 = vand.u32 %v1846, 4294901760
        %v2678 = vsub.f32 %v1846, %v2677
        %v2679 = vand.u32 %v2678, 4294901760
        %2680 = vmatmul.mubr.f32.gmra.mrb[0].mxu0 %v2679
        %v2681 = vpop.f32.mrb[0].mxu0
        %v2682 = vadd.f32 %v2485, %v2681
        %v2683 = vpop.f32.mrb[0].mxu0
        %2684 = vmatprep.mubr.f32.mxu0 0.0
        %v2685 = vand.u32 %v1847, 4294901760
        %v2686 = vsub.f32 %v1847, %v2685
        %v2687 = vand.u32 %v2686, 4294901760
        %2688 = vmatmul.mubr.f32.gmra.mrb[0].mxu0 %v2687
        %v2689 = vpop.f32.mrb[0].mxu0
        %v2690 = vadd.f32 %v2492, %v2689
        %v2691 = vpop.f32.mrb[0].mxu0
        %2692 = vmatprep.mubr.f32.mxu0 0.0
        %v2693 = vand.u32 %v1848, 4294901760
        %v2694 = vsub.f32 %v1848, %v2693
        %v2695 = vand.u32 %v2694, 4294901760
        %2696 = vmatmul.mubr.f32.gmra.mrb[0].mxu0 %v2695
        %v2697 = vpop.f32.mrb[0].mxu0
        %v2698 = vadd.f32 %v2499, %v2697
        %v2699 = vpop.f32.mrb[0].mxu0
        %2700 = vmatprep.mubr.f32.mxu0 0.0
        %v2701 = vand.u32 %v1849, 4294901760
        %v2702 = vsub.f32 %v1849, %v2701
        %v2703 = vand.u32 %v2702, 4294901760
        %2704 = vmatmul.mubr.f32.gmra.mrb[0].mxu0 %v2703
        %v2705 = vpop.f32.mrb[0].mxu0
        %v2706 = vadd.f32 %v2506, %v2705
        %v2707 = vpop.f32.mrb[0].mxu0
        %2708 = vmatprep.mubr.f32.mxu0 0.0
        %v2709 = vand.u32 %v1850, 4294901760
        %v2710 = vsub.f32 %v1850, %v2709
        %v2711 = vand.u32 %v2710, 4294901760
        %2712 = vmatmul.mubr.f32.gmra.mrb[0].mxu0 %v2711
        %v2713 = vpop.f32.mrb[0].mxu0
        %v2714 = vadd.f32 %v2513, %v2713
        %v2715 = vpop.f32.mrb[0].mxu0
        %2716 = vmatprep.mubr.f32.mxu0 0.0
        %v2717 = vand.u32 %v1851, 4294901760
        %v2718 = vsub.f32 %v1851, %v2717
        %v2719 = vand.u32 %v2718, 4294901760
        %2720 = vmatmul.mubr.f32.gmra.mrb[0].mxu0 %v2719
        %v2721 = vpop.f32.mrb[0].mxu0
        %v2722 = vadd.f32 %v2520, %v2721
        %v2723 = vpop.f32.mrb[0].mxu0
        %2724 = vmatprep.mubr.f32.mxu0 0.0
        %v2725 = vand.u32 %v1852, 4294901760
        %v2726 = vsub.f32 %v1852, %v2725
        %v2727 = vand.u32 %v2726, 4294901760
        %2728 = vmatmul.mubr.f32.gmra.mrb[0].mxu0 %v2727
        %v2729 = vpop.f32.mrb[0].mxu0
        %v2730 = vadd.f32 %v2527, %v2729
        %v2731 = vpop.f32.mrb[0].mxu0
        %2732 = vmatprep.mubr.f32.mxu0 0.0
        %v2733 = vand.u32 %v1853, 4294901760
        %v2734 = vsub.f32 %v1853, %v2733
        %v2735 = vand.u32 %v2734, 4294901760
        %2736 = vmatmul.mubr.f32.gmra.mrb[0].mxu0 %v2735
        %v2737 = vpop.f32.mrb[0].mxu0
        %v2738 = vadd.f32 %v2534, %v2737
        %v2739 = vpop.f32.mrb[0].mxu0
        %2740 = vmatprep.mubr.f32.mxu0 0.0
        %v2741 = vand.u32 %v1854, 4294901760
        %v2742 = vsub.f32 %v1854, %v2741
        %v2743 = vand.u32 %v2742, 4294901760
        %2744 = vmatmul.mubr.f32.gmra.mrb[0].mxu0 %v2743
        %v2745 = vpop.f32.mrb[0].mxu0
        %v2746 = vadd.f32 %v2541, %v2745
        %v2747 = vpop.f32.mrb[0].mxu0
        %2748 = vmatprep.mubr.f32.mxu0 0.0
        %v2749 = vand.u32 %v1855, 4294901760
        %v2750 = vsub.f32 %v1855, %v2749
        %v2751 = vand.u32 %v2750, 4294901760
        %2752 = vmatmul.mubr.f32.gmra.mrb[0].mxu0 %v2751
        %v2753 = vpop.f32.mrb[0].mxu0
        %v2754 = vadd.f32 %v2548, %v2753
        %v2755 = vpop.f32.mrb[0].mxu0
        %2756 = vmatprep.mubr.f32.mxu0 0.0
        %v2757 = vand.u32 %v1856, 4294901760
        %v2758 = vsub.f32 %v1856, %v2757
        %v2759 = vand.u32 %v2758, 4294901760
        %2760 = vmatmul.mubr.f32.gmra.mrb[0].mxu0 %v2759
        %v2761 = vpop.f32.mrb[0].mxu0
        %v2762 = vadd.f32 %v2555, %v2761
        %v2763 = vpop.f32.mrb[0].mxu0
        %2764 = vmatprep.mubr.f32.mxu0 0.0
        %v2765 = vand.u32 %v1857, 4294901760
        %v2766 = vsub.f32 %v1857, %v2765
        %v2767 = vand.u32 %v2766, 4294901760
        %2768 = vmatmul.mubr.f32.gmra.mrb[0].mxu0 %v2767
        %v2769 = vpop.f32.mrb[0].mxu0
        %v2770 = vadd.f32 %v2562, %v2769
        %v2771 = vpop.f32.mrb[0].mxu0
        %2772 = vmatprep.mubr.f32.mxu0 0.0
        %v2773 = vand.u32 %v1858, 4294901760
        %v2774 = vsub.f32 %v1858, %v2773
        %v2775 = vand.u32 %v2774, 4294901760
        %2776 = vmatmul.mubr.f32.gmra.mrb[0].mxu0 %v2775
        %v2777 = vpop.f32.mrb[0].mxu0
        %v2778 = vadd.f32 %v2569, %v2777
        %v2779 = vpop.f32.mrb[0].mxu0
        %2780 = vdwg.mxu0
        %2781 = vmatprep.subr.mxu0 0.0
        %v2782 = vand.u32 %v1860, 4294901760
        %v2783 = vsub.f32 %v1860, %v2782
        %v2784 = vand.u32 %v2783, 4294901760
        %2785 = vmatpush1.msra.mxu0 %v2784
        %2786 = vmatprep.subr.mxu0 0.0
        %v2787 = vand.u32 %v1861, 4294901760
        %v2788 = vsub.f32 %v1861, %v2787
        %v2789 = vand.u32 %v2788, 4294901760
        %2790 = vmatpush1.msra.mxu0 %v2789
        %2791 = vmatprep.subr.mxu0 0.0
        %v2792 = vand.u32 %v1862, 4294901760
        %v2793 = vsub.f32 %v1862, %v2792
        %v2794 = vand.u32 %v2793, 4294901760
        %2795 = vmatpush1.msra.mxu0 %v2794
        %2796 = vmatprep.subr.mxu0 0.0
        %v2797 = vand.u32 %v1863, 4294901760
        %v2798 = vsub.f32 %v1863, %v2797
        %v2799 = vand.u32 %v2798, 4294901760
        %2800 = vmatpush1.msra.mxu0 %v2799
        %2801 = vmatprep.subr.mxu0 0.0
        %v2802 = vand.u32 %v1864, 4294901760
        %v2803 = vsub.f32 %v1864, %v2802
        %v2804 = vand.u32 %v2803, 4294901760
        %2805 = vmatpush1.msra.mxu0 %v2804
        %2806 = vmatprep.subr.mxu0 0.0
        %v2807 = vand.u32 %v1865, 4294901760
        %v2808 = vsub.f32 %v1865, %v2807
        %v2809 = vand.u32 %v2808, 4294901760
        %2810 = vmatpush1.msra.mxu0 %v2809
        %2811 = vmatprep.subr.mxu0 0.0
        %v2812 = vand.u32 %v1866, 4294901760
        %v2813 = vsub.f32 %v1866, %v2812
        %v2814 = vand.u32 %v2813, 4294901760
        %2815 = vmatpush1.msra.mxu0 %v2814
        %2816 = vmatprep.subr.mxu0 0.0
        %v2817 = vand.u32 %v1867, 4294901760
        %v2818 = vsub.f32 %v1867, %v2817
        %v2819 = vand.u32 %v2818, 4294901760
        %2820 = vmatpush1.msra.mxu0 %v2819
        %2821 = vmatprep.subr.mxu0 0.0
        %v2822 = vand.u32 %v1868, 4294901760
        %v2823 = vsub.f32 %v1868, %v2822
        %v2824 = vand.u32 %v2823, 4294901760
        %2825 = vmatpush1.msra.mxu0 %v2824
        %2826 = vmatprep.subr.mxu0 0.0
        %v2827 = vand.u32 %v1869, 4294901760
        %v2828 = vsub.f32 %v1869, %v2827
        %v2829 = vand.u32 %v2828, 4294901760
        %2830 = vmatpush1.msra.mxu0 %v2829
        %2831 = vmatprep.subr.mxu0 0.0
        %v2832 = vand.u32 %v1870, 4294901760
        %v2833 = vsub.f32 %v1870, %v2832
        %v2834 = vand.u32 %v2833, 4294901760
        %2835 = vmatpush1.msra.mxu0 %v2834
        %2836 = vmatprep.subr.mxu0 0.0
        %v2837 = vand.u32 %v1871, 4294901760
        %v2838 = vsub.f32 %v1871, %v2837
        %v2839 = vand.u32 %v2838, 4294901760
        %2840 = vmatpush1.msra.mxu0 %v2839
        %2841 = vmatprep.subr.mxu0 0.0
        %v2842 = vand.u32 %v1872, 4294901760
        %v2843 = vsub.f32 %v1872, %v2842
        %v2844 = vand.u32 %v2843, 4294901760
        %2845 = vmatpush1.msra.mxu0 %v2844
        %2846 = vmatprep.subr.mxu0 0.0
        %v2847 = vand.u32 %v1873, 4294901760
        %v2848 = vsub.f32 %v1873, %v2847
        %v2849 = vand.u32 %v2848, 4294901760
        %2850 = vmatpush1.msra.mxu0 %v2849
        %2851 = vmatprep.subr.mxu0 0.0
        %v2852 = vand.u32 %v1874, 4294901760
        %v2853 = vsub.f32 %v1874, %v2852
        %v2854 = vand.u32 %v2853, 4294901760
        %2855 = vmatpush1.msra.mxu0 %v2854
        %2856 = vmatprep.subr.mxu0 0.0
        %v2857 = vand.u32 %v1875, 4294901760
        %v2858 = vsub.f32 %v1875, %v2857
        %v2859 = vand.u32 %v2858, 4294901760
        %2860 = vmatpush1.msra.mxu0 %v2859
        %2861 = vmatprep.subr.mxu0 0.0
        %2862 = vmatpush1.msra.mxu0 0.0
        %2863 = vmatprep.subr.mxu0 0.0
        %2864 = vmatpush1.msra.mxu0 0.0
        %2865 = vmatprep.subr.mxu0 0.0
        %2866 = vmatpush1.msra.mxu0 0.0
        %2867 = vmatprep.subr.mxu0 0.0
        %2868 = vmatpush1.msra.mxu0 0.0
        %2869 = vmatprep.subr.mxu0 0.0
        %2870 = vmatpush1.msra.mxu0 0.0
        %2871 = vmatprep.subr.mxu0 0.0
        %2872 = vmatpush1.msra.mxu0 0.0
        %2873 = vmatprep.subr.mxu0 0.0
        %2874 = vmatpush1.msra.mxu0 0.0
        %2875 = vmatprep.subr.mxu0 0.0
        %2876 = vmatpush1.msra.mxu0 0.0
        %2877 = vmatprep.subr.mxu0 0.0
        %2878 = vmatpush1.msra.mxu0 0.0
        %2879 = vmatprep.subr.mxu0 0.0
        %2880 = vmatpush1.msra.mxu0 0.0
        %2881 = vmatprep.subr.mxu0 0.0
        %2882 = vmatpush1.msra.mxu0 0.0
        %2883 = vmatprep.subr.mxu0 0.0
        %2884 = vmatpush1.msra.mxu0 0.0
        %2885 = vmatprep.subr.mxu0 0.0
        %2886 = vmatpush1.msra.mxu0 0.0
        %2887 = vmatprep.subr.mxu0 0.0
        %2888 = vmatpush1.msra.mxu0 0.0
        %2889 = vmatprep.subr.mxu0 0.0
        %2890 = vmatpush1.msra.mxu0 0.0
        %2891 = vmatprep.subr.mxu0 0.0
        %2892 = vmatpush1.msra.mxu0 0.0
        %2893 = vmatprep.mubr.f32.mxu0 0.0
        %v2894 = vand.u32 %v1843, 4294901760
        %2895 = vmatmul.mubr.f32.gmra.mrb[0].mxu0 %v2894
        %v2896 = vpop.f32.mrb[0].mxu0
        %v2897 = vadd.f32 %v2658, %v2896
        %v2898 = vpop.f32.mrb[0].mxu0
        %2899 = vmatprep.mubr.f32.mxu0 0.0
        %v2900 = vand.u32 %v1844, 4294901760
        %2901 = vmatmul.mubr.f32.gmra.mrb[0].mxu0 %v2900
        %v2902 = vpop.f32.mrb[0].mxu0
        %v2903 = vadd.f32 %v2666, %v2902
        %v2904 = vpop.f32.mrb[0].mxu0
        %2905 = vmatprep.mubr.f32.mxu0 0.0
        %v2906 = vand.u32 %v1845, 4294901760
        %2907 = vmatmul.mubr.f32.gmra.mrb[0].mxu0 %v2906
        %v2908 = vpop.f32.mrb[0].mxu0
        %v2909 = vadd.f32 %v2674, %v2908
        %v2910 = vpop.f32.mrb[0].mxu0
        %2911 = vmatprep.mubr.f32.mxu0 0.0
        %v2912 = vand.u32 %v1846, 4294901760
        %2913 = vmatmul.mubr.f32.gmra.mrb[0].mxu0 %v2912
        %v2914 = vpop.f32.mrb[0].mxu0
        %v2915 = vadd.f32 %v2682, %v2914
        %v2916 = vpop.f32.mrb[0].mxu0
        %2917 = vmatprep.mubr.f32.mxu0 0.0
        %v2918 = vand.u32 %v1847, 4294901760
        %2919 = vmatmul.mubr.f32.gmra.mrb[0].mxu0 %v2918
        %v2920 = vpop.f32.mrb[0].mxu0
        %v2921 = vadd.f32 %v2690, %v2920
        %v2922 = vpop.f32.mrb[0].mxu0
        %2923 = vmatprep.mubr.f32.mxu0 0.0
        %v2924 = vand.u32 %v1848, 4294901760
        %2925 = vmatmul.mubr.f32.gmra.mrb[0].mxu0 %v2924
        %v2926 = vpop.f32.mrb[0].mxu0
        %v2927 = vadd.f32 %v2698, %v2926
        %v2928 = vpop.f32.mrb[0].mxu0
        %2929 = vmatprep.mubr.f32.mxu0 0.0
        %v2930 = vand.u32 %v1849, 4294901760
        %2931 = vmatmul.mubr.f32.gmra.mrb[0].mxu0 %v2930
        %v2932 = vpop.f32.mrb[0].mxu0
        %v2933 = vadd.f32 %v2706, %v2932
        %v2934 = vpop.f32.mrb[0].mxu0
        %2935 = vmatprep.mubr.f32.mxu0 0.0
        %v2936 = vand.u32 %v1850, 4294901760
        %2937 = vmatmul.mubr.f32.gmra.mrb[0].mxu0 %v2936
        %v2938 = vpop.f32.mrb[0].mxu0
        %v2939 = vadd.f32 %v2714, %v2938
        %v2940 = vpop.f32.mrb[0].mxu0
        %2941 = vmatprep.mubr.f32.mxu0 0.0
        %v2942 = vand.u32 %v1851, 4294901760
        %2943 = vmatmul.mubr.f32.gmra.mrb[0].mxu0 %v2942
        %v2944 = vpop.f32.mrb[0].mxu0
        %v2945 = vadd.f32 %v2722, %v2944
        %v2946 = vpop.f32.mrb[0].mxu0
        %2947 = vmatprep.mubr.f32.mxu0 0.0
        %v2948 = vand.u32 %v1852, 4294901760
        %2949 = vmatmul.mubr.f32.gmra.mrb[0].mxu0 %v2948
        %v2950 = vpop.f32.mrb[0].mxu0
        %v2951 = vadd.f32 %v2730, %v2950
        %v2952 = vpop.f32.mrb[0].mxu0
        %2953 = vmatprep.mubr.f32.mxu0 0.0
        %v2954 = vand.u32 %v1853, 4294901760
        %2955 = vmatmul.mubr.f32.gmra.mrb[0].mxu0 %v2954
        %v2956 = vpop.f32.mrb[0].mxu0
        %v2957 = vadd.f32 %v2738, %v2956
        %v2958 = vpop.f32.mrb[0].mxu0
        %2959 = vmatprep.mubr.f32.mxu0 0.0
        %v2960 = vand.u32 %v1854, 4294901760
        %2961 = vmatmul.mubr.f32.gmra.mrb[0].mxu0 %v2960
        %v2962 = vpop.f32.mrb[0].mxu0
        %v2963 = vadd.f32 %v2746, %v2962
        %v2964 = vpop.f32.mrb[0].mxu0
        %2965 = vmatprep.mubr.f32.mxu0 0.0
        %v2966 = vand.u32 %v1855, 4294901760
        %2967 = vmatmul.mubr.f32.gmra.mrb[0].mxu0 %v2966
        %v2968 = vpop.f32.mrb[0].mxu0
        %v2969 = vadd.f32 %v2754, %v2968
        %v2970 = vpop.f32.mrb[0].mxu0
        %2971 = vmatprep.mubr.f32.mxu0 0.0
        %v2972 = vand.u32 %v1856, 4294901760
        %2973 = vmatmul.mubr.f32.gmra.mrb[0].mxu0 %v2972
        %v2974 = vpop.f32.mrb[0].mxu0
        %v2975 = vadd.f32 %v2762, %v2974
        %v2976 = vpop.f32.mrb[0].mxu0
        %2977 = vmatprep.mubr.f32.mxu0 0.0
        %v2978 = vand.u32 %v1857, 4294901760
        %2979 = vmatmul.mubr.f32.gmra.mrb[0].mxu0 %v2978
        %v2980 = vpop.f32.mrb[0].mxu0
        %v2981 = vadd.f32 %v2770, %v2980
        %v2982 = vpop.f32.mrb[0].mxu0
        %2983 = vmatprep.mubr.f32.mxu0 0.0
        %v2984 = vand.u32 %v1858, 4294901760
        %2985 = vmatmul.mubr.f32.gmra.mrb[0].mxu0 %v2984
        %v2986 = vpop.f32.mrb[0].mxu0
        %v2987 = vadd.f32 %v2778, %v2986
        %v2988 = vpop.f32.mrb[0].mxu0
        %2989 = vdwg.mxu0
        %2990 = vmatprep.subr.mxu0 0.0
        %v2991 = vand.u32 %v1860, 4294901760
        %2992 = vmatpush1.msra.mxu0 %v2991
        %2993 = vmatprep.subr.mxu0 0.0
        %v2994 = vand.u32 %v1861, 4294901760
        %2995 = vmatpush1.msra.mxu0 %v2994
        %2996 = vmatprep.subr.mxu0 0.0
        %v2997 = vand.u32 %v1862, 4294901760
        %2998 = vmatpush1.msra.mxu0 %v2997
        %2999 = vmatprep.subr.mxu0 0.0
        %v3000 = vand.u32 %v1863, 4294901760
        %3001 = vmatpush1.msra.mxu0 %v3000
        %3002 = vmatprep.subr.mxu0 0.0
        %v3003 = vand.u32 %v1864, 4294901760
        %3004 = vmatpush1.msra.mxu0 %v3003
        %3005 = vmatprep.subr.mxu0 0.0
        %v3006 = vand.u32 %v1865, 4294901760
        %3007 = vmatpush1.msra.mxu0 %v3006
        %3008 = vmatprep.subr.mxu0 0.0
        %v3009 = vand.u32 %v1866, 4294901760
        %3010 = vmatpush1.msra.mxu0 %v3009
        %3011 = vmatprep.subr.mxu0 0.0
        %v3012 = vand.u32 %v1867, 4294901760
        %3013 = vmatpush1.msra.mxu0 %v3012
        %3014 = vmatprep.subr.mxu0 0.0
        %v3015 = vand.u32 %v1868, 4294901760
        %3016 = vmatpush1.msra.mxu0 %v3015
        %3017 = vmatprep.subr.mxu0 0.0
        %v3018 = vand.u32 %v1869, 4294901760
        %3019 = vmatpush1.msra.mxu0 %v3018
        %3020 = vmatprep.subr.mxu0 0.0
        %v3021 = vand.u32 %v1870, 4294901760
        %3022 = vmatpush1.msra.mxu0 %v3021
        %3023 = vmatprep.subr.mxu0 0.0
        %v3024 = vand.u32 %v1871, 4294901760
        %3025 = vmatpush1.msra.mxu0 %v3024
        %3026 = vmatprep.subr.mxu0 0.0
        %v3027 = vand.u32 %v1872, 4294901760
        %3028 = vmatpush1.msra.mxu0 %v3027
        %3029 = vmatprep.subr.mxu0 0.0
        %v3030 = vand.u32 %v1873, 4294901760
        %3031 = vmatpush1.msra.mxu0 %v3030
        %3032 = vmatprep.subr.mxu0 0.0
        %v3033 = vand.u32 %v1874, 4294901760
        %3034 = vmatpush1.msra.mxu0 %v3033
        %3035 = vmatprep.subr.mxu0 0.0
        %v3036 = vand.u32 %v1875, 4294901760
        %3037 = vmatpush1.msra.mxu0 %v3036
        %3038 = vmatprep.subr.mxu0 0.0
        %3039 = vmatpush1.msra.mxu0 0.0
        %3040 = vmatprep.subr.mxu0 0.0
        %3041 = vmatpush1.msra.mxu0 0.0
        %3042 = vmatprep.subr.mxu0 0.0
        %3043 = vmatpush1.msra.mxu0 0.0
        %3044 = vmatprep.subr.mxu0 0.0
        %3045 = vmatpush1.msra.mxu0 0.0
        %3046 = vmatprep.subr.mxu0 0.0
        %3047 = vmatpush1.msra.mxu0 0.0
        %3048 = vmatprep.subr.mxu0 0.0
        %3049 = vmatpush1.msra.mxu0 0.0
        %3050 = vmatprep.subr.mxu0 0.0
        %3051 = vmatpush1.msra.mxu0 0.0
        %3052 = vmatprep.subr.mxu0 0.0
        %3053 = vmatpush1.msra.mxu0 0.0
        %3054 = vmatprep.subr.mxu0 0.0
        %3055 = vmatpush1.msra.mxu0 0.0
        %3056 = vmatprep.subr.mxu0 0.0
        %3057 = vmatpush1.msra.mxu0 0.0
        %3058 = vmatprep.subr.mxu0 0.0
        %3059 = vmatpush1.msra.mxu0 0.0
        %3060 = vmatprep.subr.mxu0 0.0
        %3061 = vmatpush1.msra.mxu0 0.0
        %3062 = vmatprep.subr.mxu0 0.0
        %3063 = vmatpush1.msra.mxu0 0.0
        %3064 = vmatprep.subr.mxu0 0.0
        %3065 = vmatpush1.msra.mxu0 0.0
        %3066 = vmatprep.subr.mxu0 0.0
        %3067 = vmatpush1.msra.mxu0 0.0
        %3068 = vmatprep.subr.mxu0 0.0
        %3069 = vmatpush1.msra.mxu0 0.0
        %3070 = vmatprep.mubr.f32.mxu0 0.0
        %v3071 = vand.u32 %v1843, 4294901760
        %3072 = vmatmul.mubr.f32.gmra.mrb[0].mxu0 %v3071
        %v3073 = vpop.f32.mrb[0].mxu0
        %v3074 = vadd.f32 %v2897, %v3073
        %v3075 = vpop.f32.mrb[0].mxu0
        %3076 = vmatprep.mubr.f32.mxu0 0.0
        %v3077 = vand.u32 %v1844, 4294901760
        %3078 = vmatmul.mubr.f32.gmra.mrb[0].mxu0 %v3077
        %v3079 = vpop.f32.mrb[0].mxu0
        %v3080 = vadd.f32 %v2903, %v3079
        %v3081 = vpop.f32.mrb[0].mxu0
        %3082 = vmatprep.mubr.f32.mxu0 0.0
        %v3083 = vand.u32 %v1845, 4294901760
        %3084 = vmatmul.mubr.f32.gmra.mrb[0].mxu0 %v3083
        %v3085 = vpop.f32.mrb[0].mxu0
        %v3086 = vadd.f32 %v2909, %v3085
        %v3087 = vpop.f32.mrb[0].mxu0
        %3088 = vmatprep.mubr.f32.mxu0 0.0
        %v3089 = vand.u32 %v1846, 4294901760
        %3090 = vmatmul.mubr.f32.gmra.mrb[0].mxu0 %v3089
        %v3091 = vpop.f32.mrb[0].mxu0
        %v3092 = vadd.f32 %v2915, %v3091
        %v3093 = vpop.f32.mrb[0].mxu0
        %3094 = vmatprep.mubr.f32.mxu0 0.0
        %v3095 = vand.u32 %v1847, 4294901760
        %3096 = vmatmul.mubr.f32.gmra.mrb[0].mxu0 %v3095
        %v3097 = vpop.f32.mrb[0].mxu0
        %v3098 = vadd.f32 %v2921, %v3097
        %v3099 = vpop.f32.mrb[0].mxu0
        %3100 = vmatprep.mubr.f32.mxu0 0.0
        %v3101 = vand.u32 %v1848, 4294901760
        %3102 = vmatmul.mubr.f32.gmra.mrb[0].mxu0 %v3101
        %v3103 = vpop.f32.mrb[0].mxu0
        %v3104 = vadd.f32 %v2927, %v3103
        %v3105 = vpop.f32.mrb[0].mxu0
        %3106 = vmatprep.mubr.f32.mxu0 0.0
        %v3107 = vand.u32 %v1849, 4294901760
        %3108 = vmatmul.mubr.f32.gmra.mrb[0].mxu0 %v3107
        %v3109 = vpop.f32.mrb[0].mxu0
        %v3110 = vadd.f32 %v2933, %v3109
        %v3111 = vpop.f32.mrb[0].mxu0
        %3112 = vmatprep.mubr.f32.mxu0 0.0
        %v3113 = vand.u32 %v1850, 4294901760
        %3114 = vmatmul.mubr.f32.gmra.mrb[0].mxu0 %v3113
        %v3115 = vpop.f32.mrb[0].mxu0
        %v3116 = vadd.f32 %v2939, %v3115
        %v3117 = vpop.f32.mrb[0].mxu0
        %3118 = vmatprep.mubr.f32.mxu0 0.0
        %v3119 = vand.u32 %v1851, 4294901760
        %3120 = vmatmul.mubr.f32.gmra.mrb[0].mxu0 %v3119
        %v3121 = vpop.f32.mrb[0].mxu0
        %v3122 = vadd.f32 %v2945, %v3121
        %v3123 = vpop.f32.mrb[0].mxu0
        %3124 = vmatprep.mubr.f32.mxu0 0.0
        %v3125 = vand.u32 %v1852, 4294901760
        %3126 = vmatmul.mubr.f32.gmra.mrb[0].mxu0 %v3125
        %v3127 = vpop.f32.mrb[0].mxu0
        %v3128 = vadd.f32 %v2951, %v3127
        %v3129 = vpop.f32.mrb[0].mxu0
        %3130 = vmatprep.mubr.f32.mxu0 0.0
        %v3131 = vand.u32 %v1853, 4294901760
        %3132 = vmatmul.mubr.f32.gmra.mrb[0].mxu0 %v3131
        %v3133 = vpop.f32.mrb[0].mxu0
        %v3134 = vadd.f32 %v2957, %v3133
        %v3135 = vpop.f32.mrb[0].mxu0
        %3136 = vmatprep.mubr.f32.mxu0 0.0
        %v3137 = vand.u32 %v1854, 4294901760
        %3138 = vmatmul.mubr.f32.gmra.mrb[0].mxu0 %v3137
        %v3139 = vpop.f32.mrb[0].mxu0
        %v3140 = vadd.f32 %v2963, %v3139
        %v3141 = vpop.f32.mrb[0].mxu0
        %3142 = vmatprep.mubr.f32.mxu0 0.0
        %v3143 = vand.u32 %v1855, 4294901760
        %3144 = vmatmul.mubr.f32.gmra.mrb[0].mxu0 %v3143
        %v3145 = vpop.f32.mrb[0].mxu0
        %v3146 = vadd.f32 %v2969, %v3145
        %v3147 = vpop.f32.mrb[0].mxu0
        %3148 = vmatprep.mubr.f32.mxu0 0.0
        %v3149 = vand.u32 %v1856, 4294901760
        %3150 = vmatmul.mubr.f32.gmra.mrb[0].mxu0 %v3149
        %v3151 = vpop.f32.mrb[0].mxu0
        %v3152 = vadd.f32 %v2975, %v3151
        %v3153 = vpop.f32.mrb[0].mxu0
        %3154 = vmatprep.mubr.f32.mxu0 0.0
        %v3155 = vand.u32 %v1857, 4294901760
        %3156 = vmatmul.mubr.f32.gmra.mrb[0].mxu0 %v3155
        %v3157 = vpop.f32.mrb[0].mxu0
        %v3158 = vadd.f32 %v2981, %v3157
        %v3159 = vpop.f32.mrb[0].mxu0
        %3160 = vmatprep.mubr.f32.mxu0 0.0
        %v3161 = vand.u32 %v1858, 4294901760
        %3162 = vmatmul.mubr.f32.gmra.mrb[0].mxu0 %v3161
        %v3163 = vpop.f32.mrb[0].mxu0
        %v3164 = vadd.f32 %v2987, %v3163
        %v3165 = vpop.f32.mrb[0].mxu0
        %3166 = vdwg.mxu0
        %v3167 = vtanh.pop %v3074
        %v3168 = vtanh.pop %v3080
        %v3169 = vtanh.pop %v3086
        %v3170 = vtanh.pop %v3092
        %v3171 = vtanh.pop %v3098
        %v3172 = vtanh.pop %v3104
        %v3173 = vtanh.pop %v3110
        %v3174 = vtanh.pop %v3116
        %v3175 = vtanh.pop %v3122
        %v3176 = vtanh.pop %v3128
        %v3177 = vtanh.pop %v3134
        %v3178 = vtanh.pop %v3140
        %v3179 = vtanh.pop %v3146
        %v3180 = vtanh.pop %v3152
        %v3181 = vtanh.pop %v3158
        %v3182 = vtanh.pop %v3164
        %v3183 = vld [vmem:[%s5] sm:$0xff]
        %v3184 = vld [vmem:[%s6] sm:$0xff]
        %3186 = vset.pattern.permute.xlu0 0
        %3187 = vperm.xlu0 %3186, %v3184
        %v3188 = vpop.permute.xlu0 %3187
        %3190 = vmatprep.subr.mxu0 0.0
        %v3191 = vand.u32 %v3167, 4294901760
        %3192 = vmatpush1.xpose.msra.mxu0 %v3191
        %3193 = vmatprep.subr.mxu0 0.0
        %v3194 = vand.u32 %v3168, 4294901760
        %3195 = vmatpush1.xpose.msra.mxu0 %v3194
        %3196 = vmatprep.subr.mxu0 0.0
        %v3197 = vand.u32 %v3169, 4294901760
        %3198 = vmatpush1.xpose.msra.mxu0 %v3197
        %3199 = vmatprep.subr.mxu0 0.0
        %v3200 = vand.u32 %v3170, 4294901760
        %3201 = vmatpush1.xpose.msra.mxu0 %v3200
        %3202 = vmatprep.subr.mxu0 0.0
        %v3203 = vand.u32 %v3171, 4294901760
        %3204 = vmatpush1.xpose.msra.mxu0 %v3203
        %3205 = vmatprep.subr.mxu0 0.0
        %v3206 = vand.u32 %v3172, 4294901760
        %3207 = vmatpush1.xpose.msra.mxu0 %v3206
        %3208 = vmatprep.subr.mxu0 0.0
        %v3209 = vand.u32 %v3173, 4294901760
        %3210 = vmatpush1.xpose.msra.mxu0 %v3209
        %3211 = vmatprep.subr.mxu0 0.0
        %v3212 = vand.u32 %v3174, 4294901760
        %3213 = vmatpush1.xpose.msra.mxu0 %v3212
        %3214 = vmatprep.subr.mxu0 0.0
        %v3215 = vand.u32 %v3175, 4294901760
        %3216 = vmatpush1.xpose.msra.mxu0 %v3215
        %3217 = vmatprep.subr.mxu0 0.0
        %v3218 = vand.u32 %v3176, 4294901760
        %3219 = vmatpush1.xpose.msra.mxu0 %v3218
        %3220 = vmatprep.subr.mxu0 0.0
        %v3221 = vand.u32 %v3177, 4294901760
        %3222 = vmatpush1.xpose.msra.mxu0 %v3221
        %3223 = vmatprep.subr.mxu0 0.0
        %v3224 = vand.u32 %v3178, 4294901760
        %3225 = vmatpush1.xpose.msra.mxu0 %v3224
        %3226 = vmatprep.subr.mxu0 0.0
        %v3227 = vand.u32 %v3179, 4294901760
        %3228 = vmatpush1.xpose.msra.mxu0 %v3227
        %3229 = vmatprep.subr.mxu0 0.0
        %v3230 = vand.u32 %v3180, 4294901760
        %3231 = vmatpush1.xpose.msra.mxu0 %v3230
        %3232 = vmatprep.subr.mxu0 0.0
        %v3233 = vand.u32 %v3181, 4294901760
        %3234 = vmatpush1.xpose.msra.mxu0 %v3233
        %3235 = vmatprep.subr.mxu0 0.0
        %v3236 = vand.u32 %v3182, 4294901760
        %3237 = vmatpush1.xpose.msra.mxu0 %v3236
        %3238 = vmatprep.subr.mxu0 0.0
        %3239 = vmatpush1.xpose.msra.mxu0 0.0
        %3240 = vmatprep.subr.mxu0 0.0
        %3241 = vmatpush1.xpose.msra.mxu0 0.0
        %3242 = vmatprep.subr.mxu0 0.0
        %3243 = vmatpush1.xpose.msra.mxu0 0.0
        %3244 = vmatprep.subr.mxu0 0.0
        %3245 = vmatpush1.xpose.msra.mxu0 0.0
        %3246 = vmatprep.subr.mxu0 0.0
        %3247 = vmatpush1.xpose.msra.mxu0 0.0
        %3248 = vmatprep.subr.mxu0 0.0
        %3249 = vmatpush1.xpose.msra.mxu0 0.0
        %3250 = vmatprep.subr.mxu0 0.0
        %3251 = vmatpush1.xpose.msra.mxu0 0.0
        %3252 = vmatprep.subr.mxu0 0.0
        %3253 = vmatpush1.xpose.msra.mxu0 0.0
        %3254 = vmatprep.subr.mxu0 0.0
        %3255 = vmatpush1.xpose.msra.mxu0 0.0
        %3256 = vmatprep.subr.mxu0 0.0
        %3257 = vmatpush1.xpose.msra.mxu0 0.0
        %3258 = vmatprep.subr.mxu0 0.0
        %3259 = vmatpush1.xpose.msra.mxu0 0.0
        %3260 = vmatprep.subr.mxu0 0.0
        %3261 = vmatpush1.xpose.msra.mxu0 0.0
        %3262 = vmatprep.subr.mxu0 0.0
        %3263 = vmatpush1.xpose.msra.mxu0 0.0
        %3264 = vmatprep.subr.mxu0 0.0
        %3265 = vmatpush1.xpose.msra.mxu0 0.0
        %3266 = vmatprep.subr.mxu0 0.0
        %3267 = vmatpush1.xpose.msra.mxu0 0.0
        %3268 = vmatprep.subr.mxu0 0.0
        %3269 = vmatpush1.xpose.msra.mxu0 0.0
        %3270 = vmatprep.mubr.f32.mxu0 0.0
        %v3271 = vand.u32 %v3183, 4294901760
        %v3272 = vsub.f32 %v3183, %v3271
        %v3273 = vand.u32 %v3272, 4294901760
        %v3274 = vsub.f32 %v3272, %v3273
        %v3275 = vand.u32 %v3274, 4294901760
        %3276 = vmatmul.mubr.f32.gmra.mrb[0].mxu0 %v3275
        %v3277 = vpop.f32.mrb[0].mxu0
        %v3278 = vadd.f32 %v3188, %v3277
        %v3279 = vpop.f32.mrb[0].mxu0
        %3280 = vdwg.mxu0
        %3281 = vmatprep.subr.mxu0 0.0
        %v3282 = vand.u32 %v3167, 4294901760
        %v3283 = vsub.f32 %v3167, %v3282
        %v3284 = vand.u32 %v3283, 4294901760
        %v3285 = vsub.f32 %v3283, %v3284
        %v3286 = vand.u32 %v3285, 4294901760
        %3287 = vmatpush1.xpose.msra.mxu0 %v3286
        %3288 = vmatprep.subr.mxu0 0.0
        %v3289 = vand.u32 %v3168, 4294901760
        %v3290 = vsub.f32 %v3168, %v3289
        %v3291 = vand.u32 %v3290, 4294901760
        %v3292 = vsub.f32 %v3290, %v3291
        %v3293 = vand.u32 %v3292, 4294901760
        %3294 = vmatpush1.xpose.msra.mxu0 %v3293
        %3295 = vmatprep.subr.mxu0 0.0
        %v3296 = vand.u32 %v3169, 4294901760
        %v3297 = vsub.f32 %v3169, %v3296
        %v3298 = vand.u32 %v3297, 4294901760
        %v3299 = vsub.f32 %v3297, %v3298
        %v3300 = vand.u32 %v3299, 4294901760
        %3301 = vmatpush1.xpose.msra.mxu0 %v3300
        %3302 = vmatprep.subr.mxu0 0.0
        %v3303 = vand.u32 %v3170, 4294901760
        %v3304 = vsub.f32 %v3170, %v3303
        %v3305 = vand.u32 %v3304, 4294901760
        %v3306 = vsub.f32 %v3304, %v3305
        %v3307 = vand.u32 %v3306, 4294901760
        %3308 = vmatpush1.xpose.msra.mxu0 %v3307
        %3309 = vmatprep.subr.mxu0 0.0
        %v3310 = vand.u32 %v3171, 4294901760
        %v3311 = vsub.f32 %v3171, %v3310
        %v3312 = vand.u32 %v3311, 4294901760
        %v3313 = vsub.f32 %v3311, %v3312
        %v3314 = vand.u32 %v3313, 4294901760
        %3315 = vmatpush1.xpose.msra.mxu0 %v3314
        %3316 = vmatprep.subr.mxu0 0.0
        %v3317 = vand.u32 %v3172, 4294901760
        %v3318 = vsub.f32 %v3172, %v3317
        %v3319 = vand.u32 %v3318, 4294901760
        %v3320 = vsub.f32 %v3318, %v3319
        %v3321 = vand.u32 %v3320, 4294901760
        %3322 = vmatpush1.xpose.msra.mxu0 %v3321
        %3323 = vmatprep.subr.mxu0 0.0
        %v3324 = vand.u32 %v3173, 4294901760
        %v3325 = vsub.f32 %v3173, %v3324
        %v3326 = vand.u32 %v3325, 4294901760
        %v3327 = vsub.f32 %v3325, %v3326
        %v3328 = vand.u32 %v3327, 4294901760
        %3329 = vmatpush1.xpose.msra.mxu0 %v3328
        %3330 = vmatprep.subr.mxu0 0.0
        %v3331 = vand.u32 %v3174, 4294901760
        %v3332 = vsub.f32 %v3174, %v3331
        %v3333 = vand.u32 %v3332, 4294901760
        %v3334 = vsub.f32 %v3332, %v3333
        %v3335 = vand.u32 %v3334, 4294901760
        %3336 = vmatpush1.xpose.msra.mxu0 %v3335
        %3337 = vmatprep.subr.mxu0 0.0
        %v3338 = vand.u32 %v3175, 4294901760
        %v3339 = vsub.f32 %v3175, %v3338
        %v3340 = vand.u32 %v3339, 4294901760
        %v3341 = vsub.f32 %v3339, %v3340
        %v3342 = vand.u32 %v3341, 4294901760
        %3343 = vmatpush1.xpose.msra.mxu0 %v3342
        %3344 = vmatprep.subr.mxu0 0.0
        %v3345 = vand.u32 %v3176, 4294901760
        %v3346 = vsub.f32 %v3176, %v3345
        %v3347 = vand.u32 %v3346, 4294901760
        %v3348 = vsub.f32 %v3346, %v3347
        %v3349 = vand.u32 %v3348, 4294901760
        %3350 = vmatpush1.xpose.msra.mxu0 %v3349
        %3351 = vmatprep.subr.mxu0 0.0
        %v3352 = vand.u32 %v3177, 4294901760
        %v3353 = vsub.f32 %v3177, %v3352
        %v3354 = vand.u32 %v3353, 4294901760
        %v3355 = vsub.f32 %v3353, %v3354
        %v3356 = vand.u32 %v3355, 4294901760
        %3357 = vmatpush1.xpose.msra.mxu0 %v3356
        %3358 = vmatprep.subr.mxu0 0.0
        %v3359 = vand.u32 %v3178, 4294901760
        %v3360 = vsub.f32 %v3178, %v3359
        %v3361 = vand.u32 %v3360, 4294901760
        %v3362 = vsub.f32 %v3360, %v3361
        %v3363 = vand.u32 %v3362, 4294901760
        %3364 = vmatpush1.xpose.msra.mxu0 %v3363
        %3365 = vmatprep.subr.mxu0 0.0
        %v3366 = vand.u32 %v3179, 4294901760
        %v3367 = vsub.f32 %v3179, %v3366
        %v3368 = vand.u32 %v3367, 4294901760
        %v3369 = vsub.f32 %v3367, %v3368
        %v3370 = vand.u32 %v3369, 4294901760
        %3371 = vmatpush1.xpose.msra.mxu0 %v3370
        %3372 = vmatprep.subr.mxu0 0.0
        %v3373 = vand.u32 %v3180, 4294901760
        %v3374 = vsub.f32 %v3180, %v3373
        %v3375 = vand.u32 %v3374, 4294901760
        %v3376 = vsub.f32 %v3374, %v3375
        %v3377 = vand.u32 %v3376, 4294901760
        %3378 = vmatpush1.xpose.msra.mxu0 %v3377
        %3379 = vmatprep.subr.mxu0 0.0
        %v3380 = vand.u32 %v3181, 4294901760
        %v3381 = vsub.f32 %v3181, %v3380
        %v3382 = vand.u32 %v3381, 4294901760
        %v3383 = vsub.f32 %v3381, %v3382
        %v3384 = vand.u32 %v3383, 4294901760
        %3385 = vmatpush1.xpose.msra.mxu0 %v3384
        %3386 = vmatprep.subr.mxu0 0.0
        %v3387 = vand.u32 %v3182, 4294901760
        %v3388 = vsub.f32 %v3182, %v3387
        %v3389 = vand.u32 %v3388, 4294901760
        %v3390 = vsub.f32 %v3388, %v3389
        %v3391 = vand.u32 %v3390, 4294901760
        %3392 = vmatpush1.xpose.msra.mxu0 %v3391
        %3393 = vmatprep.subr.mxu0 0.0
        %3394 = vmatpush1.xpose.msra.mxu0 0.0
        %3395 = vmatprep.subr.mxu0 0.0
        %3396 = vmatpush1.xpose.msra.mxu0 0.0
        %3397 = vmatprep.subr.mxu0 0.0
        %3398 = vmatpush1.xpose.msra.mxu0 0.0
        %3399 = vmatprep.subr.mxu0 0.0
        %3400 = vmatpush1.xpose.msra.mxu0 0.0
        %3401 = vmatprep.subr.mxu0 0.0
        %3402 = vmatpush1.xpose.msra.mxu0 0.0
        %3403 = vmatprep.subr.mxu0 0.0
        %3404 = vmatpush1.xpose.msra.mxu0 0.0
        %3405 = vmatprep.subr.mxu0 0.0
        %3406 = vmatpush1.xpose.msra.mxu0 0.0
        %3407 = vmatprep.subr.mxu0 0.0
        %3408 = vmatpush1.xpose.msra.mxu0 0.0
        %3409 = vmatprep.subr.mxu0 0.0
        %3410 = vmatpush1.xpose.msra.mxu0 0.0
        %3411 = vmatprep.subr.mxu0 0.0
        %3412 = vmatpush1.xpose.msra.mxu0 0.0
        %3413 = vmatprep.subr.mxu0 0.0
        %3414 = vmatpush1.xpose.msra.mxu0 0.0
        %3415 = vmatprep.subr.mxu0 0.0
        %3416 = vmatpush1.xpose.msra.mxu0 0.0
        %3417 = vmatprep.subr.mxu0 0.0
        %3418 = vmatpush1.xpose.msra.mxu0 0.0
        %3419 = vmatprep.subr.mxu0 0.0
        %3420 = vmatpush1.xpose.msra.mxu0 0.0
        %3421 = vmatprep.subr.mxu0 0.0
        %3422 = vmatpush1.xpose.msra.mxu0 0.0
        %3423 = vmatprep.subr.mxu0 0.0
        %3424 = vmatpush1.xpose.msra.mxu0 0.0
        %3425 = vmatprep.mubr.f32.mxu0 0.0
        %v3426 = vand.u32 %v3183, 4294901760
        %3427 = vmatmul.mubr.f32.gmra.mrb[0].mxu0 %v3426
        %v3428 = vpop.f32.mrb[0].mxu0
        %v3429 = vadd.f32 %v3278, %v3428
        %v3430 = vpop.f32.mrb[0].mxu0
        %3431 = vdwg.mxu0
        %3432 = vmatprep.subr.mxu0 0.0
        %v3433 = vand.u32 %v3167, 4294901760
        %v3434 = vsub.f32 %v3167, %v3433
        %3435 = vmatpush1.xpose.msra.mxu0 %v3434
        %3436 = vmatprep.subr.mxu0 0.0
        %v3437 = vand.u32 %v3168, 4294901760
        %v3438 = vsub.f32 %v3168, %v3437
        %3439 = vmatpush1.xpose.msra.mxu0 %v3438
        %3440 = vmatprep.subr.mxu0 0.0
        %v3441 = vand.u32 %v3169, 4294901760
        %v3442 = vsub.f32 %v3169, %v3441
        %3443 = vmatpush1.xpose.msra.mxu0 %v3442
        %3444 = vmatprep.subr.mxu0 0.0
        %v3445 = vand.u32 %v3170, 4294901760
        %v3446 = vsub.f32 %v3170, %v3445
        %3447 = vmatpush1.xpose.msra.mxu0 %v3446
        %3448 = vmatprep.subr.mxu0 0.0
        %v3449 = vand.u32 %v3171, 4294901760
        %v3450 = vsub.f32 %v3171, %v3449
        %3451 = vmatpush1.xpose.msra.mxu0 %v3450
        %3452 = vmatprep.subr.mxu0 0.0
        %v3453 = vand.u32 %v3172, 4294901760
        %v3454 = vsub.f32 %v3172, %v3453
        %3455 = vmatpush1.xpose.msra.mxu0 %v3454
        %3456 = vmatprep.subr.mxu0 0.0
        %v3457 = vand.u32 %v3173, 4294901760
        %v3458 = vsub.f32 %v3173, %v3457
        %3459 = vmatpush1.xpose.msra.mxu0 %v3458
        %3460 = vmatprep.subr.mxu0 0.0
        %v3461 = vand.u32 %v3174, 4294901760
        %v3462 = vsub.f32 %v3174, %v3461
        %3463 = vmatpush1.xpose.msra.mxu0 %v3462
        %3464 = vmatprep.subr.mxu0 0.0
        %v3465 = vand.u32 %v3175, 4294901760
        %v3466 = vsub.f32 %v3175, %v3465
        %3467 = vmatpush1.xpose.msra.mxu0 %v3466
        %3468 = vmatprep.subr.mxu0 0.0
        %v3469 = vand.u32 %v3176, 4294901760
        %v3470 = vsub.f32 %v3176, %v3469
        %3471 = vmatpush1.xpose.msra.mxu0 %v3470
        %3472 = vmatprep.subr.mxu0 0.0
        %v3473 = vand.u32 %v3177, 4294901760
        %v3474 = vsub.f32 %v3177, %v3473
        %3475 = vmatpush1.xpose.msra.mxu0 %v3474
        %3476 = vmatprep.subr.mxu0 0.0
        %v3477 = vand.u32 %v3178, 4294901760
        %v3478 = vsub.f32 %v3178, %v3477
        %3479 = vmatpush1.xpose.msra.mxu0 %v3478
        %3480 = vmatprep.subr.mxu0 0.0
        %v3481 = vand.u32 %v3179, 4294901760
        %v3482 = vsub.f32 %v3179, %v3481
        %3483 = vmatpush1.xpose.msra.mxu0 %v3482
        %3484 = vmatprep.subr.mxu0 0.0
        %v3485 = vand.u32 %v3180, 4294901760
        %v3486 = vsub.f32 %v3180, %v3485
        %3487 = vmatpush1.xpose.msra.mxu0 %v3486
        %3488 = vmatprep.subr.mxu0 0.0
        %v3489 = vand.u32 %v3181, 4294901760
        %v3490 = vsub.f32 %v3181, %v3489
        %3491 = vmatpush1.xpose.msra.mxu0 %v3490
        %3492 = vmatprep.subr.mxu0 0.0
        %v3493 = vand.u32 %v3182, 4294901760
        %v3494 = vsub.f32 %v3182, %v3493
        %3495 = vmatpush1.xpose.msra.mxu0 %v3494
        %3496 = vmatprep.subr.mxu0 0.0
        %3497 = vmatpush1.xpose.msra.mxu0 0.0
        %3498 = vmatprep.subr.mxu0 0.0
        %3499 = vmatpush1.xpose.msra.mxu0 0.0
        %3500 = vmatprep.subr.mxu0 0.0
        %3501 = vmatpush1.xpose.msra.mxu0 0.0
        %3502 = vmatprep.subr.mxu0 0.0
        %3503 = vmatpush1.xpose.msra.mxu0 0.0
        %3504 = vmatprep.subr.mxu0 0.0
        %3505 = vmatpush1.xpose.msra.mxu0 0.0
        %3506 = vmatprep.subr.mxu0 0.0
        %3507 = vmatpush1.xpose.msra.mxu0 0.0
        %3508 = vmatprep.subr.mxu0 0.0
        %3509 = vmatpush1.xpose.msra.mxu0 0.0
        %3510 = vmatprep.subr.mxu0 0.0
        %3511 = vmatpush1.xpose.msra.mxu0 0.0
        %3512 = vmatprep.subr.mxu0 0.0
        %3513 = vmatpush1.xpose.msra.mxu0 0.0
        %3514 = vmatprep.subr.mxu0 0.0
        %3515 = vmatpush1.xpose.msra.mxu0 0.0
        %3516 = vmatprep.subr.mxu0 0.0
        %3517 = vmatpush1.xpose.msra.mxu0 0.0
        %3518 = vmatprep.subr.mxu0 0.0
        %3519 = vmatpush1.xpose.msra.mxu0 0.0
        %3520 = vmatprep.subr.mxu0 0.0
        %3521 = vmatpush1.xpose.msra.mxu0 0.0
        %3522 = vmatprep.subr.mxu0 0.0
        %3523 = vmatpush1.xpose.msra.mxu0 0.0
        %3524 = vmatprep.subr.mxu0 0.0
        %3525 = vmatpush1.xpose.msra.mxu0 0.0
        %3526 = vmatprep.subr.mxu0 0.0
        %3527 = vmatpush1.xpose.msra.mxu0 0.0
        %3528 = vmatprep.mubr.f32.mxu0 0.0
        %v3529 = vand.u32 %v3183, 4294901760
        %v3530 = vsub.f32 %v3183, %v3529
        %3531 = vmatmul.mubr.f32.gmra.mrb[0].mxu0 %v3530
        %v3532 = vpop.f32.mrb[0].mxu0
        %v3533 = vadd.f32 %v3429, %v3532
        %v3534 = vpop.f32.mrb[0].mxu0
        %3535 = vdwg.mxu0
        %3536 = vmatprep.subr.mxu0 0.0
        %v3537 = vand.u32 %v3167, 4294901760
        %3538 = vmatpush1.xpose.msra.mxu0 %v3537
        %3539 = vmatprep.subr.mxu0 0.0
        %v3540 = vand.u32 %v3168, 4294901760
        %3541 = vmatpush1.xpose.msra.mxu0 %v3540
        %3542 = vmatprep.subr.mxu0 0.0
        %v3543 = vand.u32 %v3169, 4294901760
        %3544 = vmatpush1.xpose.msra.mxu0 %v3543
        %3545 = vmatprep.subr.mxu0 0.0
        %v3546 = vand.u32 %v3170, 4294901760
        %3547 = vmatpush1.xpose.msra.mxu0 %v3546
        %3548 = vmatprep.subr.mxu0 0.0
        %v3549 = vand.u32 %v3171, 4294901760
        %3550 = vmatpush1.xpose.msra.mxu0 %v3549
        %3551 = vmatprep.subr.mxu0 0.0
        %v3552 = vand.u32 %v3172, 4294901760
        %3553 = vmatpush1.xpose.msra.mxu0 %v3552
        %3554 = vmatprep.subr.mxu0 0.0
        %v3555 = vand.u32 %v3173, 4294901760
        %3556 = vmatpush1.xpose.msra.mxu0 %v3555
        %3557 = vmatprep.subr.mxu0 0.0
        %v3558 = vand.u32 %v3174, 4294901760
        %3559 = vmatpush1.xpose.msra.mxu0 %v3558
        %3560 = vmatprep.subr.mxu0 0.0
        %v3561 = vand.u32 %v3175, 4294901760
        %3562 = vmatpush1.xpose.msra.mxu0 %v3561
        %3563 = vmatprep.subr.mxu0 0.0
        %v3564 = vand.u32 %v3176, 4294901760
        %3565 = vmatpush1.xpose.msra.mxu0 %v3564
        %3566 = vmatprep.subr.mxu0 0.0
        %v3567 = vand.u32 %v3177, 4294901760
        %3568 = vmatpush1.xpose.msra.mxu0 %v3567
        %3569 = vmatprep.subr.mxu0 0.0
        %v3570 = vand.u32 %v3178, 4294901760
        %3571 = vmatpush1.xpose.msra.mxu0 %v3570
        %3572 = vmatprep.subr.mxu0 0.0
        %v3573 = vand.u32 %v3179, 4294901760
        %3574 = vmatpush1.xpose.msra.mxu0 %v3573
        %3575 = vmatprep.subr.mxu0 0.0
        %v3576 = vand.u32 %v3180, 4294901760
        %3577 = vmatpush1.xpose.msra.mxu0 %v3576
        %3578 = vmatprep.subr.mxu0 0.0
        %v3579 = vand.u32 %v3181, 4294901760
        %3580 = vmatpush1.xpose.msra.mxu0 %v3579
        %3581 = vmatprep.subr.mxu0 0.0
        %v3582 = vand.u32 %v3182, 4294901760
        %3583 = vmatpush1.xpose.msra.mxu0 %v3582
        %3584 = vmatprep.subr.mxu0 0.0
        %3585 = vmatpush1.xpose.msra.mxu0 0.0
        %3586 = vmatprep.subr.mxu0 0.0
        %3587 = vmatpush1.xpose.msra.mxu0 0.0
        %3588 = vmatprep.subr.mxu0 0.0
        %3589 = vmatpush1.xpose.msra.mxu0 0.0
        %3590 = vmatprep.subr.mxu0 0.0
        %3591 = vmatpush1.xpose.msra.mxu0 0.0
        %3592 = vmatprep.subr.mxu0 0.0
        %3593 = vmatpush1.xpose.msra.mxu0 0.0
        %3594 = vmatprep.subr.mxu0 0.0
        %3595 = vmatpush1.xpose.msra.mxu0 0.0
        %3596 = vmatprep.subr.mxu0 0.0
        %3597 = vmatpush1.xpose.msra.mxu0 0.0
        %3598 = vmatprep.subr.mxu0 0.0
        %3599 = vmatpush1.xpose.msra.mxu0 0.0
        %3600 = vmatprep.subr.mxu0 0.0
        %3601 = vmatpush1.xpose.msra.mxu0 0.0
        %3602 = vmatprep.subr.mxu0 0.0
        %3603 = vmatpush1.xpose.msra.mxu0 0.0
        %3604 = vmatprep.subr.mxu0 0.0
        %3605 = vmatpush1.xpose.msra.mxu0 0.0
        %3606 = vmatprep.subr.mxu0 0.0
        %3607 = vmatpush1.xpose.msra.mxu0 0.0
        %3608 = vmatprep.subr.mxu0 0.0
        %3609 = vmatpush1.xpose.msra.mxu0 0.0
        %3610 = vmatprep.subr.mxu0 0.0
        %3611 = vmatpush1.xpose.msra.mxu0 0.0
        %3612 = vmatprep.subr.mxu0 0.0
        %3613 = vmatpush1.xpose.msra.mxu0 0.0
        %3614 = vmatprep.subr.mxu0 0.0
        %3615 = vmatpush1.xpose.msra.mxu0 0.0
        %3616 = vmatprep.mubr.f32.mxu0 0.0
        %v3617 = vand.u32 %v3183, 4294901760
        %v3618 = vsub.f32 %v3183, %v3617
        %v3619 = vand.u32 %v3618, 4294901760
        %3620 = vmatmul.mubr.f32.gmra.mrb[0].mxu0 %v3619
        %v3621 = vpop.f32.mrb[0].mxu0
        %v3622 = vadd.f32 %v3533, %v3621
        %v3623 = vpop.f32.mrb[0].mxu0
        %3624 = vdwg.mxu0
        %3625 = vmatprep.subr.mxu0 0.0
        %v3626 = vand.u32 %v3167, 4294901760
        %v3627 = vsub.f32 %v3167, %v3626
        %v3628 = vand.u32 %v3627, 4294901760
        %3629 = vmatpush1.xpose.msra.mxu0 %v3628
        %3630 = vmatprep.subr.mxu0 0.0
        %v3631 = vand.u32 %v3168, 4294901760
        %v3632 = vsub.f32 %v3168, %v3631
        %v3633 = vand.u32 %v3632, 4294901760
        %3634 = vmatpush1.xpose.msra.mxu0 %v3633
        %3635 = vmatprep.subr.mxu0 0.0
        %v3636 = vand.u32 %v3169, 4294901760
        %v3637 = vsub.f32 %v3169, %v3636
        %v3638 = vand.u32 %v3637, 4294901760
        %3639 = vmatpush1.xpose.msra.mxu0 %v3638
        %3640 = vmatprep.subr.mxu0 0.0
        %v3641 = vand.u32 %v3170, 4294901760
        %v3642 = vsub.f32 %v3170, %v3641
        %v3643 = vand.u32 %v3642, 4294901760
        %3644 = vmatpush1.xpose.msra.mxu0 %v3643
        %3645 = vmatprep.subr.mxu0 0.0
        %v3646 = vand.u32 %v3171, 4294901760
        %v3647 = vsub.f32 %v3171, %v3646
        %v3648 = vand.u32 %v3647, 4294901760
        %3649 = vmatpush1.xpose.msra.mxu0 %v3648
        %3650 = vmatprep.subr.mxu0 0.0
        %v3651 = vand.u32 %v3172, 4294901760
        %v3652 = vsub.f32 %v3172, %v3651
        %v3653 = vand.u32 %v3652, 4294901760
        %3654 = vmatpush1.xpose.msra.mxu0 %v3653
        %3655 = vmatprep.subr.mxu0 0.0
        %v3656 = vand.u32 %v3173, 4294901760
        %v3657 = vsub.f32 %v3173, %v3656
        %v3658 = vand.u32 %v3657, 4294901760
        %3659 = vmatpush1.xpose.msra.mxu0 %v3658
        %3660 = vmatprep.subr.mxu0 0.0
        %v3661 = vand.u32 %v3174, 4294901760
        %v3662 = vsub.f32 %v3174, %v3661
        %v3663 = vand.u32 %v3662, 4294901760
        %3664 = vmatpush1.xpose.msra.mxu0 %v3663
        %3665 = vmatprep.subr.mxu0 0.0
        %v3666 = vand.u32 %v3175, 4294901760
        %v3667 = vsub.f32 %v3175, %v3666
        %v3668 = vand.u32 %v3667, 4294901760
        %3669 = vmatpush1.xpose.msra.mxu0 %v3668
        %3670 = vmatprep.subr.mxu0 0.0
        %v3671 = vand.u32 %v3176, 4294901760
        %v3672 = vsub.f32 %v3176, %v3671
        %v3673 = vand.u32 %v3672, 4294901760
        %3674 = vmatpush1.xpose.msra.mxu0 %v3673
        %3675 = vmatprep.subr.mxu0 0.0
        %v3676 = vand.u32 %v3177, 4294901760
        %v3677 = vsub.f32 %v3177, %v3676
        %v3678 = vand.u32 %v3677, 4294901760
        %3679 = vmatpush1.xpose.msra.mxu0 %v3678
        %3680 = vmatprep.subr.mxu0 0.0
        %v3681 = vand.u32 %v3178, 4294901760
        %v3682 = vsub.f32 %v3178, %v3681
        %v3683 = vand.u32 %v3682, 4294901760
        %3684 = vmatpush1.xpose.msra.mxu0 %v3683
        %3685 = vmatprep.subr.mxu0 0.0
        %v3686 = vand.u32 %v3179, 4294901760
        %v3687 = vsub.f32 %v3179, %v3686
        %v3688 = vand.u32 %v3687, 4294901760
        %3689 = vmatpush1.xpose.msra.mxu0 %v3688
        %3690 = vmatprep.subr.mxu0 0.0
        %v3691 = vand.u32 %v3180, 4294901760
        %v3692 = vsub.f32 %v3180, %v3691
        %v3693 = vand.u32 %v3692, 4294901760
        %3694 = vmatpush1.xpose.msra.mxu0 %v3693
        %3695 = vmatprep.subr.mxu0 0.0
        %v3696 = vand.u32 %v3181, 4294901760
        %v3697 = vsub.f32 %v3181, %v3696
        %v3698 = vand.u32 %v3697, 4294901760
        %3699 = vmatpush1.xpose.msra.mxu0 %v3698
        %3700 = vmatprep.subr.mxu0 0.0
        %v3701 = vand.u32 %v3182, 4294901760
        %v3702 = vsub.f32 %v3182, %v3701
        %v3703 = vand.u32 %v3702, 4294901760
        %3704 = vmatpush1.xpose.msra.mxu0 %v3703
        %3705 = vmatprep.subr.mxu0 0.0
        %3706 = vmatpush1.xpose.msra.mxu0 0.0
        %3707 = vmatprep.subr.mxu0 0.0
        %3708 = vmatpush1.xpose.msra.mxu0 0.0
        %3709 = vmatprep.subr.mxu0 0.0
        %3710 = vmatpush1.xpose.msra.mxu0 0.0
        %3711 = vmatprep.subr.mxu0 0.0
        %3712 = vmatpush1.xpose.msra.mxu0 0.0
        %3713 = vmatprep.subr.mxu0 0.0
        %3714 = vmatpush1.xpose.msra.mxu0 0.0
        %3715 = vmatprep.subr.mxu0 0.0
        %3716 = vmatpush1.xpose.msra.mxu0 0.0
        %3717 = vmatprep.subr.mxu0 0.0
        %3718 = vmatpush1.xpose.msra.mxu0 0.0
        %3719 = vmatprep.subr.mxu0 0.0
        %3720 = vmatpush1.xpose.msra.mxu0 0.0
        %3721 = vmatprep.subr.mxu0 0.0
        %3722 = vmatpush1.xpose.msra.mxu0 0.0
        %3723 = vmatprep.subr.mxu0 0.0
        %3724 = vmatpush1.xpose.msra.mxu0 0.0
        %3725 = vmatprep.subr.mxu0 0.0
        %3726 = vmatpush1.xpose.msra.mxu0 0.0
        %3727 = vmatprep.subr.mxu0 0.0
        %3728 = vmatpush1.xpose.msra.mxu0 0.0
        %3729 = vmatprep.subr.mxu0 0.0
        %3730 = vmatpush1.xpose.msra.mxu0 0.0
        %3731 = vmatprep.subr.mxu0 0.0
        %3732 = vmatpush1.xpose.msra.mxu0 0.0
        %3733 = vmatprep.subr.mxu0 0.0
        %3734 = vmatpush1.xpose.msra.mxu0 0.0
        %3735 = vmatprep.subr.mxu0 0.0
        %3736 = vmatpush1.xpose.msra.mxu0 0.0
        %3737 = vmatprep.mubr.f32.mxu0 0.0
        %v3738 = vand.u32 %v3183, 4294901760
        %3739 = vmatmul.mubr.f32.gmra.mrb[0].mxu0 %v3738
        %v3740 = vpop.f32.mrb[0].mxu0
        %v3741 = vadd.f32 %v3622, %v3740
        %v3742 = vpop.f32.mrb[0].mxu0
        %3743 = vdwg.mxu0
        %3744 = vmatprep.subr.mxu0 0.0
        %v3745 = vand.u32 %v3167, 4294901760
        %3746 = vmatpush1.xpose.msra.mxu0 %v3745
        %3747 = vmatprep.subr.mxu0 0.0
        %v3748 = vand.u32 %v3168, 4294901760
        %3749 = vmatpush1.xpose.msra.mxu0 %v3748
        %3750 = vmatprep.subr.mxu0 0.0
        %v3751 = vand.u32 %v3169, 4294901760
        %3752 = vmatpush1.xpose.msra.mxu0 %v3751
        %3753 = vmatprep.subr.mxu0 0.0
        %v3754 = vand.u32 %v3170, 4294901760
        %3755 = vmatpush1.xpose.msra.mxu0 %v3754
        %3756 = vmatprep.subr.mxu0 0.0
        %v3757 = vand.u32 %v3171, 4294901760
        %3758 = vmatpush1.xpose.msra.mxu0 %v3757
        %3759 = vmatprep.subr.mxu0 0.0
        %v3760 = vand.u32 %v3172, 4294901760
        %3761 = vmatpush1.xpose.msra.mxu0 %v3760
        %3762 = vmatprep.subr.mxu0 0.0
        %v3763 = vand.u32 %v3173, 4294901760
        %3764 = vmatpush1.xpose.msra.mxu0 %v3763
        %3765 = vmatprep.subr.mxu0 0.0
        %v3766 = vand.u32 %v3174, 4294901760
        %3767 = vmatpush1.xpose.msra.mxu0 %v3766
        %3768 = vmatprep.subr.mxu0 0.0
        %v3769 = vand.u32 %v3175, 4294901760
        %3770 = vmatpush1.xpose.msra.mxu0 %v3769
        %3771 = vmatprep.subr.mxu0 0.0
        %v3772 = vand.u32 %v3176, 4294901760
        %3773 = vmatpush1.xpose.msra.mxu0 %v3772
        %3774 = vmatprep.subr.mxu0 0.0
        %v3775 = vand.u32 %v3177, 4294901760
        %3776 = vmatpush1.xpose.msra.mxu0 %v3775
        %3777 = vmatprep.subr.mxu0 0.0
        %v3778 = vand.u32 %v3178, 4294901760
        %3779 = vmatpush1.xpose.msra.mxu0 %v3778
        %3780 = vmatprep.subr.mxu0 0.0
        %v3781 = vand.u32 %v3179, 4294901760
        %3782 = vmatpush1.xpose.msra.mxu0 %v3781
        %3783 = vmatprep.subr.mxu0 0.0
        %v3784 = vand.u32 %v3180, 4294901760
        %3785 = vmatpush1.xpose.msra.mxu0 %v3784
        %3786 = vmatprep.subr.mxu0 0.0
        %v3787 = vand.u32 %v3181, 4294901760
        %3788 = vmatpush1.xpose.msra.mxu0 %v3787
        %3789 = vmatprep.subr.mxu0 0.0
        %v3790 = vand.u32 %v3182, 4294901760
        %3791 = vmatpush1.xpose.msra.mxu0 %v3790
        %3792 = vmatprep.subr.mxu0 0.0
        %3793 = vmatpush1.xpose.msra.mxu0 0.0
        %3794 = vmatprep.subr.mxu0 0.0
        %3795 = vmatpush1.xpose.msra.mxu0 0.0
        %3796 = vmatprep.subr.mxu0 0.0
        %3797 = vmatpush1.xpose.msra.mxu0 0.0
        %3798 = vmatprep.subr.mxu0 0.0
        %3799 = vmatpush1.xpose.msra.mxu0 0.0
        %3800 = vmatprep.subr.mxu0 0.0
        %3801 = vmatpush1.xpose.msra.mxu0 0.0
        %3802 = vmatprep.subr.mxu0 0.0
        %3803 = vmatpush1.xpose.msra.mxu0 0.0
        %3804 = vmatprep.subr.mxu0 0.0
        %3805 = vmatpush1.xpose.msra.mxu0 0.0
        %3806 = vmatprep.subr.mxu0 0.0
        %3807 = vmatpush1.xpose.msra.mxu0 0.0
        %3808 = vmatprep.subr.mxu0 0.0
        %3809 = vmatpush1.xpose.msra.mxu0 0.0
        %3810 = vmatprep.subr.mxu0 0.0
        %3811 = vmatpush1.xpose.msra.mxu0 0.0
        %3812 = vmatprep.subr.mxu0 0.0
        %3813 = vmatpush1.xpose.msra.mxu0 0.0
        %3814 = vmatprep.subr.mxu0 0.0
        %3815 = vmatpush1.xpose.msra.mxu0 0.0
        %3816 = vmatprep.subr.mxu0 0.0
        %3817 = vmatpush1.xpose.msra.mxu0 0.0
        %3818 = vmatprep.subr.mxu0 0.0
        %3819 = vmatpush1.xpose.msra.mxu0 0.0
        %3820 = vmatprep.subr.mxu0 0.0
        %3821 = vmatpush1.xpose.msra.mxu0 0.0
        %3822 = vmatprep.subr.mxu0 0.0
        %3823 = vmatpush1.xpose.msra.mxu0 0.0
        %3824 = vmatprep.mubr.f32.mxu0 0.0
        %v3825 = vand.u32 %v3183, 4294901760
        %3826 = vmatmul.mubr.f32.gmra.mrb[0].mxu0 %v3825
        %v3827 = vpop.f32.mrb[0].mxu0
        %v3828 = vadd.f32 %v3741, %v3827
        %v3829 = vpop.f32.mrb[0].mxu0
        %3830 = vdwg.mxu0
        %3831 = vst [vmem:[%s272] sm:$0xff] %v3828
        %s3832 = sand.u32 %s181, 1
        %s3833 = scalar_lea.sflag [#allocation3], %s3832
        %s3834 = sand.u32 %s181, 1
        %s3835 = smul.addr %s3834, 8
        %s3836 = scalar_lea.vmem [#allocation2], %s3835
        // Predicated region
        $region49: #{tpu_custom_call.1} parent=47 // pred_check
          %p3837 = pneg %p191
        $region50: #{tpu_custom_call.1} parent=47 // pred_check_branch
          %3839 = sbr.rel (%p3837) target = $region52
        $region51: #{tpu_custom_call.1} parent=47 // pred_region
          %s3841 = ssub.s32 128, 128
          %3842 = vsyncadd %s3833, %s3841
          %s3843 = smul.addr %s21, 128
          %s3844 = scalar_lea.hbm %s7, %s3843
          %s3846 = sshll.u32 %s3836, 4
          %s3847 = int_to_ptr.vmem [resolvable:$true] %s3846
          %3849 = dma.vmem_to_hbm [thread:$0]  %s3847, 128, %s3844, %s3833
        $region52: #{tpu_custom_call.1} parent=47 // pred_fallthru
          _
      $region48: #{tpu_custom_call.1} parent=5 // pred_fallthru
        _
      %p3850 = scmp.le.s32.totalorder 2, %s16
      // Predicated region
      $region53: #{tpu_custom_call.1} parent=5 // pred_check
        %p3851 = pneg %p3850
      $region54: #{tpu_custom_call.1} parent=5 // pred_check_branch
        %3853 = sbr.rel (%p3851) target = $region56
      $region55: #{tpu_custom_call.1} parent=5 // pred_region
        %s3854 = ssub.s32 %s16, 2
        // Predicated region
        $region57: #{tpu_custom_call.1} parent=55 // pred_check
          %p3855 = pneg %p197
        $region58: #{tpu_custom_call.1} parent=55 // pred_check_branch
          %3857 = sbr.rel (%p3855) target = $region60
        $region59: #{tpu_custom_call.1} parent=55 // pred_region
          %s3858 = sand.u32 %s182, 1
          %s3859 = scalar_lea.sflag [#allocation3], %s3858
          %s3860 = sand.u32 %s182, 1
          %s3861 = smul.addr %s3860, 8
          %s3862 = scalar_lea.vmem [#allocation2], %s3861
          %3863 = dma.done %s3859, 128
        $region60: #{tpu_custom_call.1} parent=55 // pred_fallthru
          _
      $region56: #{tpu_custom_call.1} parent=5 // pred_fallthru
        _
    $region6: #{tpu_custom_call.1} parent=1 // loop_footer
      %s20 = sadd.s32 1, %s16
    $region7: #{tpu_custom_call.1} parent=1 // loop_footer_branch
      %15 = sbr.rel target = $region3
    $region8: #{tpu_custom_call.1} parent=1 // loop_exit
      _
    %3864 = vsyncpa [#allocation3], 1
    %s3865 = scalar_lea.sflag [#allocation3], 1
    %3866 = vsyncpa %s3865, 1

</llo_original>
